<compile_context>
chip_gen: v6e
topology: v6e:2x2x1
jax: 0.10.0
libtpu: 0.0.40
codegen_flags: <defaults>
</compile_context>

<pallas_src>
import numpy as np
import jax
import jax.numpy as jnp
from jax import lax
from jax.experimental import pallas as pl
from jax.experimental.pallas import tpu as pltpu


def _compiler_params():
    cls = getattr(pltpu, "CompilerParams", None) or getattr(pltpu, "TPUCompilerParams", None)
    if cls is None:
        return None
    return cls(dimension_semantics=("parallel",))


# ----------------------------------------------------------------------------
# Fused forward kernel (one grid step == one batch element)
# ----------------------------------------------------------------------------
def _fused_forward_kernel(
    x_ref,                       # (1, 1, 50, 50) f32  input image
    r1_ref, m1_ref, b1_ref,      # conv1: row-select (11,24,50), band (11,50,192), bias (1,192)
    s1_ref, t1_ref,              # maxpool1 row/col selections (2,12,24), (2,192,96)
    r3_ref,                      # 3x3 row-shift selections (3,12,12) (shared conv3/conv5)
    m3_ref, b3_ref,              # conv3 band (3,96,192), bias (1,192)
    m5_ref, b5_ref,              # conv5 band (3,192,156), bias (1,156)
    s5_ref, t5_ref,              # maxpool5 selections (2,6,12), (2,156,78)
    e6_ref,                      # row one-hots (6,1,6) used to peel rows for fl6
    g6_ref, b6_ref,              # fl6 with flatten folded in (6,78,256), bias (1,256)
    w7_ref, b7_ref,              # fl7 (256,256), (1,256)
    w8_ref, b8_ref,              # fl8 (256,3), (1,3)
    out_ref,                     # (1, 1, 3) f32
):
    f32 = jnp.float32
    bf16 = jnp.bfloat16

    def mxu(a, b):
        # bf16 MXU inputs, f32 accumulation.
        return jnp.dot(a.astype(bf16), b.astype(bf16), preferred_element_type=f32)

    x = x_ref[0, 0, :, :].astype(bf16)                     # (50, 50)

    # conv1 (11x11, stride 2, pad 4) + bias + ReLU -> (24, 24*8), cols = ow*8 + cout
    acc1 = jnp.zeros((24, 192), f32)
    for kh in range(11):
        rows = mxu(r1_ref[kh], x)                          # rows 2*oh + kh - 4 (0 if padded)
        acc1 = acc1 + mxu(rows, m1_ref[kh])                # band matmul over (kw, cin)
    a1 = jnp.maximum(acc1 + b1_ref[...], 0.0)

    # maxpool1 (2x2, stride 2) -> (12, 12*8), cols = w*8 + c
    rp1 = jnp.maximum(mxu(s1_ref[0], a1), mxu(s1_ref[1], a1))      # row pool (12, 192)
    p1 = jnp.maximum(mxu(rp1, t1_ref[0]), mxu(rp1, t1_ref[1]))     # col pool (12, 96)

    # conv3 (3x3, s1, p1) + bias + ReLU -> (12, 12*16)
    acc3 = jnp.zeros((12, 192), f32)
    for kh in range(3):
        acc3 = acc3 + mxu(mxu(r3_ref[kh], p1), m3_ref[kh])
    a3 = jnp.maximum(acc3 + b3_ref[...], 0.0)

    # conv5 (3x3, s1, p1) + bias + ReLU -> (12, 12*13)
    acc5 = jnp.zeros((12, 156), f32)
    for kh in range(3):
        acc5 = acc5 + mxu(mxu(r3_ref[kh], a3), m5_ref[kh])
    a5 = jnp.maximum(acc5 + b5_ref[...], 0.0)

    # maxpool5 (2x2, stride 2) -> (6, 6*13)
    rp5 = jnp.maximum(mxu(s5_ref[0], a5), mxu(s5_ref[1], a5))      # (6, 156)
    p5 = jnp.maximum(mxu(rp5, t5_ref[0]), mxu(rp5, t5_ref[1]))     # (6, 78), cols = w*13 + c

    # Flatten (PyTorch NCHW order folded into g6) + fl6 + ReLU
    acc6 = jnp.zeros((1, 256), f32)
    for h in range(6):
        row_h = mxu(e6_ref[h], p5)                         # (1, 78): row h of p5
        acc6 = acc6 + mxu(row_h, g6_ref[h])
    v6 = jnp.maximum(acc6 + b6_ref[...], 0.0)

    # fl7 + ReLU, fl8
    v7 = jnp.maximum(mxu(v6, w7_ref[...]) + b7_ref[...], 0.0)
    v8 = mxu(v7, w8_ref[...]) + b8_ref[...]

    out_ref[0, :, :] = v8.astype(out_ref.dtype)


# ----------------------------------------------------------------------------
# Wrapper
# ----------------------------------------------------------------------------
def classification_network_forward(x_nchw, kparams):
    """x_nchw: (B, 1, 50, 50) float32.  kparams: tuple from prepare_params()."""
    B, C, H, W = x_nchw.shape
    assert (C, H, W) == (1, 50, 50), "kernel layout is specialized to 1x50x50 input"

    in_specs = [pl.BlockSpec((1, 1, H, W), lambda b: (b, 0, 0, 0))]
    for a in kparams:
        in_specs.append(pl.BlockSpec(a.shape, lambda b, _nd=a.ndim: (0,) * _nd))

    out = pl.pallas_call(
        _fused_forward_kernel,
        out_shape=jax.ShapeDtypeStruct((B, 1, 3), jnp.float32),
        grid=(B,),
        in_specs=in_specs,
        out_specs=pl.BlockSpec((1, 1, 3), lambda b: (b, 0, 0)),
        compiler_params=_compiler_params(),
    )(x_nchw.astype(jnp.float32), *kparams)
    return out.reshape(B, 3)


# ----------------------------------------------------------------------------
# Parameters (PyTorch layouts) and one-time kernel-ready layout preparation
# ----------------------------------------------------------------------------
def init_params(key):
    """Synthetic params in PyTorch layouts: Conv2d (Cout,Cin,KH,KW), Linear (out,in)."""
    ks = jax.random.split(key, 12)

    def conv_w(k, cout, cin, kh, kw):
        return jax.random.normal(k, (cout, cin, kh, kw), jnp.float32) / np.sqrt(cin * kh * kw)

    def lin_w(k, fout, fin):
        return jax.random.normal(k, (fout, fin), jnp.float32) / np.sqrt(fin)

    def bias(k, n):
        return 0.01 * jax.random.normal(k, (n,), jnp.float32)

    return {
        "conv1_w": conv_w(ks[0], 8, 1, 11, 11), "conv1_b": bias(ks[1], 8),
        "conv3_w": conv_w(ks[2], 16, 8, 3, 3),  "conv3_b": bias(ks[3], 16),
        "conv5_w": conv_w(ks[4], 13, 16, 3, 3), "conv5_b": bias(ks[5], 13),
        "fl6_w": lin_w(ks[6], 256, 13 * 6 * 6), "fl6_b": bias(ks[7], 256),
        "fl7_w": lin_w(ks[8], 256, 256),        "fl7_b": bias(ks[9], 256),
        "fl8_w": lin_w(ks[10], 3, 256),         "fl8_b": bias(ks[11], 3),
    }


def prepare_params(params):
    """One-time host-side conversion into kernel-ready band / selection matrices."""
    w1 = np.asarray(params["conv1_w"], np.float32)
    b1 = np.asarray(params["conv1_b"], np.float32)
    w3 = np.asarray(params["conv3_w"], np.float32)
    b3 = np.asarray(params["conv3_b"], np.float32)
    w5 = np.asarray(params["conv5_w"], np.float32)
    b5 = np.asarray(params["conv5_b"], np.float32)
    w6 = np.asarray(params["fl6_w"], np.float32)
    b6 = np.asarray(params["fl6_b"], np.float32)
    w7 = np.asarray(params["fl7_w"], np.float32)
    b7 = np.asarray(params["fl7_b"], np.float32)
    w8 = np.asarray(params["fl8_w"], np.float32)
    b8 = np.asarray(params["fl8_b"], np.float32)

    H = W = 50
    K1, ST1, PD1, C1o, O1 = 11, 2, 4, 8, 24     # conv1 geometry
    H3, C3i, C3o = 12, 8, 16                    # conv3 geometry
    C5i, C5o = 16, 13                           # conv5 geometry
    H5o = 6

    # conv1: output row oh reads input row ST1*oh + kh - PD1 (zero if out of range).
    # Band M1 folds (kw, cin) -> (ow, cout); output cols = ow*8 + cout.
    R1 = np.zeros((K1, O1, H), np.float32)
    M1 = np.zeros((K1, W, O1 * C1o), np.float32)
    for kh in range(K1):
        for oh in range(O1):
            i = ST1 * oh + kh - PD1
            if 0 <= i < H:
                R1[kh, oh, i] = 1.0
        for ow in range(O1):
            for kw in range(K1):
                j = ST1 * ow + kw - PD1
                if 0 <= j < W:
                    M1[kh, j, ow * C1o:(ow + 1) * C1o] = w1[:, 0, kh, kw]

    # maxpool1 (24x24x8 -> 12x12x8): row and column-block selections.
    S1 = np.zeros((2, 12, 24), np.float32)
    T1 = np.zeros((2, 24 * C1o, 12 * C1o), np.float32)
    for d in range(2):
        for r in range(12):
            S1[d, r, 2 * r + d] = 1.0
        for wp in range(12):
            for c in range(C1o):
                T1[d, (2 * wp + d) * C1o + c, wp * C1o + c] = 1.0

    # 3x3 / stride-1 / pad-1 row shifts (shared by conv3 and conv5).
    R3 = np.zeros((3, H3, H3), np.float32)
    for kh in range(3):
        for oh in range(H3):
            i = oh + kh - 1
            if 0 <= i < H3:
                R3[kh, oh, i] = 1.0

    # conv3 band: rows = iw*8 + cin (iw = ow + kw - 1), cols = ow*16 + cout.
    M3 = np.zeros((3, H3 * C3i, H3 * C3o), np.float32)
    for kh in range(3):
        for ow in range(H3):
            for kw in range(3):
                iw = ow + kw - 1
                if 0 <= iw < H3:
                    M3[kh, iw * C3i:(iw + 1) * C3i, ow * C3o:(ow + 1) * C3o] = w3[:, :, kh, kw].T

    # conv5 band: rows = iw*16 + cin, cols = ow*13 + cout.
    M5 = np.zeros((3, H3 * C5i, H3 * C5o), np.float32)
    for kh in range(3):
        for ow in range(H3):
            for kw in range(3):
                iw = ow + kw - 1
                if 0 <= iw < H3:
                    M5[kh, iw * C5i:(iw + 1) * C5i, ow * C5o:(ow + 1) * C5o] = w5[:, :, kh, kw].T

    # maxpool5 (12x12x13 -> 6x6x13).
    S5 = np.zeros((2, H5o, H3), np.float32)
    T5 = np.zeros((2, H3 * C5o, H5o * C5o), np.float32)
    for d in range(2):
        for r in range(H5o):
            S5[d, r, 2 * r + d] = 1.0
        for wp in range(H5o):
            for c in range(C5o):
                T5[d, (2 * wp + d) * C5o + c, wp * C5o + c] = 1.0

    # Row one-hots used to peel individual rows of the pooled (6, 78) map.
    E6 = np.zeros((H5o, 1, H5o), np.float32)
    for h in range(H5o):
        E6[h, 0, h] = 1.0

    # fl6 with the PyTorch NCHW flatten (flat idx = c*36 + h*6 + w) folded in:
    # out6 = sum_h p5[h, :] @ G6[h];  p5 cols = w*13 + c.
    G6 = np.zeros((H5o, H5o * C5o, 256), np.float32)
    for h in range(H5o):
        for w_ in range(H5o):
            for c in range(C5o):
                G6[h, w_ * C5o + c, :] = w6[:, c * (H5o * H5o) + h * H5o + w_]

    def bft(a):
        return jnp.asarray(a, jnp.bfloat16)

    def f32row(a):
        return jnp.asarray(np.asarray(a)[None, :], jnp.float32)

    return (
        bft(R1), bft(M1), f32row(np.tile(b1, O1)),
        bft(S1), bft(T1),
        bft(R3),
        bft(M3), f32row(np.tile(b3, H3)),
        bft(M5), f32row(np.tile(b5, H3)),
        bft(S5), bft(T5),
        bft(E6),
        bft(G6), f32row(b6),
        bft(w7.T), f32row(b7),
        bft(w8.T), f32row(b8),
    )


# ----------------------------------------------------------------------------
# Pure-JAX reference (mirrors Classification_network.forward, f32)
# ----------------------------------------------------------------------------
def reference_forward(x, p):
    def conv(h, w, b, stride, pad):
        y = lax.conv_general_dilated(
            h, w, window_strides=(stride, stride),
            padding=[(pad, pad), (pad, pad)],
            dimension_numbers=("NCHW", "OIHW", "NCHW"))
        return y + b[None, :, None, None]

    def pool(h):
        return lax.reduce_window(h, -jnp.inf, lax.max,
                                 (1, 1, 2, 2), (1, 1, 2, 2), "VALID")

    y = jax.nn.relu(conv(x, p["conv1_w"], p["conv1_b"], 2, 4))
    y = pool(y)
    y = jax.nn.relu(conv(y, p["conv3_w"], p["conv3_b"], 1, 1))
    y = jax.nn.relu(conv(y, p["conv5_w"], p["conv5_b"], 1, 1))
    y = pool(y)
    y = y.reshape(y.shape[0], -1)
    y = jax.nn.relu(y @ p["fl6_w"].T + p["fl6_b"])
    y = jax.nn.relu(y @ p["fl7_w"].T + p["fl7_b"])
    return y @ p["fl8_w"].T + p["fl8_b"]


# ----------------------------------------------------------------------------
if __name__ == "__main__":
    key = jax.random.PRNGKey(0)
    k_param, k_x = jax.random.split(key)

    # 50x50 input is what the module's Flatten implies:
    # 50 -conv1(s2,p4,k11)-> 24 -pool-> 12 -conv3/5-> 12 -pool-> 6; 13*6*6 = 468.
    x = jax.random.normal(k_x, (2, 1, 50, 50), jnp.float32)

    params = init_params(k_param)
    kparams = prepare_params(params)        # one-time kernel-ready layouts (bf16)

    fwd = jax.jit(classification_network_forward)
    out = jax.block_until_ready(fwd(x, kparams))

    assert out.shape == (2, 3), out.shape
    assert out.dtype == jnp.float32
    assert bool(jnp.all(jnp.isfinite(out)))

    # Self-check against the pure-XLA f32 reference (bf16 MXU inputs => loose tol).
    ref = reference_forward(x, params)
    rel = float(jnp.linalg.norm(out - ref) / (jnp.linalg.norm(ref) + 1e-6))
    assert rel < 0.15, f"relative L2 error vs reference too large: {rel}"

    print("KERNEL_OK")
</pallas_src>

<mosaic_0001>
module attributes {stable_mosaic.version = 11 : i64} {
  func.func @_fused_forward_kernel(%arg0: i32, %arg1: memref<1x1x50x50xf32, #tpu.memory_space<vmem>>, %arg2: memref<11x24x50xbf16, #tpu.memory_space<vmem>>, %arg3: memref<11x50x192xbf16, #tpu.memory_space<vmem>>, %arg4: memref<1x192xf32, #tpu.memory_space<vmem>>, %arg5: memref<2x12x24xbf16, #tpu.memory_space<vmem>>, %arg6: memref<2x192x96xbf16, #tpu.memory_space<vmem>>, %arg7: memref<3x12x12xbf16, #tpu.memory_space<vmem>>, %arg8: memref<3x96x192xbf16, #tpu.memory_space<vmem>>, %arg9: memref<1x192xf32, #tpu.memory_space<vmem>>, %arg10: memref<3x192x156xbf16, #tpu.memory_space<vmem>>, %arg11: memref<1x156xf32, #tpu.memory_space<vmem>>, %arg12: memref<2x6x12xbf16, #tpu.memory_space<vmem>>, %arg13: memref<2x156x78xbf16, #tpu.memory_space<vmem>>, %arg14: memref<6x1x6xbf16, #tpu.memory_space<vmem>>, %arg15: memref<6x78x256xbf16, #tpu.memory_space<vmem>>, %arg16: memref<1x256xf32, #tpu.memory_space<vmem>>, %arg17: memref<256x256xbf16, #tpu.memory_space<vmem>>, %arg18: memref<1x256xf32, #tpu.memory_space<vmem>>, %arg19: memref<256x3xbf16, #tpu.memory_space<vmem>>, %arg20: memref<1x3xf32, #tpu.memory_space<vmem>>, %arg21: memref<1x1x3xf32, #tpu.memory_space<vmem>>) attributes {dimension_semantics = [#tpu.dimension_semantics<parallel>], iteration_bounds = array<i64: 2>, scalar_prefetch = 0 : i64, scratch_operands = 0 : i64, tpu.core_type = #tpu.core_type<tc>, window_params = [{transform_indices = @transform_0, window_bounds = array<i64: 1, 1, 50, 50>}, {pipeline_mode = #tpu.pipeline_mode<synchronous>, transform_indices = @transform_1, window_bounds = array<i64: 11, 24, 50>}, {pipeline_mode = #tpu.pipeline_mode<synchronous>, transform_indices = @transform_2, window_bounds = array<i64: 11, 50, 192>}, {pipeline_mode = #tpu.pipeline_mode<synchronous>, transform_indices = @transform_3, window_bounds = array<i64: 1, 192>}, {pipeline_mode = #tpu.pipeline_mode<synchronous>, transform_indices = @transform_4, window_bounds = array<i64: 2, 12, 24>}, {pipeline_mode = #tpu.pipeline_mode<synchronous>, transform_indices = @transform_5, window_bounds = array<i64: 2, 192, 96>}, {pipeline_mode = #tpu.pipeline_mode<synchronous>, transform_indices = @transform_6, window_bounds = array<i64: 3, 12, 12>}, {pipeline_mode = #tpu.pipeline_mode<synchronous>, transform_indices = @transform_7, window_bounds = array<i64: 3, 96, 192>}, {pipeline_mode = #tpu.pipeline_mode<synchronous>, transform_indices = @transform_8, window_bounds = array<i64: 1, 192>}, {pipeline_mode = #tpu.pipeline_mode<synchronous>, transform_indices = @transform_9, window_bounds = array<i64: 3, 192, 156>}, {pipeline_mode = #tpu.pipeline_mode<synchronous>, transform_indices = @transform_10, window_bounds = array<i64: 1, 156>}, {pipeline_mode = #tpu.pipeline_mode<synchronous>, transform_indices = @transform_11, window_bounds = array<i64: 2, 6, 12>}, {pipeline_mode = #tpu.pipeline_mode<synchronous>, transform_indices = @transform_12, window_bounds = array<i64: 2, 156, 78>}, {pipeline_mode = #tpu.pipeline_mode<synchronous>, transform_indices = @transform_13, window_bounds = array<i64: 6, 1, 6>}, {pipeline_mode = #tpu.pipeline_mode<synchronous>, transform_indices = @transform_14, window_bounds = array<i64: 6, 78, 256>}, {pipeline_mode = #tpu.pipeline_mode<synchronous>, transform_indices = @transform_15, window_bounds = array<i64: 1, 256>}, {pipeline_mode = #tpu.pipeline_mode<synchronous>, transform_indices = @transform_16, window_bounds = array<i64: 256, 256>}, {pipeline_mode = #tpu.pipeline_mode<synchronous>, transform_indices = @transform_17, window_bounds = array<i64: 1, 256>}, {pipeline_mode = #tpu.pipeline_mode<synchronous>, transform_indices = @transform_18, window_bounds = array<i64: 256, 3>}, {pipeline_mode = #tpu.pipeline_mode<synchronous>, transform_indices = @transform_19, window_bounds = array<i64: 1, 3>}, {transform_indices = @transform_20, window_bounds = array<i64: 1, 1, 3>}]} {
    %c0 = arith.constant 0 : index
    %c0_0 = arith.constant 0 : index
    %c0_1 = arith.constant 0 : index
    %c0_2 = arith.constant 0 : index
    %0 = vector.load %arg1[%c0, %c0_0, %c0_1, %c0_2] : memref<1x1x50x50xf32, #tpu.memory_space<vmem>>, vector<1x1x50x50xf32>
    %1 = vector.shape_cast %0 : vector<1x1x50x50xf32> to vector<50x50xf32>
    %2 = arith.truncf %1 : vector<50x50xf32> to vector<50x50xbf16>
    %cst = arith.constant 0.000000e+00 : f32
    %3 = vector.broadcast %cst : f32 to vector<24x192xf32>
    %c0_3 = arith.constant 0 : index
    %c0_4 = arith.constant 0 : index
    %c0_5 = arith.constant 0 : index
    %4 = vector.load %arg2[%c0_3, %c0_4, %c0_5] : memref<11x24x50xbf16, #tpu.memory_space<vmem>>, vector<1x24x50xbf16>
    %5 = vector.shape_cast %4 : vector<1x24x50xbf16> to vector<24x50xbf16>
    %cst_6 = arith.constant dense<0.000000e+00> : vector<24x50xf32>
    %6 = tpu.matmul %5, %2, %cst_6 {dimension_numbers = #tpu.dot_dimension_numbers<[1], [0], [0], [1], [0, 0, 1, 1], [], []>} : vector<24x50xbf16>, vector<50x50xbf16>, vector<24x50xf32> -> vector<24x50xf32>
    %c0_7 = arith.constant 0 : index
    %c0_8 = arith.constant 0 : index
    %c0_9 = arith.constant 0 : index
    %7 = vector.load %arg3[%c0_7, %c0_8, %c0_9] : memref<11x50x192xbf16, #tpu.memory_space<vmem>>, vector<1x50x192xbf16>
    %8 = vector.shape_cast %7 : vector<1x50x192xbf16> to vector<50x192xbf16>
    %9 = arith.truncf %6 : vector<24x50xf32> to vector<24x50xbf16>
    %cst_10 = arith.constant dense<0.000000e+00> : vector<24x192xf32>
    %10 = tpu.matmul %9, %8, %cst_10 {dimension_numbers = #tpu.dot_dimension_numbers<[1], [0], [0], [1], [0, 0, 1, 1], [], []>} : vector<24x50xbf16>, vector<50x192xbf16>, vector<24x192xf32> -> vector<24x192xf32>
    %11 = arith.addf %3, %10 : vector<24x192xf32>
    %c1 = arith.constant 1 : index
    %c0_11 = arith.constant 0 : index
    %c0_12 = arith.constant 0 : index
    %12 = vector.load %arg2[%c1, %c0_11, %c0_12] : memref<11x24x50xbf16, #tpu.memory_space<vmem>>, vector<1x24x50xbf16>
    %13 = vector.shape_cast %12 : vector<1x24x50xbf16> to vector<24x50xbf16>
    %cst_13 = arith.constant dense<0.000000e+00> : vector<24x50xf32>
    %14 = tpu.matmul %13, %2, %cst_13 {dimension_numbers = #tpu.dot_dimension_numbers<[1], [0], [0], [1], [0, 0, 1, 1], [], []>} : vector<24x50xbf16>, vector<50x50xbf16>, vector<24x50xf32> -> vector<24x50xf32>
    %c1_14 = arith.constant 1 : index
    %c0_15 = arith.constant 0 : index
    %c0_16 = arith.constant 0 : index
    %15 = vector.load %arg3[%c1_14, %c0_15, %c0_16] : memref<11x50x192xbf16, #tpu.memory_space<vmem>>, vector<1x50x192xbf16>
    %16 = vector.shape_cast %15 : vector<1x50x192xbf16> to vector<50x192xbf16>
    %17 = arith.truncf %14 : vector<24x50xf32> to vector<24x50xbf16>
    %cst_17 = arith.constant dense<0.000000e+00> : vector<24x192xf32>
    %18 = tpu.matmul %17, %16, %cst_17 {dimension_numbers = #tpu.dot_dimension_numbers<[1], [0], [0], [1], [0, 0, 1, 1], [], []>} : vector<24x50xbf16>, vector<50x192xbf16>, vector<24x192xf32> -> vector<24x192xf32>
    %19 = arith.addf %11, %18 : vector<24x192xf32>
    %c2 = arith.constant 2 : index
    %c0_18 = arith.constant 0 : index
    %c0_19 = arith.constant 0 : index
    %20 = vector.load %arg2[%c2, %c0_18, %c0_19] : memref<11x24x50xbf16, #tpu.memory_space<vmem>>, vector<1x24x50xbf16>
    %21 = vector.shape_cast %20 : vector<1x24x50xbf16> to vector<24x50xbf16>
    %cst_20 = arith.constant dense<0.000000e+00> : vector<24x50xf32>
    %22 = tpu.matmul %21, %2, %cst_20 {dimension_numbers = #tpu.dot_dimension_numbers<[1], [0], [0], [1], [0, 0, 1, 1], [], []>} : vector<24x50xbf16>, vector<50x50xbf16>, vector<24x50xf32> -> vector<24x50xf32>
    %c2_21 = arith.constant 2 : index
    %c0_22 = arith.constant 0 : index
    %c0_23 = arith.constant 0 : index
    %23 = vector.load %arg3[%c2_21, %c0_22, %c0_23] : memref<11x50x192xbf16, #tpu.memory_space<vmem>>, vector<1x50x192xbf16>
    %24 = vector.shape_cast %23 : vector<1x50x192xbf16> to vector<50x192xbf16>
    %25 = arith.truncf %22 : vector<24x50xf32> to vector<24x50xbf16>
    %cst_24 = arith.constant dense<0.000000e+00> : vector<24x192xf32>
    %26 = tpu.matmul %25, %24, %cst_24 {dimension_numbers = #tpu.dot_dimension_numbers<[1], [0], [0], [1], [0, 0, 1, 1], [], []>} : vector<24x50xbf16>, vector<50x192xbf16>, vector<24x192xf32> -> vector<24x192xf32>
    %27 = arith.addf %19, %26 : vector<24x192xf32>
    %c3 = arith.constant 3 : index
    %c0_25 = arith.constant 0 : index
    %c0_26 = arith.constant 0 : index
    %28 = vector.load %arg2[%c3, %c0_25, %c0_26] : memref<11x24x50xbf16, #tpu.memory_space<vmem>>, vector<1x24x50xbf16>
    %29 = vector.shape_cast %28 : vector<1x24x50xbf16> to vector<24x50xbf16>
    %cst_27 = arith.constant dense<0.000000e+00> : vector<24x50xf32>
    %30 = tpu.matmul %29, %2, %cst_27 {dimension_numbers = #tpu.dot_dimension_numbers<[1], [0], [0], [1], [0, 0, 1, 1], [], []>} : vector<24x50xbf16>, vector<50x50xbf16>, vector<24x50xf32> -> vector<24x50xf32>
    %c3_28 = arith.constant 3 : index
    %c0_29 = arith.constant 0 : index
    %c0_30 = arith.constant 0 : index
    %31 = vector.load %arg3[%c3_28, %c0_29, %c0_30] : memref<11x50x192xbf16, #tpu.memory_space<vmem>>, vector<1x50x192xbf16>
    %32 = vector.shape_cast %31 : vector<1x50x192xbf16> to vector<50x192xbf16>
    %33 = arith.truncf %30 : vector<24x50xf32> to vector<24x50xbf16>
    %cst_31 = arith.constant dense<0.000000e+00> : vector<24x192xf32>
    %34 = tpu.matmul %33, %32, %cst_31 {dimension_numbers = #tpu.dot_dimension_numbers<[1], [0], [0], [1], [0, 0, 1, 1], [], []>} : vector<24x50xbf16>, vector<50x192xbf16>, vector<24x192xf32> -> vector<24x192xf32>
    %35 = arith.addf %27, %34 : vector<24x192xf32>
    %c4 = arith.constant 4 : index
    %c0_32 = arith.constant 0 : index
    %c0_33 = arith.constant 0 : index
    %36 = vector.load %arg2[%c4, %c0_32, %c0_33] : memref<11x24x50xbf16, #tpu.memory_space<vmem>>, vector<1x24x50xbf16>
    %37 = vector.shape_cast %36 : vector<1x24x50xbf16> to vector<24x50xbf16>
    %cst_34 = arith.constant dense<0.000000e+00> : vector<24x50xf32>
    %38 = tpu.matmul %37, %2, %cst_34 {dimension_numbers = #tpu.dot_dimension_numbers<[1], [0], [0], [1], [0, 0, 1, 1], [], []>} : vector<24x50xbf16>, vector<50x50xbf16>, vector<24x50xf32> -> vector<24x50xf32>
    %c4_35 = arith.constant 4 : index
    %c0_36 = arith.constant 0 : index
    %c0_37 = arith.constant 0 : index
    %39 = vector.load %arg3[%c4_35, %c0_36, %c0_37] : memref<11x50x192xbf16, #tpu.memory_space<vmem>>, vector<1x50x192xbf16>
    %40 = vector.shape_cast %39 : vector<1x50x192xbf16> to vector<50x192xbf16>
    %41 = arith.truncf %38 : vector<24x50xf32> to vector<24x50xbf16>
    %cst_38 = arith.constant dense<0.000000e+00> : vector<24x192xf32>
    %42 = tpu.matmul %41, %40, %cst_38 {dimension_numbers = #tpu.dot_dimension_numbers<[1], [0], [0], [1], [0, 0, 1, 1], [], []>} : vector<24x50xbf16>, vector<50x192xbf16>, vector<24x192xf32> -> vector<24x192xf32>
    %43 = arith.addf %35, %42 : vector<24x192xf32>
    %c5 = arith.constant 5 : index
    %c0_39 = arith.constant 0 : index
    %c0_40 = arith.constant 0 : index
    %44 = vector.load %arg2[%c5, %c0_39, %c0_40] : memref<11x24x50xbf16, #tpu.memory_space<vmem>>, vector<1x24x50xbf16>
    %45 = vector.shape_cast %44 : vector<1x24x50xbf16> to vector<24x50xbf16>
    %cst_41 = arith.constant dense<0.000000e+00> : vector<24x50xf32>
    %46 = tpu.matmul %45, %2, %cst_41 {dimension_numbers = #tpu.dot_dimension_numbers<[1], [0], [0], [1], [0, 0, 1, 1], [], []>} : vector<24x50xbf16>, vector<50x50xbf16>, vector<24x50xf32> -> vector<24x50xf32>
    %c5_42 = arith.constant 5 : index
    %c0_43 = arith.constant 0 : index
    %c0_44 = arith.constant 0 : index
    %47 = vector.load %arg3[%c5_42, %c0_43, %c0_44] : memref<11x50x192xbf16, #tpu.memory_space<vmem>>, vector<1x50x192xbf16>
    %48 = vector.shape_cast %47 : vector<1x50x192xbf16> to vector<50x192xbf16>
    %49 = arith.truncf %46 : vector<24x50xf32> to vector<24x50xbf16>
    %cst_45 = arith.constant dense<0.000000e+00> : vector<24x192xf32>
    %50 = tpu.matmul %49, %48, %cst_45 {dimension_numbers = #tpu.dot_dimension_numbers<[1], [0], [0], [1], [0, 0, 1, 1], [], []>} : vector<24x50xbf16>, vector<50x192xbf16>, vector<24x192xf32> -> vector<24x192xf32>
    %51 = arith.addf %43, %50 : vector<24x192xf32>
    %c6 = arith.constant 6 : index
    %c0_46 = arith.constant 0 : index
    %c0_47 = arith.constant 0 : index
    %52 = vector.load %arg2[%c6, %c0_46, %c0_47] : memref<11x24x50xbf16, #tpu.memory_space<vmem>>, vector<1x24x50xbf16>
    %53 = vector.shape_cast %52 : vector<1x24x50xbf16> to vector<24x50xbf16>
    %cst_48 = arith.constant dense<0.000000e+00> : vector<24x50xf32>
    %54 = tpu.matmul %53, %2, %cst_48 {dimension_numbers = #tpu.dot_dimension_numbers<[1], [0], [0], [1], [0, 0, 1, 1], [], []>} : vector<24x50xbf16>, vector<50x50xbf16>, vector<24x50xf32> -> vector<24x50xf32>
    %c6_49 = arith.constant 6 : index
    %c0_50 = arith.constant 0 : index
    %c0_51 = arith.constant 0 : index
    %55 = vector.load %arg3[%c6_49, %c0_50, %c0_51] : memref<11x50x192xbf16, #tpu.memory_space<vmem>>, vector<1x50x192xbf16>
    %56 = vector.shape_cast %55 : vector<1x50x192xbf16> to vector<50x192xbf16>
    %57 = arith.truncf %54 : vector<24x50xf32> to vector<24x50xbf16>
    %cst_52 = arith.constant dense<0.000000e+00> : vector<24x192xf32>
    %58 = tpu.matmul %57, %56, %cst_52 {dimension_numbers = #tpu.dot_dimension_numbers<[1], [0], [0], [1], [0, 0, 1, 1], [], []>} : vector<24x50xbf16>, vector<50x192xbf16>, vector<24x192xf32> -> vector<24x192xf32>
    %59 = arith.addf %51, %58 : vector<24x192xf32>
    %c7 = arith.constant 7 : index
    %c0_53 = arith.constant 0 : index
    %c0_54 = arith.constant 0 : index
    %60 = vector.load %arg2[%c7, %c0_53, %c0_54] : memref<11x24x50xbf16, #tpu.memory_space<vmem>>, vector<1x24x50xbf16>
    %61 = vector.shape_cast %60 : vector<1x24x50xbf16> to vector<24x50xbf16>
    %cst_55 = arith.constant dense<0.000000e+00> : vector<24x50xf32>
    %62 = tpu.matmul %61, %2, %cst_55 {dimension_numbers = #tpu.dot_dimension_numbers<[1], [0], [0], [1], [0, 0, 1, 1], [], []>} : vector<24x50xbf16>, vector<50x50xbf16>, vector<24x50xf32> -> vector<24x50xf32>
    %c7_56 = arith.constant 7 : index
    %c0_57 = arith.constant 0 : index
    %c0_58 = arith.constant 0 : index
    %63 = vector.load %arg3[%c7_56, %c0_57, %c0_58] : memref<11x50x192xbf16, #tpu.memory_space<vmem>>, vector<1x50x192xbf16>
    %64 = vector.shape_cast %63 : vector<1x50x192xbf16> to vector<50x192xbf16>
    %65 = arith.truncf %62 : vector<24x50xf32> to vector<24x50xbf16>
    %cst_59 = arith.constant dense<0.000000e+00> : vector<24x192xf32>
    %66 = tpu.matmul %65, %64, %cst_59 {dimension_numbers = #tpu.dot_dimension_numbers<[1], [0], [0], [1], [0, 0, 1, 1], [], []>} : vector<24x50xbf16>, vector<50x192xbf16>, vector<24x192xf32> -> vector<24x192xf32>
    %67 = arith.addf %59, %66 : vector<24x192xf32>
    %c8 = arith.constant 8 : index
    %c0_60 = arith.constant 0 : index
    %c0_61 = arith.constant 0 : index
    %68 = vector.load %arg2[%c8, %c0_60, %c0_61] : memref<11x24x50xbf16, #tpu.memory_space<vmem>>, vector<1x24x50xbf16>
    %69 = vector.shape_cast %68 : vector<1x24x50xbf16> to vector<24x50xbf16>
    %cst_62 = arith.constant dense<0.000000e+00> : vector<24x50xf32>
    %70 = tpu.matmul %69, %2, %cst_62 {dimension_numbers = #tpu.dot_dimension_numbers<[1], [0], [0], [1], [0, 0, 1, 1], [], []>} : vector<24x50xbf16>, vector<50x50xbf16>, vector<24x50xf32> -> vector<24x50xf32>
    %c8_63 = arith.constant 8 : index
    %c0_64 = arith.constant 0 : index
    %c0_65 = arith.constant 0 : index
    %71 = vector.load %arg3[%c8_63, %c0_64, %c0_65] : memref<11x50x192xbf16, #tpu.memory_space<vmem>>, vector<1x50x192xbf16>
    %72 = vector.shape_cast %71 : vector<1x50x192xbf16> to vector<50x192xbf16>
    %73 = arith.truncf %70 : vector<24x50xf32> to vector<24x50xbf16>
    %cst_66 = arith.constant dense<0.000000e+00> : vector<24x192xf32>
    %74 = tpu.matmul %73, %72, %cst_66 {dimension_numbers = #tpu.dot_dimension_numbers<[1], [0], [0], [1], [0, 0, 1, 1], [], []>} : vector<24x50xbf16>, vector<50x192xbf16>, vector<24x192xf32> -> vector<24x192xf32>
    %75 = arith.addf %67, %74 : vector<24x192xf32>
    %c9 = arith.constant 9 : index
    %c0_67 = arith.constant 0 : index
    %c0_68 = arith.constant 0 : index
    %76 = vector.load %arg2[%c9, %c0_67, %c0_68] : memref<11x24x50xbf16, #tpu.memory_space<vmem>>, vector<1x24x50xbf16>
    %77 = vector.shape_cast %76 : vector<1x24x50xbf16> to vector<24x50xbf16>
    %cst_69 = arith.constant dense<0.000000e+00> : vector<24x50xf32>
    %78 = tpu.matmul %77, %2, %cst_69 {dimension_numbers = #tpu.dot_dimension_numbers<[1], [0], [0], [1], [0, 0, 1, 1], [], []>} : vector<24x50xbf16>, vector<50x50xbf16>, vector<24x50xf32> -> vector<24x50xf32>
    %c9_70 = arith.constant 9 : index
    %c0_71 = arith.constant 0 : index
    %c0_72 = arith.constant 0 : index
    %79 = vector.load %arg3[%c9_70, %c0_71, %c0_72] : memref<11x50x192xbf16, #tpu.memory_space<vmem>>, vector<1x50x192xbf16>
    %80 = vector.shape_cast %79 : vector<1x50x192xbf16> to vector<50x192xbf16>
    %81 = arith.truncf %78 : vector<24x50xf32> to vector<24x50xbf16>
    %cst_73 = arith.constant dense<0.000000e+00> : vector<24x192xf32>
    %82 = tpu.matmul %81, %80, %cst_73 {dimension_numbers = #tpu.dot_dimension_numbers<[1], [0], [0], [1], [0, 0, 1, 1], [], []>} : vector<24x50xbf16>, vector<50x192xbf16>, vector<24x192xf32> -> vector<24x192xf32>
    %83 = arith.addf %75, %82 : vector<24x192xf32>
    %c10 = arith.constant 10 : index
    %c0_74 = arith.constant 0 : index
    %c0_75 = arith.constant 0 : index
    %84 = vector.load %arg2[%c10, %c0_74, %c0_75] : memref<11x24x50xbf16, #tpu.memory_space<vmem>>, vector<1x24x50xbf16>
    %85 = vector.shape_cast %84 : vector<1x24x50xbf16> to vector<24x50xbf16>
    %cst_76 = arith.constant dense<0.000000e+00> : vector<24x50xf32>
    %86 = tpu.matmul %85, %2, %cst_76 {dimension_numbers = #tpu.dot_dimension_numbers<[1], [0], [0], [1], [0, 0, 1, 1], [], []>} : vector<24x50xbf16>, vector<50x50xbf16>, vector<24x50xf32> -> vector<24x50xf32>
    %c10_77 = arith.constant 10 : index
    %c0_78 = arith.constant 0 : index
    %c0_79 = arith.constant 0 : index
    %87 = vector.load %arg3[%c10_77, %c0_78, %c0_79] : memref<11x50x192xbf16, #tpu.memory_space<vmem>>, vector<1x50x192xbf16>
    %88 = vector.shape_cast %87 : vector<1x50x192xbf16> to vector<50x192xbf16>
    %89 = arith.truncf %86 : vector<24x50xf32> to vector<24x50xbf16>
    %cst_80 = arith.constant dense<0.000000e+00> : vector<24x192xf32>
    %90 = tpu.matmul %89, %88, %cst_80 {dimension_numbers = #tpu.dot_dimension_numbers<[1], [0], [0], [1], [0, 0, 1, 1], [], []>} : vector<24x50xbf16>, vector<50x192xbf16>, vector<24x192xf32> -> vector<24x192xf32>
    %91 = arith.addf %83, %90 : vector<24x192xf32>
    %c0_81 = arith.constant 0 : index
    %c0_82 = arith.constant 0 : index
    %92 = vector.load %arg4[%c0_81, %c0_82] : memref<1x192xf32, #tpu.memory_space<vmem>>, vector<1x192xf32>
    %93 = vector.broadcast %92 : vector<1x192xf32> to vector<24x192xf32>
    %94 = arith.addf %91, %93 : vector<24x192xf32>
    %cst_83 = arith.constant 0.000000e+00 : f32
    %95 = vector.broadcast %cst_83 : f32 to vector<24x192xf32>
    %96 = arith.maximumf %94, %95 : vector<24x192xf32>
    %c0_84 = arith.constant 0 : index
    %c0_85 = arith.constant 0 : index
    %c0_86 = arith.constant 0 : index
    %97 = vector.load %arg5[%c0_84, %c0_85, %c0_86] : memref<2x12x24xbf16, #tpu.memory_space<vmem>>, vector<1x12x24xbf16>
    %98 = vector.shape_cast %97 : vector<1x12x24xbf16> to vector<12x24xbf16>
    %99 = arith.truncf %96 : vector<24x192xf32> to vector<24x192xbf16>
    %cst_87 = arith.constant dense<0.000000e+00> : vector<12x192xf32>
    %100 = tpu.matmul %98, %99, %cst_87 {dimension_numbers = #tpu.dot_dimension_numbers<[1], [0], [0], [1], [0, 0, 1, 1], [], []>} : vector<12x24xbf16>, vector<24x192xbf16>, vector<12x192xf32> -> vector<12x192xf32>
    %c1_88 = arith.constant 1 : index
    %c0_89 = arith.constant 0 : index
    %c0_90 = arith.constant 0 : index
    %101 = vector.load %arg5[%c1_88, %c0_89, %c0_90] : memref<2x12x24xbf16, #tpu.memory_space<vmem>>, vector<1x12x24xbf16>
    %102 = vector.shape_cast %101 : vector<1x12x24xbf16> to vector<12x24xbf16>
    %103 = arith.truncf %96 : vector<24x192xf32> to vector<24x192xbf16>
    %cst_91 = arith.constant dense<0.000000e+00> : vector<12x192xf32>
    %104 = tpu.matmul %102, %103, %cst_91 {dimension_numbers = #tpu.dot_dimension_numbers<[1], [0], [0], [1], [0, 0, 1, 1], [], []>} : vector<12x24xbf16>, vector<24x192xbf16>, vector<12x192xf32> -> vector<12x192xf32>
    %105 = arith.maximumf %100, %104 : vector<12x192xf32>
    %c0_92 = arith.constant 0 : index
    %c0_93 = arith.constant 0 : index
    %c0_94 = arith.constant 0 : index
    %106 = vector.load %arg6[%c0_92, %c0_93, %c0_94] : memref<2x192x96xbf16, #tpu.memory_space<vmem>>, vector<1x192x96xbf16>
    %107 = vector.shape_cast %106 : vector<1x192x96xbf16> to vector<192x96xbf16>
    %108 = arith.truncf %105 : vector<12x192xf32> to vector<12x192xbf16>
    %cst_95 = arith.constant dense<0.000000e+00> : vector<12x96xf32>
    %109 = tpu.matmul %108, %107, %cst_95 {dimension_numbers = #tpu.dot_dimension_numbers<[1], [0], [0], [1], [0, 0, 1, 1], [], []>} : vector<12x192xbf16>, vector<192x96xbf16>, vector<12x96xf32> -> vector<12x96xf32>
    %c1_96 = arith.constant 1 : index
    %c0_97 = arith.constant 0 : index
    %c0_98 = arith.constant 0 : index
    %110 = vector.load %arg6[%c1_96, %c0_97, %c0_98] : memref<2x192x96xbf16, #tpu.memory_space<vmem>>, vector<1x192x96xbf16>
    %111 = vector.shape_cast %110 : vector<1x192x96xbf16> to vector<192x96xbf16>
    %112 = arith.truncf %105 : vector<12x192xf32> to vector<12x192xbf16>
    %cst_99 = arith.constant dense<0.000000e+00> : vector<12x96xf32>
    %113 = tpu.matmul %112, %111, %cst_99 {dimension_numbers = #tpu.dot_dimension_numbers<[1], [0], [0], [1], [0, 0, 1, 1], [], []>} : vector<12x192xbf16>, vector<192x96xbf16>, vector<12x96xf32> -> vector<12x96xf32>
    %114 = arith.maximumf %109, %113 : vector<12x96xf32>
    %cst_100 = arith.constant 0.000000e+00 : f32
    %115 = vector.broadcast %cst_100 : f32 to vector<12x192xf32>
    %c0_101 = arith.constant 0 : index
    %c0_102 = arith.constant 0 : index
    %c0_103 = arith.constant 0 : index
    %116 = vector.load %arg7[%c0_101, %c0_102, %c0_103] : memref<3x12x12xbf16, #tpu.memory_space<vmem>>, vector<1x12x12xbf16>
    %117 = vector.shape_cast %116 : vector<1x12x12xbf16> to vector<12x12xbf16>
    %118 = arith.truncf %114 : vector<12x96xf32> to vector<12x96xbf16>
    %cst_104 = arith.constant dense<0.000000e+00> : vector<12x96xf32>
    %119 = tpu.matmul %117, %118, %cst_104 {dimension_numbers = #tpu.dot_dimension_numbers<[1], [0], [0], [1], [0, 0, 1, 1], [], []>} : vector<12x12xbf16>, vector<12x96xbf16>, vector<12x96xf32> -> vector<12x96xf32>
    %c0_105 = arith.constant 0 : index
    %c0_106 = arith.constant 0 : index
    %c0_107 = arith.constant 0 : index
    %120 = vector.load %arg8[%c0_105, %c0_106, %c0_107] : memref<3x96x192xbf16, #tpu.memory_space<vmem>>, vector<1x96x192xbf16>
    %121 = vector.shape_cast %120 : vector<1x96x192xbf16> to vector<96x192xbf16>
    %122 = arith.truncf %119 : vector<12x96xf32> to vector<12x96xbf16>
    %cst_108 = arith.constant dense<0.000000e+00> : vector<12x192xf32>
    %123 = tpu.matmul %122, %121, %cst_108 {dimension_numbers = #tpu.dot_dimension_numbers<[1], [0], [0], [1], [0, 0, 1, 1], [], []>} : vector<12x96xbf16>, vector<96x192xbf16>, vector<12x192xf32> -> vector<12x192xf32>
    %124 = arith.addf %115, %123 : vector<12x192xf32>
    %c1_109 = arith.constant 1 : index
    %c0_110 = arith.constant 0 : index
    %c0_111 = arith.constant 0 : index
    %125 = vector.load %arg7[%c1_109, %c0_110, %c0_111] : memref<3x12x12xbf16, #tpu.memory_space<vmem>>, vector<1x12x12xbf16>
    %126 = vector.shape_cast %125 : vector<1x12x12xbf16> to vector<12x12xbf16>
    %127 = arith.truncf %114 : vector<12x96xf32> to vector<12x96xbf16>
    %cst_112 = arith.constant dense<0.000000e+00> : vector<12x96xf32>
    %128 = tpu.matmul %126, %127, %cst_112 {dimension_numbers = #tpu.dot_dimension_numbers<[1], [0], [0], [1], [0, 0, 1, 1], [], []>} : vector<12x12xbf16>, vector<12x96xbf16>, vector<12x96xf32> -> vector<12x96xf32>
    %c1_113 = arith.constant 1 : index
    %c0_114 = arith.constant 0 : index
    %c0_115 = arith.constant 0 : index
    %129 = vector.load %arg8[%c1_113, %c0_114, %c0_115] : memref<3x96x192xbf16, #tpu.memory_space<vmem>>, vector<1x96x192xbf16>
    %130 = vector.shape_cast %129 : vector<1x96x192xbf16> to vector<96x192xbf16>
    %131 = arith.truncf %128 : vector<12x96xf32> to vector<12x96xbf16>
    %cst_116 = arith.constant dense<0.000000e+00> : vector<12x192xf32>
    %132 = tpu.matmul %131, %130, %cst_116 {dimension_numbers = #tpu.dot_dimension_numbers<[1], [0], [0], [1], [0, 0, 1, 1], [], []>} : vector<12x96xbf16>, vector<96x192xbf16>, vector<12x192xf32> -> vector<12x192xf32>
    %133 = arith.addf %124, %132 : vector<12x192xf32>
    %c2_117 = arith.constant 2 : index
    %c0_118 = arith.constant 0 : index
    %c0_119 = arith.constant 0 : index
    %134 = vector.load %arg7[%c2_117, %c0_118, %c0_119] : memref<3x12x12xbf16, #tpu.memory_space<vmem>>, vector<1x12x12xbf16>
    %135 = vector.shape_cast %134 : vector<1x12x12xbf16> to vector<12x12xbf16>
    %136 = arith.truncf %114 : vector<12x96xf32> to vector<12x96xbf16>
    %cst_120 = arith.constant dense<0.000000e+00> : vector<12x96xf32>
    %137 = tpu.matmul %135, %136, %cst_120 {dimension_numbers = #tpu.dot_dimension_numbers<[1], [0], [0], [1], [0, 0, 1, 1], [], []>} : vector<12x12xbf16>, vector<12x96xbf16>, vector<12x96xf32> -> vector<12x96xf32>
    %c2_121 = arith.constant 2 : index
    %c0_122 = arith.constant 0 : index
    %c0_123 = arith.constant 0 : index
    %138 = vector.load %arg8[%c2_121, %c0_122, %c0_123] : memref<3x96x192xbf16, #tpu.memory_space<vmem>>, vector<1x96x192xbf16>
    %139 = vector.shape_cast %138 : vector<1x96x192xbf16> to vector<96x192xbf16>
    %140 = arith.truncf %137 : vector<12x96xf32> to vector<12x96xbf16>
    %cst_124 = arith.constant dense<0.000000e+00> : vector<12x192xf32>
    %141 = tpu.matmul %140, %139, %cst_124 {dimension_numbers = #tpu.dot_dimension_numbers<[1], [0], [0], [1], [0, 0, 1, 1], [], []>} : vector<12x96xbf16>, vector<96x192xbf16>, vector<12x192xf32> -> vector<12x192xf32>
    %142 = arith.addf %133, %141 : vector<12x192xf32>
    %c0_125 = arith.constant 0 : index
    %c0_126 = arith.constant 0 : index
    %143 = vector.load %arg9[%c0_125, %c0_126] : memref<1x192xf32, #tpu.memory_space<vmem>>, vector<1x192xf32>
    %144 = vector.broadcast %143 : vector<1x192xf32> to vector<12x192xf32>
    %145 = arith.addf %142, %144 : vector<12x192xf32>
    %cst_127 = arith.constant 0.000000e+00 : f32
    %146 = vector.broadcast %cst_127 : f32 to vector<12x192xf32>
    %147 = arith.maximumf %145, %146 : vector<12x192xf32>
    %cst_128 = arith.constant 0.000000e+00 : f32
    %148 = vector.broadcast %cst_128 : f32 to vector<12x156xf32>
    %c0_129 = arith.constant 0 : index
    %c0_130 = arith.constant 0 : index
    %c0_131 = arith.constant 0 : index
    %149 = vector.load %arg7[%c0_129, %c0_130, %c0_131] : memref<3x12x12xbf16, #tpu.memory_space<vmem>>, vector<1x12x12xbf16>
    %150 = vector.shape_cast %149 : vector<1x12x12xbf16> to vector<12x12xbf16>
    %151 = arith.truncf %147 : vector<12x192xf32> to vector<12x192xbf16>
    %cst_132 = arith.constant dense<0.000000e+00> : vector<12x192xf32>
    %152 = tpu.matmul %150, %151, %cst_132 {dimension_numbers = #tpu.dot_dimension_numbers<[1], [0], [0], [1], [0, 0, 1, 1], [], []>} : vector<12x12xbf16>, vector<12x192xbf16>, vector<12x192xf32> -> vector<12x192xf32>
    %c0_133 = arith.constant 0 : index
    %c0_134 = arith.constant 0 : index
    %c0_135 = arith.constant 0 : index
    %153 = vector.load %arg10[%c0_133, %c0_134, %c0_135] : memref<3x192x156xbf16, #tpu.memory_space<vmem>>, vector<1x192x156xbf16>
    %154 = vector.shape_cast %153 : vector<1x192x156xbf16> to vector<192x156xbf16>
    %155 = arith.truncf %152 : vector<12x192xf32> to vector<12x192xbf16>
    %cst_136 = arith.constant dense<0.000000e+00> : vector<12x156xf32>
    %156 = tpu.matmul %155, %154, %cst_136 {dimension_numbers = #tpu.dot_dimension_numbers<[1], [0], [0], [1], [0, 0, 1, 1], [], []>} : vector<12x192xbf16>, vector<192x156xbf16>, vector<12x156xf32> -> vector<12x156xf32>
    %157 = arith.addf %148, %156 : vector<12x156xf32>
    %c1_137 = arith.constant 1 : index
    %c0_138 = arith.constant 0 : index
    %c0_139 = arith.constant 0 : index
    %158 = vector.load %arg7[%c1_137, %c0_138, %c0_139] : memref<3x12x12xbf16, #tpu.memory_space<vmem>>, vector<1x12x12xbf16>
    %159 = vector.shape_cast %158 : vector<1x12x12xbf16> to vector<12x12xbf16>
    %160 = arith.truncf %147 : vector<12x192xf32> to vector<12x192xbf16>
    %cst_140 = arith.constant dense<0.000000e+00> : vector<12x192xf32>
    %161 = tpu.matmul %159, %160, %cst_140 {dimension_numbers = #tpu.dot_dimension_numbers<[1], [0], [0], [1], [0, 0, 1, 1], [], []>} : vector<12x12xbf16>, vector<12x192xbf16>, vector<12x192xf32> -> vector<12x192xf32>
    %c1_141 = arith.constant 1 : index
    %c0_142 = arith.constant 0 : index
    %c0_143 = arith.constant 0 : index
    %162 = vector.load %arg10[%c1_141, %c0_142, %c0_143] : memref<3x192x156xbf16, #tpu.memory_space<vmem>>, vector<1x192x156xbf16>
    %163 = vector.shape_cast %162 : vector<1x192x156xbf16> to vector<192x156xbf16>
    %164 = arith.truncf %161 : vector<12x192xf32> to vector<12x192xbf16>
    %cst_144 = arith.constant dense<0.000000e+00> : vector<12x156xf32>
    %165 = tpu.matmul %164, %163, %cst_144 {dimension_numbers = #tpu.dot_dimension_numbers<[1], [0], [0], [1], [0, 0, 1, 1], [], []>} : vector<12x192xbf16>, vector<192x156xbf16>, vector<12x156xf32> -> vector<12x156xf32>
    %166 = arith.addf %157, %165 : vector<12x156xf32>
    %c2_145 = arith.constant 2 : index
    %c0_146 = arith.constant 0 : index
    %c0_147 = arith.constant 0 : index
    %167 = vector.load %arg7[%c2_145, %c0_146, %c0_147] : memref<3x12x12xbf16, #tpu.memory_space<vmem>>, vector<1x12x12xbf16>
    %168 = vector.shape_cast %167 : vector<1x12x12xbf16> to vector<12x12xbf16>
    %169 = arith.truncf %147 : vector<12x192xf32> to vector<12x192xbf16>
    %cst_148 = arith.constant dense<0.000000e+00> : vector<12x192xf32>
    %170 = tpu.matmul %168, %169, %cst_148 {dimension_numbers = #tpu.dot_dimension_numbers<[1], [0], [0], [1], [0, 0, 1, 1], [], []>} : vector<12x12xbf16>, vector<12x192xbf16>, vector<12x192xf32> -> vector<12x192xf32>
    %c2_149 = arith.constant 2 : index
    %c0_150 = arith.constant 0 : index
    %c0_151 = arith.constant 0 : index
    %171 = vector.load %arg10[%c2_149, %c0_150, %c0_151] : memref<3x192x156xbf16, #tpu.memory_space<vmem>>, vector<1x192x156xbf16>
    %172 = vector.shape_cast %171 : vector<1x192x156xbf16> to vector<192x156xbf16>
    %173 = arith.truncf %170 : vector<12x192xf32> to vector<12x192xbf16>
    %cst_152 = arith.constant dense<0.000000e+00> : vector<12x156xf32>
    %174 = tpu.matmul %173, %172, %cst_152 {dimension_numbers = #tpu.dot_dimension_numbers<[1], [0], [0], [1], [0, 0, 1, 1], [], []>} : vector<12x192xbf16>, vector<192x156xbf16>, vector<12x156xf32> -> vector<12x156xf32>
    %175 = arith.addf %166, %174 : vector<12x156xf32>
    %c0_153 = arith.constant 0 : index
    %c0_154 = arith.constant 0 : index
    %176 = vector.load %arg11[%c0_153, %c0_154] : memref<1x156xf32, #tpu.memory_space<vmem>>, vector<1x156xf32>
    %177 = vector.broadcast %176 : vector<1x156xf32> to vector<12x156xf32>
    %178 = arith.addf %175, %177 : vector<12x156xf32>
    %cst_155 = arith.constant 0.000000e+00 : f32
    %179 = vector.broadcast %cst_155 : f32 to vector<12x156xf32>
    %180 = arith.maximumf %178, %179 : vector<12x156xf32>
    %c0_156 = arith.constant 0 : index
    %c0_157 = arith.constant 0 : index
    %c0_158 = arith.constant 0 : index
    %181 = vector.load %arg12[%c0_156, %c0_157, %c0_158] : memref<2x6x12xbf16, #tpu.memory_space<vmem>>, vector<1x6x12xbf16>
    %182 = vector.shape_cast %181 : vector<1x6x12xbf16> to vector<6x12xbf16>
    %183 = arith.truncf %180 : vector<12x156xf32> to vector<12x156xbf16>
    %cst_159 = arith.constant dense<0.000000e+00> : vector<6x156xf32>
    %184 = tpu.matmul %182, %183, %cst_159 {dimension_numbers = #tpu.dot_dimension_numbers<[1], [0], [0], [1], [0, 0, 1, 1], [], []>} : vector<6x12xbf16>, vector<12x156xbf16>, vector<6x156xf32> -> vector<6x156xf32>
    %c1_160 = arith.constant 1 : index
    %c0_161 = arith.constant 0 : index
    %c0_162 = arith.constant 0 : index
    %185 = vector.load %arg12[%c1_160, %c0_161, %c0_162] : memref<2x6x12xbf16, #tpu.memory_space<vmem>>, vector<1x6x12xbf16>
    %186 = vector.shape_cast %185 : vector<1x6x12xbf16> to vector<6x12xbf16>
    %187 = arith.truncf %180 : vector<12x156xf32> to vector<12x156xbf16>
    %cst_163 = arith.constant dense<0.000000e+00> : vector<6x156xf32>
    %188 = tpu.matmul %186, %187, %cst_163 {dimension_numbers = #tpu.dot_dimension_numbers<[1], [0], [0], [1], [0, 0, 1, 1], [], []>} : vector<6x12xbf16>, vector<12x156xbf16>, vector<6x156xf32> -> vector<6x156xf32>
    %189 = arith.maximumf %184, %188 : vector<6x156xf32>
    %c0_164 = arith.constant 0 : index
    %c0_165 = arith.constant 0 : index
    %c0_166 = arith.constant 0 : index
    %190 = vector.load %arg13[%c0_164, %c0_165, %c0_166] : memref<2x156x78xbf16, #tpu.memory_space<vmem>>, vector<1x156x78xbf16>
    %191 = vector.shape_cast %190 : vector<1x156x78xbf16> to vector<156x78xbf16>
    %192 = arith.truncf %189 : vector<6x156xf32> to vector<6x156xbf16>
    %cst_167 = arith.constant dense<0.000000e+00> : vector<6x78xf32>
    %193 = tpu.matmul %192, %191, %cst_167 {dimension_numbers = #tpu.dot_dimension_numbers<[1], [0], [0], [1], [0, 0, 1, 1], [], []>} : vector<6x156xbf16>, vector<156x78xbf16>, vector<6x78xf32> -> vector<6x78xf32>
    %c1_168 = arith.constant 1 : index
    %c0_169 = arith.constant 0 : index
    %c0_170 = arith.constant 0 : index
    %194 = vector.load %arg13[%c1_168, %c0_169, %c0_170] : memref<2x156x78xbf16, #tpu.memory_space<vmem>>, vector<1x156x78xbf16>
    %195 = vector.shape_cast %194 : vector<1x156x78xbf16> to vector<156x78xbf16>
    %196 = arith.truncf %189 : vector<6x156xf32> to vector<6x156xbf16>
    %cst_171 = arith.constant dense<0.000000e+00> : vector<6x78xf32>
    %197 = tpu.matmul %196, %195, %cst_171 {dimension_numbers = #tpu.dot_dimension_numbers<[1], [0], [0], [1], [0, 0, 1, 1], [], []>} : vector<6x156xbf16>, vector<156x78xbf16>, vector<6x78xf32> -> vector<6x78xf32>
    %198 = arith.maximumf %193, %197 : vector<6x78xf32>
    %cst_172 = arith.constant 0.000000e+00 : f32
    %199 = vector.broadcast %cst_172 : f32 to vector<1x256xf32>
    %c0_173 = arith.constant 0 : index
    %c0_174 = arith.constant 0 : index
    %c0_175 = arith.constant 0 : index
    %200 = vector.load %arg14[%c0_173, %c0_174, %c0_175] : memref<6x1x6xbf16, #tpu.memory_space<vmem>>, vector<1x1x6xbf16>
    %201 = vector.shape_cast %200 : vector<1x1x6xbf16> to vector<1x6xbf16>
    %202 = arith.truncf %198 : vector<6x78xf32> to vector<6x78xbf16>
    %cst_176 = arith.constant dense<0.000000e+00> : vector<1x78xf32>
    %203 = tpu.matmul %201, %202, %cst_176 {dimension_numbers = #tpu.dot_dimension_numbers<[1], [0], [0], [1], [0, 0, 1, 1], [], []>} : vector<1x6xbf16>, vector<6x78xbf16>, vector<1x78xf32> -> vector<1x78xf32>
    %c0_177 = arith.constant 0 : index
    %c0_178 = arith.constant 0 : index
    %c0_179 = arith.constant 0 : index
    %204 = vector.load %arg15[%c0_177, %c0_178, %c0_179] : memref<6x78x256xbf16, #tpu.memory_space<vmem>>, vector<1x78x256xbf16>
    %205 = vector.shape_cast %204 : vector<1x78x256xbf16> to vector<78x256xbf16>
    %206 = arith.truncf %203 : vector<1x78xf32> to vector<1x78xbf16>
    %cst_180 = arith.constant dense<0.000000e+00> : vector<1x256xf32>
    %207 = tpu.matmul %206, %205, %cst_180 {dimension_numbers = #tpu.dot_dimension_numbers<[1], [0], [0], [1], [0, 0, 1, 1], [], []>} : vector<1x78xbf16>, vector<78x256xbf16>, vector<1x256xf32> -> vector<1x256xf32>
    %208 = arith.addf %199, %207 : vector<1x256xf32>
    %c1_181 = arith.constant 1 : index
    %c0_182 = arith.constant 0 : index
    %c0_183 = arith.constant 0 : index
    %209 = vector.load %arg14[%c1_181, %c0_182, %c0_183] : memref<6x1x6xbf16, #tpu.memory_space<vmem>>, vector<1x1x6xbf16>
    %210 = vector.shape_cast %209 : vector<1x1x6xbf16> to vector<1x6xbf16>
    %211 = arith.truncf %198 : vector<6x78xf32> to vector<6x78xbf16>
    %cst_184 = arith.constant dense<0.000000e+00> : vector<1x78xf32>
    %212 = tpu.matmul %210, %211, %cst_184 {dimension_numbers = #tpu.dot_dimension_numbers<[1], [0], [0], [1], [0, 0, 1, 1], [], []>} : vector<1x6xbf16>, vector<6x78xbf16>, vector<1x78xf32> -> vector<1x78xf32>
    %c1_185 = arith.constant 1 : index
    %c0_186 = arith.constant 0 : index
    %c0_187 = arith.constant 0 : index
    %213 = vector.load %arg15[%c1_185, %c0_186, %c0_187] : memref<6x78x256xbf16, #tpu.memory_space<vmem>>, vector<1x78x256xbf16>
    %214 = vector.shape_cast %213 : vector<1x78x256xbf16> to vector<78x256xbf16>
    %215 = arith.truncf %212 : vector<1x78xf32> to vector<1x78xbf16>
    %cst_188 = arith.constant dense<0.000000e+00> : vector<1x256xf32>
    %216 = tpu.matmul %215, %214, %cst_188 {dimension_numbers = #tpu.dot_dimension_numbers<[1], [0], [0], [1], [0, 0, 1, 1], [], []>} : vector<1x78xbf16>, vector<78x256xbf16>, vector<1x256xf32> -> vector<1x256xf32>
    %217 = arith.addf %208, %216 : vector<1x256xf32>
    %c2_189 = arith.constant 2 : index
    %c0_190 = arith.constant 0 : index
    %c0_191 = arith.constant 0 : index
    %218 = vector.load %arg14[%c2_189, %c0_190, %c0_191] : memref<6x1x6xbf16, #tpu.memory_space<vmem>>, vector<1x1x6xbf16>
    %219 = vector.shape_cast %218 : vector<1x1x6xbf16> to vector<1x6xbf16>
    %220 = arith.truncf %198 : vector<6x78xf32> to vector<6x78xbf16>
    %cst_192 = arith.constant dense<0.000000e+00> : vector<1x78xf32>
    %221 = tpu.matmul %219, %220, %cst_192 {dimension_numbers = #tpu.dot_dimension_numbers<[1], [0], [0], [1], [0, 0, 1, 1], [], []>} : vector<1x6xbf16>, vector<6x78xbf16>, vector<1x78xf32> -> vector<1x78xf32>
    %c2_193 = arith.constant 2 : index
    %c0_194 = arith.constant 0 : index
    %c0_195 = arith.constant 0 : index
    %222 = vector.load %arg15[%c2_193, %c0_194, %c0_195] : memref<6x78x256xbf16, #tpu.memory_space<vmem>>, vector<1x78x256xbf16>
    %223 = vector.shape_cast %222 : vector<1x78x256xbf16> to vector<78x256xbf16>
    %224 = arith.truncf %221 : vector<1x78xf32> to vector<1x78xbf16>
    %cst_196 = arith.constant dense<0.000000e+00> : vector<1x256xf32>
    %225 = tpu.matmul %224, %223, %cst_196 {dimension_numbers = #tpu.dot_dimension_numbers<[1], [0], [0], [1], [0, 0, 1, 1], [], []>} : vector<1x78xbf16>, vector<78x256xbf16>, vector<1x256xf32> -> vector<1x256xf32>
    %226 = arith.addf %217, %225 : vector<1x256xf32>
    %c3_197 = arith.constant 3 : index
    %c0_198 = arith.constant 0 : index
    %c0_199 = arith.constant 0 : index
    %227 = vector.load %arg14[%c3_197, %c0_198, %c0_199] : memref<6x1x6xbf16, #tpu.memory_space<vmem>>, vector<1x1x6xbf16>
    %228 = vector.shape_cast %227 : vector<1x1x6xbf16> to vector<1x6xbf16>
    %229 = arith.truncf %198 : vector<6x78xf32> to vector<6x78xbf16>
    %cst_200 = arith.constant dense<0.000000e+00> : vector<1x78xf32>
    %230 = tpu.matmul %228, %229, %cst_200 {dimension_numbers = #tpu.dot_dimension_numbers<[1], [0], [0], [1], [0, 0, 1, 1], [], []>} : vector<1x6xbf16>, vector<6x78xbf16>, vector<1x78xf32> -> vector<1x78xf32>
    %c3_201 = arith.constant 3 : index
    %c0_202 = arith.constant 0 : index
    %c0_203 = arith.constant 0 : index
    %231 = vector.load %arg15[%c3_201, %c0_202, %c0_203] : memref<6x78x256xbf16, #tpu.memory_space<vmem>>, vector<1x78x256xbf16>
    %232 = vector.shape_cast %231 : vector<1x78x256xbf16> to vector<78x256xbf16>
    %233 = arith.truncf %230 : vector<1x78xf32> to vector<1x78xbf16>
    %cst_204 = arith.constant dense<0.000000e+00> : vector<1x256xf32>
    %234 = tpu.matmul %233, %232, %cst_204 {dimension_numbers = #tpu.dot_dimension_numbers<[1], [0], [0], [1], [0, 0, 1, 1], [], []>} : vector<1x78xbf16>, vector<78x256xbf16>, vector<1x256xf32> -> vector<1x256xf32>
    %235 = arith.addf %226, %234 : vector<1x256xf32>
    %c4_205 = arith.constant 4 : index
    %c0_206 = arith.constant 0 : index
    %c0_207 = arith.constant 0 : index
    %236 = vector.load %arg14[%c4_205, %c0_206, %c0_207] : memref<6x1x6xbf16, #tpu.memory_space<vmem>>, vector<1x1x6xbf16>
    %237 = vector.shape_cast %236 : vector<1x1x6xbf16> to vector<1x6xbf16>
    %238 = arith.truncf %198 : vector<6x78xf32> to vector<6x78xbf16>
    %cst_208 = arith.constant dense<0.000000e+00> : vector<1x78xf32>
    %239 = tpu.matmul %237, %238, %cst_208 {dimension_numbers = #tpu.dot_dimension_numbers<[1], [0], [0], [1], [0, 0, 1, 1], [], []>} : vector<1x6xbf16>, vector<6x78xbf16>, vector<1x78xf32> -> vector<1x78xf32>
    %c4_209 = arith.constant 4 : index
    %c0_210 = arith.constant 0 : index
    %c0_211 = arith.constant 0 : index
    %240 = vector.load %arg15[%c4_209, %c0_210, %c0_211] : memref<6x78x256xbf16, #tpu.memory_space<vmem>>, vector<1x78x256xbf16>
    %241 = vector.shape_cast %240 : vector<1x78x256xbf16> to vector<78x256xbf16>
    %242 = arith.truncf %239 : vector<1x78xf32> to vector<1x78xbf16>
    %cst_212 = arith.constant dense<0.000000e+00> : vector<1x256xf32>
    %243 = tpu.matmul %242, %241, %cst_212 {dimension_numbers = #tpu.dot_dimension_numbers<[1], [0], [0], [1], [0, 0, 1, 1], [], []>} : vector<1x78xbf16>, vector<78x256xbf16>, vector<1x256xf32> -> vector<1x256xf32>
    %244 = arith.addf %235, %243 : vector<1x256xf32>
    %c5_213 = arith.constant 5 : index
    %c0_214 = arith.constant 0 : index
    %c0_215 = arith.constant 0 : index
    %245 = vector.load %arg14[%c5_213, %c0_214, %c0_215] : memref<6x1x6xbf16, #tpu.memory_space<vmem>>, vector<1x1x6xbf16>
    %246 = vector.shape_cast %245 : vector<1x1x6xbf16> to vector<1x6xbf16>
    %247 = arith.truncf %198 : vector<6x78xf32> to vector<6x78xbf16>
    %cst_216 = arith.constant dense<0.000000e+00> : vector<1x78xf32>
    %248 = tpu.matmul %246, %247, %cst_216 {dimension_numbers = #tpu.dot_dimension_numbers<[1], [0], [0], [1], [0, 0, 1, 1], [], []>} : vector<1x6xbf16>, vector<6x78xbf16>, vector<1x78xf32> -> vector<1x78xf32>
    %c5_217 = arith.constant 5 : index
    %c0_218 = arith.constant 0 : index
    %c0_219 = arith.constant 0 : index
    %249 = vector.load %arg15[%c5_217, %c0_218, %c0_219] : memref<6x78x256xbf16, #tpu.memory_space<vmem>>, vector<1x78x256xbf16>
    %250 = vector.shape_cast %249 : vector<1x78x256xbf16> to vector<78x256xbf16>
    %251 = arith.truncf %248 : vector<1x78xf32> to vector<1x78xbf16>
    %cst_220 = arith.constant dense<0.000000e+00> : vector<1x256xf32>
    %252 = tpu.matmul %251, %250, %cst_220 {dimension_numbers = #tpu.dot_dimension_numbers<[1], [0], [0], [1], [0, 0, 1, 1], [], []>} : vector<1x78xbf16>, vector<78x256xbf16>, vector<1x256xf32> -> vector<1x256xf32>
    %253 = arith.addf %244, %252 : vector<1x256xf32>
    %c0_221 = arith.constant 0 : index
    %c0_222 = arith.constant 0 : index
    %254 = vector.load %arg16[%c0_221, %c0_222] : memref<1x256xf32, #tpu.memory_space<vmem>>, vector<1x256xf32>
    %255 = arith.addf %253, %254 : vector<1x256xf32>
    %cst_223 = arith.constant 0.000000e+00 : f32
    %256 = vector.broadcast %cst_223 : f32 to vector<1x256xf32>
    %257 = arith.maximumf %255, %256 : vector<1x256xf32>
    %c0_224 = arith.constant 0 : index
    %c0_225 = arith.constant 0 : index
    %258 = vector.load %arg17[%c0_224, %c0_225] : memref<256x256xbf16, #tpu.memory_space<vmem>>, vector<256x256xbf16>
    %259 = arith.truncf %257 : vector<1x256xf32> to vector<1x256xbf16>
    %cst_226 = arith.constant dense<0.000000e+00> : vector<1x256xf32>
    %260 = tpu.matmul %259, %258, %cst_226 {dimension_numbers = #tpu.dot_dimension_numbers<[1], [0], [0], [1], [0, 0, 1, 1], [], []>} : vector<1x256xbf16>, vector<256x256xbf16>, vector<1x256xf32> -> vector<1x256xf32>
    %c0_227 = arith.constant 0 : index
    %c0_228 = arith.constant 0 : index
    %261 = vector.load %arg18[%c0_227, %c0_228] : memref<1x256xf32, #tpu.memory_space<vmem>>, vector<1x256xf32>
    %262 = arith.addf %260, %261 : vector<1x256xf32>
    %cst_229 = arith.constant 0.000000e+00 : f32
    %263 = vector.broadcast %cst_229 : f32 to vector<1x256xf32>
    %264 = arith.maximumf %262, %263 : vector<1x256xf32>
    %c0_230 = arith.constant 0 : index
    %c0_231 = arith.constant 0 : index
    %265 = vector.load %arg19[%c0_230, %c0_231] : memref<256x3xbf16, #tpu.memory_space<vmem>>, vector<256x3xbf16>
    %266 = arith.truncf %264 : vector<1x256xf32> to vector<1x256xbf16>
    %cst_232 = arith.constant dense<0.000000e+00> : vector<1x3xf32>
    %267 = tpu.matmul %266, %265, %cst_232 {dimension_numbers = #tpu.dot_dimension_numbers<[1], [0], [0], [1], [0, 0, 1, 1], [], []>} : vector<1x256xbf16>, vector<256x3xbf16>, vector<1x3xf32> -> vector<1x3xf32>
    %c0_233 = arith.constant 0 : index
    %c0_234 = arith.constant 0 : index
    %268 = vector.load %arg20[%c0_233, %c0_234] : memref<1x3xf32, #tpu.memory_space<vmem>>, vector<1x3xf32>
    %269 = arith.addf %267, %268 : vector<1x3xf32>
    %c0_235 = arith.constant 0 : index
    %c0_236 = arith.constant 0 : index
    %c0_237 = arith.constant 0 : index
    %270 = vector.load %arg21[%c0_235, %c0_236, %c0_237] : memref<1x1x3xf32, #tpu.memory_space<vmem>>, vector<1x1x3xf32>
    %271 = vector.shape_cast %270 : vector<1x1x3xf32> to vector<1x3xf32>
    %272 = vector.shape_cast %269 : vector<1x3xf32> to vector<1x1x3xf32>
    tpu.vector_store %arg21[%c0_235, %c0_236, %c0_237], %272 {strides = array<i32>} : memref<1x1x3xf32, #tpu.memory_space<vmem>>, vector<1x1x3xf32>,
    return
  }
  func.func @transform_0(%arg0: i32) -> (i32, i32, i32, i32) {
    %c0_i32 = arith.constant 0 : i32
    %c0_i32_0 = arith.constant 0 : i32
    %c0_i32_1 = arith.constant 0 : i32
    %c0_i32_2 = arith.constant 0 : i32
    return %arg0, %c0_i32, %c0_i32_0, %c0_i32_1 : i32, i32, i32, i32
  }
  func.func @transform_1(%arg0: i32) -> (i32, i32, i32) {
    %c0_i32 = arith.constant 0 : i32
    %c0_i32_0 = arith.constant 0 : i32
    %c0_i32_1 = arith.constant 0 : i32
    %c0_i32_2 = arith.constant 0 : i32
    return %c0_i32, %c0_i32_0, %c0_i32_1 : i32, i32, i32
  }
  func.func @transform_2(%arg0: i32) -> (i32, i32, i32) {
    %c0_i32 = arith.constant 0 : i32
    %c0_i32_0 = arith.constant 0 : i32
    %c0_i32_1 = arith.constant 0 : i32
    %c0_i32_2 = arith.constant 0 : i32
    return %c0_i32, %c0_i32_0, %c0_i32_1 : i32, i32, i32
  }
  func.func @transform_3(%arg0: i32) -> (i32, i32) {
    %c0_i32 = arith.constant 0 : i32
    %c0_i32_0 = arith.constant 0 : i32
    %c0_i32_1 = arith.constant 0 : i32
    return %c0_i32, %c0_i32_0 : i32, i32
  }
  func.func @transform_4(%arg0: i32) -> (i32, i32, i32) {
    %c0_i32 = arith.constant 0 : i32
    %c0_i32_0 = arith.constant 0 : i32
    %c0_i32_1 = arith.constant 0 : i32
    %c0_i32_2 = arith.constant 0 : i32
    return %c0_i32, %c0_i32_0, %c0_i32_1 : i32, i32, i32
  }
  func.func @transform_5(%arg0: i32) -> (i32, i32, i32) {
    %c0_i32 = arith.constant 0 : i32
    %c0_i32_0 = arith.constant 0 : i32
    %c0_i32_1 = arith.constant 0 : i32
    %c0_i32_2 = arith.constant 0 : i32
    return %c0_i32, %c0_i32_0, %c0_i32_1 : i32, i32, i32
  }
  func.func @transform_6(%arg0: i32) -> (i32, i32, i32) {
    %c0_i32 = arith.constant 0 : i32
    %c0_i32_0 = arith.constant 0 : i32
    %c0_i32_1 = arith.constant 0 : i32
    %c0_i32_2 = arith.constant 0 : i32
    return %c0_i32, %c0_i32_0, %c0_i32_1 : i32, i32, i32
  }
  func.func @transform_7(%arg0: i32) -> (i32, i32, i32) {
    %c0_i32 = arith.constant 0 : i32
    %c0_i32_0 = arith.constant 0 : i32
    %c0_i32_1 = arith.constant 0 : i32
    %c0_i32_2 = arith.constant 0 : i32
    return %c0_i32, %c0_i32_0, %c0_i32_1 : i32, i32, i32
  }
  func.func @transform_8(%arg0: i32) -> (i32, i32) {
    %c0_i32 = arith.constant 0 : i32
    %c0_i32_0 = arith.constant 0 : i32
    %c0_i32_1 = arith.constant 0 : i32
    return %c0_i32, %c0_i32_0 : i32, i32
  }
  func.func @transform_9(%arg0: i32) -> (i32, i32, i32) {
    %c0_i32 = arith.constant 0 : i32
    %c0_i32_0 = arith.constant 0 : i32
    %c0_i32_1 = arith.constant 0 : i32
    %c0_i32_2 = arith.constant 0 : i32
    return %c0_i32, %c0_i32_0, %c0_i32_1 : i32, i32, i32
  }
  func.func @transform_10(%arg0: i32) -> (i32, i32) {
    %c0_i32 = arith.constant 0 : i32
    %c0_i32_0 = arith.constant 0 : i32
    %c0_i32_1 = arith.constant 0 : i32
    return %c0_i32, %c0_i32_0 : i32, i32
  }
  func.func @transform_11(%arg0: i32) -> (i32, i32, i32) {
    %c0_i32 = arith.constant 0 : i32
    %c0_i32_0 = arith.constant 0 : i32
    %c0_i32_1 = arith.constant 0 : i32
    %c0_i32_2 = arith.constant 0 : i32
    return %c0_i32, %c0_i32_0, %c0_i32_1 : i32, i32, i32
  }
  func.func @transform_12(%arg0: i32) -> (i32, i32, i32) {
    %c0_i32 = arith.constant 0 : i32
    %c0_i32_0 = arith.constant 0 : i32
    %c0_i32_1 = arith.constant 0 : i32
    %c0_i32_2 = arith.constant 0 : i32
    return %c0_i32, %c0_i32_0, %c0_i32_1 : i32, i32, i32
  }
  func.func @transform_13(%arg0: i32) -> (i32, i32, i32) {
    %c0_i32 = arith.constant 0 : i32
    %c0_i32_0 = arith.constant 0 : i32
    %c0_i32_1 = arith.constant 0 : i32
    %c0_i32_2 = arith.constant 0 : i32
    return %c0_i32, %c0_i32_0, %c0_i32_1 : i32, i32, i32
  }
  func.func @transform_14(%arg0: i32) -> (i32, i32, i32) {
    %c0_i32 = arith.constant 0 : i32
    %c0_i32_0 = arith.constant 0 : i32
    %c0_i32_1 = arith.constant 0 : i32
    %c0_i32_2 = arith.constant 0 : i32
    return %c0_i32, %c0_i32_0, %c0_i32_1 : i32, i32, i32
  }
  func.func @transform_15(%arg0: i32) -> (i32, i32) {
    %c0_i32 = arith.constant 0 : i32
    %c0_i32_0 = arith.constant 0 : i32
    %c0_i32_1 = arith.constant 0 : i32
    return %c0_i32, %c0_i32_0 : i32, i32
  }
  func.func @transform_16(%arg0: i32) -> (i32, i32) {
    %c0_i32 = arith.constant 0 : i32
    %c0_i32_0 = arith.constant 0 : i32
    %c0_i32_1 = arith.constant 0 : i32
    return %c0_i32, %c0_i32_0 : i32, i32
  }
  func.func @transform_17(%arg0: i32) -> (i32, i32) {
    %c0_i32 = arith.constant 0 : i32
    %c0_i32_0 = arith.constant 0 : i32
    %c0_i32_1 = arith.constant 0 : i32
    return %c0_i32, %c0_i32_0 : i32, i32
  }
  func.func @transform_18(%arg0: i32) -> (i32, i32) {
    %c0_i32 = arith.constant 0 : i32
    %c0_i32_0 = arith.constant 0 : i32
    %c0_i32_1 = arith.constant 0 : i32
    return %c0_i32, %c0_i32_0 : i32, i32
  }
  func.func @transform_19(%arg0: i32) -> (i32, i32) {
    %c0_i32 = arith.constant 0 : i32
    %c0_i32_0 = arith.constant 0 : i32
    %c0_i32_1 = arith.constant 0 : i32
    return %c0_i32, %c0_i32_0 : i32, i32
  }
  func.func @transform_20(%arg0: i32) -> (i32, i32, i32) {
    %c0_i32 = arith.constant 0 : i32
    %c0_i32_0 = arith.constant 0 : i32
    %c0_i32_1 = arith.constant 0 : i32
    return %arg0, %c0_i32, %c0_i32_0 : i32, i32, i32
  }
}

</mosaic_0001>

<llo_original>
// kernel: classification_network_forward.1
$region0: #{classification_network_forward.1}
  #allocation0 [shape = 'u32[]', space=smem, size = 0x4, offset = 0x4, fixed_abs, tag = 'smem constant byte address 0x4 - core index']
  #allocation1 [shape = 'u32[144,128]{1,0:T(1,128)}', space=vmem, size = 0x12000, scoped, tag = 'internal scratch']
  %s0 = inlined_call_operand.vmem [shape: f32[2,1,50,50], index: 0, kind: input, shape index: {}]
  %s1 = inlined_call_operand.hbm [shape: bf16[11,24,50], index: 1, kind: input, shape index: {}]
  %s2 = inlined_call_operand.vmem [shape: bf16[11,50,192], index: 2, kind: input, shape index: {}]
  %s3 = inlined_call_operand.vmem [shape: f32[1,192], index: 3, kind: input, shape index: {}]
  %s4 = inlined_call_operand.vmem [shape: bf16[2,12,24], index: 4, kind: input, shape index: {}]
  %s5 = inlined_call_operand.vmem [shape: bf16[2,192,96], index: 5, kind: input, shape index: {}]
  %s6 = inlined_call_operand.hbm [shape: bf16[3,12,12], index: 6, kind: input, shape index: {}]
  %s7 = inlined_call_operand.hbm [shape: bf16[3,96,192], index: 7, kind: input, shape index: {}]
  %s8 = inlined_call_operand.vmem [shape: f32[1,192], index: 8, kind: input, shape index: {}]
  %s9 = inlined_call_operand.vmem [shape: bf16[3,192,156], index: 9, kind: input, shape index: {}]
  %s10 = inlined_call_operand.hbm [shape: f32[1,156], index: 10, kind: input, shape index: {}]
  %s11 = inlined_call_operand.vmem [shape: bf16[2,6,12], index: 11, kind: input, shape index: {}]
  %s12 = inlined_call_operand.vmem [shape: bf16[2,156,78], index: 12, kind: input, shape index: {}]
  %s13 = inlined_call_operand.vmem [shape: bf16[6,1,6], index: 13, kind: input, shape index: {}]
  %s14 = inlined_call_operand.vmem [shape: bf16[6,78,256], index: 14, kind: input, shape index: {}]
  %s15 = inlined_call_operand.hbm [shape: f32[1,256], index: 15, kind: input, shape index: {}]
  %s16 = inlined_call_operand.hbm [shape: bf16[256,256], index: 16, kind: input, shape index: {}]
  %s17 = inlined_call_operand.hbm [shape: f32[1,256], index: 17, kind: input, shape index: {}]
  %s18 = inlined_call_operand.vmem [shape: bf16[256,3], index: 18, kind: input, shape index: {}]
  %s19 = inlined_call_operand.hbm [shape: f32[1,3], index: 19, kind: input, shape index: {}]
  %s20 = inlined_call_operand.hbm [shape: f32[2,1,3], index: 20, kind: output, shape index: {}]
  %s21 = sld [smem:[#allocation0]]
  $region145: #{classification_network_forward.1} parent=0
    _
  %s23 = ssub.s32 1, %s21
  %s24 = scalar_select 0, %s23, %s21
  $region1: #{classification_network_forward.1} parent=0
    #allocation2 [shape = 'u8[67584]{0}', space=vmem, size = 0x10800, scoped, tag = 'input window, operand 1, single buffered']
    #allocation3 [shape = 's32[2]{0}', space=sflag, size = 0x8, scoped, tag = 'scoped memory for classification_network_forward.1']
    #allocation4 [shape = 's32[2]{0}', space=sflag, size = 0x8, scoped, tag = 'scoped memory for classification_network_forward.1']
    #allocation5 [shape = 'u8[12288]{0}', space=vmem, size = 0x3000, scoped, tag = 'input window, operand 6, single buffered']
    #allocation6 [shape = 's32[1]{0}', space=sflag, size = 0x4, scoped, tag = 'scoped memory for classification_network_forward.1']
    #allocation7 [shape = 'u8[147456]{0}', space=vmem, size = 0x24000, scoped, tag = 'input window, operand 7, single buffered']
    #allocation8 [shape = 'u8[1024]{0}', space=vmem, size = 0x400, scoped, tag = 'input window, operand 10, single buffered']
    #allocation9 [shape = 's32[1]{0}', space=sflag, size = 0x4, scoped, tag = 'scoped memory for classification_network_forward.1']
    #allocation10 [shape = 'u8[1024]{0}', space=vmem, size = 0x400, scoped, tag = 'input window, operand 15, single buffered']
    #allocation11 [shape = 'u8[131072]{0}', space=vmem, size = 0x20000, scoped, tag = 'input window, operand 16, single buffered']
    #allocation12 [shape = 's32[1]{0}', space=sflag, size = 0x4, scoped, tag = 'scoped memory for classification_network_forward.1']
    #allocation13 [shape = 'u8[1024]{0}', space=vmem, size = 0x400, scoped, tag = 'input window, operand 17, single buffered']
    #allocation14 [shape = 'u8[512]{0}', space=vmem, size = 0x400, scoped, tag = 'input window, operand 19, single buffered']
    #allocation15 [shape = 's32[1]{0}', space=sflag, size = 0x4, scoped, tag = 'scoped memory for classification_network_forward.1']
    #allocation16 [shape = 'u8[1024]{0}', space=vmem, size = 0x400, scoped, tag = 'output window, operand 0']
    %25 = vsyncpa [#allocation3], 0
    %26 = vsyncpa [#allocation6], 0
    %27 = vsyncpa [#allocation9], 0
    %28 = vsyncpa [#allocation12], 0
    %29 = vsyncpa [#allocation15], 0
    %30 = vsyncpa [#allocation4], 0
    %s31 = scalar_lea.sflag [#allocation4], 1
    %32 = vsyncpa %s31, 0
    loop: start=0, step=1, limit=4
    $region2: #{classification_network_forward.1} parent=1 // loop_pre_header
      _
    $region3: #{classification_network_forward.1} parent=1 // loop_header
      %s34 = sphi 0, %s38
      %p35 = scmp.ge.s32.totalorder %s34, 4
      %s44 = sphi 0, %s46
      %s47 = sphi 0, %s44
      %s48 = sphi 0, %s47
      %s64 = sphi 0, %s48
      %s68 = sphi 0, %s68
      %s70 = sphi 0, %s68
      %s71 = sphi 0, %s70
      %s85 = sphi 0, %s71
      %s89 = sphi 0, %s89
      %s91 = sphi 0, %s89
      %s92 = sphi 0, %s91
      %s106 = sphi 0, %s92
      %s110 = sphi 0, %s110
      %s112 = sphi 0, %s110
      %s113 = sphi 0, %s112
      %s127 = sphi 0, %s113
      %s131 = sphi 0, %s131
      %s133 = sphi 0, %s131
      %s134 = sphi 0, %s133
      %s148 = sphi 0, %s134
      %s152 = sphi 0, %s152
      %s154 = sphi 0, %s152
      %s155 = sphi 0, %s154
      %s169 = sphi 0, %s155
      %s173 = sphi 0, %s173
      %s175 = sphi 0, %s173
      %s176 = sphi 0, %s175
      %s190 = sphi 0, %s176
      %s194 = sphi 0, %s194
      %s196 = sphi 0, %s194
      %s197 = sphi 0, %s196
      %s211 = sphi 0, %s197
      %s215 = sphi 0, %s215
      %s217 = sphi 0, %s215
      %s218 = sphi 0, %s217
      %s232 = sphi 0, %s218
      %s236 = sphi 0, %s236
      %s238 = sphi 0, %s236
      %s239 = sphi 0, %s238
      %s253 = sphi 0, %s239
      %s257 = sphi 0, %s257
      %s259 = sphi 0, %s257
      %s260 = sphi 0, %s259
      %s274 = sphi 0, %s260
      %s278 = sphi 0, %s278
      %s280 = sphi 0, %s278
      %s281 = sphi 0, %s280
      %s295 = sphi 0, %s281
      %s299 = sphi 0, %s299
      %s301 = sphi 0, %s299
      %s302 = sphi 0, %s301
      %s316 = sphi 0, %s302
      %s320 = sphi 0, %s320
      %s322 = sphi 0, %s320
      %s323 = sphi 0, %s322
      %s337 = sphi 0, %s323
      %s341 = sphi 0, %s341
      %s343 = sphi 0, %s341
      %s344 = sphi 0, %s343
      %s358 = sphi 0, %s344
      %s362 = sphi 0, %s362
      %s364 = sphi 0, %s362
      %s365 = sphi 0, %s364
      %s379 = sphi 0, %s365
      %s383 = sphi 0, %s383
      %s385 = sphi 0, %s383
      %s386 = sphi 0, %s385
      %s400 = sphi 0, %s386
      %s404 = sphi 0, %s404
      %s406 = sphi 0, %s404
      %s407 = sphi 0, %s406
      %s421 = sphi 0, %s407
      %s425 = sphi 0, %s425
      %s427 = sphi 0, %s425
      %s428 = sphi 0, %s427
      %s442 = sphi 0, %s428
      %s446 = sphi 0, %s446
      %s448 = sphi 0, %s446
      %s449 = sphi 0, %s448
      %s463 = sphi 0, %s449
      %s469 = sphi 0, %s471
      %s472 = sphi 0, %s469
      %s473 = sphi 0, %s472
      %s489 = sphi 0, %s473
    $region4: #{classification_network_forward.1} parent=1 // loop_header_branch
      %37 = sbr.rel (%p35) target = $region8
    $region5: #{classification_network_forward.1} parent=1 // loop_body
      %s39 = ssub.s32 %s34, 1
      %s40 = ssub.s32 %s34, 2
      %s41 = sadd.s32 %s34, 1
      %s42 = ssub.s32 %s34, %s41
      %p43 = scmp.eq.s32.totalorder %s42, 0
      %s45 = sadd.s32 %s44, 1
      %s46 = scalar_select %p43, %s44, %s45
      %p49 = pneg %p43
      %p50 = scmp.eq.s32.totalorder %s34, 1
      %p51 = por %p49, %p50
      %p52 = scmp.ne.s32.totalorder %s44, %s47
      %p53 = scmp.eq.s32.totalorder %s34, 0
      %p54 = por %p52, %p53
      %p55 = scmp.ne.s32.totalorder %s44, %s47
      %p56 = scmp.eq.s32.totalorder %s39, 1
      %p57 = por %p55, %p56
      %p58 = scmp.ne.s32.totalorder %s47, %s48
      %p59 = scmp.eq.s32.totalorder %s39, 0
      %p60 = por %p58, %p59
      %p61 = scmp.ne.s32.totalorder %s47, %s48
      %p62 = scmp.eq.s32.totalorder %s40, 1
      %p63 = por %p61, %p62
      %p65 = scmp.ne.s32.totalorder %s48, %s64
      %p66 = scmp.eq.s32.totalorder %s40, 0
      %p67 = por %p65, %p66
      %s69 = sadd.s32 %s68, 1
      %p72 = scmp.eq.s32.totalorder %s34, 1
      %p73 = scmp.ne.s32.totalorder %s68, %s70
      %p74 = scmp.eq.s32.totalorder %s34, 0
      %p75 = por %p73, %p74
      %p76 = scmp.ne.s32.totalorder %s68, %s70
      %p77 = scmp.eq.s32.totalorder %s39, 1
      %p78 = por %p76, %p77
      %p79 = scmp.ne.s32.totalorder %s70, %s71
      %p80 = scmp.eq.s32.totalorder %s39, 0
      %p81 = por %p79, %p80
      %p82 = scmp.ne.s32.totalorder %s70, %s71
      %p83 = scmp.eq.s32.totalorder %s40, 1
      %p84 = por %p82, %p83
      %p86 = scmp.ne.s32.totalorder %s71, %s85
      %p87 = scmp.eq.s32.totalorder %s40, 0
      %p88 = por %p86, %p87
      %s90 = sadd.s32 %s89, 1
      %p93 = scmp.eq.s32.totalorder %s34, 1
      %p94 = scmp.ne.s32.totalorder %s89, %s91
      %p95 = scmp.eq.s32.totalorder %s34, 0
      %p96 = por %p94, %p95
      %p97 = scmp.ne.s32.totalorder %s89, %s91
      %p98 = scmp.eq.s32.totalorder %s39, 1
      %p99 = por %p97, %p98
      %p100 = scmp.ne.s32.totalorder %s91, %s92
      %p101 = scmp.eq.s32.totalorder %s39, 0
      %p102 = por %p100, %p101
      %p103 = scmp.ne.s32.totalorder %s91, %s92
      %p104 = scmp.eq.s32.totalorder %s40, 1
      %p105 = por %p103, %p104
      %p107 = scmp.ne.s32.totalorder %s92, %s106
      %p108 = scmp.eq.s32.totalorder %s40, 0
      %p109 = por %p107, %p108
      %s111 = sadd.s32 %s110, 1
      %p114 = scmp.eq.s32.totalorder %s34, 1
      %p115 = scmp.ne.s32.totalorder %s110, %s112
      %p116 = scmp.eq.s32.totalorder %s34, 0
      %p117 = por %p115, %p116
      %p118 = scmp.ne.s32.totalorder %s110, %s112
      %p119 = scmp.eq.s32.totalorder %s39, 1
      %p120 = por %p118, %p119
      %p121 = scmp.ne.s32.totalorder %s112, %s113
      %p122 = scmp.eq.s32.totalorder %s39, 0
      %p123 = por %p121, %p122
      %p124 = scmp.ne.s32.totalorder %s112, %s113
      %p125 = scmp.eq.s32.totalorder %s40, 1
      %p126 = por %p124, %p125
      %p128 = scmp.ne.s32.totalorder %s113, %s127
      %p129 = scmp.eq.s32.totalorder %s40, 0
      %p130 = por %p128, %p129
      %s132 = sadd.s32 %s131, 1
      %p135 = scmp.eq.s32.totalorder %s34, 1
      %p136 = scmp.ne.s32.totalorder %s131, %s133
      %p137 = scmp.eq.s32.totalorder %s34, 0
      %p138 = por %p136, %p137
      %p139 = scmp.ne.s32.totalorder %s131, %s133
      %p140 = scmp.eq.s32.totalorder %s39, 1
      %p141 = por %p139, %p140
      %p142 = scmp.ne.s32.totalorder %s133, %s134
      %p143 = scmp.eq.s32.totalorder %s39, 0
      %p144 = por %p142, %p143
      %p145 = scmp.ne.s32.totalorder %s133, %s134
      %p146 = scmp.eq.s32.totalorder %s40, 1
      %p147 = por %p145, %p146
      %p149 = scmp.ne.s32.totalorder %s134, %s148
      %p150 = scmp.eq.s32.totalorder %s40, 0
      %p151 = por %p149, %p150
      %s153 = sadd.s32 %s152, 1
      %p156 = scmp.eq.s32.totalorder %s34, 1
      %p157 = scmp.ne.s32.totalorder %s152, %s154
      %p158 = scmp.eq.s32.totalorder %s34, 0
      %p159 = por %p157, %p158
      %p160 = scmp.ne.s32.totalorder %s152, %s154
      %p161 = scmp.eq.s32.totalorder %s39, 1
      %p162 = por %p160, %p161
      %p163 = scmp.ne.s32.totalorder %s154, %s155
      %p164 = scmp.eq.s32.totalorder %s39, 0
      %p165 = por %p163, %p164
      %p166 = scmp.ne.s32.totalorder %s154, %s155
      %p167 = scmp.eq.s32.totalorder %s40, 1
      %p168 = por %p166, %p167
      %p170 = scmp.ne.s32.totalorder %s155, %s169
      %p171 = scmp.eq.s32.totalorder %s40, 0
      %p172 = por %p170, %p171
      %s174 = sadd.s32 %s173, 1
      %p177 = scmp.eq.s32.totalorder %s34, 1
      %p178 = scmp.ne.s32.totalorder %s173, %s175
      %p179 = scmp.eq.s32.totalorder %s34, 0
      %p180 = por %p178, %p179
      %p181 = scmp.ne.s32.totalorder %s173, %s175
      %p182 = scmp.eq.s32.totalorder %s39, 1
      %p183 = por %p181, %p182
      %p184 = scmp.ne.s32.totalorder %s175, %s176
      %p185 = scmp.eq.s32.totalorder %s39, 0
      %p186 = por %p184, %p185
      %p187 = scmp.ne.s32.totalorder %s175, %s176
      %p188 = scmp.eq.s32.totalorder %s40, 1
      %p189 = por %p187, %p188
      %p191 = scmp.ne.s32.totalorder %s176, %s190
      %p192 = scmp.eq.s32.totalorder %s40, 0
      %p193 = por %p191, %p192
      %s195 = sadd.s32 %s194, 1
      %p198 = scmp.eq.s32.totalorder %s34, 1
      %p199 = scmp.ne.s32.totalorder %s194, %s196
      %p200 = scmp.eq.s32.totalorder %s34, 0
      %p201 = por %p199, %p200
      %p202 = scmp.ne.s32.totalorder %s194, %s196
      %p203 = scmp.eq.s32.totalorder %s39, 1
      %p204 = por %p202, %p203
      %p205 = scmp.ne.s32.totalorder %s196, %s197
      %p206 = scmp.eq.s32.totalorder %s39, 0
      %p207 = por %p205, %p206
      %p208 = scmp.ne.s32.totalorder %s196, %s197
      %p209 = scmp.eq.s32.totalorder %s40, 1
      %p210 = por %p208, %p209
      %p212 = scmp.ne.s32.totalorder %s197, %s211
      %p213 = scmp.eq.s32.totalorder %s40, 0
      %p214 = por %p212, %p213
      %s216 = sadd.s32 %s215, 1
      %p219 = scmp.eq.s32.totalorder %s34, 1
      %p220 = scmp.ne.s32.totalorder %s215, %s217
      %p221 = scmp.eq.s32.totalorder %s34, 0
      %p222 = por %p220, %p221
      %p223 = scmp.ne.s32.totalorder %s215, %s217
      %p224 = scmp.eq.s32.totalorder %s39, 1
      %p225 = por %p223, %p224
      %p226 = scmp.ne.s32.totalorder %s217, %s218
      %p227 = scmp.eq.s32.totalorder %s39, 0
      %p228 = por %p226, %p227
      %p229 = scmp.ne.s32.totalorder %s217, %s218
      %p230 = scmp.eq.s32.totalorder %s40, 1
      %p231 = por %p229, %p230
      %p233 = scmp.ne.s32.totalorder %s218, %s232
      %p234 = scmp.eq.s32.totalorder %s40, 0
      %p235 = por %p233, %p234
      %s237 = sadd.s32 %s236, 1
      %p240 = scmp.eq.s32.totalorder %s34, 1
      %p241 = scmp.ne.s32.totalorder %s236, %s238
      %p242 = scmp.eq.s32.totalorder %s34, 0
      %p243 = por %p241, %p242
      %p244 = scmp.ne.s32.totalorder %s236, %s238
      %p245 = scmp.eq.s32.totalorder %s39, 1
      %p246 = por %p244, %p245
      %p247 = scmp.ne.s32.totalorder %s238, %s239
      %p248 = scmp.eq.s32.totalorder %s39, 0
      %p249 = por %p247, %p248
      %p250 = scmp.ne.s32.totalorder %s238, %s239
      %p251 = scmp.eq.s32.totalorder %s40, 1
      %p252 = por %p250, %p251
      %p254 = scmp.ne.s32.totalorder %s239, %s253
      %p255 = scmp.eq.s32.totalorder %s40, 0
      %p256 = por %p254, %p255
      %s258 = sadd.s32 %s257, 1
      %p261 = scmp.eq.s32.totalorder %s34, 1
      %p262 = scmp.ne.s32.totalorder %s257, %s259
      %p263 = scmp.eq.s32.totalorder %s34, 0
      %p264 = por %p262, %p263
      %p265 = scmp.ne.s32.totalorder %s257, %s259
      %p266 = scmp.eq.s32.totalorder %s39, 1
      %p267 = por %p265, %p266
      %p268 = scmp.ne.s32.totalorder %s259, %s260
      %p269 = scmp.eq.s32.totalorder %s39, 0
      %p270 = por %p268, %p269
      %p271 = scmp.ne.s32.totalorder %s259, %s260
      %p272 = scmp.eq.s32.totalorder %s40, 1
      %p273 = por %p271, %p272
      %p275 = scmp.ne.s32.totalorder %s260, %s274
      %p276 = scmp.eq.s32.totalorder %s40, 0
      %p277 = por %p275, %p276
      %s279 = sadd.s32 %s278, 1
      %p282 = scmp.eq.s32.totalorder %s34, 1
      %p283 = scmp.ne.s32.totalorder %s278, %s280
      %p284 = scmp.eq.s32.totalorder %s34, 0
      %p285 = por %p283, %p284
      %p286 = scmp.ne.s32.totalorder %s278, %s280
      %p287 = scmp.eq.s32.totalorder %s39, 1
      %p288 = por %p286, %p287
      %p289 = scmp.ne.s32.totalorder %s280, %s281
      %p290 = scmp.eq.s32.totalorder %s39, 0
      %p291 = por %p289, %p290
      %p292 = scmp.ne.s32.totalorder %s280, %s281
      %p293 = scmp.eq.s32.totalorder %s40, 1
      %p294 = por %p292, %p293
      %p296 = scmp.ne.s32.totalorder %s281, %s295
      %p297 = scmp.eq.s32.totalorder %s40, 0
      %p298 = por %p296, %p297
      %s300 = sadd.s32 %s299, 1
      %p303 = scmp.eq.s32.totalorder %s34, 1
      %p304 = scmp.ne.s32.totalorder %s299, %s301
      %p305 = scmp.eq.s32.totalorder %s34, 0
      %p306 = por %p304, %p305
      %p307 = scmp.ne.s32.totalorder %s299, %s301
      %p308 = scmp.eq.s32.totalorder %s39, 1
      %p309 = por %p307, %p308
      %p310 = scmp.ne.s32.totalorder %s301, %s302
      %p311 = scmp.eq.s32.totalorder %s39, 0
      %p312 = por %p310, %p311
      %p313 = scmp.ne.s32.totalorder %s301, %s302
      %p314 = scmp.eq.s32.totalorder %s40, 1
      %p315 = por %p313, %p314
      %p317 = scmp.ne.s32.totalorder %s302, %s316
      %p318 = scmp.eq.s32.totalorder %s40, 0
      %p319 = por %p317, %p318
      %s321 = sadd.s32 %s320, 1
      %p324 = scmp.eq.s32.totalorder %s34, 1
      %p325 = scmp.ne.s32.totalorder %s320, %s322
      %p326 = scmp.eq.s32.totalorder %s34, 0
      %p327 = por %p325, %p326
      %p328 = scmp.ne.s32.totalorder %s320, %s322
      %p329 = scmp.eq.s32.totalorder %s39, 1
      %p330 = por %p328, %p329
      %p331 = scmp.ne.s32.totalorder %s322, %s323
      %p332 = scmp.eq.s32.totalorder %s39, 0
      %p333 = por %p331, %p332
      %p334 = scmp.ne.s32.totalorder %s322, %s323
      %p335 = scmp.eq.s32.totalorder %s40, 1
      %p336 = por %p334, %p335
      %p338 = scmp.ne.s32.totalorder %s323, %s337
      %p339 = scmp.eq.s32.totalorder %s40, 0
      %p340 = por %p338, %p339
      %s342 = sadd.s32 %s341, 1
      %p345 = scmp.eq.s32.totalorder %s34, 1
      %p346 = scmp.ne.s32.totalorder %s341, %s343
      %p347 = scmp.eq.s32.totalorder %s34, 0
      %p348 = por %p346, %p347
      %p349 = scmp.ne.s32.totalorder %s341, %s343
      %p350 = scmp.eq.s32.totalorder %s39, 1
      %p351 = por %p349, %p350
      %p352 = scmp.ne.s32.totalorder %s343, %s344
      %p353 = scmp.eq.s32.totalorder %s39, 0
      %p354 = por %p352, %p353
      %p355 = scmp.ne.s32.totalorder %s343, %s344
      %p356 = scmp.eq.s32.totalorder %s40, 1
      %p357 = por %p355, %p356
      %p359 = scmp.ne.s32.totalorder %s344, %s358
      %p360 = scmp.eq.s32.totalorder %s40, 0
      %p361 = por %p359, %p360
      %s363 = sadd.s32 %s362, 1
      %p366 = scmp.eq.s32.totalorder %s34, 1
      %p367 = scmp.ne.s32.totalorder %s362, %s364
      %p368 = scmp.eq.s32.totalorder %s34, 0
      %p369 = por %p367, %p368
      %p370 = scmp.ne.s32.totalorder %s362, %s364
      %p371 = scmp.eq.s32.totalorder %s39, 1
      %p372 = por %p370, %p371
      %p373 = scmp.ne.s32.totalorder %s364, %s365
      %p374 = scmp.eq.s32.totalorder %s39, 0
      %p375 = por %p373, %p374
      %p376 = scmp.ne.s32.totalorder %s364, %s365
      %p377 = scmp.eq.s32.totalorder %s40, 1
      %p378 = por %p376, %p377
      %p380 = scmp.ne.s32.totalorder %s365, %s379
      %p381 = scmp.eq.s32.totalorder %s40, 0
      %p382 = por %p380, %p381
      %s384 = sadd.s32 %s383, 1
      %p387 = scmp.eq.s32.totalorder %s34, 1
      %p388 = scmp.ne.s32.totalorder %s383, %s385
      %p389 = scmp.eq.s32.totalorder %s34, 0
      %p390 = por %p388, %p389
      %p391 = scmp.ne.s32.totalorder %s383, %s385
      %p392 = scmp.eq.s32.totalorder %s39, 1
      %p393 = por %p391, %p392
      %p394 = scmp.ne.s32.totalorder %s385, %s386
      %p395 = scmp.eq.s32.totalorder %s39, 0
      %p396 = por %p394, %p395
      %p397 = scmp.ne.s32.totalorder %s385, %s386
      %p398 = scmp.eq.s32.totalorder %s40, 1
      %p399 = por %p397, %p398
      %p401 = scmp.ne.s32.totalorder %s386, %s400
      %p402 = scmp.eq.s32.totalorder %s40, 0
      %p403 = por %p401, %p402
      %s405 = sadd.s32 %s404, 1
      %p408 = scmp.eq.s32.totalorder %s34, 1
      %p409 = scmp.ne.s32.totalorder %s404, %s406
      %p410 = scmp.eq.s32.totalorder %s34, 0
      %p411 = por %p409, %p410
      %p412 = scmp.ne.s32.totalorder %s404, %s406
      %p413 = scmp.eq.s32.totalorder %s39, 1
      %p414 = por %p412, %p413
      %p415 = scmp.ne.s32.totalorder %s406, %s407
      %p416 = scmp.eq.s32.totalorder %s39, 0
      %p417 = por %p415, %p416
      %p418 = scmp.ne.s32.totalorder %s406, %s407
      %p419 = scmp.eq.s32.totalorder %s40, 1
      %p420 = por %p418, %p419
      %p422 = scmp.ne.s32.totalorder %s407, %s421
      %p423 = scmp.eq.s32.totalorder %s40, 0
      %p424 = por %p422, %p423
      %s426 = sadd.s32 %s425, 1
      %p429 = scmp.eq.s32.totalorder %s34, 1
      %p430 = scmp.ne.s32.totalorder %s425, %s427
      %p431 = scmp.eq.s32.totalorder %s34, 0
      %p432 = por %p430, %p431
      %p433 = scmp.ne.s32.totalorder %s425, %s427
      %p434 = scmp.eq.s32.totalorder %s39, 1
      %p435 = por %p433, %p434
      %p436 = scmp.ne.s32.totalorder %s427, %s428
      %p437 = scmp.eq.s32.totalorder %s39, 0
      %p438 = por %p436, %p437
      %p439 = scmp.ne.s32.totalorder %s427, %s428
      %p440 = scmp.eq.s32.totalorder %s40, 1
      %p441 = por %p439, %p440
      %p443 = scmp.ne.s32.totalorder %s428, %s442
      %p444 = scmp.eq.s32.totalorder %s40, 0
      %p445 = por %p443, %p444
      %s447 = sadd.s32 %s446, 1
      %p450 = scmp.eq.s32.totalorder %s34, 1
      %p451 = scmp.ne.s32.totalorder %s446, %s448
      %p452 = scmp.eq.s32.totalorder %s34, 0
      %p453 = por %p451, %p452
      %p454 = scmp.ne.s32.totalorder %s446, %s448
      %p455 = scmp.eq.s32.totalorder %s39, 1
      %p456 = por %p454, %p455
      %p457 = scmp.ne.s32.totalorder %s448, %s449
      %p458 = scmp.eq.s32.totalorder %s39, 0
      %p459 = por %p457, %p458
      %p460 = scmp.ne.s32.totalorder %s448, %s449
      %p461 = scmp.eq.s32.totalorder %s40, 1
      %p462 = por %p460, %p461
      %p464 = scmp.ne.s32.totalorder %s449, %s463
      %p465 = scmp.eq.s32.totalorder %s40, 0
      %p466 = por %p464, %p465
      %s467 = ssub.s32 %s34, %s41
      %p468 = scmp.eq.s32.totalorder %s467, 0
      %s470 = sadd.s32 %s469, 1
      %s471 = scalar_select %p468, %s469, %s470
      %p474 = pneg %p468
      %p475 = scmp.eq.s32.totalorder %s34, 1
      %p476 = por %p474, %p475
      %p477 = scmp.ne.s32.totalorder %s469, %s472
      %p478 = scmp.eq.s32.totalorder %s34, 0
      %p479 = por %p477, %p478
      %p480 = scmp.ne.s32.totalorder %s469, %s472
      %p481 = scmp.eq.s32.totalorder %s39, 1
      %p482 = por %p480, %p481
      %p483 = scmp.ne.s32.totalorder %s472, %s473
      %p484 = scmp.eq.s32.totalorder %s39, 0
      %p485 = por %p483, %p484
      %p486 = scmp.ne.s32.totalorder %s472, %s473
      %p487 = scmp.eq.s32.totalorder %s40, 1
      %p488 = por %p486, %p487
      %p490 = scmp.ne.s32.totalorder %s473, %s489
      %p491 = scmp.eq.s32.totalorder %s40, 0
      %p492 = por %p490, %p491
      %p493 = scmp.le.s32.totalorder 1, %s34
      %p494 = scmp.lt.s32.totalorder %s34, 3
      %p495 = pnand %p493, %p494
      %p496 = pneg %p495
      // Predicated region
      $region9: #{classification_network_forward.1} parent=5 // pred_check
        _
      $region10: #{classification_network_forward.1} parent=5 // pred_check_branch
        %498 = sbr.rel (%p495) target = $region12
      $region11: #{classification_network_forward.1} parent=5 // pred_region
        %s499 = ssub.s32 %s34, 1
        // Predicated region
        $region13: #{classification_network_forward.1} parent=11 // pred_check
          %p500 = pneg %p81
        $region14: #{classification_network_forward.1} parent=11 // pred_check_branch
          %502 = sbr.rel (%p500) target = $region16
        $region15: #{classification_network_forward.1} parent=11 // pred_region
          %s504 = ssub.s32 2112, 2112
          %505 = vsyncadd [#allocation3], %s504
          %s506 = sshll.u32 [#allocation2], 4
          %s507 = int_to_ptr.vmem [resolvable:$true] %s506
          %512 = dma.hbm_to_vmem [thread:$0]  %s1, 2112, %s507, [#allocation3], 64, 64, 4
        $region16: #{classification_network_forward.1} parent=11 // pred_fallthru
          _
        // Predicated region
        $region17: #{classification_network_forward.1} parent=11 // pred_check
          %p513 = pneg %p102
        $region18: #{classification_network_forward.1} parent=11 // pred_check_branch
          %515 = sbr.rel (%p513) target = $region20
        $region19: #{classification_network_forward.1} parent=11 // pred_region
          _
        $region20: #{classification_network_forward.1} parent=11 // pred_fallthru
          _
        // Predicated region
        $region21: #{classification_network_forward.1} parent=11 // pred_check
          %p516 = pneg %p123
        $region22: #{classification_network_forward.1} parent=11 // pred_check_branch
          %518 = sbr.rel (%p516) target = $region24
        $region23: #{classification_network_forward.1} parent=11 // pred_region
          _
        $region24: #{classification_network_forward.1} parent=11 // pred_fallthru
          _
        // Predicated region
        $region25: #{classification_network_forward.1} parent=11 // pred_check
          %p519 = pneg %p144
        $region26: #{classification_network_forward.1} parent=11 // pred_check_branch
          %521 = sbr.rel (%p519) target = $region28
        $region27: #{classification_network_forward.1} parent=11 // pred_region
          _
        $region28: #{classification_network_forward.1} parent=11 // pred_fallthru
          _
        // Predicated region
        $region29: #{classification_network_forward.1} parent=11 // pred_check
          %p522 = pneg %p165
        $region30: #{classification_network_forward.1} parent=11 // pred_check_branch
          %524 = sbr.rel (%p522) target = $region32
        $region31: #{classification_network_forward.1} parent=11 // pred_region
          _
        $region32: #{classification_network_forward.1} parent=11 // pred_fallthru
          _
        // Predicated region
        $region33: #{classification_network_forward.1} parent=11 // pred_check
          %p525 = pneg %p186
        $region34: #{classification_network_forward.1} parent=11 // pred_check_branch
          %527 = sbr.rel (%p525) target = $region36
        $region35: #{classification_network_forward.1} parent=11 // pred_region
          %s529 = ssub.s32 384, 384
          %530 = vsyncadd [#allocation6], %s529
          %s531 = sshll.u32 [#allocation5], 4
          %s532 = int_to_ptr.vmem [resolvable:$true] %s531
          %537 = dma.hbm_to_vmem [thread:$0]  %s6, 384, %s532, [#allocation6], 64, 64, 4
        $region36: #{classification_network_forward.1} parent=11 // pred_fallthru
          _
        // Predicated region
        $region37: #{classification_network_forward.1} parent=11 // pred_check
          %p538 = pneg %p207
        $region38: #{classification_network_forward.1} parent=11 // pred_check_branch
          %540 = sbr.rel (%p538) target = $region40
        $region39: #{classification_network_forward.1} parent=11 // pred_region
          %s542 = ssub.s32 4608, 4608
          %543 = vsyncadd [#allocation6], %s542
          %s544 = sshll.u32 [#allocation7], 4
          %s545 = int_to_ptr.vmem [resolvable:$true] %s544
          %550 = dma.hbm_to_vmem [thread:$0]  %s7, 4608, %s545, [#allocation6], 128, 128, 8
        $region40: #{classification_network_forward.1} parent=11 // pred_fallthru
          _
        // Predicated region
        $region41: #{classification_network_forward.1} parent=11 // pred_check
          %p551 = pneg %p228
        $region42: #{classification_network_forward.1} parent=11 // pred_check_branch
          %553 = sbr.rel (%p551) target = $region44
        $region43: #{classification_network_forward.1} parent=11 // pred_region
          _
        $region44: #{classification_network_forward.1} parent=11 // pred_fallthru
          _
        // Predicated region
        $region45: #{classification_network_forward.1} parent=11 // pred_check
          %p554 = pneg %p249
        $region46: #{classification_network_forward.1} parent=11 // pred_check_branch
          %556 = sbr.rel (%p554) target = $region48
        $region47: #{classification_network_forward.1} parent=11 // pred_region
          _
        $region48: #{classification_network_forward.1} parent=11 // pred_fallthru
          _
        // Predicated region
        $region49: #{classification_network_forward.1} parent=11 // pred_check
          %p557 = pneg %p270
        $region50: #{classification_network_forward.1} parent=11 // pred_check_branch
          %559 = sbr.rel (%p557) target = $region52
        $region51: #{classification_network_forward.1} parent=11 // pred_region
          %s561 = ssub.s32 32, 32
          %562 = vsyncadd [#allocation9], %s561
          %s564 = sshll.u32 [#allocation8], 4
          %s565 = int_to_ptr.vmem [resolvable:$true] %s564
          %567 = dma.hbm_to_vmem [thread:$0]  %s10, 32, %s565, [#allocation9]
        $region52: #{classification_network_forward.1} parent=11 // pred_fallthru
          _
        // Predicated region
        $region53: #{classification_network_forward.1} parent=11 // pred_check
          %p568 = pneg %p291
        $region54: #{classification_network_forward.1} parent=11 // pred_check_branch
          %570 = sbr.rel (%p568) target = $region56
        $region55: #{classification_network_forward.1} parent=11 // pred_region
          _
        $region56: #{classification_network_forward.1} parent=11 // pred_fallthru
          _
        // Predicated region
        $region57: #{classification_network_forward.1} parent=11 // pred_check
          %p571 = pneg %p312
        $region58: #{classification_network_forward.1} parent=11 // pred_check_branch
          %573 = sbr.rel (%p571) target = $region60
        $region59: #{classification_network_forward.1} parent=11 // pred_region
          _
        $region60: #{classification_network_forward.1} parent=11 // pred_fallthru
          _
        // Predicated region
        $region61: #{classification_network_forward.1} parent=11 // pred_check
          %p574 = pneg %p333
        $region62: #{classification_network_forward.1} parent=11 // pred_check_branch
          %576 = sbr.rel (%p574) target = $region64
        $region63: #{classification_network_forward.1} parent=11 // pred_region
          _
        $region64: #{classification_network_forward.1} parent=11 // pred_fallthru
          _
        // Predicated region
        $region65: #{classification_network_forward.1} parent=11 // pred_check
          %p577 = pneg %p354
        $region66: #{classification_network_forward.1} parent=11 // pred_check_branch
          %579 = sbr.rel (%p577) target = $region68
        $region67: #{classification_network_forward.1} parent=11 // pred_region
          _
        $region68: #{classification_network_forward.1} parent=11 // pred_fallthru
          _
        // Predicated region
        $region69: #{classification_network_forward.1} parent=11 // pred_check
          %p580 = pneg %p375
        $region70: #{classification_network_forward.1} parent=11 // pred_check_branch
          %582 = sbr.rel (%p580) target = $region72
        $region71: #{classification_network_forward.1} parent=11 // pred_region
          %s584 = ssub.s32 32, 32
          %585 = vsyncadd [#allocation9], %s584
          %s587 = sshll.u32 [#allocation10], 4
          %s588 = int_to_ptr.vmem [resolvable:$true] %s587
          %590 = dma.hbm_to_vmem [thread:$0]  %s15, 32, %s588, [#allocation9]
        $region72: #{classification_network_forward.1} parent=11 // pred_fallthru
          _
        // Predicated region
        $region73: #{classification_network_forward.1} parent=11 // pred_check
          %p591 = pneg %p396
        $region74: #{classification_network_forward.1} parent=11 // pred_check_branch
          %593 = sbr.rel (%p591) target = $region76
        $region75: #{classification_network_forward.1} parent=11 // pred_region
          %s595 = ssub.s32 4096, 4096
          %596 = vsyncadd [#allocation12], %s595
          %s597 = sshll.u32 [#allocation11], 4
          %s598 = int_to_ptr.vmem [resolvable:$true] %s597
          %603 = dma.hbm_to_vmem [thread:$0]  %s16, 4096, %s598, [#allocation12], 128, 128, 8
        $region76: #{classification_network_forward.1} parent=11 // pred_fallthru
          _
        // Predicated region
        $region77: #{classification_network_forward.1} parent=11 // pred_check
          %p604 = pneg %p417
        $region78: #{classification_network_forward.1} parent=11 // pred_check_branch
          %606 = sbr.rel (%p604) target = $region80
        $region79: #{classification_network_forward.1} parent=11 // pred_region
          %s608 = ssub.s32 32, 32
          %609 = vsyncadd [#allocation12], %s608
          %s611 = sshll.u32 [#allocation13], 4
          %s612 = int_to_ptr.vmem [resolvable:$true] %s611
          %614 = dma.hbm_to_vmem [thread:$0]  %s17, 32, %s612, [#allocation12]
        $region80: #{classification_network_forward.1} parent=11 // pred_fallthru
          _
        // Predicated region
        $region81: #{classification_network_forward.1} parent=11 // pred_check
          %p615 = pneg %p438
        $region82: #{classification_network_forward.1} parent=11 // pred_check_branch
          %617 = sbr.rel (%p615) target = $region84
        $region83: #{classification_network_forward.1} parent=11 // pred_region
          _
        $region84: #{classification_network_forward.1} parent=11 // pred_fallthru
          _
        // Predicated region
        $region85: #{classification_network_forward.1} parent=11 // pred_check
          %p618 = pneg %p459
        $region86: #{classification_network_forward.1} parent=11 // pred_check_branch
          %620 = sbr.rel (%p618) target = $region88
        $region87: #{classification_network_forward.1} parent=11 // pred_region
          %s622 = ssub.s32 16, 16
          %623 = vsyncadd [#allocation15], %s622
          %s625 = sshll.u32 [#allocation14], 4
          %s626 = int_to_ptr.vmem [resolvable:$true] %s625
          %628 = dma.hbm_to_vmem [thread:$0]  %s19, 16, %s626, [#allocation15]
        $region88: #{classification_network_forward.1} parent=11 // pred_fallthru
          _
      $region12: #{classification_network_forward.1} parent=5 // pred_fallthru
        _
      %p629 = scmp.lt.s32.totalorder %s34, 2
      // Predicated region
      $region89: #{classification_network_forward.1} parent=5 // pred_check
        %p630 = pneg %p629
      $region90: #{classification_network_forward.1} parent=5 // pred_check_branch
        %632 = sbr.rel (%p630) target = $region92
      $region91: #{classification_network_forward.1} parent=5 // pred_region
        // Predicated region
        $region93: #{classification_network_forward.1} parent=91 // pred_check
          %p633 = pneg %p54
        $region94: #{classification_network_forward.1} parent=91 // pred_check_branch
          %635 = sbr.rel (%p633) target = $region96
        $region95: #{classification_network_forward.1} parent=91 // pred_region
          %p636 = scmp.lt.s32.totalorder %s34, 1
          %s637 = scalar_select %p636, %s34, 1
          %s638 = smul.addr %s637, 7
          %s639 = smul.addr %s638, 8
          %s640 = scalar_lea.vmem %s0, %s639
        $region96: #{classification_network_forward.1} parent=91 // pred_fallthru
          _
      $region92: #{classification_network_forward.1} parent=5 // pred_fallthru
        _
      %p641 = scmp.le.s32.totalorder 1, %s34
      %p642 = scmp.lt.s32.totalorder %s34, 3
      %p643 = pnand %p641, %p642
      %p644 = pneg %p643
      // Predicated region
      $region97: #{classification_network_forward.1} parent=5 // pred_check
        _
      $region98: #{classification_network_forward.1} parent=5 // pred_check_branch
        %646 = sbr.rel (%p643) target = $region100
      $region99: #{classification_network_forward.1} parent=5 // pred_region
        %s647 = ssub.s32 %s34, 1
        // Predicated region
        $region101: #{classification_network_forward.1} parent=99 // pred_check
          %p648 = pneg %p81
        $region102: #{classification_network_forward.1} parent=99 // pred_check_branch
          %650 = sbr.rel (%p648) target = $region104
        $region103: #{classification_network_forward.1} parent=99 // pred_region
          %651 = dma.done [#allocation3], 2112
        $region104: #{classification_network_forward.1} parent=99 // pred_fallthru
          _
        // Predicated region
        $region105: #{classification_network_forward.1} parent=99 // pred_check
          %p652 = pneg %p186
        $region106: #{classification_network_forward.1} parent=99 // pred_check_branch
          %654 = sbr.rel (%p652) target = $region108
        $region107: #{classification_network_forward.1} parent=99 // pred_region
          %655 = dma.done [#allocation6], 384
        $region108: #{classification_network_forward.1} parent=99 // pred_fallthru
          _
        // Predicated region
        $region109: #{classification_network_forward.1} parent=99 // pred_check
          %p656 = pneg %p207
        $region110: #{classification_network_forward.1} parent=99 // pred_check_branch
          %658 = sbr.rel (%p656) target = $region112
        $region111: #{classification_network_forward.1} parent=99 // pred_region
          %659 = dma.done [#allocation6], 4608
        $region112: #{classification_network_forward.1} parent=99 // pred_fallthru
          _
        // Predicated region
        $region113: #{classification_network_forward.1} parent=99 // pred_check
          %p660 = pneg %p270
        $region114: #{classification_network_forward.1} parent=99 // pred_check_branch
          %662 = sbr.rel (%p660) target = $region116
        $region115: #{classification_network_forward.1} parent=99 // pred_region
          %663 = dma.done [#allocation9], 32
        $region116: #{classification_network_forward.1} parent=99 // pred_fallthru
          _
        // Predicated region
        $region117: #{classification_network_forward.1} parent=99 // pred_check
          %p664 = pneg %p375
        $region118: #{classification_network_forward.1} parent=99 // pred_check_branch
          %666 = sbr.rel (%p664) target = $region120
        $region119: #{classification_network_forward.1} parent=99 // pred_region
          %667 = dma.done [#allocation9], 32
        $region120: #{classification_network_forward.1} parent=99 // pred_fallthru
          _
        // Predicated region
        $region121: #{classification_network_forward.1} parent=99 // pred_check
          %p668 = pneg %p396
        $region122: #{classification_network_forward.1} parent=99 // pred_check_branch
          %670 = sbr.rel (%p668) target = $region124
        $region123: #{classification_network_forward.1} parent=99 // pred_region
          %671 = dma.done [#allocation12], 4096
        $region124: #{classification_network_forward.1} parent=99 // pred_fallthru
          _
        // Predicated region
        $region125: #{classification_network_forward.1} parent=99 // pred_check
          %p672 = pneg %p417
        $region126: #{classification_network_forward.1} parent=99 // pred_check_branch
          %674 = sbr.rel (%p672) target = $region128
        $region127: #{classification_network_forward.1} parent=99 // pred_region
          %675 = dma.done [#allocation12], 32
        $region128: #{classification_network_forward.1} parent=99 // pred_fallthru
          _
        // Predicated region
        $region129: #{classification_network_forward.1} parent=99 // pred_check
          %p676 = pneg %p459
        $region130: #{classification_network_forward.1} parent=99 // pred_check_branch
          %678 = sbr.rel (%p676) target = $region132
        $region131: #{classification_network_forward.1} parent=99 // pred_region
          %679 = dma.done [#allocation15], 16
        $region132: #{classification_network_forward.1} parent=99 // pred_fallthru
          _
        %p680 = scmp.lt.s32.totalorder %s39, 1
        %s681 = scalar_select %p680, %s39, 1
        %s682 = smul.addr %s681, 7
        %s683 = smul.addr %s682, 8
        %s684 = scalar_lea.vmem %s0, %s683
        %p685 = pneg %p60
        %p686 = pneg %p57
        %p687 = pneg %p81
        %p688 = pneg %p78
        %p689 = pneg %p102
        %p690 = pneg %p99
        %p691 = pneg %p123
        %p692 = pneg %p120
        %p693 = pneg %p144
        %p694 = pneg %p141
        %p695 = pneg %p165
        %p696 = pneg %p162
        %p697 = pneg %p186
        %p698 = pneg %p183
        %p699 = pneg %p207
        %p700 = pneg %p204
        %p701 = pneg %p228
        %p702 = pneg %p225
        %p703 = pneg %p249
        %p704 = pneg %p246
        %p705 = pneg %p270
        %p706 = pneg %p267
        %p707 = pneg %p291
        %p708 = pneg %p288
        %p709 = pneg %p312
        %p710 = pneg %p309
        %p711 = pneg %p333
        %p712 = pneg %p330
        %p713 = pneg %p354
        %p714 = pneg %p351
        %p715 = pneg %p375
        %p716 = pneg %p372
        %p717 = pneg %p396
        %p718 = pneg %p393
        %p719 = pneg %p417
        %p720 = pneg %p414
        %p721 = pneg %p438
        %p722 = pneg %p435
        %p723 = pneg %p459
        %p724 = pneg %p456
        %p725 = pneg %p485
        %p726 = pneg %p482
        %s727 = sand.u32 %s472, 1
        %s728 = scalar_lea.sflag [#allocation4], %s727
        %s729 = sand.u32 %s472, 1
        %s730 = scalar_lea.vmem [#allocation16], %s729
        %p731 = scmp.lt.s32.totalorder %s39, 1
        %s732 = scalar_select %p731, %s39, 1
        %s733 = smul.addr %s732, 7
        %s734 = smul.addr %s733, 8
        %s735 = scalar_lea.vmem %s0, %s734
        %v737 = vld [vmem:[%s735] sm:$0xff]
        %v738 = vld [vmem:[%s735 + $0x8] sm:$0xff]
        %v739 = vld [vmem:[%s735 + $0x10] sm:$0xff]
        %v740 = vld [vmem:[%s735 + $0x18] sm:$0xff]
        %v741 = vld [vmem:[%s735 + $0x20] sm:$0xff]
        %v742 = vld [vmem:[%s735 + $0x28] sm:$0xff]
        %v743 = vld [vmem:[%s735 + $0x30] sm:$0x3]
        %v744 = vpack.c.bf16 %v738, %v737
        %v745 = vpack.c.bf16 %v740, %v739
        %v746 = vpack.c.bf16 %v742, %v741
        %v747 = vpack.c.bf16 %v743, %v743
        %v748 = vld [vmem:[#allocation2] sm:$0xf]
        %v749 = vld [vmem:[#allocation2 + $0x4] sm:$0xf]
        %v750 = vld [vmem:[#allocation2 + $0x8] sm:$0xf]
        %v754 = vunpack.c.l.b16 %v748
        %v755 = vunpack.c.l.b16 %v749
        %v756 = vunpack.c.l.b16 %v750
        %v757 = vpack.c.b16 %v755, %v754
        %v758 = vpack.c.b16 %v756, %v756
        %vm759 = vcmask 408576
        %v761 = vsel %vm759, %v757, 0
        %v764 = vsel %vm759, %v758, 0
        %vm766 = vcmask 1040384
        %v768 = vsel %vm766, %v747, 0
        %770 = vmatprep.subr.bf16.mxu0 0
        %771 = vmatpush1.bf16.msra.mxu0 0
        %772 = vmatprep.subr.bf16.mxu0 0
        %773 = vmatpush1.bf16.msra.mxu0 0
        %774 = vmatprep.subr.bf16.mxu0 0
        %775 = vmatpush1.bf16.msra.mxu0 0
        %776 = vmatprep.subr.bf16.mxu0 0
        %777 = vmatpush1.bf16.msra.mxu0 0
        %778 = vmatprep.subr.bf16.mxu0 0
        %779 = vmatpush1.bf16.msra.mxu0 %v768
        %780 = vmatprep.subr.bf16.mxu0 0
        %781 = vmatpush1.bf16.msra.mxu0 %v746
        %782 = vmatprep.subr.bf16.mxu0 0
        %783 = vmatpush1.bf16.msra.mxu0 %v745
        %784 = vmatprep.subr.bf16.mxu0 0
        %785 = vmatpush1.bf16.msra.mxu0 %v744
        %786 = vmatprep.subr.bf16.mxu0 0
        %787 = vmatpush2.bf16.msra.mxu0 0
        %788 = vmatprep.subr.bf16.mxu0 0
        %789 = vmatpush2.bf16.msra.mxu0 0
        %790 = vmatprep.subr.bf16.mxu0 0
        %791 = vmatpush2.bf16.msra.mxu0 0
        %792 = vmatprep.subr.bf16.mxu0 0
        %793 = vmatpush2.bf16.msra.mxu0 0
        %794 = vmatprep.subr.bf16.mxu0 0
        %795 = vmatpush2.bf16.msra.mxu0 0
        %796 = vmatprep.subr.bf16.mxu0 0
        %797 = vmatpush2.bf16.msra.mxu0 0
        %798 = vmatprep.subr.bf16.mxu0 0
        %799 = vmatpush2.bf16.msra.mxu0 0
        %800 = vmatprep.subr.bf16.mxu0 0
        %801 = vmatpush2.bf16.msra.mxu0 0
        %802 = vmatprep.mubr.bf16.mxu0 0
        %803 = vmatmul.mubr.bf16.gmra.mxu0 %v761
        %v804 = vpop.f32.mrf.mxu0
        %v805 = vadd.f32 0.0, %v804
        %v806 = vpop.f32.mrf.mxu0
        %v807 = vpop.f32.mrf.mxu0
        %v808 = vadd.f32 0.0, %v807
        %v809 = vpop.f32.mrf.mxu0
        %810 = vmatprep.mubr.bf16.mxu0 0
        %811 = vmatmul.mubr.bf16.gmra.mxu0 %v764
        %v812 = vpop.f32.mrf.mxu0
        %v813 = vadd.f32 0.0, %v812
        %v814 = vpop.f32.mrf.mxu0
        %v815 = vpop.f32.mrf.mxu0
        %v816 = vpop.f32.mrf.mxu0
        %817 = vdwg.mxu0
        %v818 = vld [vmem:[%s2] sm:$0xff]
        %v819 = vld [vmem:[%s2 + $0x8] sm:$0xff]
        %v820 = vld [vmem:[%s2 + $0x10] sm:$0xff]
        %v821 = vld [vmem:[%s2 + $0x18] sm:$0xff]
        %v822 = vld [vmem:[%s2 + $0x20] sm:$0xff]
        %v823 = vld [vmem:[%s2 + $0x28] sm:$0xff]
        %v824 = vld [vmem:[%s2 + $0x30] sm:$0x11]
        %v825 = vpack.c.bf16 %v808, %v805
        %v826 = vpack.c.bf16 %v813, %v813
        %s827 = scalar_lea.vmem [#allocation2], 12
        %v828 = vld [vmem:[%s827] sm:$0xf]
        %v829 = vld [vmem:[%s827 + $0x4] sm:$0xf]
        %v830 = vld [vmem:[%s827 + $0x8] sm:$0xf]
        %v834 = vunpack.c.l.b16 %v828
        %v835 = vunpack.c.l.b16 %v829
        %v836 = vunpack.c.l.b16 %v830
        %v837 = vpack.c.b16 %v835, %v834
        %v838 = vpack.c.b16 %v836, %v836
        %v840 = vsel %vm759, %v837, 0
        %v843 = vsel %vm759, %v838, 0
        %845 = vmatprep.subr.bf16.mxu0 0
        %846 = vmatpush1.bf16.msra.mxu0 0
        %847 = vmatprep.subr.bf16.mxu0 0
        %848 = vmatpush1.bf16.msra.mxu0 0
        %849 = vmatprep.subr.bf16.mxu0 0
        %850 = vmatpush1.bf16.msra.mxu0 0
        %851 = vmatprep.subr.bf16.mxu0 0
        %852 = vmatpush1.bf16.msra.mxu0 0
        %853 = vmatprep.subr.bf16.mxu0 0
        %854 = vmatpush1.bf16.msra.mxu0 %v768
        %855 = vmatprep.subr.bf16.mxu0 0
        %856 = vmatpush1.bf16.msra.mxu0 %v746
        %857 = vmatprep.subr.bf16.mxu0 0
        %858 = vmatpush1.bf16.msra.mxu0 %v745
        %859 = vmatprep.subr.bf16.mxu0 0
        %860 = vmatpush1.bf16.msra.mxu0 %v744
        %861 = vmatprep.subr.bf16.mxu0 0
        %862 = vmatpush2.bf16.msra.mxu0 0
        %863 = vmatprep.subr.bf16.mxu0 0
        %864 = vmatpush2.bf16.msra.mxu0 0
        %865 = vmatprep.subr.bf16.mxu0 0
        %866 = vmatpush2.bf16.msra.mxu0 0
        %867 = vmatprep.subr.bf16.mxu0 0
        %868 = vmatpush2.bf16.msra.mxu0 0
        %869 = vmatprep.subr.bf16.mxu0 0
        %870 = vmatpush2.bf16.msra.mxu0 0
        %871 = vmatprep.subr.bf16.mxu0 0
        %872 = vmatpush2.bf16.msra.mxu0 0
        %873 = vmatprep.subr.bf16.mxu0 0
        %874 = vmatpush2.bf16.msra.mxu0 0
        %875 = vmatprep.subr.bf16.mxu0 0
        %876 = vmatpush2.bf16.msra.mxu0 0
        %877 = vmatprep.mubr.bf16.mxu0 0
        %878 = vmatmul.mubr.bf16.gmra.mxu0 %v840
        %v879 = vpop.f32.mrf.mxu0
        %v880 = vadd.f32 0.0, %v879
        %v881 = vpop.f32.mrf.mxu0
        %v882 = vpop.f32.mrf.mxu0
        %v883 = vadd.f32 0.0, %v882
        %v884 = vpop.f32.mrf.mxu0
        %885 = vmatprep.mubr.bf16.mxu0 0
        %886 = vmatmul.mubr.bf16.gmra.mxu0 %v843
        %v887 = vpop.f32.mrf.mxu0
        %v888 = vadd.f32 0.0, %v887
        %v889 = vpop.f32.mrf.mxu0
        %v890 = vpop.f32.mrf.mxu0
        %v891 = vpop.f32.mrf.mxu0
        %892 = vdwg.mxu0
        %s893 = scalar_lea.vmem %s2, 56
        %v894 = vld [vmem:[%s893] sm:$0xff]
        %v895 = vld [vmem:[%s893 + $0x8] sm:$0xff]
        %v896 = vld [vmem:[%s893 + $0x10] sm:$0xff]
        %v897 = vld [vmem:[%s893 + $0x18] sm:$0xff]
        %v898 = vld [vmem:[%s893 + $0x20] sm:$0xff]
        %v899 = vld [vmem:[%s893 + $0x28] sm:$0xff]
        %v900 = vld [vmem:[%s893 + $0x30] sm:$0x11]
        %v901 = vpack.c.bf16 %v883, %v880
        %v902 = vpack.c.bf16 %v888, %v888
        %v910 = vunpack.c.l.b16 %v894
        %v911 = vunpack.c.h.b16 %v894
        %v912 = vunpack.c.l.b16 %v895
        %v913 = vunpack.c.h.b16 %v895
        %v914 = vunpack.c.l.b16 %v896
        %v915 = vunpack.c.h.b16 %v896
        %v916 = vunpack.c.l.b16 %v897
        %v917 = vunpack.c.h.b16 %v897
        %v918 = vunpack.c.l.b16 %v898
        %v919 = vunpack.c.h.b16 %v898
        %v920 = vunpack.c.l.b16 %v899
        %v921 = vunpack.c.h.b16 %v899
        %v922 = vunpack.c.l.b16 %v900
        %v923 = vunpack.c.h.b16 %v900
        %v924 = vpack.c.b16 %v912, %v910
        %v925 = vpack.c.b16 %v913, %v911
        %v926 = vpack.c.b16 %v916, %v914
        %v927 = vpack.c.b16 %v917, %v915
        %v928 = vpack.c.b16 %v920, %v918
        %v929 = vpack.c.b16 %v921, %v919
        %v930 = vpack.c.b16 %v922, %v922
        %v931 = vpack.c.b16 %v923, %v923
        %v939 = vsel %vm759, %v901, 0
        %v942 = vsel %vm759, %v902, 0
        %v945 = vsel %vm766, %v930, 0
        %v948 = vsel %vm766, %v931, 0
        %950 = vmatprep.subr.bf16.mxu0 0
        %951 = vmatpush1.bf16.msra.mxu0 0
        %952 = vmatprep.subr.bf16.mxu0 0
        %953 = vmatpush1.bf16.msra.mxu0 0
        %954 = vmatprep.subr.bf16.mxu0 0
        %955 = vmatpush1.bf16.msra.mxu0 0
        %956 = vmatprep.subr.bf16.mxu0 0
        %957 = vmatpush1.bf16.msra.mxu0 0
        %958 = vmatprep.subr.bf16.mxu0 %v948
        %959 = vmatpush1.bf16.msra.mxu0 %v945
        %960 = vmatprep.subr.bf16.mxu0 %v929
        %961 = vmatpush1.bf16.msra.mxu0 %v928
        %962 = vmatprep.subr.bf16.mxu0 %v927
        %963 = vmatpush1.bf16.msra.mxu0 %v926
        %964 = vmatprep.subr.bf16.mxu0 %v925
        %965 = vmatpush1.bf16.msra.mxu0 %v924
        %966 = vmatprep.subr.bf16.mxu0 0
        %967 = vmatpush2.bf16.msra.mxu0 0
        %968 = vmatprep.subr.bf16.mxu0 0
        %969 = vmatpush2.bf16.msra.mxu0 0
        %970 = vmatprep.subr.bf16.mxu0 0
        %971 = vmatpush2.bf16.msra.mxu0 0
        %972 = vmatprep.subr.bf16.mxu0 0
        %973 = vmatpush2.bf16.msra.mxu0 0
        %974 = vmatprep.subr.bf16.mxu0 0
        %975 = vmatpush2.bf16.msra.mxu0 0
        %976 = vmatprep.subr.bf16.mxu0 0
        %977 = vmatpush2.bf16.msra.mxu0 0
        %978 = vmatprep.subr.bf16.mxu0 0
        %979 = vmatpush2.bf16.msra.mxu0 0
        %980 = vmatprep.subr.bf16.mxu0 0
        %981 = vmatpush2.bf16.msra.mxu0 0
        %982 = vmatprep.mubr.bf16.mxu0 0
        %983 = vmatmul.mubr.bf16.gmra.mxu0 %v939
        %v984 = vpop.f32.mrf.mxu0
        %v985 = vadd.f32 0.0, %v984
        %v986 = vpop.f32.mrf.mxu0
        %v987 = vadd.f32 0.0, %v986
        %v988 = vpop.f32.mrf.mxu0
        %v989 = vadd.f32 0.0, %v988
        %v990 = vpop.f32.mrf.mxu0
        %v991 = vadd.f32 0.0, %v990
        %992 = vmatprep.mubr.bf16.mxu0 0
        %993 = vmatmul.mubr.bf16.gmra.mxu0 %v942
        %v994 = vpop.f32.mrf.mxu0
        %v995 = vadd.f32 0.0, %v994
        %v996 = vpop.f32.mrf.mxu0
        %v997 = vadd.f32 0.0, %v996
        %v998 = vpop.f32.mrf.mxu0
        %v999 = vpop.f32.mrf.mxu0
        %1000 = vdwg.mxu0
        %v1008 = vunpack.c.l.b16 %v818
        %v1009 = vunpack.c.h.b16 %v818
        %v1010 = vunpack.c.l.b16 %v819
        %v1011 = vunpack.c.h.b16 %v819
        %v1012 = vunpack.c.l.b16 %v820
        %v1013 = vunpack.c.h.b16 %v820
        %v1014 = vunpack.c.l.b16 %v821
        %v1015 = vunpack.c.h.b16 %v821
        %v1016 = vunpack.c.l.b16 %v822
        %v1017 = vunpack.c.h.b16 %v822
        %v1018 = vunpack.c.l.b16 %v823
        %v1019 = vunpack.c.h.b16 %v823
        %v1020 = vunpack.c.l.b16 %v824
        %v1021 = vunpack.c.h.b16 %v824
        %v1022 = vpack.c.b16 %v1010, %v1008
        %v1023 = vpack.c.b16 %v1011, %v1009
        %v1024 = vpack.c.b16 %v1014, %v1012
        %v1025 = vpack.c.b16 %v1015, %v1013
        %v1026 = vpack.c.b16 %v1018, %v1016
        %v1027 = vpack.c.b16 %v1019, %v1017
        %v1028 = vpack.c.b16 %v1020, %v1020
        %v1029 = vpack.c.b16 %v1021, %v1021
        %v1037 = vsel %vm759, %v825, 0
        %v1040 = vsel %vm759, %v826, 0
        %v1043 = vsel %vm766, %v1028, 0
        %v1046 = vsel %vm766, %v1029, 0
        %1048 = vmatprep.subr.bf16.mxu0 0
        %1049 = vmatpush1.bf16.msra.mxu0 0
        %1050 = vmatprep.subr.bf16.mxu0 0
        %1051 = vmatpush1.bf16.msra.mxu0 0
        %1052 = vmatprep.subr.bf16.mxu0 0
        %1053 = vmatpush1.bf16.msra.mxu0 0
        %1054 = vmatprep.subr.bf16.mxu0 0
        %1055 = vmatpush1.bf16.msra.mxu0 0
        %1056 = vmatprep.subr.bf16.mxu0 %v1046
        %1057 = vmatpush1.bf16.msra.mxu0 %v1043
        %1058 = vmatprep.subr.bf16.mxu0 %v1027
        %1059 = vmatpush1.bf16.msra.mxu0 %v1026
        %1060 = vmatprep.subr.bf16.mxu0 %v1025
        %1061 = vmatpush1.bf16.msra.mxu0 %v1024
        %1062 = vmatprep.subr.bf16.mxu0 %v1023
        %1063 = vmatpush1.bf16.msra.mxu0 %v1022
        %1064 = vmatprep.subr.bf16.mxu0 0
        %1065 = vmatpush2.bf16.msra.mxu0 0
        %1066 = vmatprep.subr.bf16.mxu0 0
        %1067 = vmatpush2.bf16.msra.mxu0 0
        %1068 = vmatprep.subr.bf16.mxu0 0
        %1069 = vmatpush2.bf16.msra.mxu0 0
        %1070 = vmatprep.subr.bf16.mxu0 0
        %1071 = vmatpush2.bf16.msra.mxu0 0
        %1072 = vmatprep.subr.bf16.mxu0 0
        %1073 = vmatpush2.bf16.msra.mxu0 0
        %1074 = vmatprep.subr.bf16.mxu0 0
        %1075 = vmatpush2.bf16.msra.mxu0 0
        %1076 = vmatprep.subr.bf16.mxu0 0
        %1077 = vmatpush2.bf16.msra.mxu0 0
        %1078 = vmatprep.subr.bf16.mxu0 0
        %1079 = vmatpush2.bf16.msra.mxu0 0
        %1080 = vmatprep.mubr.bf16.mxu0 0
        %1081 = vmatmul.mubr.bf16.gmra.mxu0 %v1037
        %v1082 = vpop.f32.mrf.mxu0
        %v1083 = vadd.f32 %v985, %v1082
        %v1084 = vpop.f32.mrf.mxu0
        %v1085 = vadd.f32 %v987, %v1084
        %v1086 = vpop.f32.mrf.mxu0
        %v1087 = vadd.f32 %v989, %v1086
        %v1088 = vpop.f32.mrf.mxu0
        %v1089 = vadd.f32 %v991, %v1088
        %1090 = vmatprep.mubr.bf16.mxu0 0
        %1091 = vmatmul.mubr.bf16.gmra.mxu0 %v1040
        %v1092 = vpop.f32.mrf.mxu0
        %v1093 = vadd.f32 %v995, %v1092
        %v1094 = vpop.f32.mrf.mxu0
        %v1095 = vadd.f32 %v997, %v1094
        %v1096 = vpop.f32.mrf.mxu0
        %v1097 = vpop.f32.mrf.mxu0
        %1098 = vdwg.mxu0
        %s1099 = scalar_lea.vmem [#allocation2], 24
        %v1100 = vld [vmem:[%s1099] sm:$0xf]
        %v1101 = vld [vmem:[%s1099 + $0x4] sm:$0xf]
        %v1102 = vld [vmem:[%s1099 + $0x8] sm:$0xf]
        %v1106 = vunpack.c.l.b16 %v1100
        %v1107 = vunpack.c.l.b16 %v1101
        %v1108 = vunpack.c.l.b16 %v1102
        %v1109 = vpack.c.b16 %v1107, %v1106
        %v1110 = vpack.c.b16 %v1108, %v1108
        %v1112 = vsel %vm759, %v1109, 0
        %v1115 = vsel %vm759, %v1110, 0
        %1117 = vmatprep.subr.bf16.mxu0 0
        %1118 = vmatpush1.bf16.msra.mxu0 0
        %1119 = vmatprep.subr.bf16.mxu0 0
        %1120 = vmatpush1.bf16.msra.mxu0 0
        %1121 = vmatprep.subr.bf16.mxu0 0
        %1122 = vmatpush1.bf16.msra.mxu0 0
        %1123 = vmatprep.subr.bf16.mxu0 0
        %1124 = vmatpush1.bf16.msra.mxu0 0
        %1125 = vmatprep.subr.bf16.mxu0 0
        %1126 = vmatpush1.bf16.msra.mxu0 %v768
        %1127 = vmatprep.subr.bf16.mxu0 0
        %1128 = vmatpush1.bf16.msra.mxu0 %v746
        %1129 = vmatprep.subr.bf16.mxu0 0
        %1130 = vmatpush1.bf16.msra.mxu0 %v745
        %1131 = vmatprep.subr.bf16.mxu0 0
        %1132 = vmatpush1.bf16.msra.mxu0 %v744
        %1133 = vmatprep.subr.bf16.mxu0 0
        %1134 = vmatpush2.bf16.msra.mxu0 0
        %1135 = vmatprep.subr.bf16.mxu0 0
        %1136 = vmatpush2.bf16.msra.mxu0 0
        %1137 = vmatprep.subr.bf16.mxu0 0
        %1138 = vmatpush2.bf16.msra.mxu0 0
        %1139 = vmatprep.subr.bf16.mxu0 0
        %1140 = vmatpush2.bf16.msra.mxu0 0
        %1141 = vmatprep.subr.bf16.mxu0 0
        %1142 = vmatpush2.bf16.msra.mxu0 0
        %1143 = vmatprep.subr.bf16.mxu0 0
        %1144 = vmatpush2.bf16.msra.mxu0 0
        %1145 = vmatprep.subr.bf16.mxu0 0
        %1146 = vmatpush2.bf16.msra.mxu0 0
        %1147 = vmatprep.subr.bf16.mxu0 0
        %1148 = vmatpush2.bf16.msra.mxu0 0
        %1149 = vmatprep.mubr.bf16.mxu0 0
        %1150 = vmatmul.mubr.bf16.gmra.mxu0 %v1112
        %v1151 = vpop.f32.mrf.mxu0
        %v1152 = vadd.f32 0.0, %v1151
        %v1153 = vpop.f32.mrf.mxu0
        %v1154 = vpop.f32.mrf.mxu0
        %v1155 = vadd.f32 0.0, %v1154
        %v1156 = vpop.f32.mrf.mxu0
        %1157 = vmatprep.mubr.bf16.mxu0 0
        %1158 = vmatmul.mubr.bf16.gmra.mxu0 %v1115
        %v1159 = vpop.f32.mrf.mxu0
        %v1160 = vadd.f32 0.0, %v1159
        %v1161 = vpop.f32.mrf.mxu0
        %v1162 = vpop.f32.mrf.mxu0
        %v1163 = vpop.f32.mrf.mxu0
        %1164 = vdwg.mxu0
        %s1165 = scalar_lea.vmem %s2, 112
        %v1166 = vld [vmem:[%s1165] sm:$0xff]
        %v1167 = vld [vmem:[%s1165 + $0x8] sm:$0xff]
        %v1168 = vld [vmem:[%s1165 + $0x10] sm:$0xff]
        %v1169 = vld [vmem:[%s1165 + $0x18] sm:$0xff]
        %v1170 = vld [vmem:[%s1165 + $0x20] sm:$0xff]
        %v1171 = vld [vmem:[%s1165 + $0x28] sm:$0xff]
        %v1172 = vld [vmem:[%s1165 + $0x30] sm:$0x11]
        %v1173 = vpack.c.bf16 %v1155, %v1152
        %v1174 = vpack.c.bf16 %v1160, %v1160
        %v1182 = vunpack.c.l.b16 %v1166
        %v1183 = vunpack.c.h.b16 %v1166
        %v1184 = vunpack.c.l.b16 %v1167
        %v1185 = vunpack.c.h.b16 %v1167
        %v1186 = vunpack.c.l.b16 %v1168
        %v1187 = vunpack.c.h.b16 %v1168
        %v1188 = vunpack.c.l.b16 %v1169
        %v1189 = vunpack.c.h.b16 %v1169
        %v1190 = vunpack.c.l.b16 %v1170
        %v1191 = vunpack.c.h.b16 %v1170
        %v1192 = vunpack.c.l.b16 %v1171
        %v1193 = vunpack.c.h.b16 %v1171
        %v1194 = vunpack.c.l.b16 %v1172
        %v1195 = vunpack.c.h.b16 %v1172
        %v1196 = vpack.c.b16 %v1184, %v1182
        %v1197 = vpack.c.b16 %v1185, %v1183
        %v1198 = vpack.c.b16 %v1188, %v1186
        %v1199 = vpack.c.b16 %v1189, %v1187
        %v1200 = vpack.c.b16 %v1192, %v1190
        %v1201 = vpack.c.b16 %v1193, %v1191
        %v1202 = vpack.c.b16 %v1194, %v1194
        %v1203 = vpack.c.b16 %v1195, %v1195
        %v1211 = vsel %vm759, %v1173, 0
        %v1214 = vsel %vm759, %v1174, 0
        %v1217 = vsel %vm766, %v1202, 0
        %v1220 = vsel %vm766, %v1203, 0
        %1222 = vmatprep.subr.bf16.mxu0 0
        %1223 = vmatpush1.bf16.msra.mxu0 0
        %1224 = vmatprep.subr.bf16.mxu0 0
        %1225 = vmatpush1.bf16.msra.mxu0 0
        %1226 = vmatprep.subr.bf16.mxu0 0
        %1227 = vmatpush1.bf16.msra.mxu0 0
        %1228 = vmatprep.subr.bf16.mxu0 0
        %1229 = vmatpush1.bf16.msra.mxu0 0
        %1230 = vmatprep.subr.bf16.mxu0 %v1220
        %1231 = vmatpush1.bf16.msra.mxu0 %v1217
        %1232 = vmatprep.subr.bf16.mxu0 %v1201
        %1233 = vmatpush1.bf16.msra.mxu0 %v1200
        %1234 = vmatprep.subr.bf16.mxu0 %v1199
        %1235 = vmatpush1.bf16.msra.mxu0 %v1198
        %1236 = vmatprep.subr.bf16.mxu0 %v1197
        %1237 = vmatpush1.bf16.msra.mxu0 %v1196
        %1238 = vmatprep.subr.bf16.mxu0 0
        %1239 = vmatpush2.bf16.msra.mxu0 0
        %1240 = vmatprep.subr.bf16.mxu0 0
        %1241 = vmatpush2.bf16.msra.mxu0 0
        %1242 = vmatprep.subr.bf16.mxu0 0
        %1243 = vmatpush2.bf16.msra.mxu0 0
        %1244 = vmatprep.subr.bf16.mxu0 0
        %1245 = vmatpush2.bf16.msra.mxu0 0
        %1246 = vmatprep.subr.bf16.mxu0 0
        %1247 = vmatpush2.bf16.msra.mxu0 0
        %1248 = vmatprep.subr.bf16.mxu0 0
        %1249 = vmatpush2.bf16.msra.mxu0 0
        %1250 = vmatprep.subr.bf16.mxu0 0
        %1251 = vmatpush2.bf16.msra.mxu0 0
        %1252 = vmatprep.subr.bf16.mxu0 0
        %1253 = vmatpush2.bf16.msra.mxu0 0
        %1254 = vmatprep.mubr.bf16.mxu0 0
        %1255 = vmatmul.mubr.bf16.gmra.mxu0 %v1211
        %v1256 = vpop.f32.mrf.mxu0
        %v1257 = vadd.f32 0.0, %v1256
        %v1258 = vpop.f32.mrf.mxu0
        %v1259 = vadd.f32 0.0, %v1258
        %v1260 = vpop.f32.mrf.mxu0
        %v1261 = vadd.f32 0.0, %v1260
        %v1262 = vpop.f32.mrf.mxu0
        %v1263 = vadd.f32 0.0, %v1262
        %1264 = vmatprep.mubr.bf16.mxu0 0
        %1265 = vmatmul.mubr.bf16.gmra.mxu0 %v1214
        %v1266 = vpop.f32.mrf.mxu0
        %v1267 = vadd.f32 0.0, %v1266
        %v1268 = vpop.f32.mrf.mxu0
        %v1269 = vadd.f32 0.0, %v1268
        %v1270 = vpop.f32.mrf.mxu0
        %v1271 = vpop.f32.mrf.mxu0
        %1272 = vdwg.mxu0
        %v1273 = vadd.f32 %v1083, %v1257
        %v1274 = vadd.f32 %v1085, %v1259
        %v1275 = vadd.f32 %v1087, %v1261
        %v1276 = vadd.f32 %v1089, %v1263
        %v1277 = vadd.f32 %v1093, %v1267
        %v1278 = vadd.f32 %v1095, %v1269
        %s1279 = scalar_lea.vmem [#allocation2], 36
        %v1280 = vld [vmem:[%s1279] sm:$0xf]
        %v1281 = vld [vmem:[%s1279 + $0x4] sm:$0xf]
        %v1282 = vld [vmem:[%s1279 + $0x8] sm:$0xf]
        %v1286 = vunpack.c.l.b16 %v1280
        %v1287 = vunpack.c.l.b16 %v1281
        %v1288 = vunpack.c.l.b16 %v1282
        %v1289 = vpack.c.b16 %v1287, %v1286
        %v1290 = vpack.c.b16 %v1288, %v1288
        %v1292 = vsel %vm759, %v1289, 0
        %v1295 = vsel %vm759, %v1290, 0
        %1297 = vmatprep.subr.bf16.mxu0 0
        %1298 = vmatpush1.bf16.msra.mxu0 0
        %1299 = vmatprep.subr.bf16.mxu0 0
        %1300 = vmatpush1.bf16.msra.mxu0 0
        %1301 = vmatprep.subr.bf16.mxu0 0
        %1302 = vmatpush1.bf16.msra.mxu0 0
        %1303 = vmatprep.subr.bf16.mxu0 0
        %1304 = vmatpush1.bf16.msra.mxu0 0
        %1305 = vmatprep.subr.bf16.mxu0 0
        %1306 = vmatpush1.bf16.msra.mxu0 %v768
        %1307 = vmatprep.subr.bf16.mxu0 0
        %1308 = vmatpush1.bf16.msra.mxu0 %v746
        %1309 = vmatprep.subr.bf16.mxu0 0
        %1310 = vmatpush1.bf16.msra.mxu0 %v745
        %1311 = vmatprep.subr.bf16.mxu0 0
        %1312 = vmatpush1.bf16.msra.mxu0 %v744
        %1313 = vmatprep.subr.bf16.mxu0 0
        %1314 = vmatpush2.bf16.msra.mxu0 0
        %1315 = vmatprep.subr.bf16.mxu0 0
        %1316 = vmatpush2.bf16.msra.mxu0 0
        %1317 = vmatprep.subr.bf16.mxu0 0
        %1318 = vmatpush2.bf16.msra.mxu0 0
        %1319 = vmatprep.subr.bf16.mxu0 0
        %1320 = vmatpush2.bf16.msra.mxu0 0
        %1321 = vmatprep.subr.bf16.mxu0 0
        %1322 = vmatpush2.bf16.msra.mxu0 0
        %1323 = vmatprep.subr.bf16.mxu0 0
        %1324 = vmatpush2.bf16.msra.mxu0 0
        %1325 = vmatprep.subr.bf16.mxu0 0
        %1326 = vmatpush2.bf16.msra.mxu0 0
        %1327 = vmatprep.subr.bf16.mxu0 0
        %1328 = vmatpush2.bf16.msra.mxu0 0
        %1329 = vmatprep.mubr.bf16.mxu0 0
        %1330 = vmatmul.mubr.bf16.gmra.mxu0 %v1292
        %v1331 = vpop.f32.mrf.mxu0
        %v1332 = vadd.f32 0.0, %v1331
        %v1333 = vpop.f32.mrf.mxu0
        %v1334 = vpop.f32.mrf.mxu0
        %v1335 = vadd.f32 0.0, %v1334
        %v1336 = vpop.f32.mrf.mxu0
        %1337 = vmatprep.mubr.bf16.mxu0 0
        %1338 = vmatmul.mubr.bf16.gmra.mxu0 %v1295
        %v1339 = vpop.f32.mrf.mxu0
        %v1340 = vadd.f32 0.0, %v1339
        %v1341 = vpop.f32.mrf.mxu0
        %v1342 = vpop.f32.mrf.mxu0
        %v1343 = vpop.f32.mrf.mxu0
        %1344 = vdwg.mxu0
        %s1345 = scalar_lea.vmem %s2, 168
        %v1346 = vld [vmem:[%s1345] sm:$0xff]
        %v1347 = vld [vmem:[%s1345 + $0x8] sm:$0xff]
        %v1348 = vld [vmem:[%s1345 + $0x10] sm:$0xff]
        %v1349 = vld [vmem:[%s1345 + $0x18] sm:$0xff]
        %v1350 = vld [vmem:[%s1345 + $0x20] sm:$0xff]
        %v1351 = vld [vmem:[%s1345 + $0x28] sm:$0xff]
        %v1352 = vld [vmem:[%s1345 + $0x30] sm:$0x11]
        %v1353 = vpack.c.bf16 %v1335, %v1332
        %v1354 = vpack.c.bf16 %v1340, %v1340
        %v1362 = vunpack.c.l.b16 %v1346
        %v1363 = vunpack.c.h.b16 %v1346
        %v1364 = vunpack.c.l.b16 %v1347
        %v1365 = vunpack.c.h.b16 %v1347
        %v1366 = vunpack.c.l.b16 %v1348
        %v1367 = vunpack.c.h.b16 %v1348
        %v1368 = vunpack.c.l.b16 %v1349
        %v1369 = vunpack.c.h.b16 %v1349
        %v1370 = vunpack.c.l.b16 %v1350
        %v1371 = vunpack.c.h.b16 %v1350
        %v1372 = vunpack.c.l.b16 %v1351
        %v1373 = vunpack.c.h.b16 %v1351
        %v1374 = vunpack.c.l.b16 %v1352
        %v1375 = vunpack.c.h.b16 %v1352
        %v1376 = vpack.c.b16 %v1364, %v1362
        %v1377 = vpack.c.b16 %v1365, %v1363
        %v1378 = vpack.c.b16 %v1368, %v1366
        %v1379 = vpack.c.b16 %v1369, %v1367
        %v1380 = vpack.c.b16 %v1372, %v1370
        %v1381 = vpack.c.b16 %v1373, %v1371
        %v1382 = vpack.c.b16 %v1374, %v1374
        %v1383 = vpack.c.b16 %v1375, %v1375
        %v1391 = vsel %vm759, %v1353, 0
        %v1394 = vsel %vm759, %v1354, 0
        %v1397 = vsel %vm766, %v1382, 0
        %v1400 = vsel %vm766, %v1383, 0
        %1402 = vmatprep.subr.bf16.mxu0 0
        %1403 = vmatpush1.bf16.msra.mxu0 0
        %1404 = vmatprep.subr.bf16.mxu0 0
        %1405 = vmatpush1.bf16.msra.mxu0 0
        %1406 = vmatprep.subr.bf16.mxu0 0
        %1407 = vmatpush1.bf16.msra.mxu0 0
        %1408 = vmatprep.subr.bf16.mxu0 0
        %1409 = vmatpush1.bf16.msra.mxu0 0
        %1410 = vmatprep.subr.bf16.mxu0 %v1400
        %1411 = vmatpush1.bf16.msra.mxu0 %v1397
        %1412 = vmatprep.subr.bf16.mxu0 %v1381
        %1413 = vmatpush1.bf16.msra.mxu0 %v1380
        %1414 = vmatprep.subr.bf16.mxu0 %v1379
        %1415 = vmatpush1.bf16.msra.mxu0 %v1378
        %1416 = vmatprep.subr.bf16.mxu0 %v1377
        %1417 = vmatpush1.bf16.msra.mxu0 %v1376
        %1418 = vmatprep.subr.bf16.mxu0 0
        %1419 = vmatpush2.bf16.msra.mxu0 0
        %1420 = vmatprep.subr.bf16.mxu0 0
        %1421 = vmatpush2.bf16.msra.mxu0 0
        %1422 = vmatprep.subr.bf16.mxu0 0
        %1423 = vmatpush2.bf16.msra.mxu0 0
        %1424 = vmatprep.subr.bf16.mxu0 0
        %1425 = vmatpush2.bf16.msra.mxu0 0
        %1426 = vmatprep.subr.bf16.mxu0 0
        %1427 = vmatpush2.bf16.msra.mxu0 0
        %1428 = vmatprep.subr.bf16.mxu0 0
        %1429 = vmatpush2.bf16.msra.mxu0 0
        %1430 = vmatprep.subr.bf16.mxu0 0
        %1431 = vmatpush2.bf16.msra.mxu0 0
        %1432 = vmatprep.subr.bf16.mxu0 0
        %1433 = vmatpush2.bf16.msra.mxu0 0
        %1434 = vmatprep.mubr.bf16.mxu0 0
        %1435 = vmatmul.mubr.bf16.gmra.mxu0 %v1391
        %v1436 = vpop.f32.mrf.mxu0
        %v1437 = vadd.f32 0.0, %v1436
        %v1438 = vpop.f32.mrf.mxu0
        %v1439 = vadd.f32 0.0, %v1438
        %v1440 = vpop.f32.mrf.mxu0
        %v1441 = vadd.f32 0.0, %v1440
        %v1442 = vpop.f32.mrf.mxu0
        %v1443 = vadd.f32 0.0, %v1442
        %1444 = vmatprep.mubr.bf16.mxu0 0
        %1445 = vmatmul.mubr.bf16.gmra.mxu0 %v1394
        %v1446 = vpop.f32.mrf.mxu0
        %v1447 = vadd.f32 0.0, %v1446
        %v1448 = vpop.f32.mrf.mxu0
        %v1449 = vadd.f32 0.0, %v1448
        %v1450 = vpop.f32.mrf.mxu0
        %v1451 = vpop.f32.mrf.mxu0
        %1452 = vdwg.mxu0
        %v1453 = vadd.f32 %v1273, %v1437
        %v1454 = vadd.f32 %v1274, %v1439
        %v1455 = vadd.f32 %v1275, %v1441
        %v1456 = vadd.f32 %v1276, %v1443
        %v1457 = vadd.f32 %v1277, %v1447
        %v1458 = vadd.f32 %v1278, %v1449
        %s1459 = scalar_lea.vmem [#allocation2], 48
        %v1460 = vld [vmem:[%s1459] sm:$0xf]
        %v1461 = vld [vmem:[%s1459 + $0x4] sm:$0xf]
        %v1462 = vld [vmem:[%s1459 + $0x8] sm:$0xf]
        %v1466 = vunpack.c.l.b16 %v1460
        %v1467 = vunpack.c.l.b16 %v1461
        %v1468 = vunpack.c.l.b16 %v1462
        %v1469 = vpack.c.b16 %v1467, %v1466
        %v1470 = vpack.c.b16 %v1468, %v1468
        %v1472 = vsel %vm759, %v1469, 0
        %v1475 = vsel %vm759, %v1470, 0
        %1477 = vmatprep.subr.bf16.mxu0 0
        %1478 = vmatpush1.bf16.msra.mxu0 0
        %1479 = vmatprep.subr.bf16.mxu0 0
        %1480 = vmatpush1.bf16.msra.mxu0 0
        %1481 = vmatprep.subr.bf16.mxu0 0
        %1482 = vmatpush1.bf16.msra.mxu0 0
        %1483 = vmatprep.subr.bf16.mxu0 0
        %1484 = vmatpush1.bf16.msra.mxu0 0
        %1485 = vmatprep.subr.bf16.mxu0 0
        %1486 = vmatpush1.bf16.msra.mxu0 %v768
        %1487 = vmatprep.subr.bf16.mxu0 0
        %1488 = vmatpush1.bf16.msra.mxu0 %v746
        %1489 = vmatprep.subr.bf16.mxu0 0
        %1490 = vmatpush1.bf16.msra.mxu0 %v745
        %1491 = vmatprep.subr.bf16.mxu0 0
        %1492 = vmatpush1.bf16.msra.mxu0 %v744
        %1493 = vmatprep.subr.bf16.mxu0 0
        %1494 = vmatpush2.bf16.msra.mxu0 0
        %1495 = vmatprep.subr.bf16.mxu0 0
        %1496 = vmatpush2.bf16.msra.mxu0 0
        %1497 = vmatprep.subr.bf16.mxu0 0
        %1498 = vmatpush2.bf16.msra.mxu0 0
        %1499 = vmatprep.subr.bf16.mxu0 0
        %1500 = vmatpush2.bf16.msra.mxu0 0
        %1501 = vmatprep.subr.bf16.mxu0 0
        %1502 = vmatpush2.bf16.msra.mxu0 0
        %1503 = vmatprep.subr.bf16.mxu0 0
        %1504 = vmatpush2.bf16.msra.mxu0 0
        %1505 = vmatprep.subr.bf16.mxu0 0
        %1506 = vmatpush2.bf16.msra.mxu0 0
        %1507 = vmatprep.subr.bf16.mxu0 0
        %1508 = vmatpush2.bf16.msra.mxu0 0
        %1509 = vmatprep.mubr.bf16.mxu0 0
        %1510 = vmatmul.mubr.bf16.gmra.mxu0 %v1472
        %v1511 = vpop.f32.mrf.mxu0
        %v1512 = vadd.f32 0.0, %v1511
        %v1513 = vpop.f32.mrf.mxu0
        %v1514 = vpop.f32.mrf.mxu0
        %v1515 = vadd.f32 0.0, %v1514
        %v1516 = vpop.f32.mrf.mxu0
        %1517 = vmatprep.mubr.bf16.mxu0 0
        %1518 = vmatmul.mubr.bf16.gmra.mxu0 %v1475
        %v1519 = vpop.f32.mrf.mxu0
        %v1520 = vadd.f32 0.0, %v1519
        %v1521 = vpop.f32.mrf.mxu0
        %v1522 = vpop.f32.mrf.mxu0
        %v1523 = vpop.f32.mrf.mxu0
        %1524 = vdwg.mxu0
        %s1525 = scalar_lea.vmem %s2, 224
        %v1526 = vld [vmem:[%s1525] sm:$0xff]
        %v1527 = vld [vmem:[%s1525 + $0x8] sm:$0xff]
        %v1528 = vld [vmem:[%s1525 + $0x10] sm:$0xff]
        %v1529 = vld [vmem:[%s1525 + $0x18] sm:$0xff]
        %v1530 = vld [vmem:[%s1525 + $0x20] sm:$0xff]
        %v1531 = vld [vmem:[%s1525 + $0x28] sm:$0xff]
        %v1532 = vld [vmem:[%s1525 + $0x30] sm:$0x11]
        %v1533 = vpack.c.bf16 %v1515, %v1512
        %v1534 = vpack.c.bf16 %v1520, %v1520
        %v1542 = vunpack.c.l.b16 %v1526
        %v1543 = vunpack.c.h.b16 %v1526
        %v1544 = vunpack.c.l.b16 %v1527
        %v1545 = vunpack.c.h.b16 %v1527
        %v1546 = vunpack.c.l.b16 %v1528
        %v1547 = vunpack.c.h.b16 %v1528
        %v1548 = vunpack.c.l.b16 %v1529
        %v1549 = vunpack.c.h.b16 %v1529
        %v1550 = vunpack.c.l.b16 %v1530
        %v1551 = vunpack.c.h.b16 %v1530
        %v1552 = vunpack.c.l.b16 %v1531
        %v1553 = vunpack.c.h.b16 %v1531
        %v1554 = vunpack.c.l.b16 %v1532
        %v1555 = vunpack.c.h.b16 %v1532
        %v1556 = vpack.c.b16 %v1544, %v1542
        %v1557 = vpack.c.b16 %v1545, %v1543
        %v1558 = vpack.c.b16 %v1548, %v1546
        %v1559 = vpack.c.b16 %v1549, %v1547
        %v1560 = vpack.c.b16 %v1552, %v1550
        %v1561 = vpack.c.b16 %v1553, %v1551
        %v1562 = vpack.c.b16 %v1554, %v1554
        %v1563 = vpack.c.b16 %v1555, %v1555
        %v1571 = vsel %vm759, %v1533, 0
        %v1574 = vsel %vm759, %v1534, 0
        %v1577 = vsel %vm766, %v1562, 0
        %v1580 = vsel %vm766, %v1563, 0
        %1582 = vmatprep.subr.bf16.mxu0 0
        %1583 = vmatpush1.bf16.msra.mxu0 0
        %1584 = vmatprep.subr.bf16.mxu0 0
        %1585 = vmatpush1.bf16.msra.mxu0 0
        %1586 = vmatprep.subr.bf16.mxu0 0
        %1587 = vmatpush1.bf16.msra.mxu0 0
        %1588 = vmatprep.subr.bf16.mxu0 0
        %1589 = vmatpush1.bf16.msra.mxu0 0
        %1590 = vmatprep.subr.bf16.mxu0 %v1580
        %1591 = vmatpush1.bf16.msra.mxu0 %v1577
        %1592 = vmatprep.subr.bf16.mxu0 %v1561
        %1593 = vmatpush1.bf16.msra.mxu0 %v1560
        %1594 = vmatprep.subr.bf16.mxu0 %v1559
        %1595 = vmatpush1.bf16.msra.mxu0 %v1558
        %1596 = vmatprep.subr.bf16.mxu0 %v1557
        %1597 = vmatpush1.bf16.msra.mxu0 %v1556
        %1598 = vmatprep.subr.bf16.mxu0 0
        %1599 = vmatpush2.bf16.msra.mxu0 0
        %1600 = vmatprep.subr.bf16.mxu0 0
        %1601 = vmatpush2.bf16.msra.mxu0 0
        %1602 = vmatprep.subr.bf16.mxu0 0
        %1603 = vmatpush2.bf16.msra.mxu0 0
        %1604 = vmatprep.subr.bf16.mxu0 0
        %1605 = vmatpush2.bf16.msra.mxu0 0
        %1606 = vmatprep.subr.bf16.mxu0 0
        %1607 = vmatpush2.bf16.msra.mxu0 0
        %1608 = vmatprep.subr.bf16.mxu0 0
        %1609 = vmatpush2.bf16.msra.mxu0 0
        %1610 = vmatprep.subr.bf16.mxu0 0
        %1611 = vmatpush2.bf16.msra.mxu0 0
        %1612 = vmatprep.subr.bf16.mxu0 0
        %1613 = vmatpush2.bf16.msra.mxu0 0
        %1614 = vmatprep.mubr.bf16.mxu0 0
        %1615 = vmatmul.mubr.bf16.gmra.mxu0 %v1571
        %v1616 = vpop.f32.mrf.mxu0
        %v1617 = vadd.f32 0.0, %v1616
        %v1618 = vpop.f32.mrf.mxu0
        %v1619 = vadd.f32 0.0, %v1618
        %v1620 = vpop.f32.mrf.mxu0
        %v1621 = vadd.f32 0.0, %v1620
        %v1622 = vpop.f32.mrf.mxu0
        %v1623 = vadd.f32 0.0, %v1622
        %1624 = vmatprep.mubr.bf16.mxu0 0
        %1625 = vmatmul.mubr.bf16.gmra.mxu0 %v1574
        %v1626 = vpop.f32.mrf.mxu0
        %v1627 = vadd.f32 0.0, %v1626
        %v1628 = vpop.f32.mrf.mxu0
        %v1629 = vadd.f32 0.0, %v1628
        %v1630 = vpop.f32.mrf.mxu0
        %v1631 = vpop.f32.mrf.mxu0
        %1632 = vdwg.mxu0
        %v1633 = vadd.f32 %v1453, %v1617
        %v1634 = vadd.f32 %v1454, %v1619
        %v1635 = vadd.f32 %v1455, %v1621
        %v1636 = vadd.f32 %v1456, %v1623
        %v1637 = vadd.f32 %v1457, %v1627
        %v1638 = vadd.f32 %v1458, %v1629
        %s1639 = scalar_lea.vmem [#allocation2], 60
        %v1640 = vld [vmem:[%s1639] sm:$0xf]
        %v1641 = vld [vmem:[%s1639 + $0x4] sm:$0xf]
        %v1642 = vld [vmem:[%s1639 + $0x8] sm:$0xf]
        %v1646 = vunpack.c.l.b16 %v1640
        %v1647 = vunpack.c.l.b16 %v1641
        %v1648 = vunpack.c.l.b16 %v1642
        %v1649 = vpack.c.b16 %v1647, %v1646
        %v1650 = vpack.c.b16 %v1648, %v1648
        %v1652 = vsel %vm759, %v1649, 0
        %v1655 = vsel %vm759, %v1650, 0
        %1657 = vmatprep.subr.bf16.mxu0 0
        %1658 = vmatpush1.bf16.msra.mxu0 0
        %1659 = vmatprep.subr.bf16.mxu0 0
        %1660 = vmatpush1.bf16.msra.mxu0 0
        %1661 = vmatprep.subr.bf16.mxu0 0
        %1662 = vmatpush1.bf16.msra.mxu0 0
        %1663 = vmatprep.subr.bf16.mxu0 0
        %1664 = vmatpush1.bf16.msra.mxu0 0
        %1665 = vmatprep.subr.bf16.mxu0 0
        %1666 = vmatpush1.bf16.msra.mxu0 %v768
        %1667 = vmatprep.subr.bf16.mxu0 0
        %1668 = vmatpush1.bf16.msra.mxu0 %v746
        %1669 = vmatprep.subr.bf16.mxu0 0
        %1670 = vmatpush1.bf16.msra.mxu0 %v745
        %1671 = vmatprep.subr.bf16.mxu0 0
        %1672 = vmatpush1.bf16.msra.mxu0 %v744
        %1673 = vmatprep.subr.bf16.mxu0 0
        %1674 = vmatpush2.bf16.msra.mxu0 0
        %1675 = vmatprep.subr.bf16.mxu0 0
        %1676 = vmatpush2.bf16.msra.mxu0 0
        %1677 = vmatprep.subr.bf16.mxu0 0
        %1678 = vmatpush2.bf16.msra.mxu0 0
        %1679 = vmatprep.subr.bf16.mxu0 0
        %1680 = vmatpush2.bf16.msra.mxu0 0
        %1681 = vmatprep.subr.bf16.mxu0 0
        %1682 = vmatpush2.bf16.msra.mxu0 0
        %1683 = vmatprep.subr.bf16.mxu0 0
        %1684 = vmatpush2.bf16.msra.mxu0 0
        %1685 = vmatprep.subr.bf16.mxu0 0
        %1686 = vmatpush2.bf16.msra.mxu0 0
        %1687 = vmatprep.subr.bf16.mxu0 0
        %1688 = vmatpush2.bf16.msra.mxu0 0
        %1689 = vmatprep.mubr.bf16.mxu0 0
        %1690 = vmatmul.mubr.bf16.gmra.mxu0 %v1652
        %v1691 = vpop.f32.mrf.mxu0
        %v1692 = vadd.f32 0.0, %v1691
        %v1693 = vpop.f32.mrf.mxu0
        %v1694 = vpop.f32.mrf.mxu0
        %v1695 = vadd.f32 0.0, %v1694
        %v1696 = vpop.f32.mrf.mxu0
        %1697 = vmatprep.mubr.bf16.mxu0 0
        %1698 = vmatmul.mubr.bf16.gmra.mxu0 %v1655
        %v1699 = vpop.f32.mrf.mxu0
        %v1700 = vadd.f32 0.0, %v1699
        %v1701 = vpop.f32.mrf.mxu0
        %v1702 = vpop.f32.mrf.mxu0
        %v1703 = vpop.f32.mrf.mxu0
        %1704 = vdwg.mxu0
        %s1705 = scalar_lea.vmem %s2, 280
        %v1706 = vld [vmem:[%s1705] sm:$0xff]
        %v1707 = vld [vmem:[%s1705 + $0x8] sm:$0xff]
        %v1708 = vld [vmem:[%s1705 + $0x10] sm:$0xff]
        %v1709 = vld [vmem:[%s1705 + $0x18] sm:$0xff]
        %v1710 = vld [vmem:[%s1705 + $0x20] sm:$0xff]
        %v1711 = vld [vmem:[%s1705 + $0x28] sm:$0xff]
        %v1712 = vld [vmem:[%s1705 + $0x30] sm:$0x11]
        %v1713 = vpack.c.bf16 %v1695, %v1692
        %v1714 = vpack.c.bf16 %v1700, %v1700
        %v1722 = vunpack.c.l.b16 %v1706
        %v1723 = vunpack.c.h.b16 %v1706
        %v1724 = vunpack.c.l.b16 %v1707
        %v1725 = vunpack.c.h.b16 %v1707
        %v1726 = vunpack.c.l.b16 %v1708
        %v1727 = vunpack.c.h.b16 %v1708
        %v1728 = vunpack.c.l.b16 %v1709
        %v1729 = vunpack.c.h.b16 %v1709
        %v1730 = vunpack.c.l.b16 %v1710
        %v1731 = vunpack.c.h.b16 %v1710
        %v1732 = vunpack.c.l.b16 %v1711
        %v1733 = vunpack.c.h.b16 %v1711
        %v1734 = vunpack.c.l.b16 %v1712
        %v1735 = vunpack.c.h.b16 %v1712
        %v1736 = vpack.c.b16 %v1724, %v1722
        %v1737 = vpack.c.b16 %v1725, %v1723
        %v1738 = vpack.c.b16 %v1728, %v1726
        %v1739 = vpack.c.b16 %v1729, %v1727
        %v1740 = vpack.c.b16 %v1732, %v1730
        %v1741 = vpack.c.b16 %v1733, %v1731
        %v1742 = vpack.c.b16 %v1734, %v1734
        %v1743 = vpack.c.b16 %v1735, %v1735
        %v1751 = vsel %vm759, %v1713, 0
        %v1754 = vsel %vm759, %v1714, 0
        %v1757 = vsel %vm766, %v1742, 0
        %v1760 = vsel %vm766, %v1743, 0
        %1762 = vmatprep.subr.bf16.mxu0 0
        %1763 = vmatpush1.bf16.msra.mxu0 0
        %1764 = vmatprep.subr.bf16.mxu0 0
        %1765 = vmatpush1.bf16.msra.mxu0 0
        %1766 = vmatprep.subr.bf16.mxu0 0
        %1767 = vmatpush1.bf16.msra.mxu0 0
        %1768 = vmatprep.subr.bf16.mxu0 0
        %1769 = vmatpush1.bf16.msra.mxu0 0
        %1770 = vmatprep.subr.bf16.mxu0 %v1760
        %1771 = vmatpush1.bf16.msra.mxu0 %v1757
        %1772 = vmatprep.subr.bf16.mxu0 %v1741
        %1773 = vmatpush1.bf16.msra.mxu0 %v1740
        %1774 = vmatprep.subr.bf16.mxu0 %v1739
        %1775 = vmatpush1.bf16.msra.mxu0 %v1738
        %1776 = vmatprep.subr.bf16.mxu0 %v1737
        %1777 = vmatpush1.bf16.msra.mxu0 %v1736
        %1778 = vmatprep.subr.bf16.mxu0 0
        %1779 = vmatpush2.bf16.msra.mxu0 0
        %1780 = vmatprep.subr.bf16.mxu0 0
        %1781 = vmatpush2.bf16.msra.mxu0 0
        %1782 = vmatprep.subr.bf16.mxu0 0
        %1783 = vmatpush2.bf16.msra.mxu0 0
        %1784 = vmatprep.subr.bf16.mxu0 0
        %1785 = vmatpush2.bf16.msra.mxu0 0
        %1786 = vmatprep.subr.bf16.mxu0 0
        %1787 = vmatpush2.bf16.msra.mxu0 0
        %1788 = vmatprep.subr.bf16.mxu0 0
        %1789 = vmatpush2.bf16.msra.mxu0 0
        %1790 = vmatprep.subr.bf16.mxu0 0
        %1791 = vmatpush2.bf16.msra.mxu0 0
        %1792 = vmatprep.subr.bf16.mxu0 0
        %1793 = vmatpush2.bf16.msra.mxu0 0
        %1794 = vmatprep.mubr.bf16.mxu0 0
        %1795 = vmatmul.mubr.bf16.gmra.mxu0 %v1751
        %v1796 = vpop.f32.mrf.mxu0
        %v1797 = vadd.f32 0.0, %v1796
        %v1798 = vpop.f32.mrf.mxu0
        %v1799 = vadd.f32 0.0, %v1798
        %v1800 = vpop.f32.mrf.mxu0
        %v1801 = vadd.f32 0.0, %v1800
        %v1802 = vpop.f32.mrf.mxu0
        %v1803 = vadd.f32 0.0, %v1802
        %1804 = vmatprep.mubr.bf16.mxu0 0
        %1805 = vmatmul.mubr.bf16.gmra.mxu0 %v1754
        %v1806 = vpop.f32.mrf.mxu0
        %v1807 = vadd.f32 0.0, %v1806
        %v1808 = vpop.f32.mrf.mxu0
        %v1809 = vadd.f32 0.0, %v1808
        %v1810 = vpop.f32.mrf.mxu0
        %v1811 = vpop.f32.mrf.mxu0
        %1812 = vdwg.mxu0
        %v1813 = vadd.f32 %v1633, %v1797
        %v1814 = vadd.f32 %v1634, %v1799
        %v1815 = vadd.f32 %v1635, %v1801
        %v1816 = vadd.f32 %v1636, %v1803
        %v1817 = vadd.f32 %v1637, %v1807
        %v1818 = vadd.f32 %v1638, %v1809
        %s1819 = scalar_lea.vmem [#allocation2], 72
        %v1820 = vld [vmem:[%s1819] sm:$0xf]
        %v1821 = vld [vmem:[%s1819 + $0x4] sm:$0xf]
        %v1822 = vld [vmem:[%s1819 + $0x8] sm:$0xf]
        %v1826 = vunpack.c.l.b16 %v1820
        %v1827 = vunpack.c.l.b16 %v1821
        %v1828 = vunpack.c.l.b16 %v1822
        %v1829 = vpack.c.b16 %v1827, %v1826
        %v1830 = vpack.c.b16 %v1828, %v1828
        %v1832 = vsel %vm759, %v1829, 0
        %v1835 = vsel %vm759, %v1830, 0
        %1837 = vmatprep.subr.bf16.mxu0 0
        %1838 = vmatpush1.bf16.msra.mxu0 0
        %1839 = vmatprep.subr.bf16.mxu0 0
        %1840 = vmatpush1.bf16.msra.mxu0 0
        %1841 = vmatprep.subr.bf16.mxu0 0
        %1842 = vmatpush1.bf16.msra.mxu0 0
        %1843 = vmatprep.subr.bf16.mxu0 0
        %1844 = vmatpush1.bf16.msra.mxu0 0
        %1845 = vmatprep.subr.bf16.mxu0 0
        %1846 = vmatpush1.bf16.msra.mxu0 %v768
        %1847 = vmatprep.subr.bf16.mxu0 0
        %1848 = vmatpush1.bf16.msra.mxu0 %v746
        %1849 = vmatprep.subr.bf16.mxu0 0
        %1850 = vmatpush1.bf16.msra.mxu0 %v745
        %1851 = vmatprep.subr.bf16.mxu0 0
        %1852 = vmatpush1.bf16.msra.mxu0 %v744
        %1853 = vmatprep.subr.bf16.mxu0 0
        %1854 = vmatpush2.bf16.msra.mxu0 0
        %1855 = vmatprep.subr.bf16.mxu0 0
        %1856 = vmatpush2.bf16.msra.mxu0 0
        %1857 = vmatprep.subr.bf16.mxu0 0
        %1858 = vmatpush2.bf16.msra.mxu0 0
        %1859 = vmatprep.subr.bf16.mxu0 0
        %1860 = vmatpush2.bf16.msra.mxu0 0
        %1861 = vmatprep.subr.bf16.mxu0 0
        %1862 = vmatpush2.bf16.msra.mxu0 0
        %1863 = vmatprep.subr.bf16.mxu0 0
        %1864 = vmatpush2.bf16.msra.mxu0 0
        %1865 = vmatprep.subr.bf16.mxu0 0
        %1866 = vmatpush2.bf16.msra.mxu0 0
        %1867 = vmatprep.subr.bf16.mxu0 0
        %1868 = vmatpush2.bf16.msra.mxu0 0
        %1869 = vmatprep.mubr.bf16.mxu0 0
        %1870 = vmatmul.mubr.bf16.gmra.mxu0 %v1832
        %v1871 = vpop.f32.mrf.mxu0
        %v1872 = vadd.f32 0.0, %v1871
        %v1873 = vpop.f32.mrf.mxu0
        %v1874 = vpop.f32.mrf.mxu0
        %v1875 = vadd.f32 0.0, %v1874
        %v1876 = vpop.f32.mrf.mxu0
        %1877 = vmatprep.mubr.bf16.mxu0 0
        %1878 = vmatmul.mubr.bf16.gmra.mxu0 %v1835
        %v1879 = vpop.f32.mrf.mxu0
        %v1880 = vadd.f32 0.0, %v1879
        %v1881 = vpop.f32.mrf.mxu0
        %v1882 = vpop.f32.mrf.mxu0
        %v1883 = vpop.f32.mrf.mxu0
        %1884 = vdwg.mxu0
        %s1885 = scalar_lea.vmem %s2, 336
        %v1886 = vld [vmem:[%s1885] sm:$0xff]
        %v1887 = vld [vmem:[%s1885 + $0x8] sm:$0xff]
        %v1888 = vld [vmem:[%s1885 + $0x10] sm:$0xff]
        %v1889 = vld [vmem:[%s1885 + $0x18] sm:$0xff]
        %v1890 = vld [vmem:[%s1885 + $0x20] sm:$0xff]
        %v1891 = vld [vmem:[%s1885 + $0x28] sm:$0xff]
        %v1892 = vld [vmem:[%s1885 + $0x30] sm:$0x11]
        %v1893 = vpack.c.bf16 %v1875, %v1872
        %v1894 = vpack.c.bf16 %v1880, %v1880
        %v1902 = vunpack.c.l.b16 %v1886
        %v1903 = vunpack.c.h.b16 %v1886
        %v1904 = vunpack.c.l.b16 %v1887
        %v1905 = vunpack.c.h.b16 %v1887
        %v1906 = vunpack.c.l.b16 %v1888
        %v1907 = vunpack.c.h.b16 %v1888
        %v1908 = vunpack.c.l.b16 %v1889
        %v1909 = vunpack.c.h.b16 %v1889
        %v1910 = vunpack.c.l.b16 %v1890
        %v1911 = vunpack.c.h.b16 %v1890
        %v1912 = vunpack.c.l.b16 %v1891
        %v1913 = vunpack.c.h.b16 %v1891
        %v1914 = vunpack.c.l.b16 %v1892
        %v1915 = vunpack.c.h.b16 %v1892
        %v1916 = vpack.c.b16 %v1904, %v1902
        %v1917 = vpack.c.b16 %v1905, %v1903
        %v1918 = vpack.c.b16 %v1908, %v1906
        %v1919 = vpack.c.b16 %v1909, %v1907
        %v1920 = vpack.c.b16 %v1912, %v1910
        %v1921 = vpack.c.b16 %v1913, %v1911
        %v1922 = vpack.c.b16 %v1914, %v1914
        %v1923 = vpack.c.b16 %v1915, %v1915
        %v1931 = vsel %vm759, %v1893, 0
        %v1934 = vsel %vm759, %v1894, 0
        %v1937 = vsel %vm766, %v1922, 0
        %v1940 = vsel %vm766, %v1923, 0
        %1942 = vmatprep.subr.bf16.mxu0 0
        %1943 = vmatpush1.bf16.msra.mxu0 0
        %1944 = vmatprep.subr.bf16.mxu0 0
        %1945 = vmatpush1.bf16.msra.mxu0 0
        %1946 = vmatprep.subr.bf16.mxu0 0
        %1947 = vmatpush1.bf16.msra.mxu0 0
        %1948 = vmatprep.subr.bf16.mxu0 0
        %1949 = vmatpush1.bf16.msra.mxu0 0
        %1950 = vmatprep.subr.bf16.mxu0 %v1940
        %1951 = vmatpush1.bf16.msra.mxu0 %v1937
        %1952 = vmatprep.subr.bf16.mxu0 %v1921
        %1953 = vmatpush1.bf16.msra.mxu0 %v1920
        %1954 = vmatprep.subr.bf16.mxu0 %v1919
        %1955 = vmatpush1.bf16.msra.mxu0 %v1918
        %1956 = vmatprep.subr.bf16.mxu0 %v1917
        %1957 = vmatpush1.bf16.msra.mxu0 %v1916
        %1958 = vmatprep.subr.bf16.mxu0 0
        %1959 = vmatpush2.bf16.msra.mxu0 0
        %1960 = vmatprep.subr.bf16.mxu0 0
        %1961 = vmatpush2.bf16.msra.mxu0 0
        %1962 = vmatprep.subr.bf16.mxu0 0
        %1963 = vmatpush2.bf16.msra.mxu0 0
        %1964 = vmatprep.subr.bf16.mxu0 0
        %1965 = vmatpush2.bf16.msra.mxu0 0
        %1966 = vmatprep.subr.bf16.mxu0 0
        %1967 = vmatpush2.bf16.msra.mxu0 0
        %1968 = vmatprep.subr.bf16.mxu0 0
        %1969 = vmatpush2.bf16.msra.mxu0 0
        %1970 = vmatprep.subr.bf16.mxu0 0
        %1971 = vmatpush2.bf16.msra.mxu0 0
        %1972 = vmatprep.subr.bf16.mxu0 0
        %1973 = vmatpush2.bf16.msra.mxu0 0
        %1974 = vmatprep.mubr.bf16.mxu0 0
        %1975 = vmatmul.mubr.bf16.gmra.mxu0 %v1931
        %v1976 = vpop.f32.mrf.mxu0
        %v1977 = vadd.f32 0.0, %v1976
        %v1978 = vpop.f32.mrf.mxu0
        %v1979 = vadd.f32 0.0, %v1978
        %v1980 = vpop.f32.mrf.mxu0
        %v1981 = vadd.f32 0.0, %v1980
        %v1982 = vpop.f32.mrf.mxu0
        %v1983 = vadd.f32 0.0, %v1982
        %1984 = vmatprep.mubr.bf16.mxu0 0
        %1985 = vmatmul.mubr.bf16.gmra.mxu0 %v1934
        %v1986 = vpop.f32.mrf.mxu0
        %v1987 = vadd.f32 0.0, %v1986
        %v1988 = vpop.f32.mrf.mxu0
        %v1989 = vadd.f32 0.0, %v1988
        %v1990 = vpop.f32.mrf.mxu0
        %v1991 = vpop.f32.mrf.mxu0
        %1992 = vdwg.mxu0
        %v1993 = vadd.f32 %v1813, %v1977
        %v1994 = vadd.f32 %v1814, %v1979
        %v1995 = vadd.f32 %v1815, %v1981
        %v1996 = vadd.f32 %v1816, %v1983
        %v1997 = vadd.f32 %v1817, %v1987
        %v1998 = vadd.f32 %v1818, %v1989
        %s1999 = scalar_lea.vmem [#allocation2], 84
        %v2000 = vld [vmem:[%s1999] sm:$0xf]
        %v2001 = vld [vmem:[%s1999 + $0x4] sm:$0xf]
        %v2002 = vld [vmem:[%s1999 + $0x8] sm:$0xf]
        %v2006 = vunpack.c.l.b16 %v2000
        %v2007 = vunpack.c.l.b16 %v2001
        %v2008 = vunpack.c.l.b16 %v2002
        %v2009 = vpack.c.b16 %v2007, %v2006
        %v2010 = vpack.c.b16 %v2008, %v2008
        %v2012 = vsel %vm759, %v2009, 0
        %v2015 = vsel %vm759, %v2010, 0
        %2017 = vmatprep.subr.bf16.mxu0 0
        %2018 = vmatpush1.bf16.msra.mxu0 0
        %2019 = vmatprep.subr.bf16.mxu0 0
        %2020 = vmatpush1.bf16.msra.mxu0 0
        %2021 = vmatprep.subr.bf16.mxu0 0
        %2022 = vmatpush1.bf16.msra.mxu0 0
        %2023 = vmatprep.subr.bf16.mxu0 0
        %2024 = vmatpush1.bf16.msra.mxu0 0
        %2025 = vmatprep.subr.bf16.mxu0 0
        %2026 = vmatpush1.bf16.msra.mxu0 %v768
        %2027 = vmatprep.subr.bf16.mxu0 0
        %2028 = vmatpush1.bf16.msra.mxu0 %v746
        %2029 = vmatprep.subr.bf16.mxu0 0
        %2030 = vmatpush1.bf16.msra.mxu0 %v745
        %2031 = vmatprep.subr.bf16.mxu0 0
        %2032 = vmatpush1.bf16.msra.mxu0 %v744
        %2033 = vmatprep.subr.bf16.mxu0 0
        %2034 = vmatpush2.bf16.msra.mxu0 0
        %2035 = vmatprep.subr.bf16.mxu0 0
        %2036 = vmatpush2.bf16.msra.mxu0 0
        %2037 = vmatprep.subr.bf16.mxu0 0
        %2038 = vmatpush2.bf16.msra.mxu0 0
        %2039 = vmatprep.subr.bf16.mxu0 0
        %2040 = vmatpush2.bf16.msra.mxu0 0
        %2041 = vmatprep.subr.bf16.mxu0 0
        %2042 = vmatpush2.bf16.msra.mxu0 0
        %2043 = vmatprep.subr.bf16.mxu0 0
        %2044 = vmatpush2.bf16.msra.mxu0 0
        %2045 = vmatprep.subr.bf16.mxu0 0
        %2046 = vmatpush2.bf16.msra.mxu0 0
        %2047 = vmatprep.subr.bf16.mxu0 0
        %2048 = vmatpush2.bf16.msra.mxu0 0
        %2049 = vmatprep.mubr.bf16.mxu0 0
        %2050 = vmatmul.mubr.bf16.gmra.mxu0 %v2012
        %v2051 = vpop.f32.mrf.mxu0
        %v2052 = vadd.f32 0.0, %v2051
        %v2053 = vpop.f32.mrf.mxu0
        %v2054 = vpop.f32.mrf.mxu0
        %v2055 = vadd.f32 0.0, %v2054
        %v2056 = vpop.f32.mrf.mxu0
        %2057 = vmatprep.mubr.bf16.mxu0 0
        %2058 = vmatmul.mubr.bf16.gmra.mxu0 %v2015
        %v2059 = vpop.f32.mrf.mxu0
        %v2060 = vadd.f32 0.0, %v2059
        %v2061 = vpop.f32.mrf.mxu0
        %v2062 = vpop.f32.mrf.mxu0
        %v2063 = vpop.f32.mrf.mxu0
        %2064 = vdwg.mxu0
        %s2065 = scalar_lea.vmem %s2, 392
        %v2066 = vld [vmem:[%s2065] sm:$0xff]
        %v2067 = vld [vmem:[%s2065 + $0x8] sm:$0xff]
        %v2068 = vld [vmem:[%s2065 + $0x10] sm:$0xff]
        %v2069 = vld [vmem:[%s2065 + $0x18] sm:$0xff]
        %v2070 = vld [vmem:[%s2065 + $0x20] sm:$0xff]
        %v2071 = vld [vmem:[%s2065 + $0x28] sm:$0xff]
        %v2072 = vld [vmem:[%s2065 + $0x30] sm:$0x11]
        %v2073 = vpack.c.bf16 %v2055, %v2052
        %v2074 = vpack.c.bf16 %v2060, %v2060
        %v2082 = vunpack.c.l.b16 %v2066
        %v2083 = vunpack.c.h.b16 %v2066
        %v2084 = vunpack.c.l.b16 %v2067
        %v2085 = vunpack.c.h.b16 %v2067
        %v2086 = vunpack.c.l.b16 %v2068
        %v2087 = vunpack.c.h.b16 %v2068
        %v2088 = vunpack.c.l.b16 %v2069
        %v2089 = vunpack.c.h.b16 %v2069
        %v2090 = vunpack.c.l.b16 %v2070
        %v2091 = vunpack.c.h.b16 %v2070
        %v2092 = vunpack.c.l.b16 %v2071
        %v2093 = vunpack.c.h.b16 %v2071
        %v2094 = vunpack.c.l.b16 %v2072
        %v2095 = vunpack.c.h.b16 %v2072
        %v2096 = vpack.c.b16 %v2084, %v2082
        %v2097 = vpack.c.b16 %v2085, %v2083
        %v2098 = vpack.c.b16 %v2088, %v2086
        %v2099 = vpack.c.b16 %v2089, %v2087
        %v2100 = vpack.c.b16 %v2092, %v2090
        %v2101 = vpack.c.b16 %v2093, %v2091
        %v2102 = vpack.c.b16 %v2094, %v2094
        %v2103 = vpack.c.b16 %v2095, %v2095
        %v2111 = vsel %vm759, %v2073, 0
        %v2114 = vsel %vm759, %v2074, 0
        %v2117 = vsel %vm766, %v2102, 0
        %v2120 = vsel %vm766, %v2103, 0
        %2122 = vmatprep.subr.bf16.mxu0 0
        %2123 = vmatpush1.bf16.msra.mxu0 0
        %2124 = vmatprep.subr.bf16.mxu0 0
        %2125 = vmatpush1.bf16.msra.mxu0 0
        %2126 = vmatprep.subr.bf16.mxu0 0
        %2127 = vmatpush1.bf16.msra.mxu0 0
        %2128 = vmatprep.subr.bf16.mxu0 0
        %2129 = vmatpush1.bf16.msra.mxu0 0
        %2130 = vmatprep.subr.bf16.mxu0 %v2120
        %2131 = vmatpush1.bf16.msra.mxu0 %v2117
        %2132 = vmatprep.subr.bf16.mxu0 %v2101
        %2133 = vmatpush1.bf16.msra.mxu0 %v2100
        %2134 = vmatprep.subr.bf16.mxu0 %v2099
        %2135 = vmatpush1.bf16.msra.mxu0 %v2098
        %2136 = vmatprep.subr.bf16.mxu0 %v2097
        %2137 = vmatpush1.bf16.msra.mxu0 %v2096
        %2138 = vmatprep.subr.bf16.mxu0 0
        %2139 = vmatpush2.bf16.msra.mxu0 0
        %2140 = vmatprep.subr.bf16.mxu0 0
        %2141 = vmatpush2.bf16.msra.mxu0 0
        %2142 = vmatprep.subr.bf16.mxu0 0
        %2143 = vmatpush2.bf16.msra.mxu0 0
        %2144 = vmatprep.subr.bf16.mxu0 0
        %2145 = vmatpush2.bf16.msra.mxu0 0
        %2146 = vmatprep.subr.bf16.mxu0 0
        %2147 = vmatpush2.bf16.msra.mxu0 0
        %2148 = vmatprep.subr.bf16.mxu0 0
        %2149 = vmatpush2.bf16.msra.mxu0 0
        %2150 = vmatprep.subr.bf16.mxu0 0
        %2151 = vmatpush2.bf16.msra.mxu0 0
        %2152 = vmatprep.subr.bf16.mxu0 0
        %2153 = vmatpush2.bf16.msra.mxu0 0
        %2154 = vmatprep.mubr.bf16.mxu0 0
        %2155 = vmatmul.mubr.bf16.gmra.mxu0 %v2111
        %v2156 = vpop.f32.mrf.mxu0
        %v2157 = vadd.f32 0.0, %v2156
        %v2158 = vpop.f32.mrf.mxu0
        %v2159 = vadd.f32 0.0, %v2158
        %v2160 = vpop.f32.mrf.mxu0
        %v2161 = vadd.f32 0.0, %v2160
        %v2162 = vpop.f32.mrf.mxu0
        %v2163 = vadd.f32 0.0, %v2162
        %2164 = vmatprep.mubr.bf16.mxu0 0
        %2165 = vmatmul.mubr.bf16.gmra.mxu0 %v2114
        %v2166 = vpop.f32.mrf.mxu0
        %v2167 = vadd.f32 0.0, %v2166
        %v2168 = vpop.f32.mrf.mxu0
        %v2169 = vadd.f32 0.0, %v2168
        %v2170 = vpop.f32.mrf.mxu0
        %v2171 = vpop.f32.mrf.mxu0
        %2172 = vdwg.mxu0
        %v2173 = vadd.f32 %v1993, %v2157
        %v2174 = vadd.f32 %v1994, %v2159
        %v2175 = vadd.f32 %v1995, %v2161
        %v2176 = vadd.f32 %v1996, %v2163
        %v2177 = vadd.f32 %v1997, %v2167
        %v2178 = vadd.f32 %v1998, %v2169
        %s2179 = scalar_lea.vmem [#allocation2], 96
        %v2180 = vld [vmem:[%s2179] sm:$0xf]
        %v2181 = vld [vmem:[%s2179 + $0x4] sm:$0xf]
        %v2182 = vld [vmem:[%s2179 + $0x8] sm:$0xf]
        %v2186 = vunpack.c.l.b16 %v2180
        %v2187 = vunpack.c.l.b16 %v2181
        %v2188 = vunpack.c.l.b16 %v2182
        %v2189 = vpack.c.b16 %v2187, %v2186
        %v2190 = vpack.c.b16 %v2188, %v2188
        %v2192 = vsel %vm759, %v2189, 0
        %v2195 = vsel %vm759, %v2190, 0
        %2197 = vmatprep.subr.bf16.mxu0 0
        %2198 = vmatpush1.bf16.msra.mxu0 0
        %2199 = vmatprep.subr.bf16.mxu0 0
        %2200 = vmatpush1.bf16.msra.mxu0 0
        %2201 = vmatprep.subr.bf16.mxu0 0
        %2202 = vmatpush1.bf16.msra.mxu0 0
        %2203 = vmatprep.subr.bf16.mxu0 0
        %2204 = vmatpush1.bf16.msra.mxu0 0
        %2205 = vmatprep.subr.bf16.mxu0 0
        %2206 = vmatpush1.bf16.msra.mxu0 %v768
        %2207 = vmatprep.subr.bf16.mxu0 0
        %2208 = vmatpush1.bf16.msra.mxu0 %v746
        %2209 = vmatprep.subr.bf16.mxu0 0
        %2210 = vmatpush1.bf16.msra.mxu0 %v745
        %2211 = vmatprep.subr.bf16.mxu0 0
        %2212 = vmatpush1.bf16.msra.mxu0 %v744
        %2213 = vmatprep.subr.bf16.mxu0 0
        %2214 = vmatpush2.bf16.msra.mxu0 0
        %2215 = vmatprep.subr.bf16.mxu0 0
        %2216 = vmatpush2.bf16.msra.mxu0 0
        %2217 = vmatprep.subr.bf16.mxu0 0
        %2218 = vmatpush2.bf16.msra.mxu0 0
        %2219 = vmatprep.subr.bf16.mxu0 0
        %2220 = vmatpush2.bf16.msra.mxu0 0
        %2221 = vmatprep.subr.bf16.mxu0 0
        %2222 = vmatpush2.bf16.msra.mxu0 0
        %2223 = vmatprep.subr.bf16.mxu0 0
        %2224 = vmatpush2.bf16.msra.mxu0 0
        %2225 = vmatprep.subr.bf16.mxu0 0
        %2226 = vmatpush2.bf16.msra.mxu0 0
        %2227 = vmatprep.subr.bf16.mxu0 0
        %2228 = vmatpush2.bf16.msra.mxu0 0
        %2229 = vmatprep.mubr.bf16.mxu0 0
        %2230 = vmatmul.mubr.bf16.gmra.mxu0 %v2192
        %v2231 = vpop.f32.mrf.mxu0
        %v2232 = vadd.f32 0.0, %v2231
        %v2233 = vpop.f32.mrf.mxu0
        %v2234 = vpop.f32.mrf.mxu0
        %v2235 = vadd.f32 0.0, %v2234
        %v2236 = vpop.f32.mrf.mxu0
        %2237 = vmatprep.mubr.bf16.mxu0 0
        %2238 = vmatmul.mubr.bf16.gmra.mxu0 %v2195
        %v2239 = vpop.f32.mrf.mxu0
        %v2240 = vadd.f32 0.0, %v2239
        %v2241 = vpop.f32.mrf.mxu0
        %v2242 = vpop.f32.mrf.mxu0
        %v2243 = vpop.f32.mrf.mxu0
        %2244 = vdwg.mxu0
        %s2245 = scalar_lea.vmem %s2, 448
        %v2246 = vld [vmem:[%s2245] sm:$0xff]
        %v2247 = vld [vmem:[%s2245 + $0x8] sm:$0xff]
        %v2248 = vld [vmem:[%s2245 + $0x10] sm:$0xff]
        %v2249 = vld [vmem:[%s2245 + $0x18] sm:$0xff]
        %v2250 = vld [vmem:[%s2245 + $0x20] sm:$0xff]
        %v2251 = vld [vmem:[%s2245 + $0x28] sm:$0xff]
        %v2252 = vld [vmem:[%s2245 + $0x30] sm:$0x11]
        %v2253 = vpack.c.bf16 %v2235, %v2232
        %v2254 = vpack.c.bf16 %v2240, %v2240
        %v2262 = vunpack.c.l.b16 %v2246
        %v2263 = vunpack.c.h.b16 %v2246
        %v2264 = vunpack.c.l.b16 %v2247
        %v2265 = vunpack.c.h.b16 %v2247
        %v2266 = vunpack.c.l.b16 %v2248
        %v2267 = vunpack.c.h.b16 %v2248
        %v2268 = vunpack.c.l.b16 %v2249
        %v2269 = vunpack.c.h.b16 %v2249
        %v2270 = vunpack.c.l.b16 %v2250
        %v2271 = vunpack.c.h.b16 %v2250
        %v2272 = vunpack.c.l.b16 %v2251
        %v2273 = vunpack.c.h.b16 %v2251
        %v2274 = vunpack.c.l.b16 %v2252
        %v2275 = vunpack.c.h.b16 %v2252
        %v2276 = vpack.c.b16 %v2264, %v2262
        %v2277 = vpack.c.b16 %v2265, %v2263
        %v2278 = vpack.c.b16 %v2268, %v2266
        %v2279 = vpack.c.b16 %v2269, %v2267
        %v2280 = vpack.c.b16 %v2272, %v2270
        %v2281 = vpack.c.b16 %v2273, %v2271
        %v2282 = vpack.c.b16 %v2274, %v2274
        %v2283 = vpack.c.b16 %v2275, %v2275
        %v2291 = vsel %vm759, %v2253, 0
        %v2294 = vsel %vm759, %v2254, 0
        %v2297 = vsel %vm766, %v2282, 0
        %v2300 = vsel %vm766, %v2283, 0
        %2302 = vmatprep.subr.bf16.mxu0 0
        %2303 = vmatpush1.bf16.msra.mxu0 0
        %2304 = vmatprep.subr.bf16.mxu0 0
        %2305 = vmatpush1.bf16.msra.mxu0 0
        %2306 = vmatprep.subr.bf16.mxu0 0
        %2307 = vmatpush1.bf16.msra.mxu0 0
        %2308 = vmatprep.subr.bf16.mxu0 0
        %2309 = vmatpush1.bf16.msra.mxu0 0
        %2310 = vmatprep.subr.bf16.mxu0 %v2300
        %2311 = vmatpush1.bf16.msra.mxu0 %v2297
        %2312 = vmatprep.subr.bf16.mxu0 %v2281
        %2313 = vmatpush1.bf16.msra.mxu0 %v2280
        %2314 = vmatprep.subr.bf16.mxu0 %v2279
        %2315 = vmatpush1.bf16.msra.mxu0 %v2278
        %2316 = vmatprep.subr.bf16.mxu0 %v2277
        %2317 = vmatpush1.bf16.msra.mxu0 %v2276
        %2318 = vmatprep.subr.bf16.mxu0 0
        %2319 = vmatpush2.bf16.msra.mxu0 0
        %2320 = vmatprep.subr.bf16.mxu0 0
        %2321 = vmatpush2.bf16.msra.mxu0 0
        %2322 = vmatprep.subr.bf16.mxu0 0
        %2323 = vmatpush2.bf16.msra.mxu0 0
        %2324 = vmatprep.subr.bf16.mxu0 0
        %2325 = vmatpush2.bf16.msra.mxu0 0
        %2326 = vmatprep.subr.bf16.mxu0 0
        %2327 = vmatpush2.bf16.msra.mxu0 0
        %2328 = vmatprep.subr.bf16.mxu0 0
        %2329 = vmatpush2.bf16.msra.mxu0 0
        %2330 = vmatprep.subr.bf16.mxu0 0
        %2331 = vmatpush2.bf16.msra.mxu0 0
        %2332 = vmatprep.subr.bf16.mxu0 0
        %2333 = vmatpush2.bf16.msra.mxu0 0
        %2334 = vmatprep.mubr.bf16.mxu0 0
        %2335 = vmatmul.mubr.bf16.gmra.mxu0 %v2291
        %v2336 = vpop.f32.mrf.mxu0
        %v2337 = vadd.f32 0.0, %v2336
        %v2338 = vpop.f32.mrf.mxu0
        %v2339 = vadd.f32 0.0, %v2338
        %v2340 = vpop.f32.mrf.mxu0
        %v2341 = vadd.f32 0.0, %v2340
        %v2342 = vpop.f32.mrf.mxu0
        %v2343 = vadd.f32 0.0, %v2342
        %2344 = vmatprep.mubr.bf16.mxu0 0
        %2345 = vmatmul.mubr.bf16.gmra.mxu0 %v2294
        %v2346 = vpop.f32.mrf.mxu0
        %v2347 = vadd.f32 0.0, %v2346
        %v2348 = vpop.f32.mrf.mxu0
        %v2349 = vadd.f32 0.0, %v2348
        %v2350 = vpop.f32.mrf.mxu0
        %v2351 = vpop.f32.mrf.mxu0
        %2352 = vdwg.mxu0
        %v2353 = vadd.f32 %v2173, %v2337
        %v2354 = vadd.f32 %v2174, %v2339
        %v2355 = vadd.f32 %v2175, %v2341
        %v2356 = vadd.f32 %v2176, %v2343
        %v2357 = vadd.f32 %v2177, %v2347
        %v2358 = vadd.f32 %v2178, %v2349
        %s2359 = scalar_lea.vmem [#allocation2], 108
        %v2360 = vld [vmem:[%s2359] sm:$0xf]
        %v2361 = vld [vmem:[%s2359 + $0x4] sm:$0xf]
        %v2362 = vld [vmem:[%s2359 + $0x8] sm:$0xf]
        %v2366 = vunpack.c.l.b16 %v2360
        %v2367 = vunpack.c.l.b16 %v2361
        %v2368 = vunpack.c.l.b16 %v2362
        %v2369 = vpack.c.b16 %v2367, %v2366
        %v2370 = vpack.c.b16 %v2368, %v2368
        %v2372 = vsel %vm759, %v2369, 0
        %v2375 = vsel %vm759, %v2370, 0
        %2377 = vmatprep.subr.bf16.mxu0 0
        %2378 = vmatpush1.bf16.msra.mxu0 0
        %2379 = vmatprep.subr.bf16.mxu0 0
        %2380 = vmatpush1.bf16.msra.mxu0 0
        %2381 = vmatprep.subr.bf16.mxu0 0
        %2382 = vmatpush1.bf16.msra.mxu0 0
        %2383 = vmatprep.subr.bf16.mxu0 0
        %2384 = vmatpush1.bf16.msra.mxu0 0
        %2385 = vmatprep.subr.bf16.mxu0 0
        %2386 = vmatpush1.bf16.msra.mxu0 %v768
        %2387 = vmatprep.subr.bf16.mxu0 0
        %2388 = vmatpush1.bf16.msra.mxu0 %v746
        %2389 = vmatprep.subr.bf16.mxu0 0
        %2390 = vmatpush1.bf16.msra.mxu0 %v745
        %2391 = vmatprep.subr.bf16.mxu0 0
        %2392 = vmatpush1.bf16.msra.mxu0 %v744
        %2393 = vmatprep.subr.bf16.mxu0 0
        %2394 = vmatpush2.bf16.msra.mxu0 0
        %2395 = vmatprep.subr.bf16.mxu0 0
        %2396 = vmatpush2.bf16.msra.mxu0 0
        %2397 = vmatprep.subr.bf16.mxu0 0
        %2398 = vmatpush2.bf16.msra.mxu0 0
        %2399 = vmatprep.subr.bf16.mxu0 0
        %2400 = vmatpush2.bf16.msra.mxu0 0
        %2401 = vmatprep.subr.bf16.mxu0 0
        %2402 = vmatpush2.bf16.msra.mxu0 0
        %2403 = vmatprep.subr.bf16.mxu0 0
        %2404 = vmatpush2.bf16.msra.mxu0 0
        %2405 = vmatprep.subr.bf16.mxu0 0
        %2406 = vmatpush2.bf16.msra.mxu0 0
        %2407 = vmatprep.subr.bf16.mxu0 0
        %2408 = vmatpush2.bf16.msra.mxu0 0
        %2409 = vmatprep.mubr.bf16.mxu0 0
        %2410 = vmatmul.mubr.bf16.gmra.mxu0 %v2372
        %v2411 = vpop.f32.mrf.mxu0
        %v2412 = vadd.f32 0.0, %v2411
        %v2413 = vpop.f32.mrf.mxu0
        %v2414 = vpop.f32.mrf.mxu0
        %v2415 = vadd.f32 0.0, %v2414
        %v2416 = vpop.f32.mrf.mxu0
        %2417 = vmatprep.mubr.bf16.mxu0 0
        %2418 = vmatmul.mubr.bf16.gmra.mxu0 %v2375
        %v2419 = vpop.f32.mrf.mxu0
        %v2420 = vadd.f32 0.0, %v2419
        %v2421 = vpop.f32.mrf.mxu0
        %v2422 = vpop.f32.mrf.mxu0
        %v2423 = vpop.f32.mrf.mxu0
        %2424 = vdwg.mxu0
        %s2425 = scalar_lea.vmem %s2, 504
        %v2426 = vld [vmem:[%s2425] sm:$0xff]
        %v2427 = vld [vmem:[%s2425 + $0x8] sm:$0xff]
        %v2428 = vld [vmem:[%s2425 + $0x10] sm:$0xff]
        %v2429 = vld [vmem:[%s2425 + $0x18] sm:$0xff]
        %v2430 = vld [vmem:[%s2425 + $0x20] sm:$0xff]
        %v2431 = vld [vmem:[%s2425 + $0x28] sm:$0xff]
        %v2432 = vld [vmem:[%s2425 + $0x30] sm:$0x11]
        %v2433 = vpack.c.bf16 %v2415, %v2412
        %v2434 = vpack.c.bf16 %v2420, %v2420
        %v2442 = vunpack.c.l.b16 %v2426
        %v2443 = vunpack.c.h.b16 %v2426
        %v2444 = vunpack.c.l.b16 %v2427
        %v2445 = vunpack.c.h.b16 %v2427
        %v2446 = vunpack.c.l.b16 %v2428
        %v2447 = vunpack.c.h.b16 %v2428
        %v2448 = vunpack.c.l.b16 %v2429
        %v2449 = vunpack.c.h.b16 %v2429
        %v2450 = vunpack.c.l.b16 %v2430
        %v2451 = vunpack.c.h.b16 %v2430
        %v2452 = vunpack.c.l.b16 %v2431
        %v2453 = vunpack.c.h.b16 %v2431
        %v2454 = vunpack.c.l.b16 %v2432
        %v2455 = vunpack.c.h.b16 %v2432
        %v2456 = vpack.c.b16 %v2444, %v2442
        %v2457 = vpack.c.b16 %v2445, %v2443
        %v2458 = vpack.c.b16 %v2448, %v2446
        %v2459 = vpack.c.b16 %v2449, %v2447
        %v2460 = vpack.c.b16 %v2452, %v2450
        %v2461 = vpack.c.b16 %v2453, %v2451
        %v2462 = vpack.c.b16 %v2454, %v2454
        %v2463 = vpack.c.b16 %v2455, %v2455
        %v2471 = vsel %vm759, %v2433, 0
        %v2474 = vsel %vm759, %v2434, 0
        %v2477 = vsel %vm766, %v2462, 0
        %v2480 = vsel %vm766, %v2463, 0
        %2482 = vmatprep.subr.bf16.mxu0 0
        %2483 = vmatpush1.bf16.msra.mxu0 0
        %2484 = vmatprep.subr.bf16.mxu0 0
        %2485 = vmatpush1.bf16.msra.mxu0 0
        %2486 = vmatprep.subr.bf16.mxu0 0
        %2487 = vmatpush1.bf16.msra.mxu0 0
        %2488 = vmatprep.subr.bf16.mxu0 0
        %2489 = vmatpush1.bf16.msra.mxu0 0
        %2490 = vmatprep.subr.bf16.mxu0 %v2480
        %2491 = vmatpush1.bf16.msra.mxu0 %v2477
        %2492 = vmatprep.subr.bf16.mxu0 %v2461
        %2493 = vmatpush1.bf16.msra.mxu0 %v2460
        %2494 = vmatprep.subr.bf16.mxu0 %v2459
        %2495 = vmatpush1.bf16.msra.mxu0 %v2458
        %2496 = vmatprep.subr.bf16.mxu0 %v2457
        %2497 = vmatpush1.bf16.msra.mxu0 %v2456
        %2498 = vmatprep.subr.bf16.mxu0 0
        %2499 = vmatpush2.bf16.msra.mxu0 0
        %2500 = vmatprep.subr.bf16.mxu0 0
        %2501 = vmatpush2.bf16.msra.mxu0 0
        %2502 = vmatprep.subr.bf16.mxu0 0
        %2503 = vmatpush2.bf16.msra.mxu0 0
        %2504 = vmatprep.subr.bf16.mxu0 0
        %2505 = vmatpush2.bf16.msra.mxu0 0
        %2506 = vmatprep.subr.bf16.mxu0 0
        %2507 = vmatpush2.bf16.msra.mxu0 0
        %2508 = vmatprep.subr.bf16.mxu0 0
        %2509 = vmatpush2.bf16.msra.mxu0 0
        %2510 = vmatprep.subr.bf16.mxu0 0
        %2511 = vmatpush2.bf16.msra.mxu0 0
        %2512 = vmatprep.subr.bf16.mxu0 0
        %2513 = vmatpush2.bf16.msra.mxu0 0
        %2514 = vmatprep.mubr.bf16.mxu0 0
        %2515 = vmatmul.mubr.bf16.gmra.mxu0 %v2471
        %v2516 = vpop.f32.mrf.mxu0
        %v2517 = vadd.f32 0.0, %v2516
        %v2518 = vpop.f32.mrf.mxu0
        %v2519 = vadd.f32 0.0, %v2518
        %v2520 = vpop.f32.mrf.mxu0
        %v2521 = vadd.f32 0.0, %v2520
        %v2522 = vpop.f32.mrf.mxu0
        %v2523 = vadd.f32 0.0, %v2522
        %2524 = vmatprep.mubr.bf16.mxu0 0
        %2525 = vmatmul.mubr.bf16.gmra.mxu0 %v2474
        %v2526 = vpop.f32.mrf.mxu0
        %v2527 = vadd.f32 0.0, %v2526
        %v2528 = vpop.f32.mrf.mxu0
        %v2529 = vadd.f32 0.0, %v2528
        %v2530 = vpop.f32.mrf.mxu0
        %v2531 = vpop.f32.mrf.mxu0
        %2532 = vdwg.mxu0
        %v2533 = vadd.f32 %v2353, %v2517
        %v2534 = vadd.f32 %v2354, %v2519
        %v2535 = vadd.f32 %v2355, %v2521
        %v2536 = vadd.f32 %v2356, %v2523
        %v2537 = vadd.f32 %v2357, %v2527
        %v2538 = vadd.f32 %v2358, %v2529
        %s2539 = scalar_lea.vmem [#allocation2], 120
        %v2540 = vld [vmem:[%s2539] sm:$0xf]
        %v2541 = vld [vmem:[%s2539 + $0x4] sm:$0xf]
        %v2542 = vld [vmem:[%s2539 + $0x8] sm:$0xf]
        %v2546 = vunpack.c.l.b16 %v2540
        %v2547 = vunpack.c.l.b16 %v2541
        %v2548 = vunpack.c.l.b16 %v2542
        %v2549 = vpack.c.b16 %v2547, %v2546
        %v2550 = vpack.c.b16 %v2548, %v2548
        %v2552 = vsel %vm759, %v2549, 0
        %v2555 = vsel %vm759, %v2550, 0
        %2557 = vmatprep.subr.bf16.mxu0 0
        %2558 = vmatpush1.bf16.msra.mxu0 0
        %2559 = vmatprep.subr.bf16.mxu0 0
        %2560 = vmatpush1.bf16.msra.mxu0 0
        %2561 = vmatprep.subr.bf16.mxu0 0
        %2562 = vmatpush1.bf16.msra.mxu0 0
        %2563 = vmatprep.subr.bf16.mxu0 0
        %2564 = vmatpush1.bf16.msra.mxu0 0
        %2565 = vmatprep.subr.bf16.mxu0 0
        %2566 = vmatpush1.bf16.msra.mxu0 %v768
        %2567 = vmatprep.subr.bf16.mxu0 0
        %2568 = vmatpush1.bf16.msra.mxu0 %v746
        %2569 = vmatprep.subr.bf16.mxu0 0
        %2570 = vmatpush1.bf16.msra.mxu0 %v745
        %2571 = vmatprep.subr.bf16.mxu0 0
        %2572 = vmatpush1.bf16.msra.mxu0 %v744
        %2573 = vmatprep.subr.bf16.mxu0 0
        %2574 = vmatpush2.bf16.msra.mxu0 0
        %2575 = vmatprep.subr.bf16.mxu0 0
        %2576 = vmatpush2.bf16.msra.mxu0 0
        %2577 = vmatprep.subr.bf16.mxu0 0
        %2578 = vmatpush2.bf16.msra.mxu0 0
        %2579 = vmatprep.subr.bf16.mxu0 0
        %2580 = vmatpush2.bf16.msra.mxu0 0
        %2581 = vmatprep.subr.bf16.mxu0 0
        %2582 = vmatpush2.bf16.msra.mxu0 0
        %2583 = vmatprep.subr.bf16.mxu0 0
        %2584 = vmatpush2.bf16.msra.mxu0 0
        %2585 = vmatprep.subr.bf16.mxu0 0
        %2586 = vmatpush2.bf16.msra.mxu0 0
        %2587 = vmatprep.subr.bf16.mxu0 0
        %2588 = vmatpush2.bf16.msra.mxu0 0
        %2589 = vmatprep.mubr.bf16.mxu0 0
        %2590 = vmatmul.mubr.bf16.gmra.mxu0 %v2552
        %v2591 = vpop.f32.mrf.mxu0
        %v2592 = vadd.f32 0.0, %v2591
        %v2593 = vpop.f32.mrf.mxu0
        %v2594 = vpop.f32.mrf.mxu0
        %v2595 = vadd.f32 0.0, %v2594
        %v2596 = vpop.f32.mrf.mxu0
        %2597 = vmatprep.mubr.bf16.mxu0 0
        %2598 = vmatmul.mubr.bf16.gmra.mxu0 %v2555
        %v2599 = vpop.f32.mrf.mxu0
        %v2600 = vadd.f32 0.0, %v2599
        %v2601 = vpop.f32.mrf.mxu0
        %v2602 = vpop.f32.mrf.mxu0
        %v2603 = vpop.f32.mrf.mxu0
        %2604 = vdwg.mxu0
        %s2605 = scalar_lea.vmem %s2, 560
        %v2606 = vld [vmem:[%s2605] sm:$0xff]
        %v2607 = vld [vmem:[%s2605 + $0x8] sm:$0xff]
        %v2608 = vld [vmem:[%s2605 + $0x10] sm:$0xff]
        %v2609 = vld [vmem:[%s2605 + $0x18] sm:$0xff]
        %v2610 = vld [vmem:[%s2605 + $0x20] sm:$0xff]
        %v2611 = vld [vmem:[%s2605 + $0x28] sm:$0xff]
        %v2612 = vld [vmem:[%s2605 + $0x30] sm:$0x11]
        %v2613 = vpack.c.bf16 %v2595, %v2592
        %v2614 = vpack.c.bf16 %v2600, %v2600
        %v2622 = vunpack.c.l.b16 %v2606
        %v2623 = vunpack.c.h.b16 %v2606
        %v2624 = vunpack.c.l.b16 %v2607
        %v2625 = vunpack.c.h.b16 %v2607
        %v2626 = vunpack.c.l.b16 %v2608
        %v2627 = vunpack.c.h.b16 %v2608
        %v2628 = vunpack.c.l.b16 %v2609
        %v2629 = vunpack.c.h.b16 %v2609
        %v2630 = vunpack.c.l.b16 %v2610
        %v2631 = vunpack.c.h.b16 %v2610
        %v2632 = vunpack.c.l.b16 %v2611
        %v2633 = vunpack.c.h.b16 %v2611
        %v2634 = vunpack.c.l.b16 %v2612
        %v2635 = vunpack.c.h.b16 %v2612
        %v2636 = vpack.c.b16 %v2624, %v2622
        %v2637 = vpack.c.b16 %v2625, %v2623
        %v2638 = vpack.c.b16 %v2628, %v2626
        %v2639 = vpack.c.b16 %v2629, %v2627
        %v2640 = vpack.c.b16 %v2632, %v2630
        %v2641 = vpack.c.b16 %v2633, %v2631
        %v2642 = vpack.c.b16 %v2634, %v2634
        %v2643 = vpack.c.b16 %v2635, %v2635
        %v2651 = vsel %vm759, %v2613, 0
        %v2654 = vsel %vm759, %v2614, 0
        %v2657 = vsel %vm766, %v2642, 0
        %v2660 = vsel %vm766, %v2643, 0
        %2662 = vmatprep.subr.bf16.mxu0 0
        %2663 = vmatpush1.bf16.msra.mxu0 0
        %2664 = vmatprep.subr.bf16.mxu0 0
        %2665 = vmatpush1.bf16.msra.mxu0 0
        %2666 = vmatprep.subr.bf16.mxu0 0
        %2667 = vmatpush1.bf16.msra.mxu0 0
        %2668 = vmatprep.subr.bf16.mxu0 0
        %2669 = vmatpush1.bf16.msra.mxu0 0
        %2670 = vmatprep.subr.bf16.mxu0 %v2660
        %2671 = vmatpush1.bf16.msra.mxu0 %v2657
        %2672 = vmatprep.subr.bf16.mxu0 %v2641
        %2673 = vmatpush1.bf16.msra.mxu0 %v2640
        %2674 = vmatprep.subr.bf16.mxu0 %v2639
        %2675 = vmatpush1.bf16.msra.mxu0 %v2638
        %2676 = vmatprep.subr.bf16.mxu0 %v2637
        %2677 = vmatpush1.bf16.msra.mxu0 %v2636
        %2678 = vmatprep.subr.bf16.mxu0 0
        %2679 = vmatpush2.bf16.msra.mxu0 0
        %2680 = vmatprep.subr.bf16.mxu0 0
        %2681 = vmatpush2.bf16.msra.mxu0 0
        %2682 = vmatprep.subr.bf16.mxu0 0
        %2683 = vmatpush2.bf16.msra.mxu0 0
        %2684 = vmatprep.subr.bf16.mxu0 0
        %2685 = vmatpush2.bf16.msra.mxu0 0
        %2686 = vmatprep.subr.bf16.mxu0 0
        %2687 = vmatpush2.bf16.msra.mxu0 0
        %2688 = vmatprep.subr.bf16.mxu0 0
        %2689 = vmatpush2.bf16.msra.mxu0 0
        %2690 = vmatprep.subr.bf16.mxu0 0
        %2691 = vmatpush2.bf16.msra.mxu0 0
        %2692 = vmatprep.subr.bf16.mxu0 0
        %2693 = vmatpush2.bf16.msra.mxu0 0
        %2694 = vmatprep.mubr.bf16.mxu0 0
        %2695 = vmatmul.mubr.bf16.gmra.mxu0 %v2651
        %v2696 = vpop.f32.mrf.mxu0
        %v2697 = vadd.f32 0.0, %v2696
        %v2698 = vpop.f32.mrf.mxu0
        %v2699 = vadd.f32 0.0, %v2698
        %v2700 = vpop.f32.mrf.mxu0
        %v2701 = vadd.f32 0.0, %v2700
        %v2702 = vpop.f32.mrf.mxu0
        %v2703 = vadd.f32 0.0, %v2702
        %2704 = vmatprep.mubr.bf16.mxu0 0
        %2705 = vmatmul.mubr.bf16.gmra.mxu0 %v2654
        %v2706 = vpop.f32.mrf.mxu0
        %v2707 = vadd.f32 0.0, %v2706
        %v2708 = vpop.f32.mrf.mxu0
        %v2709 = vadd.f32 0.0, %v2708
        %v2710 = vpop.f32.mrf.mxu0
        %v2711 = vpop.f32.mrf.mxu0
        %2712 = vdwg.mxu0
        %v2713 = vadd.f32 %v2533, %v2697
        %v2714 = vadd.f32 %v2534, %v2699
        %v2715 = vadd.f32 %v2535, %v2701
        %v2716 = vadd.f32 %v2536, %v2703
        %v2717 = vadd.f32 %v2537, %v2707
        %v2718 = vadd.f32 %v2538, %v2709
        %v2719 = vld [vmem:[%s3] sm:$0x3]
        %v2721 = vlaneseq
        %v2722 = vshrl.u32 %v2721, 7
        %v2723 = vsub.s32 0, %v2722
        %v2724 = vrot.slane %v2719, %v2723
        %v2725 = vlaneseq
        %v2726 = vshrl.u32 %v2725, 7
        %v2727 = vsub.s32 1, %v2726
        %v2728 = vrot.slane %v2719, %v2727
        %v2731 = vadd.f32 %v2713, %v2724
        %v2732 = vadd.f32 %v2714, %v2728
        %v2733 = vadd.f32 %v2715, %v2724
        %v2734 = vadd.f32 %v2716, %v2728
        %v2735 = vadd.f32 %v2717, %v2724
        %v2736 = vadd.f32 %v2718, %v2728
        %v2737 = vmax.f32 %v2731, 0.0
        %v2738 = vmax.f32 %v2732, 0.0
        %v2739 = vmax.f32 %v2733, 0.0
        %v2740 = vmax.f32 %v2734, 0.0
        %v2741 = vmax.f32 %v2735, 0.0
        %v2742 = vmax.f32 %v2736, 0.0
        %v2743 = vld [vmem:[%s4] sm:$0xf]
        %v2744 = vld [vmem:[%s4 + $0x4] sm:$0x3]
        %v2745 = vpack.c.bf16 %v2739, %v2737
        %v2746 = vpack.c.bf16 %v2740, %v2738
        %v2747 = vpack.c.bf16 %v2741, %v2741
        %v2748 = vpack.c.bf16 %v2742, %v2742
        %v2751 = vunpack.c.l.b16 %v2743
        %v2752 = vunpack.c.l.b16 %v2744
        %v2753 = vpack.c.b16 %v2752, %v2751
        %vm2754 = vcmask 195584
        %v2756 = vsel %vm2754, %v2753, 0
        %vm2758 = vcmask 1043456
        %v2760 = vsel %vm2758, %v2747, 0
        %v2763 = vsel %vm2758, %v2748, 0
        %2765 = vmatprep.subr.bf16.mxu0 0
        %2766 = vmatpush1.bf16.msra.mxu0 0
        %2767 = vmatprep.subr.bf16.mxu0 0
        %2768 = vmatpush1.bf16.msra.mxu0 0
        %2769 = vmatprep.subr.bf16.mxu0 0
        %2770 = vmatpush1.bf16.msra.mxu0 0
        %2771 = vmatprep.subr.bf16.mxu0 0
        %2772 = vmatpush1.bf16.msra.mxu0 0
        %2773 = vmatprep.subr.bf16.mxu0 0
        %2774 = vmatpush1.bf16.msra.mxu0 0
        %2775 = vmatprep.subr.bf16.mxu0 0
        %2776 = vmatpush1.bf16.msra.mxu0 0
        %2777 = vmatprep.subr.bf16.mxu0 %v2763
        %2778 = vmatpush1.bf16.msra.mxu0 %v2760
        %2779 = vmatprep.subr.bf16.mxu0 %v2746
        %2780 = vmatpush1.bf16.msra.mxu0 %v2745
        %2781 = vmatprep.subr.bf16.mxu0 0
        %2782 = vmatpush2.bf16.msra.mxu0 0
        %2783 = vmatprep.subr.bf16.mxu0 0
        %2784 = vmatpush2.bf16.msra.mxu0 0
        %2785 = vmatprep.subr.bf16.mxu0 0
        %2786 = vmatpush2.bf16.msra.mxu0 0
        %2787 = vmatprep.subr.bf16.mxu0 0
        %2788 = vmatpush2.bf16.msra.mxu0 0
        %2789 = vmatprep.subr.bf16.mxu0 0
        %2790 = vmatpush2.bf16.msra.mxu0 0
        %2791 = vmatprep.subr.bf16.mxu0 0
        %2792 = vmatpush2.bf16.msra.mxu0 0
        %2793 = vmatprep.subr.bf16.mxu0 0
        %2794 = vmatpush2.bf16.msra.mxu0 0
        %2795 = vmatprep.subr.bf16.mxu0 0
        %2796 = vmatpush2.bf16.msra.mxu0 0
        %2797 = vmatprep.mubr.bf16.mxu0 0
        %2798 = vmatmul.mubr.bf16.gmra.mxu0 %v2756
        %v2799 = vpop.f32.mrf.mxu0
        %v2800 = vadd.f32 0.0, %v2799
        %v2801 = vpop.f32.mrf.mxu0
        %v2802 = vadd.f32 0.0, %v2801
        %v2803 = vpop.f32.mrf.mxu0
        %v2804 = vadd.f32 0.0, %v2803
        %v2805 = vpop.f32.mrf.mxu0
        %v2806 = vadd.f32 0.0, %v2805
        %2807 = vdwg.mxu0
        %s2808 = scalar_lea.vmem %s4, 8
        %v2809 = vld [vmem:[%s2808] sm:$0xf]
        %v2810 = vld [vmem:[%s2808 + $0x4] sm:$0x3]
        %v2813 = vunpack.c.l.b16 %v2809
        %v2814 = vunpack.c.l.b16 %v2810
        %v2815 = vpack.c.b16 %v2814, %v2813
        %v2817 = vsel %vm2754, %v2815, 0
        %2819 = vmatprep.subr.bf16.mxu0 0
        %2820 = vmatpush1.bf16.msra.mxu0 0
        %2821 = vmatprep.subr.bf16.mxu0 0
        %2822 = vmatpush1.bf16.msra.mxu0 0
        %2823 = vmatprep.subr.bf16.mxu0 0
        %2824 = vmatpush1.bf16.msra.mxu0 0
        %2825 = vmatprep.subr.bf16.mxu0 0
        %2826 = vmatpush1.bf16.msra.mxu0 0
        %2827 = vmatprep.subr.bf16.mxu0 0
        %2828 = vmatpush1.bf16.msra.mxu0 0
        %2829 = vmatprep.subr.bf16.mxu0 0
        %2830 = vmatpush1.bf16.msra.mxu0 0
        %2831 = vmatprep.subr.bf16.mxu0 %v2763
        %2832 = vmatpush1.bf16.msra.mxu0 %v2760
        %2833 = vmatprep.subr.bf16.mxu0 %v2746
        %2834 = vmatpush1.bf16.msra.mxu0 %v2745
        %2835 = vmatprep.subr.bf16.mxu0 0
        %2836 = vmatpush2.bf16.msra.mxu0 0
        %2837 = vmatprep.subr.bf16.mxu0 0
        %2838 = vmatpush2.bf16.msra.mxu0 0
        %2839 = vmatprep.subr.bf16.mxu0 0
        %2840 = vmatpush2.bf16.msra.mxu0 0
        %2841 = vmatprep.subr.bf16.mxu0 0
        %2842 = vmatpush2.bf16.msra.mxu0 0
        %2843 = vmatprep.subr.bf16.mxu0 0
        %2844 = vmatpush2.bf16.msra.mxu0 0
        %2845 = vmatprep.subr.bf16.mxu0 0
        %2846 = vmatpush2.bf16.msra.mxu0 0
        %2847 = vmatprep.subr.bf16.mxu0 0
        %2848 = vmatpush2.bf16.msra.mxu0 0
        %2849 = vmatprep.subr.bf16.mxu0 0
        %2850 = vmatpush2.bf16.msra.mxu0 0
        %2851 = vmatprep.mubr.bf16.mxu0 0
        %2852 = vmatmul.mubr.bf16.gmra.mxu0 %v2817
        %v2853 = vpop.f32.mrf.mxu0
        %v2854 = vadd.f32 0.0, %v2853
        %v2855 = vpop.f32.mrf.mxu0
        %v2856 = vadd.f32 0.0, %v2855
        %v2857 = vpop.f32.mrf.mxu0
        %v2858 = vadd.f32 0.0, %v2857
        %v2859 = vpop.f32.mrf.mxu0
        %v2860 = vadd.f32 0.0, %v2859
        %2861 = vdwg.mxu0
        %v2862 = vmax.f32 %v2800, %v2854
        %v2863 = vmax.f32 %v2802, %v2856
        %v2864 = vmax.f32 %v2804, %v2858
        %v2865 = vmax.f32 %v2806, %v2860
        %v2866 = vld [vmem:[%s5] sm:$0xf]
        %v2867 = vld [vmem:[%s5 + $0x4] sm:$0xf]
        %v2868 = vld [vmem:[%s5 + $0x8] sm:$0xf]
        %v2869 = vld [vmem:[%s5 + $0xc] sm:$0xf]
        %v2870 = vld [vmem:[%s5 + $0x10] sm:$0xf]
        %v2871 = vld [vmem:[%s5 + $0x14] sm:$0xf]
        %v2872 = vld [vmem:[%s5 + $0x18] sm:$0xf]
        %v2873 = vld [vmem:[%s5 + $0x1c] sm:$0xf]
        %v2874 = vld [vmem:[%s5 + $0x20] sm:$0xf]
        %v2875 = vld [vmem:[%s5 + $0x24] sm:$0xf]
        %v2876 = vld [vmem:[%s5 + $0x28] sm:$0xf]
        %v2877 = vld [vmem:[%s5 + $0x2c] sm:$0xf]
        %v2878 = vld [vmem:[%s5 + $0x30] sm:$0xf]
        %v2879 = vld [vmem:[%s5 + $0x34] sm:$0xf]
        %v2880 = vld [vmem:[%s5 + $0x38] sm:$0xf]
        %v2881 = vld [vmem:[%s5 + $0x3c] sm:$0xf]
        %v2882 = vld [vmem:[%s5 + $0x40] sm:$0xf]
        %v2883 = vld [vmem:[%s5 + $0x44] sm:$0xf]
        %v2884 = vld [vmem:[%s5 + $0x48] sm:$0xf]
        %v2885 = vld [vmem:[%s5 + $0x4c] sm:$0xf]
        %v2886 = vld [vmem:[%s5 + $0x50] sm:$0xf]
        %v2887 = vld [vmem:[%s5 + $0x54] sm:$0xf]
        %v2888 = vld [vmem:[%s5 + $0x58] sm:$0xf]
        %v2889 = vld [vmem:[%s5 + $0x5c] sm:$0xf]
        %v2890 = vpack.c.bf16 %v2864, %v2862
        %v2891 = vpack.c.bf16 %v2865, %v2863
        %v2916 = vunpack.c.l.b16 %v2866
        %v2917 = vunpack.c.l.b16 %v2867
        %v2918 = vunpack.c.l.b16 %v2868
        %v2919 = vunpack.c.l.b16 %v2869
        %v2920 = vunpack.c.l.b16 %v2870
        %v2921 = vunpack.c.l.b16 %v2871
        %v2922 = vunpack.c.l.b16 %v2872
        %v2923 = vunpack.c.l.b16 %v2873
        %v2924 = vunpack.c.l.b16 %v2874
        %v2925 = vunpack.c.l.b16 %v2875
        %v2926 = vunpack.c.l.b16 %v2876
        %v2927 = vunpack.c.l.b16 %v2877
        %v2928 = vunpack.c.l.b16 %v2878
        %v2929 = vunpack.c.l.b16 %v2879
        %v2930 = vunpack.c.l.b16 %v2880
        %v2931 = vunpack.c.l.b16 %v2881
        %v2932 = vunpack.c.l.b16 %v2882
        %v2933 = vunpack.c.l.b16 %v2883
        %v2934 = vunpack.c.l.b16 %v2884
        %v2935 = vunpack.c.l.b16 %v2885
        %v2936 = vunpack.c.l.b16 %v2886
        %v2937 = vunpack.c.l.b16 %v2887
        %v2938 = vunpack.c.l.b16 %v2888
        %v2939 = vunpack.c.l.b16 %v2889
        %v2940 = vpack.c.b16 %v2917, %v2916
        %v2941 = vpack.c.b16 %v2919, %v2918
        %v2942 = vpack.c.b16 %v2921, %v2920
        %v2943 = vpack.c.b16 %v2923, %v2922
        %v2944 = vpack.c.b16 %v2925, %v2924
        %v2945 = vpack.c.b16 %v2927, %v2926
        %v2946 = vpack.c.b16 %v2929, %v2928
        %v2947 = vpack.c.b16 %v2931, %v2930
        %v2948 = vpack.c.b16 %v2933, %v2932
        %v2949 = vpack.c.b16 %v2935, %v2934
        %v2950 = vpack.c.b16 %v2937, %v2936
        %v2951 = vpack.c.b16 %v2939, %v2938
        %vm2964 = vcmask 523264
        %v2966 = vsel %vm2964, %v2891, 0
        %2968 = vmatprep.subr.bf16.mxu0 0
        %2969 = vmatpush1.bf16.msra.mxu0 %v2947
        %2970 = vmatprep.subr.bf16.mxu0 0
        %2971 = vmatpush1.bf16.msra.mxu0 %v2946
        %2972 = vmatprep.subr.bf16.mxu0 0
        %2973 = vmatpush1.bf16.msra.mxu0 %v2945
        %2974 = vmatprep.subr.bf16.mxu0 0
        %2975 = vmatpush1.bf16.msra.mxu0 %v2944
        %2976 = vmatprep.subr.bf16.mxu0 0
        %2977 = vmatpush1.bf16.msra.mxu0 %v2943
        %2978 = vmatprep.subr.bf16.mxu0 0
        %2979 = vmatpush1.bf16.msra.mxu0 %v2942
        %2980 = vmatprep.subr.bf16.mxu0 0
        %2981 = vmatpush1.bf16.msra.mxu0 %v2941
        %2982 = vmatprep.subr.bf16.mxu0 0
        %2983 = vmatpush1.bf16.msra.mxu0 %v2940
        %2984 = vmatprep.subr.bf16.mxu0 0
        %2985 = vmatpush2.bf16.msra.mxu0 0
        %2986 = vmatprep.subr.bf16.mxu0 0
        %2987 = vmatpush2.bf16.msra.mxu0 0
        %2988 = vmatprep.subr.bf16.mxu0 0
        %2989 = vmatpush2.bf16.msra.mxu0 0
        %2990 = vmatprep.subr.bf16.mxu0 0
        %2991 = vmatpush2.bf16.msra.mxu0 0
        %2992 = vmatprep.subr.bf16.mxu0 0
        %2993 = vmatpush2.bf16.msra.mxu0 %v2951
        %2994 = vmatprep.subr.bf16.mxu0 0
        %2995 = vmatpush2.bf16.msra.mxu0 %v2950
        %2996 = vmatprep.subr.bf16.mxu0 0
        %2997 = vmatpush2.bf16.msra.mxu0 %v2949
        %2998 = vmatprep.subr.bf16.mxu0 0
        %2999 = vmatpush2.bf16.msra.mxu0 %v2948
        %3000 = vmatprep.mubr.bf16.mxu0 %v2966
        %3001 = vmatmul.mubr.bf16.gmra.mxu0 %v2890
        %v3002 = vpop.f32.mrf.mxu0
        %v3003 = vadd.f32 0.0, %v3002
        %v3004 = vpop.f32.mrf.mxu0
        %v3005 = vpop.f32.mrf.mxu0
        %v3006 = vadd.f32 0.0, %v3005
        %v3007 = vpop.f32.mrf.mxu0
        %3008 = vdwg.mxu0
        %s3009 = scalar_lea.vmem %s5, 96
        %v3010 = vld [vmem:[%s3009] sm:$0xf]
        %v3011 = vld [vmem:[%s3009 + $0x4] sm:$0xf]
        %v3012 = vld [vmem:[%s3009 + $0x8] sm:$0xf]
        %v3013 = vld [vmem:[%s3009 + $0xc] sm:$0xf]
        %v3014 = vld [vmem:[%s3009 + $0x10] sm:$0xf]
        %v3015 = vld [vmem:[%s3009 + $0x14] sm:$0xf]
        %v3016 = vld [vmem:[%s3009 + $0x18] sm:$0xf]
        %v3017 = vld [vmem:[%s3009 + $0x1c] sm:$0xf]
        %v3018 = vld [vmem:[%s3009 + $0x20] sm:$0xf]
        %v3019 = vld [vmem:[%s3009 + $0x24] sm:$0xf]
        %v3020 = vld [vmem:[%s3009 + $0x28] sm:$0xf]
        %v3021 = vld [vmem:[%s3009 + $0x2c] sm:$0xf]
        %v3022 = vld [vmem:[%s3009 + $0x30] sm:$0xf]
        %v3023 = vld [vmem:[%s3009 + $0x34] sm:$0xf]
        %v3024 = vld [vmem:[%s3009 + $0x38] sm:$0xf]
        %v3025 = vld [vmem:[%s3009 + $0x3c] sm:$0xf]
        %v3026 = vld [vmem:[%s3009 + $0x40] sm:$0xf]
        %v3027 = vld [vmem:[%s3009 + $0x44] sm:$0xf]
        %v3028 = vld [vmem:[%s3009 + $0x48] sm:$0xf]
        %v3029 = vld [vmem:[%s3009 + $0x4c] sm:$0xf]
        %v3030 = vld [vmem:[%s3009 + $0x50] sm:$0xf]
        %v3031 = vld [vmem:[%s3009 + $0x54] sm:$0xf]
        %v3032 = vld [vmem:[%s3009 + $0x58] sm:$0xf]
        %v3033 = vld [vmem:[%s3009 + $0x5c] sm:$0xf]
        %v3058 = vunpack.c.l.b16 %v3010
        %v3059 = vunpack.c.l.b16 %v3011
        %v3060 = vunpack.c.l.b16 %v3012
        %v3061 = vunpack.c.l.b16 %v3013
        %v3062 = vunpack.c.l.b16 %v3014
        %v3063 = vunpack.c.l.b16 %v3015
        %v3064 = vunpack.c.l.b16 %v3016
        %v3065 = vunpack.c.l.b16 %v3017
        %v3066 = vunpack.c.l.b16 %v3018
        %v3067 = vunpack.c.l.b16 %v3019
        %v3068 = vunpack.c.l.b16 %v3020
        %v3069 = vunpack.c.l.b16 %v3021
        %v3070 = vunpack.c.l.b16 %v3022
        %v3071 = vunpack.c.l.b16 %v3023
        %v3072 = vunpack.c.l.b16 %v3024
        %v3073 = vunpack.c.l.b16 %v3025
        %v3074 = vunpack.c.l.b16 %v3026
        %v3075 = vunpack.c.l.b16 %v3027
        %v3076 = vunpack.c.l.b16 %v3028
        %v3077 = vunpack.c.l.b16 %v3029
        %v3078 = vunpack.c.l.b16 %v3030
        %v3079 = vunpack.c.l.b16 %v3031
        %v3080 = vunpack.c.l.b16 %v3032
        %v3081 = vunpack.c.l.b16 %v3033
        %v3082 = vpack.c.b16 %v3059, %v3058
        %v3083 = vpack.c.b16 %v3061, %v3060
        %v3084 = vpack.c.b16 %v3063, %v3062
        %v3085 = vpack.c.b16 %v3065, %v3064
        %v3086 = vpack.c.b16 %v3067, %v3066
        %v3087 = vpack.c.b16 %v3069, %v3068
        %v3088 = vpack.c.b16 %v3071, %v3070
        %v3089 = vpack.c.b16 %v3073, %v3072
        %v3090 = vpack.c.b16 %v3075, %v3074
        %v3091 = vpack.c.b16 %v3077, %v3076
        %v3092 = vpack.c.b16 %v3079, %v3078
        %v3093 = vpack.c.b16 %v3081, %v3080
        %3106 = vmatprep.subr.bf16.mxu0 0
        %3107 = vmatpush1.bf16.msra.mxu0 %v3089
        %3108 = vmatprep.subr.bf16.mxu0 0
        %3109 = vmatpush1.bf16.msra.mxu0 %v3088
        %3110 = vmatprep.subr.bf16.mxu0 0
        %3111 = vmatpush1.bf16.msra.mxu0 %v3087
        %3112 = vmatprep.subr.bf16.mxu0 0
        %3113 = vmatpush1.bf16.msra.mxu0 %v3086
        %3114 = vmatprep.subr.bf16.mxu0 0
        %3115 = vmatpush1.bf16.msra.mxu0 %v3085
        %3116 = vmatprep.subr.bf16.mxu0 0
        %3117 = vmatpush1.bf16.msra.mxu0 %v3084
        %3118 = vmatprep.subr.bf16.mxu0 0
        %3119 = vmatpush1.bf16.msra.mxu0 %v3083
        %3120 = vmatprep.subr.bf16.mxu0 0
        %3121 = vmatpush1.bf16.msra.mxu0 %v3082
        %3122 = vmatprep.subr.bf16.mxu0 0
        %3123 = vmatpush2.bf16.msra.mxu0 0
        %3124 = vmatprep.subr.bf16.mxu0 0
        %3125 = vmatpush2.bf16.msra.mxu0 0
        %3126 = vmatprep.subr.bf16.mxu0 0
        %3127 = vmatpush2.bf16.msra.mxu0 0
        %3128 = vmatprep.subr.bf16.mxu0 0
        %3129 = vmatpush2.bf16.msra.mxu0 0
        %3130 = vmatprep.subr.bf16.mxu0 0
        %3131 = vmatpush2.bf16.msra.mxu0 %v3093
        %3132 = vmatprep.subr.bf16.mxu0 0
        %3133 = vmatpush2.bf16.msra.mxu0 %v3092
        %3134 = vmatprep.subr.bf16.mxu0 0
        %3135 = vmatpush2.bf16.msra.mxu0 %v3091
        %3136 = vmatprep.subr.bf16.mxu0 0
        %3137 = vmatpush2.bf16.msra.mxu0 %v3090
        %3138 = vmatprep.mubr.bf16.mxu0 %v2966
        %3139 = vmatmul.mubr.bf16.gmra.mxu0 %v2890
        %v3140 = vpop.f32.mrf.mxu0
        %v3141 = vadd.f32 0.0, %v3140
        %v3142 = vpop.f32.mrf.mxu0
        %v3143 = vpop.f32.mrf.mxu0
        %v3144 = vadd.f32 0.0, %v3143
        %v3145 = vpop.f32.mrf.mxu0
        %3146 = vdwg.mxu0
        %v3147 = vmax.f32 %v3003, %v3141
        %v3148 = vmax.f32 %v3006, %v3144
        %v3149 = vld [vmem:[#allocation5] sm:$0xf]
        %v3150 = vld [vmem:[#allocation5 + $0x4] sm:$0x3]
        %v3151 = vpack.c.bf16 %v3148, %v3147
        %v3154 = vunpack.c.l.b16 %v3149
        %v3155 = vunpack.c.l.b16 %v3150
        %v3156 = vpack.c.b16 %v3155, %v3154
        %vm3157 = vcmask 97280
        %v3159 = vsel %vm3157, %v3156, 0
        %vm3161 = vcmask 1045504
        %v3163 = vsel %vm3161, %v3151, 0
        %3165 = vmatprep.subr.bf16.mxu0 0
        %3166 = vmatpush1.bf16.msra.mxu0 0
        %3167 = vmatprep.subr.bf16.mxu0 0
        %3168 = vmatpush1.bf16.msra.mxu0 0
        %3169 = vmatprep.subr.bf16.mxu0 0
        %3170 = vmatpush1.bf16.msra.mxu0 0
        %3171 = vmatprep.subr.bf16.mxu0 0
        %3172 = vmatpush1.bf16.msra.mxu0 0
        %3173 = vmatprep.subr.bf16.mxu0 0
        %3174 = vmatpush1.bf16.msra.mxu0 0
        %3175 = vmatprep.subr.bf16.mxu0 0
        %3176 = vmatpush1.bf16.msra.mxu0 0
        %3177 = vmatprep.subr.bf16.mxu0 0
        %3178 = vmatpush1.bf16.msra.mxu0 0
        %3179 = vmatprep.subr.bf16.mxu0 0
        %3180 = vmatpush1.bf16.msra.mxu0 %v3163
        %3181 = vmatprep.subr.bf16.mxu0 0
        %3182 = vmatpush2.bf16.msra.mxu0 0
        %3183 = vmatprep.subr.bf16.mxu0 0
        %3184 = vmatpush2.bf16.msra.mxu0 0
        %3185 = vmatprep.subr.bf16.mxu0 0
        %3186 = vmatpush2.bf16.msra.mxu0 0
        %3187 = vmatprep.subr.bf16.mxu0 0
        %3188 = vmatpush2.bf16.msra.mxu0 0
        %3189 = vmatprep.subr.bf16.mxu0 0
        %3190 = vmatpush2.bf16.msra.mxu0 0
        %3191 = vmatprep.subr.bf16.mxu0 0
        %3192 = vmatpush2.bf16.msra.mxu0 0
        %3193 = vmatprep.subr.bf16.mxu0 0
        %3194 = vmatpush2.bf16.msra.mxu0 0
        %3195 = vmatprep.subr.bf16.mxu0 0
        %3196 = vmatpush2.bf16.msra.mxu0 0
        %3197 = vmatprep.mubr.bf16.mxu0 0
        %3198 = vmatmul.mubr.bf16.gmra.mxu0 %v3159
        %v3199 = vpop.f32.mrf.mxu0
        %v3200 = vadd.f32 0.0, %v3199
        %v3201 = vpop.f32.mrf.mxu0
        %v3202 = vpop.f32.mrf.mxu0
        %v3203 = vadd.f32 0.0, %v3202
        %v3204 = vpop.f32.mrf.mxu0
        %3205 = vdwg.mxu0
        %v3206 = vld [vmem:[#allocation7] sm:$0xff]
        %v3207 = vld [vmem:[#allocation7 + $0x8] sm:$0xff]
        %v3208 = vld [vmem:[#allocation7 + $0x10] sm:$0xff]
        %v3209 = vld [vmem:[#allocation7 + $0x18] sm:$0xff]
        %v3210 = vld [vmem:[#allocation7 + $0x20] sm:$0xff]
        %v3211 = vld [vmem:[#allocation7 + $0x28] sm:$0xff]
        %v3212 = vld [vmem:[#allocation7 + $0x30] sm:$0xff]
        %v3213 = vld [vmem:[#allocation7 + $0x38] sm:$0xff]
        %v3214 = vld [vmem:[#allocation7 + $0x40] sm:$0xff]
        %v3215 = vld [vmem:[#allocation7 + $0x48] sm:$0xff]
        %v3216 = vld [vmem:[#allocation7 + $0x50] sm:$0xff]
        %v3217 = vld [vmem:[#allocation7 + $0x58] sm:$0xff]
        %v3218 = vpack.c.bf16 %v3203, %v3200
        %s3219 = scalar_lea.vmem [#allocation5], 8
        %v3220 = vld [vmem:[%s3219] sm:$0xf]
        %v3221 = vld [vmem:[%s3219 + $0x4] sm:$0x3]
        %v3224 = vunpack.c.l.b16 %v3220
        %v3225 = vunpack.c.l.b16 %v3221
        %v3226 = vpack.c.b16 %v3225, %v3224
        %v3228 = vsel %vm3157, %v3226, 0
        %3230 = vmatprep.subr.bf16.mxu0 0
        %3231 = vmatpush1.bf16.msra.mxu0 0
        %3232 = vmatprep.subr.bf16.mxu0 0
        %3233 = vmatpush1.bf16.msra.mxu0 0
        %3234 = vmatprep.subr.bf16.mxu0 0
        %3235 = vmatpush1.bf16.msra.mxu0 0
        %3236 = vmatprep.subr.bf16.mxu0 0
        %3237 = vmatpush1.bf16.msra.mxu0 0
        %3238 = vmatprep.subr.bf16.mxu0 0
        %3239 = vmatpush1.bf16.msra.mxu0 0
        %3240 = vmatprep.subr.bf16.mxu0 0
        %3241 = vmatpush1.bf16.msra.mxu0 0
        %3242 = vmatprep.subr.bf16.mxu0 0
        %3243 = vmatpush1.bf16.msra.mxu0 0
        %3244 = vmatprep.subr.bf16.mxu0 0
        %3245 = vmatpush1.bf16.msra.mxu0 %v3163
        %3246 = vmatprep.subr.bf16.mxu0 0
        %3247 = vmatpush2.bf16.msra.mxu0 0
        %3248 = vmatprep.subr.bf16.mxu0 0
        %3249 = vmatpush2.bf16.msra.mxu0 0
        %3250 = vmatprep.subr.bf16.mxu0 0
        %3251 = vmatpush2.bf16.msra.mxu0 0
        %3252 = vmatprep.subr.bf16.mxu0 0
        %3253 = vmatpush2.bf16.msra.mxu0 0
        %3254 = vmatprep.subr.bf16.mxu0 0
        %3255 = vmatpush2.bf16.msra.mxu0 0
        %3256 = vmatprep.subr.bf16.mxu0 0
        %3257 = vmatpush2.bf16.msra.mxu0 0
        %3258 = vmatprep.subr.bf16.mxu0 0
        %3259 = vmatpush2.bf16.msra.mxu0 0
        %3260 = vmatprep.subr.bf16.mxu0 0
        %3261 = vmatpush2.bf16.msra.mxu0 0
        %3262 = vmatprep.mubr.bf16.mxu0 0
        %3263 = vmatmul.mubr.bf16.gmra.mxu0 %v3228
        %v3264 = vpop.f32.mrf.mxu0
        %v3265 = vadd.f32 0.0, %v3264
        %v3266 = vpop.f32.mrf.mxu0
        %v3267 = vpop.f32.mrf.mxu0
        %v3268 = vadd.f32 0.0, %v3267
        %v3269 = vpop.f32.mrf.mxu0
        %3270 = vdwg.mxu0
        %s3271 = scalar_lea.vmem [#allocation7], 96
        %v3272 = vld [vmem:[%s3271] sm:$0xff]
        %v3273 = vld [vmem:[%s3271 + $0x8] sm:$0xff]
        %v3274 = vld [vmem:[%s3271 + $0x10] sm:$0xff]
        %v3275 = vld [vmem:[%s3271 + $0x18] sm:$0xff]
        %v3276 = vld [vmem:[%s3271 + $0x20] sm:$0xff]
        %v3277 = vld [vmem:[%s3271 + $0x28] sm:$0xff]
        %v3278 = vld [vmem:[%s3271 + $0x30] sm:$0xff]
        %v3279 = vld [vmem:[%s3271 + $0x38] sm:$0xff]
        %v3280 = vld [vmem:[%s3271 + $0x40] sm:$0xff]
        %v3281 = vld [vmem:[%s3271 + $0x48] sm:$0xff]
        %v3282 = vld [vmem:[%s3271 + $0x50] sm:$0xff]
        %v3283 = vld [vmem:[%s3271 + $0x58] sm:$0xff]
        %v3284 = vpack.c.bf16 %v3268, %v3265
        %v3297 = vunpack.c.l.b16 %v3272
        %v3298 = vunpack.c.h.b16 %v3272
        %v3299 = vunpack.c.l.b16 %v3273
        %v3300 = vunpack.c.h.b16 %v3273
        %v3301 = vunpack.c.l.b16 %v3274
        %v3302 = vunpack.c.h.b16 %v3274
        %v3303 = vunpack.c.l.b16 %v3275
        %v3304 = vunpack.c.h.b16 %v3275
        %v3305 = vunpack.c.l.b16 %v3276
        %v3306 = vunpack.c.h.b16 %v3276
        %v3307 = vunpack.c.l.b16 %v3277
        %v3308 = vunpack.c.h.b16 %v3277
        %v3309 = vunpack.c.l.b16 %v3278
        %v3310 = vunpack.c.h.b16 %v3278
        %v3311 = vunpack.c.l.b16 %v3279
        %v3312 = vunpack.c.h.b16 %v3279
        %v3313 = vunpack.c.l.b16 %v3280
        %v3314 = vunpack.c.h.b16 %v3280
        %v3315 = vunpack.c.l.b16 %v3281
        %v3316 = vunpack.c.h.b16 %v3281
        %v3317 = vunpack.c.l.b16 %v3282
        %v3318 = vunpack.c.h.b16 %v3282
        %v3319 = vunpack.c.l.b16 %v3283
        %v3320 = vunpack.c.h.b16 %v3283
        %v3321 = vpack.c.b16 %v3299, %v3297
        %v3322 = vpack.c.b16 %v3300, %v3298
        %v3323 = vpack.c.b16 %v3303, %v3301
        %v3324 = vpack.c.b16 %v3304, %v3302
        %v3325 = vpack.c.b16 %v3307, %v3305
        %v3326 = vpack.c.b16 %v3308, %v3306
        %v3327 = vpack.c.b16 %v3311, %v3309
        %v3328 = vpack.c.b16 %v3312, %v3310
        %v3329 = vpack.c.b16 %v3315, %v3313
        %v3330 = vpack.c.b16 %v3316, %v3314
        %v3331 = vpack.c.b16 %v3319, %v3317
        %v3332 = vpack.c.b16 %v3320, %v3318
        %vm3345 = vcmask 785408
        %v3347 = vsel %vm3345, %v3284, 0
        %3349 = vmatprep.subr.bf16.mxu0 0
        %3350 = vmatpush1.bf16.msra.mxu0 0
        %3351 = vmatprep.subr.bf16.mxu0 0
        %3352 = vmatpush1.bf16.msra.mxu0 0
        %3353 = vmatprep.subr.bf16.mxu0 %v3332
        %3354 = vmatpush1.bf16.msra.mxu0 %v3331
        %3355 = vmatprep.subr.bf16.mxu0 %v3330
        %3356 = vmatpush1.bf16.msra.mxu0 %v3329
        %3357 = vmatprep.subr.bf16.mxu0 %v3328
        %3358 = vmatpush1.bf16.msra.mxu0 %v3327
        %3359 = vmatprep.subr.bf16.mxu0 %v3326
        %3360 = vmatpush1.bf16.msra.mxu0 %v3325
        %3361 = vmatprep.subr.bf16.mxu0 %v3324
        %3362 = vmatpush1.bf16.msra.mxu0 %v3323
        %3363 = vmatprep.subr.bf16.mxu0 %v3322
        %3364 = vmatpush1.bf16.msra.mxu0 %v3321
        %3365 = vmatprep.subr.bf16.mxu0 0
        %3366 = vmatpush2.bf16.msra.mxu0 0
        %3367 = vmatprep.subr.bf16.mxu0 0
        %3368 = vmatpush2.bf16.msra.mxu0 0
        %3369 = vmatprep.subr.bf16.mxu0 0
        %3370 = vmatpush2.bf16.msra.mxu0 0
        %3371 = vmatprep.subr.bf16.mxu0 0
        %3372 = vmatpush2.bf16.msra.mxu0 0
        %3373 = vmatprep.subr.bf16.mxu0 0
        %3374 = vmatpush2.bf16.msra.mxu0 0
        %3375 = vmatprep.subr.bf16.mxu0 0
        %3376 = vmatpush2.bf16.msra.mxu0 0
        %3377 = vmatprep.subr.bf16.mxu0 0
        %3378 = vmatpush2.bf16.msra.mxu0 0
        %3379 = vmatprep.subr.bf16.mxu0 0
        %3380 = vmatpush2.bf16.msra.mxu0 0
        %3381 = vmatprep.mubr.bf16.mxu0 0
        %3382 = vmatmul.mubr.bf16.gmra.mxu0 %v3347
        %v3383 = vpop.f32.mrf.mxu0
        %v3384 = vadd.f32 0.0, %v3383
        %v3385 = vpop.f32.mrf.mxu0
        %v3386 = vadd.f32 0.0, %v3385
        %v3387 = vpop.f32.mrf.mxu0
        %v3388 = vadd.f32 0.0, %v3387
        %v3389 = vpop.f32.mrf.mxu0
        %v3390 = vadd.f32 0.0, %v3389
        %3391 = vdwg.mxu0
        %v3404 = vunpack.c.l.b16 %v3206
        %v3405 = vunpack.c.h.b16 %v3206
        %v3406 = vunpack.c.l.b16 %v3207
        %v3407 = vunpack.c.h.b16 %v3207
        %v3408 = vunpack.c.l.b16 %v3208
        %v3409 = vunpack.c.h.b16 %v3208
        %v3410 = vunpack.c.l.b16 %v3209
        %v3411 = vunpack.c.h.b16 %v3209
        %v3412 = vunpack.c.l.b16 %v3210
        %v3413 = vunpack.c.h.b16 %v3210
        %v3414 = vunpack.c.l.b16 %v3211
        %v3415 = vunpack.c.h.b16 %v3211
        %v3416 = vunpack.c.l.b16 %v3212
        %v3417 = vunpack.c.h.b16 %v3212
        %v3418 = vunpack.c.l.b16 %v3213
        %v3419 = vunpack.c.h.b16 %v3213
        %v3420 = vunpack.c.l.b16 %v3214
        %v3421 = vunpack.c.h.b16 %v3214
        %v3422 = vunpack.c.l.b16 %v3215
        %v3423 = vunpack.c.h.b16 %v3215
        %v3424 = vunpack.c.l.b16 %v3216
        %v3425 = vunpack.c.h.b16 %v3216
        %v3426 = vunpack.c.l.b16 %v3217
        %v3427 = vunpack.c.h.b16 %v3217
        %v3428 = vpack.c.b16 %v3406, %v3404
        %v3429 = vpack.c.b16 %v3407, %v3405
        %v3430 = vpack.c.b16 %v3410, %v3408
        %v3431 = vpack.c.b16 %v3411, %v3409
        %v3432 = vpack.c.b16 %v3414, %v3412
        %v3433 = vpack.c.b16 %v3415, %v3413
        %v3434 = vpack.c.b16 %v3418, %v3416
        %v3435 = vpack.c.b16 %v3419, %v3417
        %v3436 = vpack.c.b16 %v3422, %v3420
        %v3437 = vpack.c.b16 %v3423, %v3421
        %v3438 = vpack.c.b16 %v3426, %v3424
        %v3439 = vpack.c.b16 %v3427, %v3425
        %v3453 = vsel %vm3345, %v3218, 0
        %3455 = vmatprep.subr.bf16.mxu0 0
        %3456 = vmatpush1.bf16.msra.mxu0 0
        %3457 = vmatprep.subr.bf16.mxu0 0
        %3458 = vmatpush1.bf16.msra.mxu0 0
        %3459 = vmatprep.subr.bf16.mxu0 %v3439
        %3460 = vmatpush1.bf16.msra.mxu0 %v3438
        %3461 = vmatprep.subr.bf16.mxu0 %v3437
        %3462 = vmatpush1.bf16.msra.mxu0 %v3436
        %3463 = vmatprep.subr.bf16.mxu0 %v3435
        %3464 = vmatpush1.bf16.msra.mxu0 %v3434
        %3465 = vmatprep.subr.bf16.mxu0 %v3433
        %3466 = vmatpush1.bf16.msra.mxu0 %v3432
        %3467 = vmatprep.subr.bf16.mxu0 %v3431
        %3468 = vmatpush1.bf16.msra.mxu0 %v3430
        %3469 = vmatprep.subr.bf16.mxu0 %v3429
        %3470 = vmatpush1.bf16.msra.mxu0 %v3428
        %3471 = vmatprep.subr.bf16.mxu0 0
        %3472 = vmatpush2.bf16.msra.mxu0 0
        %3473 = vmatprep.subr.bf16.mxu0 0
        %3474 = vmatpush2.bf16.msra.mxu0 0
        %3475 = vmatprep.subr.bf16.mxu0 0
        %3476 = vmatpush2.bf16.msra.mxu0 0
        %3477 = vmatprep.subr.bf16.mxu0 0
        %3478 = vmatpush2.bf16.msra.mxu0 0
        %3479 = vmatprep.subr.bf16.mxu0 0
        %3480 = vmatpush2.bf16.msra.mxu0 0
        %3481 = vmatprep.subr.bf16.mxu0 0
        %3482 = vmatpush2.bf16.msra.mxu0 0
        %3483 = vmatprep.subr.bf16.mxu0 0
        %3484 = vmatpush2.bf16.msra.mxu0 0
        %3485 = vmatprep.subr.bf16.mxu0 0
        %3486 = vmatpush2.bf16.msra.mxu0 0
        %3487 = vmatprep.mubr.bf16.mxu0 0
        %3488 = vmatmul.mubr.bf16.gmra.mxu0 %v3453
        %v3489 = vpop.f32.mrf.mxu0
        %v3490 = vadd.f32 %v3384, %v3489
        %v3491 = vpop.f32.mrf.mxu0
        %v3492 = vadd.f32 %v3386, %v3491
        %v3493 = vpop.f32.mrf.mxu0
        %v3494 = vadd.f32 %v3388, %v3493
        %v3495 = vpop.f32.mrf.mxu0
        %v3496 = vadd.f32 %v3390, %v3495
        %3497 = vdwg.mxu0
        %s3498 = scalar_lea.vmem [#allocation5], 16
        %v3499 = vld [vmem:[%s3498] sm:$0xf]
        %v3500 = vld [vmem:[%s3498 + $0x4] sm:$0x3]
        %v3503 = vunpack.c.l.b16 %v3499
        %v3504 = vunpack.c.l.b16 %v3500
        %v3505 = vpack.c.b16 %v3504, %v3503
        %v3507 = vsel %vm3157, %v3505, 0
        %3509 = vmatprep.subr.bf16.mxu0 0
        %3510 = vmatpush1.bf16.msra.mxu0 0
        %3511 = vmatprep.subr.bf16.mxu0 0
        %3512 = vmatpush1.bf16.msra.mxu0 0
        %3513 = vmatprep.subr.bf16.mxu0 0
        %3514 = vmatpush1.bf16.msra.mxu0 0
        %3515 = vmatprep.subr.bf16.mxu0 0
        %3516 = vmatpush1.bf16.msra.mxu0 0
        %3517 = vmatprep.subr.bf16.mxu0 0
        %3518 = vmatpush1.bf16.msra.mxu0 0
        %3519 = vmatprep.subr.bf16.mxu0 0
        %3520 = vmatpush1.bf16.msra.mxu0 0
        %3521 = vmatprep.subr.bf16.mxu0 0
        %3522 = vmatpush1.bf16.msra.mxu0 0
        %3523 = vmatprep.subr.bf16.mxu0 0
        %3524 = vmatpush1.bf16.msra.mxu0 %v3163
        %3525 = vmatprep.subr.bf16.mxu0 0
        %3526 = vmatpush2.bf16.msra.mxu0 0
        %3527 = vmatprep.subr.bf16.mxu0 0
        %3528 = vmatpush2.bf16.msra.mxu0 0
        %3529 = vmatprep.subr.bf16.mxu0 0
        %3530 = vmatpush2.bf16.msra.mxu0 0
        %3531 = vmatprep.subr.bf16.mxu0 0
        %3532 = vmatpush2.bf16.msra.mxu0 0
        %3533 = vmatprep.subr.bf16.mxu0 0
        %3534 = vmatpush2.bf16.msra.mxu0 0
        %3535 = vmatprep.subr.bf16.mxu0 0
        %3536 = vmatpush2.bf16.msra.mxu0 0
        %3537 = vmatprep.subr.bf16.mxu0 0
        %3538 = vmatpush2.bf16.msra.mxu0 0
        %3539 = vmatprep.subr.bf16.mxu0 0
        %3540 = vmatpush2.bf16.msra.mxu0 0
        %3541 = vmatprep.mubr.bf16.mxu0 0
        %3542 = vmatmul.mubr.bf16.gmra.mxu0 %v3507
        %v3543 = vpop.f32.mrf.mxu0
        %v3544 = vadd.f32 0.0, %v3543
        %v3545 = vpop.f32.mrf.mxu0
        %v3546 = vpop.f32.mrf.mxu0
        %v3547 = vadd.f32 0.0, %v3546
        %v3548 = vpop.f32.mrf.mxu0
        %3549 = vdwg.mxu0
        %s3550 = scalar_lea.vmem [#allocation7], 192
        %v3551 = vld [vmem:[%s3550] sm:$0xff]
        %v3552 = vld [vmem:[%s3550 + $0x8] sm:$0xff]
        %v3553 = vld [vmem:[%s3550 + $0x10] sm:$0xff]
        %v3554 = vld [vmem:[%s3550 + $0x18] sm:$0xff]
        %v3555 = vld [vmem:[%s3550 + $0x20] sm:$0xff]
        %v3556 = vld [vmem:[%s3550 + $0x28] sm:$0xff]
        %v3557 = vld [vmem:[%s3550 + $0x30] sm:$0xff]
        %v3558 = vld [vmem:[%s3550 + $0x38] sm:$0xff]
        %v3559 = vld [vmem:[%s3550 + $0x40] sm:$0xff]
        %v3560 = vld [vmem:[%s3550 + $0x48] sm:$0xff]
        %v3561 = vld [vmem:[%s3550 + $0x50] sm:$0xff]
        %v3562 = vld [vmem:[%s3550 + $0x58] sm:$0xff]
        %v3563 = vpack.c.bf16 %v3547, %v3544
        %v3576 = vunpack.c.l.b16 %v3551
        %v3577 = vunpack.c.h.b16 %v3551
        %v3578 = vunpack.c.l.b16 %v3552
        %v3579 = vunpack.c.h.b16 %v3552
        %v3580 = vunpack.c.l.b16 %v3553
        %v3581 = vunpack.c.h.b16 %v3553
        %v3582 = vunpack.c.l.b16 %v3554
        %v3583 = vunpack.c.h.b16 %v3554
        %v3584 = vunpack.c.l.b16 %v3555
        %v3585 = vunpack.c.h.b16 %v3555
        %v3586 = vunpack.c.l.b16 %v3556
        %v3587 = vunpack.c.h.b16 %v3556
        %v3588 = vunpack.c.l.b16 %v3557
        %v3589 = vunpack.c.h.b16 %v3557
        %v3590 = vunpack.c.l.b16 %v3558
        %v3591 = vunpack.c.h.b16 %v3558
        %v3592 = vunpack.c.l.b16 %v3559
        %v3593 = vunpack.c.h.b16 %v3559
        %v3594 = vunpack.c.l.b16 %v3560
        %v3595 = vunpack.c.h.b16 %v3560
        %v3596 = vunpack.c.l.b16 %v3561
        %v3597 = vunpack.c.h.b16 %v3561
        %v3598 = vunpack.c.l.b16 %v3562
        %v3599 = vunpack.c.h.b16 %v3562
        %v3600 = vpack.c.b16 %v3578, %v3576
        %v3601 = vpack.c.b16 %v3579, %v3577
        %v3602 = vpack.c.b16 %v3582, %v3580
        %v3603 = vpack.c.b16 %v3583, %v3581
        %v3604 = vpack.c.b16 %v3586, %v3584
        %v3605 = vpack.c.b16 %v3587, %v3585
        %v3606 = vpack.c.b16 %v3590, %v3588
        %v3607 = vpack.c.b16 %v3591, %v3589
        %v3608 = vpack.c.b16 %v3594, %v3592
        %v3609 = vpack.c.b16 %v3595, %v3593
        %v3610 = vpack.c.b16 %v3598, %v3596
        %v3611 = vpack.c.b16 %v3599, %v3597
        %v3625 = vsel %vm3345, %v3563, 0
        %3627 = vmatprep.subr.bf16.mxu0 0
        %3628 = vmatpush1.bf16.msra.mxu0 0
        %3629 = vmatprep.subr.bf16.mxu0 0
        %3630 = vmatpush1.bf16.msra.mxu0 0
        %3631 = vmatprep.subr.bf16.mxu0 %v3611
        %3632 = vmatpush1.bf16.msra.mxu0 %v3610
        %3633 = vmatprep.subr.bf16.mxu0 %v3609
        %3634 = vmatpush1.bf16.msra.mxu0 %v3608
        %3635 = vmatprep.subr.bf16.mxu0 %v3607
        %3636 = vmatpush1.bf16.msra.mxu0 %v3606
        %3637 = vmatprep.subr.bf16.mxu0 %v3605
        %3638 = vmatpush1.bf16.msra.mxu0 %v3604
        %3639 = vmatprep.subr.bf16.mxu0 %v3603
        %3640 = vmatpush1.bf16.msra.mxu0 %v3602
        %3641 = vmatprep.subr.bf16.mxu0 %v3601
        %3642 = vmatpush1.bf16.msra.mxu0 %v3600
        %3643 = vmatprep.subr.bf16.mxu0 0
        %3644 = vmatpush2.bf16.msra.mxu0 0
        %3645 = vmatprep.subr.bf16.mxu0 0
        %3646 = vmatpush2.bf16.msra.mxu0 0
        %3647 = vmatprep.subr.bf16.mxu0 0
        %3648 = vmatpush2.bf16.msra.mxu0 0
        %3649 = vmatprep.subr.bf16.mxu0 0
        %3650 = vmatpush2.bf16.msra.mxu0 0
        %3651 = vmatprep.subr.bf16.mxu0 0
        %3652 = vmatpush2.bf16.msra.mxu0 0
        %3653 = vmatprep.subr.bf16.mxu0 0
        %3654 = vmatpush2.bf16.msra.mxu0 0
        %3655 = vmatprep.subr.bf16.mxu0 0
        %3656 = vmatpush2.bf16.msra.mxu0 0
        %3657 = vmatprep.subr.bf16.mxu0 0
        %3658 = vmatpush2.bf16.msra.mxu0 0
        %3659 = vmatprep.mubr.bf16.mxu0 0
        %3660 = vmatmul.mubr.bf16.gmra.mxu0 %v3625
        %v3661 = vpop.f32.mrf.mxu0
        %v3662 = vadd.f32 0.0, %v3661
        %v3663 = vpop.f32.mrf.mxu0
        %v3664 = vadd.f32 0.0, %v3663
        %v3665 = vpop.f32.mrf.mxu0
        %v3666 = vadd.f32 0.0, %v3665
        %v3667 = vpop.f32.mrf.mxu0
        %v3668 = vadd.f32 0.0, %v3667
        %3669 = vdwg.mxu0
        %v3670 = vadd.f32 %v3490, %v3662
        %v3671 = vadd.f32 %v3492, %v3664
        %v3672 = vadd.f32 %v3494, %v3666
        %v3673 = vadd.f32 %v3496, %v3668
        %v3674 = vld [vmem:[%s8] sm:$0x3]
        %v3676 = vlaneseq
        %v3677 = vshrl.u32 %v3676, 7
        %v3678 = vsub.s32 0, %v3677
        %v3679 = vrot.slane %v3674, %v3678
        %v3680 = vlaneseq
        %v3681 = vshrl.u32 %v3680, 7
        %v3682 = vsub.s32 1, %v3681
        %v3683 = vrot.slane %v3674, %v3682
        %v3686 = vadd.f32 %v3670, %v3679
        %v3687 = vadd.f32 %v3671, %v3683
        %v3688 = vadd.f32 %v3672, %v3679
        %v3689 = vadd.f32 %v3673, %v3683
        %v3690 = vmax.f32 %v3686, 0.0
        %v3691 = vmax.f32 %v3687, 0.0
        %v3692 = vmax.f32 %v3688, 0.0
        %v3693 = vmax.f32 %v3689, 0.0
        %v3694 = vpack.c.bf16 %v3692, %v3690
        %v3695 = vpack.c.bf16 %v3693, %v3691
        %v3697 = vsel %vm3161, %v3694, 0
        %v3700 = vsel %vm3161, %v3695, 0
        %3702 = vmatprep.subr.bf16.mxu0 0
        %3703 = vmatpush1.bf16.msra.mxu0 0
        %3704 = vmatprep.subr.bf16.mxu0 0
        %3705 = vmatpush1.bf16.msra.mxu0 0
        %3706 = vmatprep.subr.bf16.mxu0 0
        %3707 = vmatpush1.bf16.msra.mxu0 0
        %3708 = vmatprep.subr.bf16.mxu0 0
        %3709 = vmatpush1.bf16.msra.mxu0 0
        %3710 = vmatprep.subr.bf16.mxu0 0
        %3711 = vmatpush1.bf16.msra.mxu0 0
        %3712 = vmatprep.subr.bf16.mxu0 0
        %3713 = vmatpush1.bf16.msra.mxu0 0
        %3714 = vmatprep.subr.bf16.mxu0 0
        %3715 = vmatpush1.bf16.msra.mxu0 0
        %3716 = vmatprep.subr.bf16.mxu0 %v3700
        %3717 = vmatpush1.bf16.msra.mxu0 %v3697
        %3718 = vmatprep.subr.bf16.mxu0 0
        %3719 = vmatpush2.bf16.msra.mxu0 0
        %3720 = vmatprep.subr.bf16.mxu0 0
        %3721 = vmatpush2.bf16.msra.mxu0 0
        %3722 = vmatprep.subr.bf16.mxu0 0
        %3723 = vmatpush2.bf16.msra.mxu0 0
        %3724 = vmatprep.subr.bf16.mxu0 0
        %3725 = vmatpush2.bf16.msra.mxu0 0
        %3726 = vmatprep.subr.bf16.mxu0 0
        %3727 = vmatpush2.bf16.msra.mxu0 0
        %3728 = vmatprep.subr.bf16.mxu0 0
        %3729 = vmatpush2.bf16.msra.mxu0 0
        %3730 = vmatprep.subr.bf16.mxu0 0
        %3731 = vmatpush2.bf16.msra.mxu0 0
        %3732 = vmatprep.subr.bf16.mxu0 0
        %3733 = vmatpush2.bf16.msra.mxu0 0
        %3734 = vmatprep.mubr.bf16.mxu0 0
        %3735 = vmatmul.mubr.bf16.gmra.mxu0 %v3159
        %v3736 = vpop.f32.mrf.mxu0
        %v3737 = vadd.f32 0.0, %v3736
        %v3738 = vpop.f32.mrf.mxu0
        %v3739 = vadd.f32 0.0, %v3738
        %v3740 = vpop.f32.mrf.mxu0
        %v3741 = vadd.f32 0.0, %v3740
        %v3742 = vpop.f32.mrf.mxu0
        %v3743 = vadd.f32 0.0, %v3742
        %3744 = vdwg.mxu0
        %v3745 = vld [vmem:[%s9] sm:$0xff]
        %v3746 = vld [vmem:[%s9 + $0x8] sm:$0xff]
        %v3747 = vld [vmem:[%s9 + $0x10] sm:$0xff]
        %v3748 = vld [vmem:[%s9 + $0x18] sm:$0xff]
        %v3749 = vld [vmem:[%s9 + $0x20] sm:$0xff]
        %v3750 = vld [vmem:[%s9 + $0x28] sm:$0xff]
        %v3751 = vld [vmem:[%s9 + $0x30] sm:$0xff]
        %v3752 = vld [vmem:[%s9 + $0x38] sm:$0xff]
        %v3753 = vld [vmem:[%s9 + $0x40] sm:$0xff]
        %v3754 = vld [vmem:[%s9 + $0x48] sm:$0xff]
        %v3755 = vld [vmem:[%s9 + $0x50] sm:$0xff]
        %v3756 = vld [vmem:[%s9 + $0x58] sm:$0xff]
        %v3757 = vld [vmem:[%s9 + $0x60] sm:$0xff]
        %v3758 = vld [vmem:[%s9 + $0x68] sm:$0xff]
        %v3759 = vld [vmem:[%s9 + $0x70] sm:$0xff]
        %v3760 = vld [vmem:[%s9 + $0x78] sm:$0xff]
        %v3761 = vld [vmem:[%s9 + $0x80] sm:$0xff]
        %v3762 = vld [vmem:[%s9 + $0x88] sm:$0xff]
        %v3763 = vld [vmem:[%s9 + $0x90] sm:$0xff]
        %v3764 = vld [vmem:[%s9 + $0x98] sm:$0xff]
        %v3765 = vld [vmem:[%s9 + $0xa0] sm:$0xff]
        %v3766 = vld [vmem:[%s9 + $0xa8] sm:$0xff]
        %v3767 = vld [vmem:[%s9 + $0xb0] sm:$0xff]
        %v3768 = vld [vmem:[%s9 + $0xb8] sm:$0xff]
        %v3769 = vpack.c.bf16 %v3741, %v3737
        %v3770 = vpack.c.bf16 %v3743, %v3739
        %3771 = vmatprep.subr.bf16.mxu0 0
        %3772 = vmatpush1.bf16.msra.mxu0 0
        %3773 = vmatprep.subr.bf16.mxu0 0
        %3774 = vmatpush1.bf16.msra.mxu0 0
        %3775 = vmatprep.subr.bf16.mxu0 0
        %3776 = vmatpush1.bf16.msra.mxu0 0
        %3777 = vmatprep.subr.bf16.mxu0 0
        %3778 = vmatpush1.bf16.msra.mxu0 0
        %3779 = vmatprep.subr.bf16.mxu0 0
        %3780 = vmatpush1.bf16.msra.mxu0 0
        %3781 = vmatprep.subr.bf16.mxu0 0
        %3782 = vmatpush1.bf16.msra.mxu0 0
        %3783 = vmatprep.subr.bf16.mxu0 0
        %3784 = vmatpush1.bf16.msra.mxu0 0
        %3785 = vmatprep.subr.bf16.mxu0 %v3700
        %3786 = vmatpush1.bf16.msra.mxu0 %v3697
        %3787 = vmatprep.subr.bf16.mxu0 0
        %3788 = vmatpush2.bf16.msra.mxu0 0
        %3789 = vmatprep.subr.bf16.mxu0 0
        %3790 = vmatpush2.bf16.msra.mxu0 0
        %3791 = vmatprep.subr.bf16.mxu0 0
        %3792 = vmatpush2.bf16.msra.mxu0 0
        %3793 = vmatprep.subr.bf16.mxu0 0
        %3794 = vmatpush2.bf16.msra.mxu0 0
        %3795 = vmatprep.subr.bf16.mxu0 0
        %3796 = vmatpush2.bf16.msra.mxu0 0
        %3797 = vmatprep.subr.bf16.mxu0 0
        %3798 = vmatpush2.bf16.msra.mxu0 0
        %3799 = vmatprep.subr.bf16.mxu0 0
        %3800 = vmatpush2.bf16.msra.mxu0 0
        %3801 = vmatprep.subr.bf16.mxu0 0
        %3802 = vmatpush2.bf16.msra.mxu0 0
        %3803 = vmatprep.mubr.bf16.mxu0 0
        %3804 = vmatmul.mubr.bf16.gmra.mxu0 %v3228
        %v3805 = vpop.f32.mrf.mxu0
        %v3806 = vadd.f32 0.0, %v3805
        %v3807 = vpop.f32.mrf.mxu0
        %v3808 = vadd.f32 0.0, %v3807
        %v3809 = vpop.f32.mrf.mxu0
        %v3810 = vadd.f32 0.0, %v3809
        %v3811 = vpop.f32.mrf.mxu0
        %v3812 = vadd.f32 0.0, %v3811
        %3813 = vdwg.mxu0
        %s3814 = scalar_lea.vmem %s9, 192
        %v3815 = vld [vmem:[%s3814] sm:$0xff]
        %v3816 = vld [vmem:[%s3814 + $0x8] sm:$0xff]
        %v3817 = vld [vmem:[%s3814 + $0x10] sm:$0xff]
        %v3818 = vld [vmem:[%s3814 + $0x18] sm:$0xff]
        %v3819 = vld [vmem:[%s3814 + $0x20] sm:$0xff]
        %v3820 = vld [vmem:[%s3814 + $0x28] sm:$0xff]
        %v3821 = vld [vmem:[%s3814 + $0x30] sm:$0xff]
        %v3822 = vld [vmem:[%s3814 + $0x38] sm:$0xff]
        %v3823 = vld [vmem:[%s3814 + $0x40] sm:$0xff]
        %v3824 = vld [vmem:[%s3814 + $0x48] sm:$0xff]
        %v3825 = vld [vmem:[%s3814 + $0x50] sm:$0xff]
        %v3826 = vld [vmem:[%s3814 + $0x58] sm:$0xff]
        %v3827 = vld [vmem:[%s3814 + $0x60] sm:$0xff]
        %v3828 = vld [vmem:[%s3814 + $0x68] sm:$0xff]
        %v3829 = vld [vmem:[%s3814 + $0x70] sm:$0xff]
        %v3830 = vld [vmem:[%s3814 + $0x78] sm:$0xff]
        %v3831 = vld [vmem:[%s3814 + $0x80] sm:$0xff]
        %v3832 = vld [vmem:[%s3814 + $0x88] sm:$0xff]
        %v3833 = vld [vmem:[%s3814 + $0x90] sm:$0xff]
        %v3834 = vld [vmem:[%s3814 + $0x98] sm:$0xff]
        %v3835 = vld [vmem:[%s3814 + $0xa0] sm:$0xff]
        %v3836 = vld [vmem:[%s3814 + $0xa8] sm:$0xff]
        %v3837 = vld [vmem:[%s3814 + $0xb0] sm:$0xff]
        %v3838 = vld [vmem:[%s3814 + $0xb8] sm:$0xff]
        %v3839 = vpack.c.bf16 %v3810, %v3806
        %v3840 = vpack.c.bf16 %v3812, %v3808
        %v3865 = vunpack.c.l.b16 %v3815
        %v3866 = vunpack.c.h.b16 %v3815
        %v3867 = vunpack.c.l.b16 %v3816
        %v3868 = vunpack.c.h.b16 %v3816
        %v3869 = vunpack.c.l.b16 %v3817
        %v3870 = vunpack.c.h.b16 %v3817
        %v3871 = vunpack.c.l.b16 %v3818
        %v3872 = vunpack.c.h.b16 %v3818
        %v3873 = vunpack.c.l.b16 %v3819
        %v3874 = vunpack.c.h.b16 %v3819
        %v3875 = vunpack.c.l.b16 %v3820
        %v3876 = vunpack.c.h.b16 %v3820
        %v3877 = vunpack.c.l.b16 %v3821
        %v3878 = vunpack.c.h.b16 %v3821
        %v3879 = vunpack.c.l.b16 %v3822
        %v3880 = vunpack.c.h.b16 %v3822
        %v3881 = vunpack.c.l.b16 %v3823
        %v3882 = vunpack.c.h.b16 %v3823
        %v3883 = vunpack.c.l.b16 %v3824
        %v3884 = vunpack.c.h.b16 %v3824
        %v3885 = vunpack.c.l.b16 %v3825
        %v3886 = vunpack.c.h.b16 %v3825
        %v3887 = vunpack.c.l.b16 %v3826
        %v3888 = vunpack.c.h.b16 %v3826
        %v3889 = vunpack.c.l.b16 %v3827
        %v3890 = vunpack.c.h.b16 %v3827
        %v3891 = vunpack.c.l.b16 %v3828
        %v3892 = vunpack.c.h.b16 %v3828
        %v3893 = vunpack.c.l.b16 %v3829
        %v3894 = vunpack.c.h.b16 %v3829
        %v3895 = vunpack.c.l.b16 %v3830
        %v3896 = vunpack.c.h.b16 %v3830
        %v3897 = vunpack.c.l.b16 %v3831
        %v3898 = vunpack.c.h.b16 %v3831
        %v3899 = vunpack.c.l.b16 %v3832
        %v3900 = vunpack.c.h.b16 %v3832
        %v3901 = vunpack.c.l.b16 %v3833
        %v3902 = vunpack.c.h.b16 %v3833
        %v3903 = vunpack.c.l.b16 %v3834
        %v3904 = vunpack.c.h.b16 %v3834
        %v3905 = vunpack.c.l.b16 %v3835
        %v3906 = vunpack.c.h.b16 %v3835
        %v3907 = vunpack.c.l.b16 %v3836
        %v3908 = vunpack.c.h.b16 %v3836
        %v3909 = vunpack.c.l.b16 %v3837
        %v3910 = vunpack.c.h.b16 %v3837
        %v3911 = vunpack.c.l.b16 %v3838
        %v3912 = vunpack.c.h.b16 %v3838
        %v3913 = vpack.c.b16 %v3867, %v3865
        %v3914 = vpack.c.b16 %v3868, %v3866
        %v3915 = vpack.c.b16 %v3871, %v3869
        %v3916 = vpack.c.b16 %v3872, %v3870
        %v3917 = vpack.c.b16 %v3875, %v3873
        %v3918 = vpack.c.b16 %v3876, %v3874
        %v3919 = vpack.c.b16 %v3879, %v3877
        %v3920 = vpack.c.b16 %v3880, %v3878
        %v3921 = vpack.c.b16 %v3883, %v3881
        %v3922 = vpack.c.b16 %v3884, %v3882
        %v3923 = vpack.c.b16 %v3887, %v3885
        %v3924 = vpack.c.b16 %v3888, %v3886
        %v3925 = vpack.c.b16 %v3891, %v3889
        %v3926 = vpack.c.b16 %v3892, %v3890
        %v3927 = vpack.c.b16 %v3895, %v3893
        %v3928 = vpack.c.b16 %v3896, %v3894
        %v3929 = vpack.c.b16 %v3899, %v3897
        %v3930 = vpack.c.b16 %v3900, %v3898
        %v3931 = vpack.c.b16 %v3903, %v3901
        %v3932 = vpack.c.b16 %v3904, %v3902
        %v3933 = vpack.c.b16 %v3907, %v3905
        %v3934 = vpack.c.b16 %v3908, %v3906
        %v3935 = vpack.c.b16 %v3911, %v3909
        %v3936 = vpack.c.b16 %v3912, %v3910
        %v3962 = vsel %vm2964, %v3840, 0
        %3964 = vmatprep.subr.bf16.mxu0 %v3928
        %3965 = vmatpush1.bf16.msra.mxu0 %v3927
        %3966 = vmatprep.subr.bf16.mxu0 %v3926
        %3967 = vmatpush1.bf16.msra.mxu0 %v3925
        %3968 = vmatprep.subr.bf16.mxu0 %v3924
        %3969 = vmatpush1.bf16.msra.mxu0 %v3923
        %3970 = vmatprep.subr.bf16.mxu0 %v3922
        %3971 = vmatpush1.bf16.msra.mxu0 %v3921
        %3972 = vmatprep.subr.bf16.mxu0 %v3920
        %3973 = vmatpush1.bf16.msra.mxu0 %v3919
        %3974 = vmatprep.subr.bf16.mxu0 %v3918
        %3975 = vmatpush1.bf16.msra.mxu0 %v3917
        %3976 = vmatprep.subr.bf16.mxu0 %v3916
        %3977 = vmatpush1.bf16.msra.mxu0 %v3915
        %3978 = vmatprep.subr.bf16.mxu0 %v3914
        %3979 = vmatpush1.bf16.msra.mxu0 %v3913
        %3980 = vmatprep.subr.bf16.mxu0 0
        %3981 = vmatpush2.bf16.msra.mxu0 0
        %3982 = vmatprep.subr.bf16.mxu0 0
        %3983 = vmatpush2.bf16.msra.mxu0 0
        %3984 = vmatprep.subr.bf16.mxu0 0
        %3985 = vmatpush2.bf16.msra.mxu0 0
        %3986 = vmatprep.subr.bf16.mxu0 0
        %3987 = vmatpush2.bf16.msra.mxu0 0
        %3988 = vmatprep.subr.bf16.mxu0 %v3936
        %3989 = vmatpush2.bf16.msra.mxu0 %v3935
        %3990 = vmatprep.subr.bf16.mxu0 %v3934
        %3991 = vmatpush2.bf16.msra.mxu0 %v3933
        %3992 = vmatprep.subr.bf16.mxu0 %v3932
        %3993 = vmatpush2.bf16.msra.mxu0 %v3931
        %3994 = vmatprep.subr.bf16.mxu0 %v3930
        %3995 = vmatpush2.bf16.msra.mxu0 %v3929
        %3996 = vmatprep.mubr.bf16.mxu0 %v3962
        %3997 = vmatmul.mubr.bf16.gmra.mxu0 %v3839
        %v3998 = vpop.f32.mrf.mxu0
        %v3999 = vadd.f32 0.0, %v3998
        %v4000 = vpop.f32.mrf.mxu0
        %v4001 = vadd.f32 0.0, %v4000
        %v4002 = vpop.f32.mrf.mxu0
        %v4003 = vadd.f32 0.0, %v4002
        %v4004 = vpop.f32.mrf.mxu0
        %v4005 = vadd.f32 0.0, %v4004
        %4006 = vdwg.mxu0
        %v4031 = vunpack.c.l.b16 %v3745
        %v4032 = vunpack.c.h.b16 %v3745
        %v4033 = vunpack.c.l.b16 %v3746
        %v4034 = vunpack.c.h.b16 %v3746
        %v4035 = vunpack.c.l.b16 %v3747
        %v4036 = vunpack.c.h.b16 %v3747
        %v4037 = vunpack.c.l.b16 %v3748
        %v4038 = vunpack.c.h.b16 %v3748
        %v4039 = vunpack.c.l.b16 %v3749
        %v4040 = vunpack.c.h.b16 %v3749
        %v4041 = vunpack.c.l.b16 %v3750
        %v4042 = vunpack.c.h.b16 %v3750
        %v4043 = vunpack.c.l.b16 %v3751
        %v4044 = vunpack.c.h.b16 %v3751
        %v4045 = vunpack.c.l.b16 %v3752
        %v4046 = vunpack.c.h.b16 %v3752
        %v4047 = vunpack.c.l.b16 %v3753
        %v4048 = vunpack.c.h.b16 %v3753
        %v4049 = vunpack.c.l.b16 %v3754
        %v4050 = vunpack.c.h.b16 %v3754
        %v4051 = vunpack.c.l.b16 %v3755
        %v4052 = vunpack.c.h.b16 %v3755
        %v4053 = vunpack.c.l.b16 %v3756
        %v4054 = vunpack.c.h.b16 %v3756
        %v4055 = vunpack.c.l.b16 %v3757
        %v4056 = vunpack.c.h.b16 %v3757
        %v4057 = vunpack.c.l.b16 %v3758
        %v4058 = vunpack.c.h.b16 %v3758
        %v4059 = vunpack.c.l.b16 %v3759
        %v4060 = vunpack.c.h.b16 %v3759
        %v4061 = vunpack.c.l.b16 %v3760
        %v4062 = vunpack.c.h.b16 %v3760
        %v4063 = vunpack.c.l.b16 %v3761
        %v4064 = vunpack.c.h.b16 %v3761
        %v4065 = vunpack.c.l.b16 %v3762
        %v4066 = vunpack.c.h.b16 %v3762
        %v4067 = vunpack.c.l.b16 %v3763
        %v4068 = vunpack.c.h.b16 %v3763
        %v4069 = vunpack.c.l.b16 %v3764
        %v4070 = vunpack.c.h.b16 %v3764
        %v4071 = vunpack.c.l.b16 %v3765
        %v4072 = vunpack.c.h.b16 %v3765
        %v4073 = vunpack.c.l.b16 %v3766
        %v4074 = vunpack.c.h.b16 %v3766
        %v4075 = vunpack.c.l.b16 %v3767
        %v4076 = vunpack.c.h.b16 %v3767
        %v4077 = vunpack.c.l.b16 %v3768
        %v4078 = vunpack.c.h.b16 %v3768
        %v4079 = vpack.c.b16 %v4033, %v4031
        %v4080 = vpack.c.b16 %v4034, %v4032
        %v4081 = vpack.c.b16 %v4037, %v4035
        %v4082 = vpack.c.b16 %v4038, %v4036
        %v4083 = vpack.c.b16 %v4041, %v4039
        %v4084 = vpack.c.b16 %v4042, %v4040
        %v4085 = vpack.c.b16 %v4045, %v4043
        %v4086 = vpack.c.b16 %v4046, %v4044
        %v4087 = vpack.c.b16 %v4049, %v4047
        %v4088 = vpack.c.b16 %v4050, %v4048
        %v4089 = vpack.c.b16 %v4053, %v4051
        %v4090 = vpack.c.b16 %v4054, %v4052
        %v4091 = vpack.c.b16 %v4057, %v4055
        %v4092 = vpack.c.b16 %v4058, %v4056
        %v4093 = vpack.c.b16 %v4061, %v4059
        %v4094 = vpack.c.b16 %v4062, %v4060
        %v4095 = vpack.c.b16 %v4065, %v4063
        %v4096 = vpack.c.b16 %v4066, %v4064
        %v4097 = vpack.c.b16 %v4069, %v4067
        %v4098 = vpack.c.b16 %v4070, %v4068
        %v4099 = vpack.c.b16 %v4073, %v4071
        %v4100 = vpack.c.b16 %v4074, %v4072
        %v4101 = vpack.c.b16 %v4077, %v4075
        %v4102 = vpack.c.b16 %v4078, %v4076
        %v4128 = vsel %vm2964, %v3770, 0
        %4130 = vmatprep.subr.bf16.mxu0 %v4094
        %4131 = vmatpush1.bf16.msra.mxu0 %v4093
        %4132 = vmatprep.subr.bf16.mxu0 %v4092
        %4133 = vmatpush1.bf16.msra.mxu0 %v4091
        %4134 = vmatprep.subr.bf16.mxu0 %v4090
        %4135 = vmatpush1.bf16.msra.mxu0 %v4089
        %4136 = vmatprep.subr.bf16.mxu0 %v4088
        %4137 = vmatpush1.bf16.msra.mxu0 %v4087
        %4138 = vmatprep.subr.bf16.mxu0 %v4086
        %4139 = vmatpush1.bf16.msra.mxu0 %v4085
        %4140 = vmatprep.subr.bf16.mxu0 %v4084
        %4141 = vmatpush1.bf16.msra.mxu0 %v4083
        %4142 = vmatprep.subr.bf16.mxu0 %v4082
        %4143 = vmatpush1.bf16.msra.mxu0 %v4081
        %4144 = vmatprep.subr.bf16.mxu0 %v4080
        %4145 = vmatpush1.bf16.msra.mxu0 %v4079
        %4146 = vmatprep.subr.bf16.mxu0 0
        %4147 = vmatpush2.bf16.msra.mxu0 0
        %4148 = vmatprep.subr.bf16.mxu0 0
        %4149 = vmatpush2.bf16.msra.mxu0 0
        %4150 = vmatprep.subr.bf16.mxu0 0
        %4151 = vmatpush2.bf16.msra.mxu0 0
        %4152 = vmatprep.subr.bf16.mxu0 0
        %4153 = vmatpush2.bf16.msra.mxu0 0
        %4154 = vmatprep.subr.bf16.mxu0 %v4102
        %4155 = vmatpush2.bf16.msra.mxu0 %v4101
        %4156 = vmatprep.subr.bf16.mxu0 %v4100
        %4157 = vmatpush2.bf16.msra.mxu0 %v4099
        %4158 = vmatprep.subr.bf16.mxu0 %v4098
        %4159 = vmatpush2.bf16.msra.mxu0 %v4097
        %4160 = vmatprep.subr.bf16.mxu0 %v4096
        %4161 = vmatpush2.bf16.msra.mxu0 %v4095
        %4162 = vmatprep.mubr.bf16.mxu0 %v4128
        %4163 = vmatmul.mubr.bf16.gmra.mxu0 %v3769
        %v4164 = vpop.f32.mrf.mxu0
        %v4165 = vadd.f32 %v3999, %v4164
        %v4166 = vpop.f32.mrf.mxu0
        %v4167 = vadd.f32 %v4001, %v4166
        %v4168 = vpop.f32.mrf.mxu0
        %v4169 = vadd.f32 %v4003, %v4168
        %v4170 = vpop.f32.mrf.mxu0
        %v4171 = vadd.f32 %v4005, %v4170
        %4172 = vdwg.mxu0
        %4173 = vmatprep.subr.bf16.mxu0 0
        %4174 = vmatpush1.bf16.msra.mxu0 0
        %4175 = vmatprep.subr.bf16.mxu0 0
        %4176 = vmatpush1.bf16.msra.mxu0 0
        %4177 = vmatprep.subr.bf16.mxu0 0
        %4178 = vmatpush1.bf16.msra.mxu0 0
        %4179 = vmatprep.subr.bf16.mxu0 0
        %4180 = vmatpush1.bf16.msra.mxu0 0
        %4181 = vmatprep.subr.bf16.mxu0 0
        %4182 = vmatpush1.bf16.msra.mxu0 0
        %4183 = vmatprep.subr.bf16.mxu0 0
        %4184 = vmatpush1.bf16.msra.mxu0 0
        %4185 = vmatprep.subr.bf16.mxu0 0
        %4186 = vmatpush1.bf16.msra.mxu0 0
        %4187 = vmatprep.subr.bf16.mxu0 %v3700
        %4188 = vmatpush1.bf16.msra.mxu0 %v3697
        %4189 = vmatprep.subr.bf16.mxu0 0
        %4190 = vmatpush2.bf16.msra.mxu0 0
        %4191 = vmatprep.subr.bf16.mxu0 0
        %4192 = vmatpush2.bf16.msra.mxu0 0
        %4193 = vmatprep.subr.bf16.mxu0 0
        %4194 = vmatpush2.bf16.msra.mxu0 0
        %4195 = vmatprep.subr.bf16.mxu0 0
        %4196 = vmatpush2.bf16.msra.mxu0 0
        %4197 = vmatprep.subr.bf16.mxu0 0
        %4198 = vmatpush2.bf16.msra.mxu0 0
        %4199 = vmatprep.subr.bf16.mxu0 0
        %4200 = vmatpush2.bf16.msra.mxu0 0
        %4201 = vmatprep.subr.bf16.mxu0 0
        %4202 = vmatpush2.bf16.msra.mxu0 0
        %4203 = vmatprep.subr.bf16.mxu0 0
        %4204 = vmatpush2.bf16.msra.mxu0 0
        %4205 = vmatprep.mubr.bf16.mxu0 0
        %4206 = vmatmul.mubr.bf16.gmra.mxu0 %v3507
        %v4207 = vpop.f32.mrf.mxu0
        %v4208 = vadd.f32 0.0, %v4207
        %v4209 = vpop.f32.mrf.mxu0
        %v4210 = vadd.f32 0.0, %v4209
        %v4211 = vpop.f32.mrf.mxu0
        %v4212 = vadd.f32 0.0, %v4211
        %v4213 = vpop.f32.mrf.mxu0
        %v4214 = vadd.f32 0.0, %v4213
        %4215 = vdwg.mxu0
        %s4216 = scalar_lea.vmem %s9, 384
        %v4217 = vld [vmem:[%s4216] sm:$0xff]
        %v4218 = vld [vmem:[%s4216 + $0x8] sm:$0xff]
        %v4219 = vld [vmem:[%s4216 + $0x10] sm:$0xff]
        %v4220 = vld [vmem:[%s4216 + $0x18] sm:$0xff]
        %v4221 = vld [vmem:[%s4216 + $0x20] sm:$0xff]
        %v4222 = vld [vmem:[%s4216 + $0x28] sm:$0xff]
        %v4223 = vld [vmem:[%s4216 + $0x30] sm:$0xff]
        %v4224 = vld [vmem:[%s4216 + $0x38] sm:$0xff]
        %v4225 = vld [vmem:[%s4216 + $0x40] sm:$0xff]
        %v4226 = vld [vmem:[%s4216 + $0x48] sm:$0xff]
        %v4227 = vld [vmem:[%s4216 + $0x50] sm:$0xff]
        %v4228 = vld [vmem:[%s4216 + $0x58] sm:$0xff]
        %v4229 = vld [vmem:[%s4216 + $0x60] sm:$0xff]
        %v4230 = vld [vmem:[%s4216 + $0x68] sm:$0xff]
        %v4231 = vld [vmem:[%s4216 + $0x70] sm:$0xff]
        %v4232 = vld [vmem:[%s4216 + $0x78] sm:$0xff]
        %v4233 = vld [vmem:[%s4216 + $0x80] sm:$0xff]
        %v4234 = vld [vmem:[%s4216 + $0x88] sm:$0xff]
        %v4235 = vld [vmem:[%s4216 + $0x90] sm:$0xff]
        %v4236 = vld [vmem:[%s4216 + $0x98] sm:$0xff]
        %v4237 = vld [vmem:[%s4216 + $0xa0] sm:$0xff]
        %v4238 = vld [vmem:[%s4216 + $0xa8] sm:$0xff]
        %v4239 = vld [vmem:[%s4216 + $0xb0] sm:$0xff]
        %v4240 = vld [vmem:[%s4216 + $0xb8] sm:$0xff]
        %v4241 = vpack.c.bf16 %v4212, %v4208
        %v4242 = vpack.c.bf16 %v4214, %v4210
        %v4267 = vunpack.c.l.b16 %v4217
        %v4268 = vunpack.c.h.b16 %v4217
        %v4269 = vunpack.c.l.b16 %v4218
        %v4270 = vunpack.c.h.b16 %v4218
        %v4271 = vunpack.c.l.b16 %v4219
        %v4272 = vunpack.c.h.b16 %v4219
        %v4273 = vunpack.c.l.b16 %v4220
        %v4274 = vunpack.c.h.b16 %v4220
        %v4275 = vunpack.c.l.b16 %v4221
        %v4276 = vunpack.c.h.b16 %v4221
        %v4277 = vunpack.c.l.b16 %v4222
        %v4278 = vunpack.c.h.b16 %v4222
        %v4279 = vunpack.c.l.b16 %v4223
        %v4280 = vunpack.c.h.b16 %v4223
        %v4281 = vunpack.c.l.b16 %v4224
        %v4282 = vunpack.c.h.b16 %v4224
        %v4283 = vunpack.c.l.b16 %v4225
        %v4284 = vunpack.c.h.b16 %v4225
        %v4285 = vunpack.c.l.b16 %v4226
        %v4286 = vunpack.c.h.b16 %v4226
        %v4287 = vunpack.c.l.b16 %v4227
        %v4288 = vunpack.c.h.b16 %v4227
        %v4289 = vunpack.c.l.b16 %v4228
        %v4290 = vunpack.c.h.b16 %v4228
        %v4291 = vunpack.c.l.b16 %v4229
        %v4292 = vunpack.c.h.b16 %v4229
        %v4293 = vunpack.c.l.b16 %v4230
        %v4294 = vunpack.c.h.b16 %v4230
        %v4295 = vunpack.c.l.b16 %v4231
        %v4296 = vunpack.c.h.b16 %v4231
        %v4297 = vunpack.c.l.b16 %v4232
        %v4298 = vunpack.c.h.b16 %v4232
        %v4299 = vunpack.c.l.b16 %v4233
        %v4300 = vunpack.c.h.b16 %v4233
        %v4301 = vunpack.c.l.b16 %v4234
        %v4302 = vunpack.c.h.b16 %v4234
        %v4303 = vunpack.c.l.b16 %v4235
        %v4304 = vunpack.c.h.b16 %v4235
        %v4305 = vunpack.c.l.b16 %v4236
        %v4306 = vunpack.c.h.b16 %v4236
        %v4307 = vunpack.c.l.b16 %v4237
        %v4308 = vunpack.c.h.b16 %v4237
        %v4309 = vunpack.c.l.b16 %v4238
        %v4310 = vunpack.c.h.b16 %v4238
        %v4311 = vunpack.c.l.b16 %v4239
        %v4312 = vunpack.c.h.b16 %v4239
        %v4313 = vunpack.c.l.b16 %v4240
        %v4314 = vunpack.c.h.b16 %v4240
        %v4315 = vpack.c.b16 %v4269, %v4267
        %v4316 = vpack.c.b16 %v4270, %v4268
        %v4317 = vpack.c.b16 %v4273, %v4271
        %v4318 = vpack.c.b16 %v4274, %v4272
        %v4319 = vpack.c.b16 %v4277, %v4275
        %v4320 = vpack.c.b16 %v4278, %v4276
        %v4321 = vpack.c.b16 %v4281, %v4279
        %v4322 = vpack.c.b16 %v4282, %v4280
        %v4323 = vpack.c.b16 %v4285, %v4283
        %v4324 = vpack.c.b16 %v4286, %v4284
        %v4325 = vpack.c.b16 %v4289, %v4287
        %v4326 = vpack.c.b16 %v4290, %v4288
        %v4327 = vpack.c.b16 %v4293, %v4291
        %v4328 = vpack.c.b16 %v4294, %v4292
        %v4329 = vpack.c.b16 %v4297, %v4295
        %v4330 = vpack.c.b16 %v4298, %v4296
        %v4331 = vpack.c.b16 %v4301, %v4299
        %v4332 = vpack.c.b16 %v4302, %v4300
        %v4333 = vpack.c.b16 %v4305, %v4303
        %v4334 = vpack.c.b16 %v4306, %v4304
        %v4335 = vpack.c.b16 %v4309, %v4307
        %v4336 = vpack.c.b16 %v4310, %v4308
        %v4337 = vpack.c.b16 %v4313, %v4311
        %v4338 = vpack.c.b16 %v4314, %v4312
        %v4364 = vsel %vm2964, %v4242, 0
        %4366 = vmatprep.subr.bf16.mxu0 %v4330
        %4367 = vmatpush1.bf16.msra.mxu0 %v4329
        %4368 = vmatprep.subr.bf16.mxu0 %v4328
        %4369 = vmatpush1.bf16.msra.mxu0 %v4327
        %4370 = vmatprep.subr.bf16.mxu0 %v4326
        %4371 = vmatpush1.bf16.msra.mxu0 %v4325
        %4372 = vmatprep.subr.bf16.mxu0 %v4324
        %4373 = vmatpush1.bf16.msra.mxu0 %v4323
        %4374 = vmatprep.subr.bf16.mxu0 %v4322
        %4375 = vmatpush1.bf16.msra.mxu0 %v4321
        %4376 = vmatprep.subr.bf16.mxu0 %v4320
        %4377 = vmatpush1.bf16.msra.mxu0 %v4319
        %4378 = vmatprep.subr.bf16.mxu0 %v4318
        %4379 = vmatpush1.bf16.msra.mxu0 %v4317
        %4380 = vmatprep.subr.bf16.mxu0 %v4316
        %4381 = vmatpush1.bf16.msra.mxu0 %v4315
        %4382 = vmatprep.subr.bf16.mxu0 0
        %4383 = vmatpush2.bf16.msra.mxu0 0
        %4384 = vmatprep.subr.bf16.mxu0 0
        %4385 = vmatpush2.bf16.msra.mxu0 0
        %4386 = vmatprep.subr.bf16.mxu0 0
        %4387 = vmatpush2.bf16.msra.mxu0 0
        %4388 = vmatprep.subr.bf16.mxu0 0
        %4389 = vmatpush2.bf16.msra.mxu0 0
        %4390 = vmatprep.subr.bf16.mxu0 %v4338
        %4391 = vmatpush2.bf16.msra.mxu0 %v4337
        %4392 = vmatprep.subr.bf16.mxu0 %v4336
        %4393 = vmatpush2.bf16.msra.mxu0 %v4335
        %4394 = vmatprep.subr.bf16.mxu0 %v4334
        %4395 = vmatpush2.bf16.msra.mxu0 %v4333
        %4396 = vmatprep.subr.bf16.mxu0 %v4332
        %4397 = vmatpush2.bf16.msra.mxu0 %v4331
        %4398 = vmatprep.mubr.bf16.mxu0 %v4364
        %4399 = vmatmul.mubr.bf16.gmra.mxu0 %v4241
        %v4400 = vpop.f32.mrf.mxu0
        %v4401 = vadd.f32 0.0, %v4400
        %v4402 = vpop.f32.mrf.mxu0
        %v4403 = vadd.f32 0.0, %v4402
        %v4404 = vpop.f32.mrf.mxu0
        %v4405 = vadd.f32 0.0, %v4404
        %v4406 = vpop.f32.mrf.mxu0
        %v4407 = vadd.f32 0.0, %v4406
        %4408 = vdwg.mxu0
        %v4409 = vadd.f32 %v4165, %v4401
        %v4410 = vadd.f32 %v4167, %v4403
        %v4411 = vadd.f32 %v4169, %v4405
        %v4412 = vadd.f32 %v4171, %v4407
        %v4413 = vld [vmem:[#allocation8] sm:$0x3]
        %v4415 = vlaneseq
        %v4416 = vshrl.u32 %v4415, 7
        %v4417 = vsub.s32 0, %v4416
        %v4418 = vrot.slane %v4413, %v4417
        %v4419 = vlaneseq
        %v4420 = vshrl.u32 %v4419, 7
        %v4421 = vsub.s32 1, %v4420
        %v4422 = vrot.slane %v4413, %v4421
        %v4425 = vadd.f32 %v4409, %v4418
        %v4426 = vadd.f32 %v4410, %v4422
        %v4427 = vadd.f32 %v4411, %v4418
        %v4428 = vadd.f32 %v4412, %v4422
        %v4429 = vmax.f32 %v4425, 0.0
        %v4430 = vmax.f32 %v4426, 0.0
        %v4431 = vmax.f32 %v4427, 0.0
        %v4432 = vmax.f32 %v4428, 0.0
        %v4433 = vld [vmem:[%s11] sm:$0x7]
        %v4434 = vpack.c.bf16 %v4431, %v4429
        %v4435 = vpack.c.bf16 %v4432, %v4430
        %v4437 = vsel %vm3157, %v4433, 0
        %v4440 = vsel %vm3161, %v4434, 0
        %v4443 = vsel %vm3161, %v4435, 0
        %4445 = vmatprep.subr.bf16.mxu0 0
        %4446 = vmatpush1.bf16.msra.mxu0 0
        %4447 = vmatprep.subr.bf16.mxu0 0
        %4448 = vmatpush1.bf16.msra.mxu0 0
        %4449 = vmatprep.subr.bf16.mxu0 0
        %4450 = vmatpush1.bf16.msra.mxu0 0
        %4451 = vmatprep.subr.bf16.mxu0 0
        %4452 = vmatpush1.bf16.msra.mxu0 0
        %4453 = vmatprep.subr.bf16.mxu0 0
        %4454 = vmatpush1.bf16.msra.mxu0 0
        %4455 = vmatprep.subr.bf16.mxu0 0
        %4456 = vmatpush1.bf16.msra.mxu0 0
        %4457 = vmatprep.subr.bf16.mxu0 0
        %4458 = vmatpush1.bf16.msra.mxu0 0
        %4459 = vmatprep.subr.bf16.mxu0 %v4443
        %4460 = vmatpush1.bf16.msra.mxu0 %v4440
        %4461 = vmatprep.subr.bf16.mxu0 0
        %4462 = vmatpush2.bf16.msra.mxu0 0
        %4463 = vmatprep.subr.bf16.mxu0 0
        %4464 = vmatpush2.bf16.msra.mxu0 0
        %4465 = vmatprep.subr.bf16.mxu0 0
        %4466 = vmatpush2.bf16.msra.mxu0 0
        %4467 = vmatprep.subr.bf16.mxu0 0
        %4468 = vmatpush2.bf16.msra.mxu0 0
        %4469 = vmatprep.subr.bf16.mxu0 0
        %4470 = vmatpush2.bf16.msra.mxu0 0
        %4471 = vmatprep.subr.bf16.mxu0 0
        %4472 = vmatpush2.bf16.msra.mxu0 0
        %4473 = vmatprep.subr.bf16.mxu0 0
        %4474 = vmatpush2.bf16.msra.mxu0 0
        %4475 = vmatprep.subr.bf16.mxu0 0
        %4476 = vmatpush2.bf16.msra.mxu0 0
        %4477 = vmatprep.mubr.bf16.mxu0 0
        %4478 = vmatmul.mubr.bf16.gmra.mxu0 %v4437
        %v4479 = vpop.f32.mrf.mxu0
        %v4480 = vadd.f32 0.0, %v4479
        %v4481 = vpop.f32.mrf.mxu0
        %v4482 = vadd.f32 0.0, %v4481
        %v4483 = vpop.f32.mrf.mxu0
        %v4484 = vpop.f32.mrf.mxu0
        %4485 = vdwg.mxu0
        %s4486 = scalar_lea.vmem %s11, 4
        %v4487 = vld [vmem:[%s4486] sm:$0x7]
        %v4489 = vsel %vm3157, %v4487, 0
        %4491 = vmatprep.subr.bf16.mxu0 0
        %4492 = vmatpush1.bf16.msra.mxu0 0
        %4493 = vmatprep.subr.bf16.mxu0 0
        %4494 = vmatpush1.bf16.msra.mxu0 0
        %4495 = vmatprep.subr.bf16.mxu0 0
        %4496 = vmatpush1.bf16.msra.mxu0 0
        %4497 = vmatprep.subr.bf16.mxu0 0
        %4498 = vmatpush1.bf16.msra.mxu0 0
        %4499 = vmatprep.subr.bf16.mxu0 0
        %4500 = vmatpush1.bf16.msra.mxu0 0
        %4501 = vmatprep.subr.bf16.mxu0 0
        %4502 = vmatpush1.bf16.msra.mxu0 0
        %4503 = vmatprep.subr.bf16.mxu0 0
        %4504 = vmatpush1.bf16.msra.mxu0 0
        %4505 = vmatprep.subr.bf16.mxu0 %v4443
        %4506 = vmatpush1.bf16.msra.mxu0 %v4440
        %4507 = vmatprep.subr.bf16.mxu0 0
        %4508 = vmatpush2.bf16.msra.mxu0 0
        %4509 = vmatprep.subr.bf16.mxu0 0
        %4510 = vmatpush2.bf16.msra.mxu0 0
        %4511 = vmatprep.subr.bf16.mxu0 0
        %4512 = vmatpush2.bf16.msra.mxu0 0
        %4513 = vmatprep.subr.bf16.mxu0 0
        %4514 = vmatpush2.bf16.msra.mxu0 0
        %4515 = vmatprep.subr.bf16.mxu0 0
        %4516 = vmatpush2.bf16.msra.mxu0 0
        %4517 = vmatprep.subr.bf16.mxu0 0
        %4518 = vmatpush2.bf16.msra.mxu0 0
        %4519 = vmatprep.subr.bf16.mxu0 0
        %4520 = vmatpush2.bf16.msra.mxu0 0
        %4521 = vmatprep.subr.bf16.mxu0 0
        %4522 = vmatpush2.bf16.msra.mxu0 0
        %4523 = vmatprep.mubr.bf16.mxu0 0
        %4524 = vmatmul.mubr.bf16.gmra.mxu0 %v4489
        %v4525 = vpop.f32.mrf.mxu0
        %v4526 = vadd.f32 0.0, %v4525
        %v4527 = vpop.f32.mrf.mxu0
        %v4528 = vadd.f32 0.0, %v4527
        %v4529 = vpop.f32.mrf.mxu0
        %v4530 = vpop.f32.mrf.mxu0
        %4531 = vdwg.mxu0
        %v4532 = vmax.f32 %v4480, %v4526
        %v4533 = vmax.f32 %v4482, %v4528
        %v4534 = vld [vmem:[%s12] sm:$0xf]
        %v4535 = vld [vmem:[%s12 + $0x4] sm:$0xf]
        %v4536 = vld [vmem:[%s12 + $0x8] sm:$0xf]
        %v4537 = vld [vmem:[%s12 + $0xc] sm:$0xf]
        %v4538 = vld [vmem:[%s12 + $0x10] sm:$0xf]
        %v4539 = vld [vmem:[%s12 + $0x14] sm:$0xf]
        %v4540 = vld [vmem:[%s12 + $0x18] sm:$0xf]
        %v4541 = vld [vmem:[%s12 + $0x1c] sm:$0xf]
        %v4542 = vld [vmem:[%s12 + $0x20] sm:$0xf]
        %v4543 = vld [vmem:[%s12 + $0x24] sm:$0xf]
        %v4544 = vld [vmem:[%s12 + $0x28] sm:$0xf]
        %v4545 = vld [vmem:[%s12 + $0x2c] sm:$0xf]
        %v4546 = vld [vmem:[%s12 + $0x30] sm:$0xf]
        %v4547 = vld [vmem:[%s12 + $0x34] sm:$0xf]
        %v4548 = vld [vmem:[%s12 + $0x38] sm:$0xf]
        %v4549 = vld [vmem:[%s12 + $0x3c] sm:$0xf]
        %v4550 = vld [vmem:[%s12 + $0x40] sm:$0xf]
        %v4551 = vld [vmem:[%s12 + $0x44] sm:$0xf]
        %v4552 = vld [vmem:[%s12 + $0x48] sm:$0xf]
        %v4553 = vld [vmem:[%s12 + $0x4c] sm:$0x3]
        %v4554 = vpack.c.bf16 %v4532, %v4532
        %v4555 = vpack.c.bf16 %v4533, %v4533
        %v4576 = vunpack.c.l.b16 %v4534
        %v4577 = vunpack.c.l.b16 %v4535
        %v4578 = vunpack.c.l.b16 %v4536
        %v4579 = vunpack.c.l.b16 %v4537
        %v4580 = vunpack.c.l.b16 %v4538
        %v4581 = vunpack.c.l.b16 %v4539
        %v4582 = vunpack.c.l.b16 %v4540
        %v4583 = vunpack.c.l.b16 %v4541
        %v4584 = vunpack.c.l.b16 %v4542
        %v4585 = vunpack.c.l.b16 %v4543
        %v4586 = vunpack.c.l.b16 %v4544
        %v4587 = vunpack.c.l.b16 %v4545
        %v4588 = vunpack.c.l.b16 %v4546
        %v4589 = vunpack.c.l.b16 %v4547
        %v4590 = vunpack.c.l.b16 %v4548
        %v4591 = vunpack.c.l.b16 %v4549
        %v4592 = vunpack.c.l.b16 %v4550
        %v4593 = vunpack.c.l.b16 %v4551
        %v4594 = vunpack.c.l.b16 %v4552
        %v4595 = vunpack.c.l.b16 %v4553
        %v4596 = vpack.c.b16 %v4577, %v4576
        %v4597 = vpack.c.b16 %v4579, %v4578
        %v4598 = vpack.c.b16 %v4581, %v4580
        %v4599 = vpack.c.b16 %v4583, %v4582
        %v4600 = vpack.c.b16 %v4585, %v4584
        %v4601 = vpack.c.b16 %v4587, %v4586
        %v4602 = vpack.c.b16 %v4589, %v4588
        %v4603 = vpack.c.b16 %v4591, %v4590
        %v4604 = vpack.c.b16 %v4593, %v4592
        %v4605 = vpack.c.b16 %v4595, %v4594
        %vm4615 = vcmask 228352
        %v4617 = vsel %vm4615, %v4555, 0
        %v4620 = vsel %vm3161, %v4605, 0
        %4622 = vmatprep.subr.bf16.mxu0 0
        %4623 = vmatpush1.bf16.msra.mxu0 %v4603
        %4624 = vmatprep.subr.bf16.mxu0 0
        %4625 = vmatpush1.bf16.msra.mxu0 %v4602
        %4626 = vmatprep.subr.bf16.mxu0 0
        %4627 = vmatpush1.bf16.msra.mxu0 %v4601
        %4628 = vmatprep.subr.bf16.mxu0 0
        %4629 = vmatpush1.bf16.msra.mxu0 %v4600
        %4630 = vmatprep.subr.bf16.mxu0 0
        %4631 = vmatpush1.bf16.msra.mxu0 %v4599
        %4632 = vmatprep.subr.bf16.mxu0 0
        %4633 = vmatpush1.bf16.msra.mxu0 %v4598
        %4634 = vmatprep.subr.bf16.mxu0 0
        %4635 = vmatpush1.bf16.msra.mxu0 %v4597
        %4636 = vmatprep.subr.bf16.mxu0 0
        %4637 = vmatpush1.bf16.msra.mxu0 %v4596
        %4638 = vmatprep.subr.bf16.mxu0 0
        %4639 = vmatpush2.bf16.msra.mxu0 0
        %4640 = vmatprep.subr.bf16.mxu0 0
        %4641 = vmatpush2.bf16.msra.mxu0 0
        %4642 = vmatprep.subr.bf16.mxu0 0
        %4643 = vmatpush2.bf16.msra.mxu0 0
        %4644 = vmatprep.subr.bf16.mxu0 0
        %4645 = vmatpush2.bf16.msra.mxu0 0
        %4646 = vmatprep.subr.bf16.mxu0 0
        %4647 = vmatpush2.bf16.msra.mxu0 0
        %4648 = vmatprep.subr.bf16.mxu0 0
        %4649 = vmatpush2.bf16.msra.mxu0 0
        %4650 = vmatprep.subr.bf16.mxu0 0
        %4651 = vmatpush2.bf16.msra.mxu0 %v4620
        %4652 = vmatprep.subr.bf16.mxu0 0
        %4653 = vmatpush2.bf16.msra.mxu0 %v4604
        %4654 = vmatprep.mubr.bf16.mxu0 %v4617
        %4655 = vmatmul.mubr.bf16.gmra.mxu0 %v4554
        %v4656 = vpop.f32.mrf.mxu0
        %v4657 = vadd.f32 0.0, %v4656
        %v4658 = vpop.f32.mrf.mxu0
        %v4659 = vpop.f32.mrf.mxu0
        %v4660 = vpop.f32.mrf.mxu0
        %4661 = vdwg.mxu0
        %s4662 = scalar_lea.vmem %s12, 80
        %v4663 = vld [vmem:[%s4662] sm:$0xf]
        %v4664 = vld [vmem:[%s4662 + $0x4] sm:$0xf]
        %v4665 = vld [vmem:[%s4662 + $0x8] sm:$0xf]
        %v4666 = vld [vmem:[%s4662 + $0xc] sm:$0xf]
        %v4667 = vld [vmem:[%s4662 + $0x10] sm:$0xf]
        %v4668 = vld [vmem:[%s4662 + $0x14] sm:$0xf]
        %v4669 = vld [vmem:[%s4662 + $0x18] sm:$0xf]
        %v4670 = vld [vmem:[%s4662 + $0x1c] sm:$0xf]
        %v4671 = vld [vmem:[%s4662 + $0x20] sm:$0xf]
        %v4672 = vld [vmem:[%s4662 + $0x24] sm:$0xf]
        %v4673 = vld [vmem:[%s4662 + $0x28] sm:$0xf]
        %v4674 = vld [vmem:[%s4662 + $0x2c] sm:$0xf]
        %v4675 = vld [vmem:[%s4662 + $0x30] sm:$0xf]
        %v4676 = vld [vmem:[%s4662 + $0x34] sm:$0xf]
        %v4677 = vld [vmem:[%s4662 + $0x38] sm:$0xf]
        %v4678 = vld [vmem:[%s4662 + $0x3c] sm:$0xf]
        %v4679 = vld [vmem:[%s4662 + $0x40] sm:$0xf]
        %v4680 = vld [vmem:[%s4662 + $0x44] sm:$0xf]
        %v4681 = vld [vmem:[%s4662 + $0x48] sm:$0xf]
        %v4682 = vld [vmem:[%s4662 + $0x4c] sm:$0x3]
        %v4703 = vunpack.c.l.b16 %v4663
        %v4704 = vunpack.c.l.b16 %v4664
        %v4705 = vunpack.c.l.b16 %v4665
        %v4706 = vunpack.c.l.b16 %v4666
        %v4707 = vunpack.c.l.b16 %v4667
        %v4708 = vunpack.c.l.b16 %v4668
        %v4709 = vunpack.c.l.b16 %v4669
        %v4710 = vunpack.c.l.b16 %v4670
        %v4711 = vunpack.c.l.b16 %v4671
        %v4712 = vunpack.c.l.b16 %v4672
        %v4713 = vunpack.c.l.b16 %v4673
        %v4714 = vunpack.c.l.b16 %v4674
        %v4715 = vunpack.c.l.b16 %v4675
        %v4716 = vunpack.c.l.b16 %v4676
        %v4717 = vunpack.c.l.b16 %v4677
        %v4718 = vunpack.c.l.b16 %v4678
        %v4719 = vunpack.c.l.b16 %v4679
        %v4720 = vunpack.c.l.b16 %v4680
        %v4721 = vunpack.c.l.b16 %v4681
        %v4722 = vunpack.c.l.b16 %v4682
        %v4723 = vpack.c.b16 %v4704, %v4703
        %v4724 = vpack.c.b16 %v4706, %v4705
        %v4725 = vpack.c.b16 %v4708, %v4707
        %v4726 = vpack.c.b16 %v4710, %v4709
        %v4727 = vpack.c.b16 %v4712, %v4711
        %v4728 = vpack.c.b16 %v4714, %v4713
        %v4729 = vpack.c.b16 %v4716, %v4715
        %v4730 = vpack.c.b16 %v4718, %v4717
        %v4731 = vpack.c.b16 %v4720, %v4719
        %v4732 = vpack.c.b16 %v4722, %v4721
        %v4743 = vsel %vm3161, %v4732, 0
        %4745 = vmatprep.subr.bf16.mxu0 0
        %4746 = vmatpush1.bf16.msra.mxu0 %v4730
        %4747 = vmatprep.subr.bf16.mxu0 0
        %4748 = vmatpush1.bf16.msra.mxu0 %v4729
        %4749 = vmatprep.subr.bf16.mxu0 0
        %4750 = vmatpush1.bf16.msra.mxu0 %v4728
        %4751 = vmatprep.subr.bf16.mxu0 0
        %4752 = vmatpush1.bf16.msra.mxu0 %v4727
        %4753 = vmatprep.subr.bf16.mxu0 0
        %4754 = vmatpush1.bf16.msra.mxu0 %v4726
        %4755 = vmatprep.subr.bf16.mxu0 0
        %4756 = vmatpush1.bf16.msra.mxu0 %v4725
        %4757 = vmatprep.subr.bf16.mxu0 0
        %4758 = vmatpush1.bf16.msra.mxu0 %v4724
        %4759 = vmatprep.subr.bf16.mxu0 0
        %4760 = vmatpush1.bf16.msra.mxu0 %v4723
        %4761 = vmatprep.subr.bf16.mxu0 0
        %4762 = vmatpush2.bf16.msra.mxu0 0
        %4763 = vmatprep.subr.bf16.mxu0 0
        %4764 = vmatpush2.bf16.msra.mxu0 0
        %4765 = vmatprep.subr.bf16.mxu0 0
        %4766 = vmatpush2.bf16.msra.mxu0 0
        %4767 = vmatprep.subr.bf16.mxu0 0
        %4768 = vmatpush2.bf16.msra.mxu0 0
        %4769 = vmatprep.subr.bf16.mxu0 0
        %4770 = vmatpush2.bf16.msra.mxu0 0
        %4771 = vmatprep.subr.bf16.mxu0 0
        %4772 = vmatpush2.bf16.msra.mxu0 0
        %4773 = vmatprep.subr.bf16.mxu0 0
        %4774 = vmatpush2.bf16.msra.mxu0 %v4743
        %4775 = vmatprep.subr.bf16.mxu0 0
        %4776 = vmatpush2.bf16.msra.mxu0 %v4731
        %4777 = vmatprep.mubr.bf16.mxu0 %v4617
        %4778 = vmatmul.mubr.bf16.gmra.mxu0 %v4554
        %v4779 = vpop.f32.mrf.mxu0
        %v4780 = vadd.f32 0.0, %v4779
        %v4781 = vpop.f32.mrf.mxu0
        %v4782 = vpop.f32.mrf.mxu0
        %v4783 = vpop.f32.mrf.mxu0
        %4784 = vdwg.mxu0
        %v4785 = vmax.f32 %v4657, %v4780
        %v4786 = vld [vmem:[%s13] sm:$0x1]
        %v4787 = vpack.c.bf16 %v4785, %v4785
        %vm4788 = vcmask 48128
        %v4790 = vsel %vm4788, %v4786, 0
        %vm4792 = vcmask 1042432
        %v4794 = vsel %vm4792, %v4787, 0
        %4796 = vmatprep.subr.bf16.mxu0 0
        %4797 = vmatpush1.bf16.msra.mxu0 0
        %4798 = vmatprep.subr.bf16.mxu0 0
        %4799 = vmatpush1.bf16.msra.mxu0 0
        %4800 = vmatprep.subr.bf16.mxu0 0
        %4801 = vmatpush1.bf16.msra.mxu0 0
        %4802 = vmatprep.subr.bf16.mxu0 0
        %4803 = vmatpush1.bf16.msra.mxu0 0
        %4804 = vmatprep.subr.bf16.mxu0 0
        %4805 = vmatpush1.bf16.msra.mxu0 0
        %4806 = vmatprep.subr.bf16.mxu0 0
        %4807 = vmatpush1.bf16.msra.mxu0 0
        %4808 = vmatprep.subr.bf16.mxu0 0
        %4809 = vmatpush1.bf16.msra.mxu0 0
        %4810 = vmatprep.subr.bf16.mxu0 0
        %4811 = vmatpush1.bf16.msra.mxu0 %v4794
        %4812 = vmatprep.subr.bf16.mxu0 0
        %4813 = vmatpush2.bf16.msra.mxu0 0
        %4814 = vmatprep.subr.bf16.mxu0 0
        %4815 = vmatpush2.bf16.msra.mxu0 0
        %4816 = vmatprep.subr.bf16.mxu0 0
        %4817 = vmatpush2.bf16.msra.mxu0 0
        %4818 = vmatprep.subr.bf16.mxu0 0
        %4819 = vmatpush2.bf16.msra.mxu0 0
        %4820 = vmatprep.subr.bf16.mxu0 0
        %4821 = vmatpush2.bf16.msra.mxu0 0
        %4822 = vmatprep.subr.bf16.mxu0 0
        %4823 = vmatpush2.bf16.msra.mxu0 0
        %4824 = vmatprep.subr.bf16.mxu0 0
        %4825 = vmatpush2.bf16.msra.mxu0 0
        %4826 = vmatprep.subr.bf16.mxu0 0
        %4827 = vmatpush2.bf16.msra.mxu0 0
        %4828 = vmatprep.mubr.bf16.mxu0 0
        %4829 = vmatmul.mubr.bf16.gmra.mxu0 %v4790
        %v4830 = vpop.f32.mrf.mxu0
        %v4831 = vadd.f32 0.0, %v4830
        %v4832 = vpop.f32.mrf.mxu0
        %v4833 = vpop.f32.mrf.mxu0
        %v4834 = vpop.f32.mrf.mxu0
        %4835 = vdwg.mxu0
        %v4836 = vld [vmem:[%s14] sm:$0xff]
        %v4837 = vld [vmem:[%s14 + $0x8] sm:$0xff]
        %v4838 = vld [vmem:[%s14 + $0x10] sm:$0xff]
        %v4839 = vld [vmem:[%s14 + $0x18] sm:$0xff]
        %v4840 = vld [vmem:[%s14 + $0x20] sm:$0xff]
        %v4841 = vld [vmem:[%s14 + $0x28] sm:$0xff]
        %v4842 = vld [vmem:[%s14 + $0x30] sm:$0xff]
        %v4843 = vld [vmem:[%s14 + $0x38] sm:$0xff]
        %v4844 = vld [vmem:[%s14 + $0x40] sm:$0xff]
        %v4845 = vld [vmem:[%s14 + $0x48] sm:$0x77]
        %v4846 = vpack.c.bf16 %v4831, %v4831
        %s4847 = scalar_lea.vmem %s13, 1
        %v4848 = vld [vmem:[%s4847] sm:$0x1]
        %v4850 = vsel %vm4788, %v4848, 0
        %4852 = vmatprep.subr.bf16.mxu0 0
        %4853 = vmatpush1.bf16.msra.mxu0 0
        %4854 = vmatprep.subr.bf16.mxu0 0
        %4855 = vmatpush1.bf16.msra.mxu0 0
        %4856 = vmatprep.subr.bf16.mxu0 0
        %4857 = vmatpush1.bf16.msra.mxu0 0
        %4858 = vmatprep.subr.bf16.mxu0 0
        %4859 = vmatpush1.bf16.msra.mxu0 0
        %4860 = vmatprep.subr.bf16.mxu0 0
        %4861 = vmatpush1.bf16.msra.mxu0 0
        %4862 = vmatprep.subr.bf16.mxu0 0
        %4863 = vmatpush1.bf16.msra.mxu0 0
        %4864 = vmatprep.subr.bf16.mxu0 0
        %4865 = vmatpush1.bf16.msra.mxu0 0
        %4866 = vmatprep.subr.bf16.mxu0 0
        %4867 = vmatpush1.bf16.msra.mxu0 %v4794
        %4868 = vmatprep.subr.bf16.mxu0 0
        %4869 = vmatpush2.bf16.msra.mxu0 0
        %4870 = vmatprep.subr.bf16.mxu0 0
        %4871 = vmatpush2.bf16.msra.mxu0 0
        %4872 = vmatprep.subr.bf16.mxu0 0
        %4873 = vmatpush2.bf16.msra.mxu0 0
        %4874 = vmatprep.subr.bf16.mxu0 0
        %4875 = vmatpush2.bf16.msra.mxu0 0
        %4876 = vmatprep.subr.bf16.mxu0 0
        %4877 = vmatpush2.bf16.msra.mxu0 0
        %4878 = vmatprep.subr.bf16.mxu0 0
        %4879 = vmatpush2.bf16.msra.mxu0 0
        %4880 = vmatprep.subr.bf16.mxu0 0
        %4881 = vmatpush2.bf16.msra.mxu0 0
        %4882 = vmatprep.subr.bf16.mxu0 0
        %4883 = vmatpush2.bf16.msra.mxu0 0
        %4884 = vmatprep.mubr.bf16.mxu0 0
        %4885 = vmatmul.mubr.bf16.gmra.mxu0 %v4850
        %v4886 = vpop.f32.mrf.mxu0
        %v4887 = vadd.f32 0.0, %v4886
        %v4888 = vpop.f32.mrf.mxu0
        %v4889 = vpop.f32.mrf.mxu0
        %v4890 = vpop.f32.mrf.mxu0
        %4891 = vdwg.mxu0
        %s4892 = scalar_lea.vmem %s14, 80
        %v4893 = vld [vmem:[%s4892] sm:$0xff]
        %v4894 = vld [vmem:[%s4892 + $0x8] sm:$0xff]
        %v4895 = vld [vmem:[%s4892 + $0x10] sm:$0xff]
        %v4896 = vld [vmem:[%s4892 + $0x18] sm:$0xff]
        %v4897 = vld [vmem:[%s4892 + $0x20] sm:$0xff]
        %v4898 = vld [vmem:[%s4892 + $0x28] sm:$0xff]
        %v4899 = vld [vmem:[%s4892 + $0x30] sm:$0xff]
        %v4900 = vld [vmem:[%s4892 + $0x38] sm:$0xff]
        %v4901 = vld [vmem:[%s4892 + $0x40] sm:$0xff]
        %v4902 = vld [vmem:[%s4892 + $0x48] sm:$0x77]
        %v4903 = vpack.c.bf16 %v4887, %v4887
        %v4914 = vunpack.c.l.b16 %v4893
        %v4915 = vunpack.c.h.b16 %v4893
        %v4916 = vunpack.c.l.b16 %v4894
        %v4917 = vunpack.c.h.b16 %v4894
        %v4918 = vunpack.c.l.b16 %v4895
        %v4919 = vunpack.c.h.b16 %v4895
        %v4920 = vunpack.c.l.b16 %v4896
        %v4921 = vunpack.c.h.b16 %v4896
        %v4922 = vunpack.c.l.b16 %v4897
        %v4923 = vunpack.c.h.b16 %v4897
        %v4924 = vunpack.c.l.b16 %v4898
        %v4925 = vunpack.c.h.b16 %v4898
        %v4926 = vunpack.c.l.b16 %v4899
        %v4927 = vunpack.c.h.b16 %v4899
        %v4928 = vunpack.c.l.b16 %v4900
        %v4929 = vunpack.c.h.b16 %v4900
        %v4930 = vunpack.c.l.b16 %v4901
        %v4931 = vunpack.c.h.b16 %v4901
        %v4932 = vunpack.c.l.b16 %v4902
        %v4933 = vunpack.c.h.b16 %v4902
        %v4934 = vpack.c.b16 %v4916, %v4914
        %v4935 = vpack.c.b16 %v4917, %v4915
        %v4936 = vpack.c.b16 %v4920, %v4918
        %v4937 = vpack.c.b16 %v4921, %v4919
        %v4938 = vpack.c.b16 %v4924, %v4922
        %v4939 = vpack.c.b16 %v4925, %v4923
        %v4940 = vpack.c.b16 %v4928, %v4926
        %v4941 = vpack.c.b16 %v4929, %v4927
        %v4942 = vpack.c.b16 %v4932, %v4930
        %v4943 = vpack.c.b16 %v4933, %v4931
        %vm4952 = vcmask 637952
        %v4954 = vsel %vm4952, %v4903, 0
        %vm4956 = vcmask 1046528
        %v4958 = vsel %vm4956, %v4942, 0
        %v4961 = vsel %vm4956, %v4943, 0
        %4963 = vmatprep.subr.bf16.mxu0 0
        %4964 = vmatpush1.bf16.msra.mxu0 0
        %4965 = vmatprep.subr.bf16.mxu0 0
        %4966 = vmatpush1.bf16.msra.mxu0 0
        %4967 = vmatprep.subr.bf16.mxu0 0
        %4968 = vmatpush1.bf16.msra.mxu0 0
        %4969 = vmatprep.subr.bf16.mxu0 %v4961
        %4970 = vmatpush1.bf16.msra.mxu0 %v4958
        %4971 = vmatprep.subr.bf16.mxu0 %v4941
        %4972 = vmatpush1.bf16.msra.mxu0 %v4940
        %4973 = vmatprep.subr.bf16.mxu0 %v4939
        %4974 = vmatpush1.bf16.msra.mxu0 %v4938
        %4975 = vmatprep.subr.bf16.mxu0 %v4937
        %4976 = vmatpush1.bf16.msra.mxu0 %v4936
        %4977 = vmatprep.subr.bf16.mxu0 %v4935
        %4978 = vmatpush1.bf16.msra.mxu0 %v4934
        %4979 = vmatprep.subr.bf16.mxu0 0
        %4980 = vmatpush2.bf16.msra.mxu0 0
        %4981 = vmatprep.subr.bf16.mxu0 0
        %4982 = vmatpush2.bf16.msra.mxu0 0
        %4983 = vmatprep.subr.bf16.mxu0 0
        %4984 = vmatpush2.bf16.msra.mxu0 0
        %4985 = vmatprep.subr.bf16.mxu0 0
        %4986 = vmatpush2.bf16.msra.mxu0 0
        %4987 = vmatprep.subr.bf16.mxu0 0
        %4988 = vmatpush2.bf16.msra.mxu0 0
        %4989 = vmatprep.subr.bf16.mxu0 0
        %4990 = vmatpush2.bf16.msra.mxu0 0
        %4991 = vmatprep.subr.bf16.mxu0 0
        %4992 = vmatpush2.bf16.msra.mxu0 0
        %4993 = vmatprep.subr.bf16.mxu0 0
        %4994 = vmatpush2.bf16.msra.mxu0 0
        %4995 = vmatprep.mubr.bf16.mxu0 0
        %4996 = vmatmul.mubr.bf16.gmra.mxu0 %v4954
        %v4997 = vpop.f32.mrf.mxu0
        %v4998 = vadd.f32 0.0, %v4997
        %v4999 = vpop.f32.mrf.mxu0
        %v5000 = vadd.f32 0.0, %v4999
        %v5001 = vpop.f32.mrf.mxu0
        %v5002 = vpop.f32.mrf.mxu0
        %5003 = vdwg.mxu0
        %v5014 = vunpack.c.l.b16 %v4836
        %v5015 = vunpack.c.h.b16 %v4836
        %v5016 = vunpack.c.l.b16 %v4837
        %v5017 = vunpack.c.h.b16 %v4837
        %v5018 = vunpack.c.l.b16 %v4838
        %v5019 = vunpack.c.h.b16 %v4838
        %v5020 = vunpack.c.l.b16 %v4839
        %v5021 = vunpack.c.h.b16 %v4839
        %v5022 = vunpack.c.l.b16 %v4840
        %v5023 = vunpack.c.h.b16 %v4840
        %v5024 = vunpack.c.l.b16 %v4841
        %v5025 = vunpack.c.h.b16 %v4841
        %v5026 = vunpack.c.l.b16 %v4842
        %v5027 = vunpack.c.h.b16 %v4842
        %v5028 = vunpack.c.l.b16 %v4843
        %v5029 = vunpack.c.h.b16 %v4843
        %v5030 = vunpack.c.l.b16 %v4844
        %v5031 = vunpack.c.h.b16 %v4844
        %v5032 = vunpack.c.l.b16 %v4845
        %v5033 = vunpack.c.h.b16 %v4845
        %v5034 = vpack.c.b16 %v5016, %v5014
        %v5035 = vpack.c.b16 %v5017, %v5015
        %v5036 = vpack.c.b16 %v5020, %v5018
        %v5037 = vpack.c.b16 %v5021, %v5019
        %v5038 = vpack.c.b16 %v5024, %v5022
        %v5039 = vpack.c.b16 %v5025, %v5023
        %v5040 = vpack.c.b16 %v5028, %v5026
        %v5041 = vpack.c.b16 %v5029, %v5027
        %v5042 = vpack.c.b16 %v5032, %v5030
        %v5043 = vpack.c.b16 %v5033, %v5031
        %v5053 = vsel %vm4952, %v4846, 0
        %v5056 = vsel %vm4956, %v5042, 0
        %v5059 = vsel %vm4956, %v5043, 0
        %5061 = vmatprep.subr.bf16.mxu0 0
        %5062 = vmatpush1.bf16.msra.mxu0 0
        %5063 = vmatprep.subr.bf16.mxu0 0
        %5064 = vmatpush1.bf16.msra.mxu0 0
        %5065 = vmatprep.subr.bf16.mxu0 0
        %5066 = vmatpush1.bf16.msra.mxu0 0
        %5067 = vmatprep.subr.bf16.mxu0 %v5059
        %5068 = vmatpush1.bf16.msra.mxu0 %v5056
        %5069 = vmatprep.subr.bf16.mxu0 %v5041
        %5070 = vmatpush1.bf16.msra.mxu0 %v5040
        %5071 = vmatprep.subr.bf16.mxu0 %v5039
        %5072 = vmatpush1.bf16.msra.mxu0 %v5038
        %5073 = vmatprep.subr.bf16.mxu0 %v5037
        %5074 = vmatpush1.bf16.msra.mxu0 %v5036
        %5075 = vmatprep.subr.bf16.mxu0 %v5035
        %5076 = vmatpush1.bf16.msra.mxu0 %v5034
        %5077 = vmatprep.subr.bf16.mxu0 0
        %5078 = vmatpush2.bf16.msra.mxu0 0
        %5079 = vmatprep.subr.bf16.mxu0 0
        %5080 = vmatpush2.bf16.msra.mxu0 0
        %5081 = vmatprep.subr.bf16.mxu0 0
        %5082 = vmatpush2.bf16.msra.mxu0 0
        %5083 = vmatprep.subr.bf16.mxu0 0
        %5084 = vmatpush2.bf16.msra.mxu0 0
        %5085 = vmatprep.subr.bf16.mxu0 0
        %5086 = vmatpush2.bf16.msra.mxu0 0
        %5087 = vmatprep.subr.bf16.mxu0 0
        %5088 = vmatpush2.bf16.msra.mxu0 0
        %5089 = vmatprep.subr.bf16.mxu0 0
        %5090 = vmatpush2.bf16.msra.mxu0 0
        %5091 = vmatprep.subr.bf16.mxu0 0
        %5092 = vmatpush2.bf16.msra.mxu0 0
        %5093 = vmatprep.mubr.bf16.mxu0 0
        %5094 = vmatmul.mubr.bf16.gmra.mxu0 %v5053
        %v5095 = vpop.f32.mrf.mxu0
        %v5096 = vadd.f32 %v4998, %v5095
        %v5097 = vpop.f32.mrf.mxu0
        %v5098 = vadd.f32 %v5000, %v5097
        %v5099 = vpop.f32.mrf.mxu0
        %v5100 = vpop.f32.mrf.mxu0
        %5101 = vdwg.mxu0
        %s5102 = scalar_lea.vmem %s13, 2
        %v5103 = vld [vmem:[%s5102] sm:$0x1]
        %v5105 = vsel %vm4788, %v5103, 0
        %5107 = vmatprep.subr.bf16.mxu0 0
        %5108 = vmatpush1.bf16.msra.mxu0 0
        %5109 = vmatprep.subr.bf16.mxu0 0
        %5110 = vmatpush1.bf16.msra.mxu0 0
        %5111 = vmatprep.subr.bf16.mxu0 0
        %5112 = vmatpush1.bf16.msra.mxu0 0
        %5113 = vmatprep.subr.bf16.mxu0 0
        %5114 = vmatpush1.bf16.msra.mxu0 0
        %5115 = vmatprep.subr.bf16.mxu0 0
        %5116 = vmatpush1.bf16.msra.mxu0 0
        %5117 = vmatprep.subr.bf16.mxu0 0
        %5118 = vmatpush1.bf16.msra.mxu0 0
        %5119 = vmatprep.subr.bf16.mxu0 0
        %5120 = vmatpush1.bf16.msra.mxu0 0
        %5121 = vmatprep.subr.bf16.mxu0 0
        %5122 = vmatpush1.bf16.msra.mxu0 %v4794
        %5123 = vmatprep.subr.bf16.mxu0 0
        %5124 = vmatpush2.bf16.msra.mxu0 0
        %5125 = vmatprep.subr.bf16.mxu0 0
        %5126 = vmatpush2.bf16.msra.mxu0 0
        %5127 = vmatprep.subr.bf16.mxu0 0
        %5128 = vmatpush2.bf16.msra.mxu0 0
        %5129 = vmatprep.subr.bf16.mxu0 0
        %5130 = vmatpush2.bf16.msra.mxu0 0
        %5131 = vmatprep.subr.bf16.mxu0 0
        %5132 = vmatpush2.bf16.msra.mxu0 0
        %5133 = vmatprep.subr.bf16.mxu0 0
        %5134 = vmatpush2.bf16.msra.mxu0 0
        %5135 = vmatprep.subr.bf16.mxu0 0
        %5136 = vmatpush2.bf16.msra.mxu0 0
        %5137 = vmatprep.subr.bf16.mxu0 0
        %5138 = vmatpush2.bf16.msra.mxu0 0
        %5139 = vmatprep.mubr.bf16.mxu0 0
        %5140 = vmatmul.mubr.bf16.gmra.mxu0 %v5105
        %v5141 = vpop.f32.mrf.mxu0
        %v5142 = vadd.f32 0.0, %v5141
        %v5143 = vpop.f32.mrf.mxu0
        %v5144 = vpop.f32.mrf.mxu0
        %v5145 = vpop.f32.mrf.mxu0
        %5146 = vdwg.mxu0
        %s5147 = scalar_lea.vmem %s14, 160
        %v5148 = vld [vmem:[%s5147] sm:$0xff]
        %v5149 = vld [vmem:[%s5147 + $0x8] sm:$0xff]
        %v5150 = vld [vmem:[%s5147 + $0x10] sm:$0xff]
        %v5151 = vld [vmem:[%s5147 + $0x18] sm:$0xff]
        %v5152 = vld [vmem:[%s5147 + $0x20] sm:$0xff]
        %v5153 = vld [vmem:[%s5147 + $0x28] sm:$0xff]
        %v5154 = vld [vmem:[%s5147 + $0x30] sm:$0xff]
        %v5155 = vld [vmem:[%s5147 + $0x38] sm:$0xff]
        %v5156 = vld [vmem:[%s5147 + $0x40] sm:$0xff]
        %v5157 = vld [vmem:[%s5147 + $0x48] sm:$0x77]
        %v5158 = vpack.c.bf16 %v5142, %v5142
        %v5169 = vunpack.c.l.b16 %v5148
        %v5170 = vunpack.c.h.b16 %v5148
        %v5171 = vunpack.c.l.b16 %v5149
        %v5172 = vunpack.c.h.b16 %v5149
        %v5173 = vunpack.c.l.b16 %v5150
        %v5174 = vunpack.c.h.b16 %v5150
        %v5175 = vunpack.c.l.b16 %v5151
        %v5176 = vunpack.c.h.b16 %v5151
        %v5177 = vunpack.c.l.b16 %v5152
        %v5178 = vunpack.c.h.b16 %v5152
        %v5179 = vunpack.c.l.b16 %v5153
        %v5180 = vunpack.c.h.b16 %v5153
        %v5181 = vunpack.c.l.b16 %v5154
        %v5182 = vunpack.c.h.b16 %v5154
        %v5183 = vunpack.c.l.b16 %v5155
        %v5184 = vunpack.c.h.b16 %v5155
        %v5185 = vunpack.c.l.b16 %v5156
        %v5186 = vunpack.c.h.b16 %v5156
        %v5187 = vunpack.c.l.b16 %v5157
        %v5188 = vunpack.c.h.b16 %v5157
        %v5189 = vpack.c.b16 %v5171, %v5169
        %v5190 = vpack.c.b16 %v5172, %v5170
        %v5191 = vpack.c.b16 %v5175, %v5173
        %v5192 = vpack.c.b16 %v5176, %v5174
        %v5193 = vpack.c.b16 %v5179, %v5177
        %v5194 = vpack.c.b16 %v5180, %v5178
        %v5195 = vpack.c.b16 %v5183, %v5181
        %v5196 = vpack.c.b16 %v5184, %v5182
        %v5197 = vpack.c.b16 %v5187, %v5185
        %v5198 = vpack.c.b16 %v5188, %v5186
        %v5208 = vsel %vm4952, %v5158, 0
        %v5211 = vsel %vm4956, %v5197, 0
        %v5214 = vsel %vm4956, %v5198, 0
        %5216 = vmatprep.subr.bf16.mxu0 0
        %5217 = vmatpush1.bf16.msra.mxu0 0
        %5218 = vmatprep.subr.bf16.mxu0 0
        %5219 = vmatpush1.bf16.msra.mxu0 0
        %5220 = vmatprep.subr.bf16.mxu0 0
        %5221 = vmatpush1.bf16.msra.mxu0 0
        %5222 = vmatprep.subr.bf16.mxu0 %v5214
        %5223 = vmatpush1.bf16.msra.mxu0 %v5211
        %5224 = vmatprep.subr.bf16.mxu0 %v5196
        %5225 = vmatpush1.bf16.msra.mxu0 %v5195
        %5226 = vmatprep.subr.bf16.mxu0 %v5194
        %5227 = vmatpush1.bf16.msra.mxu0 %v5193
        %5228 = vmatprep.subr.bf16.mxu0 %v5192
        %5229 = vmatpush1.bf16.msra.mxu0 %v5191
        %5230 = vmatprep.subr.bf16.mxu0 %v5190
        %5231 = vmatpush1.bf16.msra.mxu0 %v5189
        %5232 = vmatprep.subr.bf16.mxu0 0
        %5233 = vmatpush2.bf16.msra.mxu0 0
        %5234 = vmatprep.subr.bf16.mxu0 0
        %5235 = vmatpush2.bf16.msra.mxu0 0
        %5236 = vmatprep.subr.bf16.mxu0 0
        %5237 = vmatpush2.bf16.msra.mxu0 0
        %5238 = vmatprep.subr.bf16.mxu0 0
        %5239 = vmatpush2.bf16.msra.mxu0 0
        %5240 = vmatprep.subr.bf16.mxu0 0
        %5241 = vmatpush2.bf16.msra.mxu0 0
        %5242 = vmatprep.subr.bf16.mxu0 0
        %5243 = vmatpush2.bf16.msra.mxu0 0
        %5244 = vmatprep.subr.bf16.mxu0 0
        %5245 = vmatpush2.bf16.msra.mxu0 0
        %5246 = vmatprep.subr.bf16.mxu0 0
        %5247 = vmatpush2.bf16.msra.mxu0 0
        %5248 = vmatprep.mubr.bf16.mxu0 0
        %5249 = vmatmul.mubr.bf16.gmra.mxu0 %v5208
        %v5250 = vpop.f32.mrf.mxu0
        %v5251 = vadd.f32 0.0, %v5250
        %v5252 = vpop.f32.mrf.mxu0
        %v5253 = vadd.f32 0.0, %v5252
        %v5254 = vpop.f32.mrf.mxu0
        %v5255 = vpop.f32.mrf.mxu0
        %5256 = vdwg.mxu0
        %v5257 = vadd.f32 %v5096, %v5251
        %v5258 = vadd.f32 %v5098, %v5253
        %s5259 = scalar_lea.vmem %s13, 3
        %v5260 = vld [vmem:[%s5259] sm:$0x1]
        %v5262 = vsel %vm4788, %v5260, 0
        %5264 = vmatprep.subr.bf16.mxu0 0
        %5265 = vmatpush1.bf16.msra.mxu0 0
        %5266 = vmatprep.subr.bf16.mxu0 0
        %5267 = vmatpush1.bf16.msra.mxu0 0
        %5268 = vmatprep.subr.bf16.mxu0 0
        %5269 = vmatpush1.bf16.msra.mxu0 0
        %5270 = vmatprep.subr.bf16.mxu0 0
        %5271 = vmatpush1.bf16.msra.mxu0 0
        %5272 = vmatprep.subr.bf16.mxu0 0
        %5273 = vmatpush1.bf16.msra.mxu0 0
        %5274 = vmatprep.subr.bf16.mxu0 0
        %5275 = vmatpush1.bf16.msra.mxu0 0
        %5276 = vmatprep.subr.bf16.mxu0 0
        %5277 = vmatpush1.bf16.msra.mxu0 0
        %5278 = vmatprep.subr.bf16.mxu0 0
        %5279 = vmatpush1.bf16.msra.mxu0 %v4794
        %5280 = vmatprep.subr.bf16.mxu0 0
        %5281 = vmatpush2.bf16.msra.mxu0 0
        %5282 = vmatprep.subr.bf16.mxu0 0
        %5283 = vmatpush2.bf16.msra.mxu0 0
        %5284 = vmatprep.subr.bf16.mxu0 0
        %5285 = vmatpush2.bf16.msra.mxu0 0
        %5286 = vmatprep.subr.bf16.mxu0 0
        %5287 = vmatpush2.bf16.msra.mxu0 0
        %5288 = vmatprep.subr.bf16.mxu0 0
        %5289 = vmatpush2.bf16.msra.mxu0 0
        %5290 = vmatprep.subr.bf16.mxu0 0
        %5291 = vmatpush2.bf16.msra.mxu0 0
        %5292 = vmatprep.subr.bf16.mxu0 0
        %5293 = vmatpush2.bf16.msra.mxu0 0
        %5294 = vmatprep.subr.bf16.mxu0 0
        %5295 = vmatpush2.bf16.msra.mxu0 0
        %5296 = vmatprep.mubr.bf16.mxu0 0
        %5297 = vmatmul.mubr.bf16.gmra.mxu0 %v5262
        %v5298 = vpop.f32.mrf.mxu0
        %v5299 = vadd.f32 0.0, %v5298
        %v5300 = vpop.f32.mrf.mxu0
        %v5301 = vpop.f32.mrf.mxu0
        %v5302 = vpop.f32.mrf.mxu0
        %5303 = vdwg.mxu0
        %s5304 = scalar_lea.vmem %s14, 240
        %v5305 = vld [vmem:[%s5304] sm:$0xff]
        %v5306 = vld [vmem:[%s5304 + $0x8] sm:$0xff]
        %v5307 = vld [vmem:[%s5304 + $0x10] sm:$0xff]
        %v5308 = vld [vmem:[%s5304 + $0x18] sm:$0xff]
        %v5309 = vld [vmem:[%s5304 + $0x20] sm:$0xff]
        %v5310 = vld [vmem:[%s5304 + $0x28] sm:$0xff]
        %v5311 = vld [vmem:[%s5304 + $0x30] sm:$0xff]
        %v5312 = vld [vmem:[%s5304 + $0x38] sm:$0xff]
        %v5313 = vld [vmem:[%s5304 + $0x40] sm:$0xff]
        %v5314 = vld [vmem:[%s5304 + $0x48] sm:$0x77]
        %v5315 = vpack.c.bf16 %v5299, %v5299
        %v5326 = vunpack.c.l.b16 %v5305
        %v5327 = vunpack.c.h.b16 %v5305
        %v5328 = vunpack.c.l.b16 %v5306
        %v5329 = vunpack.c.h.b16 %v5306
        %v5330 = vunpack.c.l.b16 %v5307
        %v5331 = vunpack.c.h.b16 %v5307
        %v5332 = vunpack.c.l.b16 %v5308
        %v5333 = vunpack.c.h.b16 %v5308
        %v5334 = vunpack.c.l.b16 %v5309
        %v5335 = vunpack.c.h.b16 %v5309
        %v5336 = vunpack.c.l.b16 %v5310
        %v5337 = vunpack.c.h.b16 %v5310
        %v5338 = vunpack.c.l.b16 %v5311
        %v5339 = vunpack.c.h.b16 %v5311
        %v5340 = vunpack.c.l.b16 %v5312
        %v5341 = vunpack.c.h.b16 %v5312
        %v5342 = vunpack.c.l.b16 %v5313
        %v5343 = vunpack.c.h.b16 %v5313
        %v5344 = vunpack.c.l.b16 %v5314
        %v5345 = vunpack.c.h.b16 %v5314
        %v5346 = vpack.c.b16 %v5328, %v5326
        %v5347 = vpack.c.b16 %v5329, %v5327
        %v5348 = vpack.c.b16 %v5332, %v5330
        %v5349 = vpack.c.b16 %v5333, %v5331
        %v5350 = vpack.c.b16 %v5336, %v5334
        %v5351 = vpack.c.b16 %v5337, %v5335
        %v5352 = vpack.c.b16 %v5340, %v5338
        %v5353 = vpack.c.b16 %v5341, %v5339
        %v5354 = vpack.c.b16 %v5344, %v5342
        %v5355 = vpack.c.b16 %v5345, %v5343
        %v5365 = vsel %vm4952, %v5315, 0
        %v5368 = vsel %vm4956, %v5354, 0
        %v5371 = vsel %vm4956, %v5355, 0
        %5373 = vmatprep.subr.bf16.mxu0 0
        %5374 = vmatpush1.bf16.msra.mxu0 0
        %5375 = vmatprep.subr.bf16.mxu0 0
        %5376 = vmatpush1.bf16.msra.mxu0 0
        %5377 = vmatprep.subr.bf16.mxu0 0
        %5378 = vmatpush1.bf16.msra.mxu0 0
        %5379 = vmatprep.subr.bf16.mxu0 %v5371
        %5380 = vmatpush1.bf16.msra.mxu0 %v5368
        %5381 = vmatprep.subr.bf16.mxu0 %v5353
        %5382 = vmatpush1.bf16.msra.mxu0 %v5352
        %5383 = vmatprep.subr.bf16.mxu0 %v5351
        %5384 = vmatpush1.bf16.msra.mxu0 %v5350
        %5385 = vmatprep.subr.bf16.mxu0 %v5349
        %5386 = vmatpush1.bf16.msra.mxu0 %v5348
        %5387 = vmatprep.subr.bf16.mxu0 %v5347
        %5388 = vmatpush1.bf16.msra.mxu0 %v5346
        %5389 = vmatprep.subr.bf16.mxu0 0
        %5390 = vmatpush2.bf16.msra.mxu0 0
        %5391 = vmatprep.subr.bf16.mxu0 0
        %5392 = vmatpush2.bf16.msra.mxu0 0
        %5393 = vmatprep.subr.bf16.mxu0 0
        %5394 = vmatpush2.bf16.msra.mxu0 0
        %5395 = vmatprep.subr.bf16.mxu0 0
        %5396 = vmatpush2.bf16.msra.mxu0 0
        %5397 = vmatprep.subr.bf16.mxu0 0
        %5398 = vmatpush2.bf16.msra.mxu0 0
        %5399 = vmatprep.subr.bf16.mxu0 0
        %5400 = vmatpush2.bf16.msra.mxu0 0
        %5401 = vmatprep.subr.bf16.mxu0 0
        %5402 = vmatpush2.bf16.msra.mxu0 0
        %5403 = vmatprep.subr.bf16.mxu0 0
        %5404 = vmatpush2.bf16.msra.mxu0 0
        %5405 = vmatprep.mubr.bf16.mxu0 0
        %5406 = vmatmul.mubr.bf16.gmra.mxu0 %v5365
        %v5407 = vpop.f32.mrf.mxu0
        %v5408 = vadd.f32 0.0, %v5407
        %v5409 = vpop.f32.mrf.mxu0
        %v5410 = vadd.f32 0.0, %v5409
        %v5411 = vpop.f32.mrf.mxu0
        %v5412 = vpop.f32.mrf.mxu0
        %5413 = vdwg.mxu0
        %v5414 = vadd.f32 %v5257, %v5408
        %v5415 = vadd.f32 %v5258, %v5410
        %s5416 = scalar_lea.vmem %s13, 4
        %v5417 = vld [vmem:[%s5416] sm:$0x1]
        %v5419 = vsel %vm4788, %v5417, 0
        %5421 = vmatprep.subr.bf16.mxu0 0
        %5422 = vmatpush1.bf16.msra.mxu0 0
        %5423 = vmatprep.subr.bf16.mxu0 0
        %5424 = vmatpush1.bf16.msra.mxu0 0
        %5425 = vmatprep.subr.bf16.mxu0 0
        %5426 = vmatpush1.bf16.msra.mxu0 0
        %5427 = vmatprep.subr.bf16.mxu0 0
        %5428 = vmatpush1.bf16.msra.mxu0 0
        %5429 = vmatprep.subr.bf16.mxu0 0
        %5430 = vmatpush1.bf16.msra.mxu0 0
        %5431 = vmatprep.subr.bf16.mxu0 0
        %5432 = vmatpush1.bf16.msra.mxu0 0
        %5433 = vmatprep.subr.bf16.mxu0 0
        %5434 = vmatpush1.bf16.msra.mxu0 0
        %5435 = vmatprep.subr.bf16.mxu0 0
        %5436 = vmatpush1.bf16.msra.mxu0 %v4794
        %5437 = vmatprep.subr.bf16.mxu0 0
        %5438 = vmatpush2.bf16.msra.mxu0 0
        %5439 = vmatprep.subr.bf16.mxu0 0
        %5440 = vmatpush2.bf16.msra.mxu0 0
        %5441 = vmatprep.subr.bf16.mxu0 0
        %5442 = vmatpush2.bf16.msra.mxu0 0
        %5443 = vmatprep.subr.bf16.mxu0 0
        %5444 = vmatpush2.bf16.msra.mxu0 0
        %5445 = vmatprep.subr.bf16.mxu0 0
        %5446 = vmatpush2.bf16.msra.mxu0 0
        %5447 = vmatprep.subr.bf16.mxu0 0
        %5448 = vmatpush2.bf16.msra.mxu0 0
        %5449 = vmatprep.subr.bf16.mxu0 0
        %5450 = vmatpush2.bf16.msra.mxu0 0
        %5451 = vmatprep.subr.bf16.mxu0 0
        %5452 = vmatpush2.bf16.msra.mxu0 0
        %5453 = vmatprep.mubr.bf16.mxu0 0
        %5454 = vmatmul.mubr.bf16.gmra.mxu0 %v5419
        %v5455 = vpop.f32.mrf.mxu0
        %v5456 = vadd.f32 0.0, %v5455
        %v5457 = vpop.f32.mrf.mxu0
        %v5458 = vpop.f32.mrf.mxu0
        %v5459 = vpop.f32.mrf.mxu0
        %5460 = vdwg.mxu0
        %s5461 = scalar_lea.vmem %s14, 320
        %v5462 = vld [vmem:[%s5461] sm:$0xff]
        %v5463 = vld [vmem:[%s5461 + $0x8] sm:$0xff]
        %v5464 = vld [vmem:[%s5461 + $0x10] sm:$0xff]
        %v5465 = vld [vmem:[%s5461 + $0x18] sm:$0xff]
        %v5466 = vld [vmem:[%s5461 + $0x20] sm:$0xff]
        %v5467 = vld [vmem:[%s5461 + $0x28] sm:$0xff]
        %v5468 = vld [vmem:[%s5461 + $0x30] sm:$0xff]
        %v5469 = vld [vmem:[%s5461 + $0x38] sm:$0xff]
        %v5470 = vld [vmem:[%s5461 + $0x40] sm:$0xff]
        %v5471 = vld [vmem:[%s5461 + $0x48] sm:$0x77]
        %v5472 = vpack.c.bf16 %v5456, %v5456
        %v5483 = vunpack.c.l.b16 %v5462
        %v5484 = vunpack.c.h.b16 %v5462
        %v5485 = vunpack.c.l.b16 %v5463
        %v5486 = vunpack.c.h.b16 %v5463
        %v5487 = vunpack.c.l.b16 %v5464
        %v5488 = vunpack.c.h.b16 %v5464
        %v5489 = vunpack.c.l.b16 %v5465
        %v5490 = vunpack.c.h.b16 %v5465
        %v5491 = vunpack.c.l.b16 %v5466
        %v5492 = vunpack.c.h.b16 %v5466
        %v5493 = vunpack.c.l.b16 %v5467
        %v5494 = vunpack.c.h.b16 %v5467
        %v5495 = vunpack.c.l.b16 %v5468
        %v5496 = vunpack.c.h.b16 %v5468
        %v5497 = vunpack.c.l.b16 %v5469
        %v5498 = vunpack.c.h.b16 %v5469
        %v5499 = vunpack.c.l.b16 %v5470
        %v5500 = vunpack.c.h.b16 %v5470
        %v5501 = vunpack.c.l.b16 %v5471
        %v5502 = vunpack.c.h.b16 %v5471
        %v5503 = vpack.c.b16 %v5485, %v5483
        %v5504 = vpack.c.b16 %v5486, %v5484
        %v5505 = vpack.c.b16 %v5489, %v5487
        %v5506 = vpack.c.b16 %v5490, %v5488
        %v5507 = vpack.c.b16 %v5493, %v5491
        %v5508 = vpack.c.b16 %v5494, %v5492
        %v5509 = vpack.c.b16 %v5497, %v5495
        %v5510 = vpack.c.b16 %v5498, %v5496
        %v5511 = vpack.c.b16 %v5501, %v5499
        %v5512 = vpack.c.b16 %v5502, %v5500
        %v5522 = vsel %vm4952, %v5472, 0
        %v5525 = vsel %vm4956, %v5511, 0
        %v5528 = vsel %vm4956, %v5512, 0
        %5530 = vmatprep.subr.bf16.mxu0 0
        %5531 = vmatpush1.bf16.msra.mxu0 0
        %5532 = vmatprep.subr.bf16.mxu0 0
        %5533 = vmatpush1.bf16.msra.mxu0 0
        %5534 = vmatprep.subr.bf16.mxu0 0
        %5535 = vmatpush1.bf16.msra.mxu0 0
        %5536 = vmatprep.subr.bf16.mxu0 %v5528
        %5537 = vmatpush1.bf16.msra.mxu0 %v5525
        %5538 = vmatprep.subr.bf16.mxu0 %v5510
        %5539 = vmatpush1.bf16.msra.mxu0 %v5509
        %5540 = vmatprep.subr.bf16.mxu0 %v5508
        %5541 = vmatpush1.bf16.msra.mxu0 %v5507
        %5542 = vmatprep.subr.bf16.mxu0 %v5506
        %5543 = vmatpush1.bf16.msra.mxu0 %v5505
        %5544 = vmatprep.subr.bf16.mxu0 %v5504
        %5545 = vmatpush1.bf16.msra.mxu0 %v5503
        %5546 = vmatprep.subr.bf16.mxu0 0
        %5547 = vmatpush2.bf16.msra.mxu0 0
        %5548 = vmatprep.subr.bf16.mxu0 0
        %5549 = vmatpush2.bf16.msra.mxu0 0
        %5550 = vmatprep.subr.bf16.mxu0 0
        %5551 = vmatpush2.bf16.msra.mxu0 0
        %5552 = vmatprep.subr.bf16.mxu0 0
        %5553 = vmatpush2.bf16.msra.mxu0 0
        %5554 = vmatprep.subr.bf16.mxu0 0
        %5555 = vmatpush2.bf16.msra.mxu0 0
        %5556 = vmatprep.subr.bf16.mxu0 0
        %5557 = vmatpush2.bf16.msra.mxu0 0
        %5558 = vmatprep.subr.bf16.mxu0 0
        %5559 = vmatpush2.bf16.msra.mxu0 0
        %5560 = vmatprep.subr.bf16.mxu0 0
        %5561 = vmatpush2.bf16.msra.mxu0 0
        %5562 = vmatprep.mubr.bf16.mxu0 0
        %5563 = vmatmul.mubr.bf16.gmra.mxu0 %v5522
        %v5564 = vpop.f32.mrf.mxu0
        %v5565 = vadd.f32 0.0, %v5564
        %v5566 = vpop.f32.mrf.mxu0
        %v5567 = vadd.f32 0.0, %v5566
        %v5568 = vpop.f32.mrf.mxu0
        %v5569 = vpop.f32.mrf.mxu0
        %5570 = vdwg.mxu0
        %v5571 = vadd.f32 %v5414, %v5565
        %v5572 = vadd.f32 %v5415, %v5567
        %s5573 = scalar_lea.vmem %s13, 5
        %v5574 = vld [vmem:[%s5573] sm:$0x1]
        %v5576 = vsel %vm4788, %v5574, 0
        %5578 = vmatprep.subr.bf16.mxu0 0
        %5579 = vmatpush1.bf16.msra.mxu0 0
        %5580 = vmatprep.subr.bf16.mxu0 0
        %5581 = vmatpush1.bf16.msra.mxu0 0
        %5582 = vmatprep.subr.bf16.mxu0 0
        %5583 = vmatpush1.bf16.msra.mxu0 0
        %5584 = vmatprep.subr.bf16.mxu0 0
        %5585 = vmatpush1.bf16.msra.mxu0 0
        %5586 = vmatprep.subr.bf16.mxu0 0
        %5587 = vmatpush1.bf16.msra.mxu0 0
        %5588 = vmatprep.subr.bf16.mxu0 0
        %5589 = vmatpush1.bf16.msra.mxu0 0
        %5590 = vmatprep.subr.bf16.mxu0 0
        %5591 = vmatpush1.bf16.msra.mxu0 0
        %5592 = vmatprep.subr.bf16.mxu0 0
        %5593 = vmatpush1.bf16.msra.mxu0 %v4794
        %5594 = vmatprep.subr.bf16.mxu0 0
        %5595 = vmatpush2.bf16.msra.mxu0 0
        %5596 = vmatprep.subr.bf16.mxu0 0
        %5597 = vmatpush2.bf16.msra.mxu0 0
        %5598 = vmatprep.subr.bf16.mxu0 0
        %5599 = vmatpush2.bf16.msra.mxu0 0
        %5600 = vmatprep.subr.bf16.mxu0 0
        %5601 = vmatpush2.bf16.msra.mxu0 0
        %5602 = vmatprep.subr.bf16.mxu0 0
        %5603 = vmatpush2.bf16.msra.mxu0 0
        %5604 = vmatprep.subr.bf16.mxu0 0
        %5605 = vmatpush2.bf16.msra.mxu0 0
        %5606 = vmatprep.subr.bf16.mxu0 0
        %5607 = vmatpush2.bf16.msra.mxu0 0
        %5608 = vmatprep.subr.bf16.mxu0 0
        %5609 = vmatpush2.bf16.msra.mxu0 0
        %5610 = vmatprep.mubr.bf16.mxu0 0
        %5611 = vmatmul.mubr.bf16.gmra.mxu0 %v5576
        %v5612 = vpop.f32.mrf.mxu0
        %v5613 = vadd.f32 0.0, %v5612
        %v5614 = vpop.f32.mrf.mxu0
        %v5615 = vpop.f32.mrf.mxu0
        %v5616 = vpop.f32.mrf.mxu0
        %5617 = vdwg.mxu0
        %s5618 = scalar_lea.vmem %s14, 400
        %v5619 = vld [vmem:[%s5618] sm:$0xff]
        %v5620 = vld [vmem:[%s5618 + $0x8] sm:$0xff]
        %v5621 = vld [vmem:[%s5618 + $0x10] sm:$0xff]
        %v5622 = vld [vmem:[%s5618 + $0x18] sm:$0xff]
        %v5623 = vld [vmem:[%s5618 + $0x20] sm:$0xff]
        %v5624 = vld [vmem:[%s5618 + $0x28] sm:$0xff]
        %v5625 = vld [vmem:[%s5618 + $0x30] sm:$0xff]
        %v5626 = vld [vmem:[%s5618 + $0x38] sm:$0xff]
        %v5627 = vld [vmem:[%s5618 + $0x40] sm:$0xff]
        %v5628 = vld [vmem:[%s5618 + $0x48] sm:$0x77]
        %v5629 = vpack.c.bf16 %v5613, %v5613
        %v5640 = vunpack.c.l.b16 %v5619
        %v5641 = vunpack.c.h.b16 %v5619
        %v5642 = vunpack.c.l.b16 %v5620
        %v5643 = vunpack.c.h.b16 %v5620
        %v5644 = vunpack.c.l.b16 %v5621
        %v5645 = vunpack.c.h.b16 %v5621
        %v5646 = vunpack.c.l.b16 %v5622
        %v5647 = vunpack.c.h.b16 %v5622
        %v5648 = vunpack.c.l.b16 %v5623
        %v5649 = vunpack.c.h.b16 %v5623
        %v5650 = vunpack.c.l.b16 %v5624
        %v5651 = vunpack.c.h.b16 %v5624
        %v5652 = vunpack.c.l.b16 %v5625
        %v5653 = vunpack.c.h.b16 %v5625
        %v5654 = vunpack.c.l.b16 %v5626
        %v5655 = vunpack.c.h.b16 %v5626
        %v5656 = vunpack.c.l.b16 %v5627
        %v5657 = vunpack.c.h.b16 %v5627
        %v5658 = vunpack.c.l.b16 %v5628
        %v5659 = vunpack.c.h.b16 %v5628
        %v5660 = vpack.c.b16 %v5642, %v5640
        %v5661 = vpack.c.b16 %v5643, %v5641
        %v5662 = vpack.c.b16 %v5646, %v5644
        %v5663 = vpack.c.b16 %v5647, %v5645
        %v5664 = vpack.c.b16 %v5650, %v5648
        %v5665 = vpack.c.b16 %v5651, %v5649
        %v5666 = vpack.c.b16 %v5654, %v5652
        %v5667 = vpack.c.b16 %v5655, %v5653
        %v5668 = vpack.c.b16 %v5658, %v5656
        %v5669 = vpack.c.b16 %v5659, %v5657
        %v5679 = vsel %vm4952, %v5629, 0
        %v5682 = vsel %vm4956, %v5668, 0
        %v5685 = vsel %vm4956, %v5669, 0
        %5687 = vmatprep.subr.bf16.mxu0 0
        %5688 = vmatpush1.bf16.msra.mxu0 0
        %5689 = vmatprep.subr.bf16.mxu0 0
        %5690 = vmatpush1.bf16.msra.mxu0 0
        %5691 = vmatprep.subr.bf16.mxu0 0
        %5692 = vmatpush1.bf16.msra.mxu0 0
        %5693 = vmatprep.subr.bf16.mxu0 %v5685
        %5694 = vmatpush1.bf16.msra.mxu0 %v5682
        %5695 = vmatprep.subr.bf16.mxu0 %v5667
        %5696 = vmatpush1.bf16.msra.mxu0 %v5666
        %5697 = vmatprep.subr.bf16.mxu0 %v5665
        %5698 = vmatpush1.bf16.msra.mxu0 %v5664
        %5699 = vmatprep.subr.bf16.mxu0 %v5663
        %5700 = vmatpush1.bf16.msra.mxu0 %v5662
        %5701 = vmatprep.subr.bf16.mxu0 %v5661
        %5702 = vmatpush1.bf16.msra.mxu0 %v5660
        %5703 = vmatprep.subr.bf16.mxu0 0
        %5704 = vmatpush2.bf16.msra.mxu0 0
        %5705 = vmatprep.subr.bf16.mxu0 0
        %5706 = vmatpush2.bf16.msra.mxu0 0
        %5707 = vmatprep.subr.bf16.mxu0 0
        %5708 = vmatpush2.bf16.msra.mxu0 0
        %5709 = vmatprep.subr.bf16.mxu0 0
        %5710 = vmatpush2.bf16.msra.mxu0 0
        %5711 = vmatprep.subr.bf16.mxu0 0
        %5712 = vmatpush2.bf16.msra.mxu0 0
        %5713 = vmatprep.subr.bf16.mxu0 0
        %5714 = vmatpush2.bf16.msra.mxu0 0
        %5715 = vmatprep.subr.bf16.mxu0 0
        %5716 = vmatpush2.bf16.msra.mxu0 0
        %5717 = vmatprep.subr.bf16.mxu0 0
        %5718 = vmatpush2.bf16.msra.mxu0 0
        %5719 = vmatprep.mubr.bf16.mxu0 0
        %5720 = vmatmul.mubr.bf16.gmra.mxu0 %v5679
        %v5721 = vpop.f32.mrf.mxu0
        %v5722 = vadd.f32 0.0, %v5721
        %v5723 = vpop.f32.mrf.mxu0
        %v5724 = vadd.f32 0.0, %v5723
        %v5725 = vpop.f32.mrf.mxu0
        %v5726 = vpop.f32.mrf.mxu0
        %5727 = vdwg.mxu0
        %v5728 = vadd.f32 %v5571, %v5722
        %v5729 = vadd.f32 %v5572, %v5724
        %v5730 = vld [vmem:[#allocation10] sm:$0x3]
        %v5732 = vlaneseq
        %v5733 = vshrl.u32 %v5732, 7
        %v5734 = vsub.s32 0, %v5733
        %v5735 = vrot.slane %v5730, %v5734
        %v5736 = vlaneseq
        %v5737 = vshrl.u32 %v5736, 7
        %v5738 = vsub.s32 1, %v5737
        %v5739 = vrot.slane %v5730, %v5738
        %v5742 = vadd.f32 %v5728, %v5735
        %v5743 = vadd.f32 %v5729, %v5739
        %v5744 = vmax.f32 %v5742, 0.0
        %v5745 = vmax.f32 %v5743, 0.0
        %v5746 = vld [vmem:[#allocation11] sm:$0xff]
        %v5747 = vld [vmem:[#allocation11 + $0x8] sm:$0xff]
        %v5748 = vld [vmem:[#allocation11 + $0x10] sm:$0xff]
        %v5749 = vld [vmem:[#allocation11 + $0x18] sm:$0xff]
        %v5750 = vld [vmem:[#allocation11 + $0x20] sm:$0xff]
        %v5751 = vld [vmem:[#allocation11 + $0x28] sm:$0xff]
        %v5752 = vld [vmem:[#allocation11 + $0x30] sm:$0xff]
        %v5753 = vld [vmem:[#allocation11 + $0x38] sm:$0xff]
        %v5754 = vld [vmem:[#allocation11 + $0x40] sm:$0xff]
        %v5755 = vld [vmem:[#allocation11 + $0x48] sm:$0xff]
        %v5756 = vld [vmem:[#allocation11 + $0x50] sm:$0xff]
        %v5757 = vld [vmem:[#allocation11 + $0x58] sm:$0xff]
        %v5758 = vld [vmem:[#allocation11 + $0x60] sm:$0xff]
        %v5759 = vld [vmem:[#allocation11 + $0x68] sm:$0xff]
        %v5760 = vld [vmem:[#allocation11 + $0x70] sm:$0xff]
        %v5761 = vld [vmem:[#allocation11 + $0x78] sm:$0xff]
        %v5762 = vld [vmem:[#allocation11 + $0x80] sm:$0xff]
        %v5763 = vld [vmem:[#allocation11 + $0x88] sm:$0xff]
        %v5764 = vld [vmem:[#allocation11 + $0x90] sm:$0xff]
        %v5765 = vld [vmem:[#allocation11 + $0x98] sm:$0xff]
        %v5766 = vld [vmem:[#allocation11 + $0xa0] sm:$0xff]
        %v5767 = vld [vmem:[#allocation11 + $0xa8] sm:$0xff]
        %v5768 = vld [vmem:[#allocation11 + $0xb0] sm:$0xff]
        %v5769 = vld [vmem:[#allocation11 + $0xb8] sm:$0xff]
        %v5770 = vld [vmem:[#allocation11 + $0xc0] sm:$0xff]
        %v5771 = vld [vmem:[#allocation11 + $0xc8] sm:$0xff]
        %v5772 = vld [vmem:[#allocation11 + $0xd0] sm:$0xff]
        %v5773 = vld [vmem:[#allocation11 + $0xd8] sm:$0xff]
        %v5774 = vld [vmem:[#allocation11 + $0xe0] sm:$0xff]
        %v5775 = vld [vmem:[#allocation11 + $0xe8] sm:$0xff]
        %v5776 = vld [vmem:[#allocation11 + $0xf0] sm:$0xff]
        %v5777 = vld [vmem:[#allocation11 + $0xf8] sm:$0xff]
        %v5778 = vpack.c.bf16 %v5744, %v5744
        %v5779 = vpack.c.bf16 %v5745, %v5745
        %v5780 = vld [vmem:[#allocation13] sm:$0x3]
        %v5813 = vunpack.c.l.b16 %v5746
        %v5814 = vunpack.c.h.b16 %v5746
        %v5815 = vunpack.c.l.b16 %v5747
        %v5816 = vunpack.c.h.b16 %v5747
        %v5817 = vunpack.c.l.b16 %v5748
        %v5818 = vunpack.c.h.b16 %v5748
        %v5819 = vunpack.c.l.b16 %v5749
        %v5820 = vunpack.c.h.b16 %v5749
        %v5821 = vunpack.c.l.b16 %v5750
        %v5822 = vunpack.c.h.b16 %v5750
        %v5823 = vunpack.c.l.b16 %v5751
        %v5824 = vunpack.c.h.b16 %v5751
        %v5825 = vunpack.c.l.b16 %v5752
        %v5826 = vunpack.c.h.b16 %v5752
        %v5827 = vunpack.c.l.b16 %v5753
        %v5828 = vunpack.c.h.b16 %v5753
        %v5829 = vunpack.c.l.b16 %v5754
        %v5830 = vunpack.c.h.b16 %v5754
        %v5831 = vunpack.c.l.b16 %v5755
        %v5832 = vunpack.c.h.b16 %v5755
        %v5833 = vunpack.c.l.b16 %v5756
        %v5834 = vunpack.c.h.b16 %v5756
        %v5835 = vunpack.c.l.b16 %v5757
        %v5836 = vunpack.c.h.b16 %v5757
        %v5837 = vunpack.c.l.b16 %v5758
        %v5838 = vunpack.c.h.b16 %v5758
        %v5839 = vunpack.c.l.b16 %v5759
        %v5840 = vunpack.c.h.b16 %v5759
        %v5841 = vunpack.c.l.b16 %v5760
        %v5842 = vunpack.c.h.b16 %v5760
        %v5843 = vunpack.c.l.b16 %v5761
        %v5844 = vunpack.c.h.b16 %v5761
        %v5845 = vunpack.c.l.b16 %v5762
        %v5846 = vunpack.c.h.b16 %v5762
        %v5847 = vunpack.c.l.b16 %v5763
        %v5848 = vunpack.c.h.b16 %v5763
        %v5849 = vunpack.c.l.b16 %v5764
        %v5850 = vunpack.c.h.b16 %v5764
        %v5851 = vunpack.c.l.b16 %v5765
        %v5852 = vunpack.c.h.b16 %v5765
        %v5853 = vunpack.c.l.b16 %v5766
        %v5854 = vunpack.c.h.b16 %v5766
        %v5855 = vunpack.c.l.b16 %v5767
        %v5856 = vunpack.c.h.b16 %v5767
        %v5857 = vunpack.c.l.b16 %v5768
        %v5858 = vunpack.c.h.b16 %v5768
        %v5859 = vunpack.c.l.b16 %v5769
        %v5860 = vunpack.c.h.b16 %v5769
        %v5861 = vunpack.c.l.b16 %v5770
        %v5862 = vunpack.c.h.b16 %v5770
        %v5863 = vunpack.c.l.b16 %v5771
        %v5864 = vunpack.c.h.b16 %v5771
        %v5865 = vunpack.c.l.b16 %v5772
        %v5866 = vunpack.c.h.b16 %v5772
        %v5867 = vunpack.c.l.b16 %v5773
        %v5868 = vunpack.c.h.b16 %v5773
        %v5869 = vunpack.c.l.b16 %v5774
        %v5870 = vunpack.c.h.b16 %v5774
        %v5871 = vunpack.c.l.b16 %v5775
        %v5872 = vunpack.c.h.b16 %v5775
        %v5873 = vunpack.c.l.b16 %v5776
        %v5874 = vunpack.c.h.b16 %v5776
        %v5875 = vunpack.c.l.b16 %v5777
        %v5876 = vunpack.c.h.b16 %v5777
        %v5877 = vpack.c.b16 %v5815, %v5813
        %v5878 = vpack.c.b16 %v5816, %v5814
        %v5879 = vpack.c.b16 %v5819, %v5817
        %v5880 = vpack.c.b16 %v5820, %v5818
        %v5881 = vpack.c.b16 %v5823, %v5821
        %v5882 = vpack.c.b16 %v5824, %v5822
        %v5883 = vpack.c.b16 %v5827, %v5825
        %v5884 = vpack.c.b16 %v5828, %v5826
        %v5885 = vpack.c.b16 %v5831, %v5829
        %v5886 = vpack.c.b16 %v5832, %v5830
        %v5887 = vpack.c.b16 %v5835, %v5833
        %v5888 = vpack.c.b16 %v5836, %v5834
        %v5889 = vpack.c.b16 %v5839, %v5837
        %v5890 = vpack.c.b16 %v5840, %v5838
        %v5891 = vpack.c.b16 %v5843, %v5841
        %v5892 = vpack.c.b16 %v5844, %v5842
        %v5893 = vpack.c.b16 %v5847, %v5845
        %v5894 = vpack.c.b16 %v5848, %v5846
        %v5895 = vpack.c.b16 %v5851, %v5849
        %v5896 = vpack.c.b16 %v5852, %v5850
        %v5897 = vpack.c.b16 %v5855, %v5853
        %v5898 = vpack.c.b16 %v5856, %v5854
        %v5899 = vpack.c.b16 %v5859, %v5857
        %v5900 = vpack.c.b16 %v5860, %v5858
        %v5901 = vpack.c.b16 %v5863, %v5861
        %v5902 = vpack.c.b16 %v5864, %v5862
        %v5903 = vpack.c.b16 %v5867, %v5865
        %v5904 = vpack.c.b16 %v5868, %v5866
        %v5905 = vpack.c.b16 %v5871, %v5869
        %v5906 = vpack.c.b16 %v5872, %v5870
        %v5907 = vpack.c.b16 %v5875, %v5873
        %v5908 = vpack.c.b16 %v5876, %v5874
        %v5942 = vlaneseq
        %v5943 = vshrl.u32 %v5942, 7
        %v5944 = vsub.s32 0, %v5943
        %v5945 = vrot.slane %v5780, %v5944
        %v5946 = vlaneseq
        %v5947 = vshrl.u32 %v5946, 7
        %v5948 = vsub.s32 1, %v5947
        %v5949 = vrot.slane %v5780, %v5948
        %5952 = vmatprep.subr.bf16.mxu0 %v5892
        %5953 = vmatpush1.bf16.msra.mxu0 %v5891
        %5954 = vmatprep.subr.bf16.mxu0 %v5890
        %5955 = vmatpush1.bf16.msra.mxu0 %v5889
        %5956 = vmatprep.subr.bf16.mxu0 %v5888
        %5957 = vmatpush1.bf16.msra.mxu0 %v5887
        %5958 = vmatprep.subr.bf16.mxu0 %v5886
        %5959 = vmatpush1.bf16.msra.mxu0 %v5885
        %5960 = vmatprep.subr.bf16.mxu0 %v5884
        %5961 = vmatpush1.bf16.msra.mxu0 %v5883
        %5962 = vmatprep.subr.bf16.mxu0 %v5882
        %5963 = vmatpush1.bf16.msra.mxu0 %v5881
        %5964 = vmatprep.subr.bf16.mxu0 %v5880
        %5965 = vmatpush1.bf16.msra.mxu0 %v5879
        %5966 = vmatprep.subr.bf16.mxu0 %v5878
        %5967 = vmatpush1.bf16.msra.mxu0 %v5877
        %5968 = vmatprep.subr.bf16.mxu0 %v5908
        %5969 = vmatpush2.bf16.msra.mxu0 %v5907
        %5970 = vmatprep.subr.bf16.mxu0 %v5906
        %5971 = vmatpush2.bf16.msra.mxu0 %v5905
        %5972 = vmatprep.subr.bf16.mxu0 %v5904
        %5973 = vmatpush2.bf16.msra.mxu0 %v5903
        %5974 = vmatprep.subr.bf16.mxu0 %v5902
        %5975 = vmatpush2.bf16.msra.mxu0 %v5901
        %5976 = vmatprep.subr.bf16.mxu0 %v5900
        %5977 = vmatpush2.bf16.msra.mxu0 %v5899
        %5978 = vmatprep.subr.bf16.mxu0 %v5898
        %5979 = vmatpush2.bf16.msra.mxu0 %v5897
        %5980 = vmatprep.subr.bf16.mxu0 %v5896
        %5981 = vmatpush2.bf16.msra.mxu0 %v5895
        %5982 = vmatprep.subr.bf16.mxu0 %v5894
        %5983 = vmatpush2.bf16.msra.mxu0 %v5893
        %5984 = vmatprep.mubr.bf16.mxu0 %v5779
        %5985 = vmatmul.mubr.bf16.gmra.mxu0 %v5778
        %v5986 = vpop.f32.mrf.mxu0
        %v5987 = vadd.f32 %v5945, %v5986
        %v5988 = vpop.f32.mrf.mxu0
        %v5989 = vadd.f32 %v5949, %v5988
        %v5990 = vpop.f32.mrf.mxu0
        %v5991 = vpop.f32.mrf.mxu0
        %5992 = vdwg.mxu0
        %v5993 = vmax.f32 %v5987, 0.0
        %v5994 = vmax.f32 %v5989, 0.0
        %v5995 = vld [vmem:[%s18] sm:$0xf]
        %v5996 = vld [vmem:[%s18 + $0x4] sm:$0xf]
        %v5997 = vld [vmem:[%s18 + $0x8] sm:$0xf]
        %v5998 = vld [vmem:[%s18 + $0xc] sm:$0xf]
        %v5999 = vld [vmem:[%s18 + $0x10] sm:$0xf]
        %v6000 = vld [vmem:[%s18 + $0x14] sm:$0xf]
        %v6001 = vld [vmem:[%s18 + $0x18] sm:$0xf]
        %v6002 = vld [vmem:[%s18 + $0x1c] sm:$0xf]
        %v6003 = vld [vmem:[%s18 + $0x20] sm:$0xf]
        %v6004 = vld [vmem:[%s18 + $0x24] sm:$0xf]
        %v6005 = vld [vmem:[%s18 + $0x28] sm:$0xf]
        %v6006 = vld [vmem:[%s18 + $0x2c] sm:$0xf]
        %v6007 = vld [vmem:[%s18 + $0x30] sm:$0xf]
        %v6008 = vld [vmem:[%s18 + $0x34] sm:$0xf]
        %v6009 = vld [vmem:[%s18 + $0x38] sm:$0xf]
        %v6010 = vld [vmem:[%s18 + $0x3c] sm:$0xf]
        %v6011 = vld [vmem:[%s18 + $0x40] sm:$0xf]
        %v6012 = vld [vmem:[%s18 + $0x44] sm:$0xf]
        %v6013 = vld [vmem:[%s18 + $0x48] sm:$0xf]
        %v6014 = vld [vmem:[%s18 + $0x4c] sm:$0xf]
        %v6015 = vld [vmem:[%s18 + $0x50] sm:$0xf]
        %v6016 = vld [vmem:[%s18 + $0x54] sm:$0xf]
        %v6017 = vld [vmem:[%s18 + $0x58] sm:$0xf]
        %v6018 = vld [vmem:[%s18 + $0x5c] sm:$0xf]
        %v6019 = vld [vmem:[%s18 + $0x60] sm:$0xf]
        %v6020 = vld [vmem:[%s18 + $0x64] sm:$0xf]
        %v6021 = vld [vmem:[%s18 + $0x68] sm:$0xf]
        %v6022 = vld [vmem:[%s18 + $0x6c] sm:$0xf]
        %v6023 = vld [vmem:[%s18 + $0x70] sm:$0xf]
        %v6024 = vld [vmem:[%s18 + $0x74] sm:$0xf]
        %v6025 = vld [vmem:[%s18 + $0x78] sm:$0xf]
        %v6026 = vld [vmem:[%s18 + $0x7c] sm:$0xf]
        %v6027 = vpack.c.bf16 %v5993, %v5993
        %v6028 = vpack.c.bf16 %v5994, %v5994
        %v6029 = vld [vmem:[#allocation14] sm:$0x1]
        %v6062 = vunpack.c.l.b16 %v5995
        %v6063 = vunpack.c.l.b16 %v5996
        %v6064 = vunpack.c.l.b16 %v5997
        %v6065 = vunpack.c.l.b16 %v5998
        %v6066 = vunpack.c.l.b16 %v5999
        %v6067 = vunpack.c.l.b16 %v6000
        %v6068 = vunpack.c.l.b16 %v6001
        %v6069 = vunpack.c.l.b16 %v6002
        %v6070 = vunpack.c.l.b16 %v6003
        %v6071 = vunpack.c.l.b16 %v6004
        %v6072 = vunpack.c.l.b16 %v6005
        %v6073 = vunpack.c.l.b16 %v6006
        %v6074 = vunpack.c.l.b16 %v6007
        %v6075 = vunpack.c.l.b16 %v6008
        %v6076 = vunpack.c.l.b16 %v6009
        %v6077 = vunpack.c.l.b16 %v6010
        %v6078 = vunpack.c.l.b16 %v6011
        %v6079 = vunpack.c.l.b16 %v6012
        %v6080 = vunpack.c.l.b16 %v6013
        %v6081 = vunpack.c.l.b16 %v6014
        %v6082 = vunpack.c.l.b16 %v6015
        %v6083 = vunpack.c.l.b16 %v6016
        %v6084 = vunpack.c.l.b16 %v6017
        %v6085 = vunpack.c.l.b16 %v6018
        %v6086 = vunpack.c.l.b16 %v6019
        %v6087 = vunpack.c.l.b16 %v6020
        %v6088 = vunpack.c.l.b16 %v6021
        %v6089 = vunpack.c.l.b16 %v6022
        %v6090 = vunpack.c.l.b16 %v6023
        %v6091 = vunpack.c.l.b16 %v6024
        %v6092 = vunpack.c.l.b16 %v6025
        %v6093 = vunpack.c.l.b16 %v6026
        %v6094 = vpack.c.b16 %v6063, %v6062
        %v6095 = vpack.c.b16 %v6065, %v6064
        %v6096 = vpack.c.b16 %v6067, %v6066
        %v6097 = vpack.c.b16 %v6069, %v6068
        %v6098 = vpack.c.b16 %v6071, %v6070
        %v6099 = vpack.c.b16 %v6073, %v6072
        %v6100 = vpack.c.b16 %v6075, %v6074
        %v6101 = vpack.c.b16 %v6077, %v6076
        %v6102 = vpack.c.b16 %v6079, %v6078
        %v6103 = vpack.c.b16 %v6081, %v6080
        %v6104 = vpack.c.b16 %v6083, %v6082
        %v6105 = vpack.c.b16 %v6085, %v6084
        %v6106 = vpack.c.b16 %v6087, %v6086
        %v6107 = vpack.c.b16 %v6089, %v6088
        %v6108 = vpack.c.b16 %v6091, %v6090
        %v6109 = vpack.c.b16 %v6093, %v6092
        %6126 = vmatprep.subr.bf16.mxu0 0
        %6127 = vmatpush1.bf16.msra.mxu0 %v6101
        %6128 = vmatprep.subr.bf16.mxu0 0
        %6129 = vmatpush1.bf16.msra.mxu0 %v6100
        %6130 = vmatprep.subr.bf16.mxu0 0
        %6131 = vmatpush1.bf16.msra.mxu0 %v6099
        %6132 = vmatprep.subr.bf16.mxu0 0
        %6133 = vmatpush1.bf16.msra.mxu0 %v6098
        %6134 = vmatprep.subr.bf16.mxu0 0
        %6135 = vmatpush1.bf16.msra.mxu0 %v6097
        %6136 = vmatprep.subr.bf16.mxu0 0
        %6137 = vmatpush1.bf16.msra.mxu0 %v6096
        %6138 = vmatprep.subr.bf16.mxu0 0
        %6139 = vmatpush1.bf16.msra.mxu0 %v6095
        %6140 = vmatprep.subr.bf16.mxu0 0
        %6141 = vmatpush1.bf16.msra.mxu0 %v6094
        %6142 = vmatprep.subr.bf16.mxu0 0
        %6143 = vmatpush2.bf16.msra.mxu0 %v6109
        %6144 = vmatprep.subr.bf16.mxu0 0
        %6145 = vmatpush2.bf16.msra.mxu0 %v6108
        %6146 = vmatprep.subr.bf16.mxu0 0
        %6147 = vmatpush2.bf16.msra.mxu0 %v6107
        %6148 = vmatprep.subr.bf16.mxu0 0
        %6149 = vmatpush2.bf16.msra.mxu0 %v6106
        %6150 = vmatprep.subr.bf16.mxu0 0
        %6151 = vmatpush2.bf16.msra.mxu0 %v6105
        %6152 = vmatprep.subr.bf16.mxu0 0
        %6153 = vmatpush2.bf16.msra.mxu0 %v6104
        %6154 = vmatprep.subr.bf16.mxu0 0
        %6155 = vmatpush2.bf16.msra.mxu0 %v6103
        %6156 = vmatprep.subr.bf16.mxu0 0
        %6157 = vmatpush2.bf16.msra.mxu0 %v6102
        %6158 = vmatprep.mubr.bf16.mxu0 %v6028
        %6159 = vmatmul.mubr.bf16.gmra.mxu0 %v6027
        %v6160 = vpop.f32.mrf.mxu0
        %v6161 = vadd.f32 %v6029, %v6160
        %v6162 = vpop.f32.mrf.mxu0
        %v6163 = vpop.f32.mrf.mxu0
        %v6164 = vpop.f32.mrf.mxu0
        %6165 = vdwg.mxu0
        %vm6166 = vcmask 16384
        %6167 = vst.msk [vmem:[%s730] sm:$0x1] %vm6166, %v6161
        %s6168 = sand.u32 %s472, 1
        %s6169 = scalar_lea.sflag [#allocation4], %s6168
        %s6170 = sand.u32 %s472, 1
        %s6171 = scalar_lea.vmem [#allocation16], %s6170
        // Predicated region
        $region133: #{classification_network_forward.1} parent=99 // pred_check
          %p6172 = pneg %p482
        $region134: #{classification_network_forward.1} parent=99 // pred_check_branch
          %6174 = sbr.rel (%p6172) target = $region136
        $region135: #{classification_network_forward.1} parent=99 // pred_region
          %s6176 = ssub.s32 16, 16
          %6177 = vsyncadd %s6169, %s6176
          %s6178 = smul.addr %s39, 16
          %s6179 = scalar_lea.hbm %s20, %s6178
          %s6181 = sshll.u32 %s6171, 4
          %s6182 = int_to_ptr.vmem [resolvable:$true] %s6181
          %6184 = dma.vmem_to_hbm [thread:$0]  %s6182, 16, %s6179, %s6169
        $region136: #{classification_network_forward.1} parent=99 // pred_fallthru
          _
      $region100: #{classification_network_forward.1} parent=5 // pred_fallthru
        _
      %p6185 = scmp.le.s32.totalorder 2, %s34
      // Predicated region
      $region137: #{classification_network_forward.1} parent=5 // pred_check
        %p6186 = pneg %p6185
      $region138: #{classification_network_forward.1} parent=5 // pred_check_branch
        %6188 = sbr.rel (%p6186) target = $region140
      $region139: #{classification_network_forward.1} parent=5 // pred_region
        %s6189 = ssub.s32 %s34, 2
        // Predicated region
        $region141: #{classification_network_forward.1} parent=139 // pred_check
          %p6190 = pneg %p488
        $region142: #{classification_network_forward.1} parent=139 // pred_check_branch
          %6192 = sbr.rel (%p6190) target = $region144
        $region143: #{classification_network_forward.1} parent=139 // pred_region
          %s6193 = sand.u32 %s473, 1
          %s6194 = scalar_lea.sflag [#allocation4], %s6193
          %s6195 = sand.u32 %s473, 1
          %s6196 = scalar_lea.vmem [#allocation16], %s6195
          %6197 = dma.done %s6194, 16
        $region144: #{classification_network_forward.1} parent=139 // pred_fallthru
          _
      $region140: #{classification_network_forward.1} parent=5 // pred_fallthru
        _
    $region6: #{classification_network_forward.1} parent=1 // loop_footer
      %s38 = sadd.s32 1, %s34
    $region7: #{classification_network_forward.1} parent=1 // loop_footer_branch
      %33 = sbr.rel target = $region3
    $region8: #{classification_network_forward.1} parent=1 // loop_exit
      _
    %6198 = vsyncpa [#allocation3], 1
    %s6199 = scalar_lea.sflag [#allocation3], 1
    %6200 = vsyncpa %s6199, 1
    %6201 = vsyncpa [#allocation6], 1
    %6202 = vsyncpa [#allocation9], 1
    %6203 = vsyncpa [#allocation12], 1
    %6204 = vsyncpa [#allocation15], 1
    %6205 = vsyncpa [#allocation4], 1
    %s6206 = scalar_lea.sflag [#allocation4], 1
    %6207 = vsyncpa %s6206, 1

</llo_original>
